<compile_context>
chip_gen: v6e
topology: v6e:2x2x1
jax: 0.10.0
libtpu: 0.0.40
codegen_flags: <defaults>
</compile_context>

<pallas_src>
import functools
import math

import jax
import jax.numpy as jnp
from jax import lax
from jax.experimental import pallas as pl
from jax.experimental.pallas import tpu as pltpu


def _round_up(n, m):
    return (n + m - 1) // m * m


def _layer_norm(x, gamma, beta, eps=1e-5):
    mean = jnp.mean(x, axis=-1, keepdims=True)
    var = jnp.mean((x - mean) ** 2, axis=-1, keepdims=True)
    return (x - mean) * lax.rsqrt(var + eps) * gamma + beta


# --------------------------------- kernel -----------------------------------
def patch_mixer_kernel(x_ref, wqkv_ref, wo_ref, w1_ref, w2_ref, vec_ref, o_ref, *,
                       num_heads, num_layers, seq_len, vec_offsets):
    M, E = x_ref.shape                    # M = B_blk * S  (batch folded into rows)
    S = seq_len
    Bblk = M // S
    H = num_heads
    Dh = E // H
    G = Bblk * H                          # attention batch = batch * heads
    scale = 1.0 / math.sqrt(Dh)
    mm = wqkv_ref.dtype                   # bf16 matmul operands, f32 accumulate

    x = x_ref[...].astype(jnp.float32)    # resident across all layers

    def to_heads(t):                      # (M, E) -> (G, S, Dh)
        return (t.reshape(Bblk, S, H, Dh)
                 .transpose(0, 2, 1, 3)
                 .reshape(G, S, Dh))

    # TODO(synk): dropout (p=0.1) omitted -- eval-mode semantics only.
    for l in range(num_layers):           # static unroll; weights stay in VMEM
        def vec(name, _l=l):              # 128-aligned lane slice of packed vectors
            off, n = vec_offsets[name]
            return vec_ref[_l, off:off + n]

        # ---- fused QKV projection on all B*S rows (bf16 MXU, f32 acc) ----
        qkv = jnp.dot(x.astype(mm), wqkv_ref[l],
                      preferred_element_type=jnp.float32) + vec("bqkv")   # (M, 3E)

        # slice/cast q, k, v once each; attention batched over batch*heads
        q = to_heads(qkv[:, 0:E]).astype(mm)
        k = to_heads(qkv[:, E:2 * E]).astype(mm)
        v = to_heads(qkv[:, 2 * E:3 * E]).astype(mm)

        s = jnp.einsum("gqd,gkd->gqk", q, k,
                       preferred_element_type=jnp.float32) * scale        # (G, S, S)
        s = s - jnp.max(s, axis=-1, keepdims=True)
        p = jnp.exp(s)
        p = p * pl.reciprocal(jnp.sum(p, axis=-1, keepdims=True), approx=True)

        ctx = jnp.einsum("gqk,gkd->gqd", p.astype(mm), v,
                         preferred_element_type=jnp.float32)               # (G, S, Dh)
        ctx = (ctx.reshape(Bblk, H, S, Dh)
                  .transpose(0, 2, 1, 3)
                  .reshape(M, E))

        attn = jnp.dot(ctx.astype(mm), wo_ref[l],
                       preferred_element_type=jnp.float32) + vec("bo")

        # ---- residual + LayerNorm 1 (post-norm, f32) ----
        x = _layer_norm(x + attn, vec("ln1w"), vec("ln1b"))

        # ---- feed-forward: relu(x @ w1 + b1) @ w2^T + b2 ----
        h1 = jnp.dot(x.astype(mm), w1_ref[l],
                     preferred_element_type=jnp.float32) + vec("b1")       # (M, FF)
        h1 = jnp.maximum(h1, 0.0)
        # w2 stored lane-dense as (E, FF); contract over FF (rhs-transposed matmul)
        ff = lax.dot_general(h1.astype(mm), w2_ref[l],
                             dimension_numbers=(((1,), (1,)), ((), ())),
                             preferred_element_type=jnp.float32) + vec("b2")

        # ---- residual + LayerNorm 2 ----
        x = _layer_norm(x + ff, vec("ln2w"), vec("ln2b"))

    o_ref[...] = x.astype(o_ref.dtype)


# -------------------------------- wrapper ------------------------------------
def _padded_bytes(a):
    """Rough VMEM footprint of one buffer: pad last dim to 128, 2nd-last to 8."""
    s = list(a.shape)
    s[-1] = _round_up(s[-1], 128)
    if len(s) >= 2:
        s[-2] = _round_up(s[-2], 8)
    return math.prod(s) * a.dtype.itemsize


def patch_mixer_pallas(x, mats, vecs, vec_offsets, *, num_heads, num_layers,
                       num_batch_blocks=1):
    """x: (B, S, E) f32.  mats: dict of stacked (L, ...) bf16 weights.
    num_batch_blocks: 1 on v5e/v6e (single fat block); 2 on v7x for megacore."""
    B, S, E = x.shape
    assert B % num_batch_blocks == 0
    Bblk = B // num_batch_blocks
    M = B * S

    x2 = x.reshape(M, E)                  # fold batch into the matmul M dimension
    weight_args = (mats["wqkv"], mats["wo"], mats["w1"], mats["w2"], vecs)
    FF = mats["w1"].shape[-1]

    kernel = functools.partial(patch_mixer_kernel, num_heads=num_heads,
                               num_layers=num_layers, seq_len=S,
                               vec_offsets=vec_offsets)

    in_specs = [pl.BlockSpec((Bblk * S, E), lambda i: (i, 0))]
    in_specs += [pl.BlockSpec(w.shape, lambda i, nd=w.ndim: (0,) * nd)
                 for w in weight_args]

    # explicit VMEM budget: every input BlockSpec is double-buffered
    io_bytes = 2 * _round_up(Bblk * S, 8) * _round_up(E, 128) * x.dtype.itemsize
    weight_bytes = sum(_padded_bytes(w) for w in weight_args)
    vmem_limit = max(2 * (weight_bytes + io_bytes) + (8 << 20), 32 << 20)

    flops = num_layers * (2 * M * E * (4 * E + 2 * FF) + 4 * M * S * E)
    transcendentals = num_layers * (B * num_heads * S * S + 2 * M)
    bytes_accessed = (2 * M * E * x.dtype.itemsize
                      + sum(int(w.size) * w.dtype.itemsize for w in weight_args))

    out = pl.pallas_call(
        kernel,
        out_shape=jax.ShapeDtypeStruct((M, E), x.dtype),
        grid=(num_batch_blocks,),
        in_specs=in_specs,
        out_specs=pl.BlockSpec((Bblk * S, E), lambda i: (i, 0)),
        compiler_params=pltpu.CompilerParams(
            dimension_semantics=("parallel",),
            vmem_limit_bytes=int(vmem_limit)),
        cost_estimate=pl.CostEstimate(flops=int(flops),
                                      transcendentals=int(transcendentals),
                                      bytes_accessed=int(bytes_accessed)),
    )(x2, *weight_args)
    return out.reshape(B, S, E)


# ----------------------- parameter packing (wrapper-side) --------------------
_VEC_NAMES = ("bqkv", "bo", "ln1w", "ln1b", "ln2w", "ln2b", "b1", "b2")


def pack_params(layer_params, matmul_dtype=jnp.bfloat16):
    """Stack per-layer dicts along L; bf16 matmul weights; pack small vectors
    into one (L, P) f32 array with 128-aligned segments."""
    mats = {k: jnp.stack([p[k] for p in layer_params]).astype(matmul_dtype)
            for k in ("wqkv", "wo", "w1", "w2")}
    offsets, off = {}, 0
    for name in _VEC_NAMES:
        n = layer_params[0][name].shape[-1]
        offsets[name] = (off, n)
        off += _round_up(n, 128)
    vecs = jnp.zeros((len(layer_params), off), jnp.float32)
    for name in _VEC_NAMES:
        o, n = offsets[name]
        col = jnp.stack([p[name] for p in layer_params]).astype(jnp.float32)
        vecs = vecs.at[:, o:o + n].set(col)
    return mats, vecs, offsets


# ---------------- pure-JAX f32 reference (silent correctness check) ----------
def encoder_layer_ref(x, p, num_heads):
    B, S, E = x.shape
    Dh = E // num_heads
    scale = 1.0 / math.sqrt(Dh)

    qkv = x @ p["wqkv"] + p["bqkv"]
    q, k, v = qkv[..., :E], qkv[..., E:2 * E], qkv[..., 2 * E:]

    def split(t):  # (B,S,E) -> (B,H,S,Dh)
        return t.reshape(B, S, num_heads, Dh).transpose(0, 2, 1, 3)

    qh, kh, vh = split(q), split(k), split(v)
    s = jnp.einsum("bhqd,bhkd->bhqk", qh, kh) * scale
    a = jax.nn.softmax(s, axis=-1)
    ctx = jnp.einsum("bhqk,bhkd->bhqd", a, vh).transpose(0, 2, 1, 3).reshape(B, S, E)
    attn = ctx @ p["wo"] + p["bo"]

    y1 = _layer_norm(x + attn, p["ln1w"], p["ln1b"])
    ff = jnp.maximum(y1 @ p["w1"] + p["b1"], 0.0) @ p["w2"].T + p["b2"]
    return _layer_norm(y1 + ff, p["ln2w"], p["ln2b"])


def patch_mixer_ref(x, layer_params, num_heads):
    for p in layer_params:
        x = encoder_layer_ref(x, p, num_heads)
    return x


def init_layer_params(key, embed_dim, dim_feedforward):
    E, FF = embed_dim, dim_feedforward
    ks = jax.random.split(key, 6)
    std = 0.02
    return {
        "wqkv": jax.random.normal(ks[0], (E, 3 * E), jnp.float32) * std,  # (in, out)
        "bqkv": jnp.zeros((3 * E,), jnp.float32),
        "wo":   jax.random.normal(ks[1], (E, E), jnp.float32) * std,      # (in, out)
        "bo":   jnp.zeros((E,), jnp.float32),
        "ln1w": jnp.ones((E,), jnp.float32),
        "ln1b": jnp.zeros((E,), jnp.float32),
        "ln2w": jnp.ones((E,), jnp.float32),
        "ln2b": jnp.zeros((E,), jnp.float32),
        "w1":   jax.random.normal(ks[2], (E, FF), jnp.float32) * std,     # (in, out)
        "b1":   jax.random.normal(ks[3], (FF,), jnp.float32) * std,
        "w2":   jax.random.normal(ks[4], (E, FF), jnp.float32) * std,     # lane-dense (E, FF)
        "b2":   jax.random.normal(ks[5], (E,), jnp.float32) * std,
    }


if __name__ == "__main__":
    B, S, E = 2, 8, 32            # batch, sequence (num patches), embed_dim
    num_heads = 4
    num_layers = 2
    dim_feedforward = 2048        # nn.TransformerEncoderLayer default

    root = jax.random.PRNGKey(0)
    kx, kp = jax.random.split(root)
    x = jax.random.normal(kx, (B, S, E), jnp.float32)

    layer_keys = jax.random.split(kp, num_layers)
    layer_params = [init_layer_params(k, E, dim_feedforward) for k in layer_keys]
    mats, vecs, vec_offsets = pack_params(layer_params, matmul_dtype=jnp.bfloat16)

    out = patch_mixer_pallas(x, mats, vecs, vec_offsets,
                             num_heads=num_heads, num_layers=num_layers,
                             num_batch_blocks=1)   # use 2 on v7x (2 TensorCores)
    out = jax.block_until_ready(out)

    ref = jax.block_until_ready(patch_mixer_ref(x, layer_params, num_heads))
    assert out.shape == (B, S, E)
    # bf16 MXU operands (f32 accumulate) vs. a pure-f32 reference -> bf16-level tolerance.
    assert jnp.allclose(out, ref, atol=2e-2, rtol=2e-2), "mismatch vs. JAX reference"

    print("KERNEL_OK")
</pallas_src>

<mosaic_0001>
module attributes {stable_mosaic.version = 11 : i64} {
  func.func @patch_mixer_kernel(%arg0: i32, %arg1: memref<16x32xf32, #tpu.memory_space<vmem>>, %arg2: memref<2x32x96xbf16, #tpu.memory_space<vmem>>, %arg3: memref<2x32x32xbf16, #tpu.memory_space<vmem>>, %arg4: memref<2x32x2048xbf16, #tpu.memory_space<vmem>>, %arg5: memref<2x32x2048xbf16, #tpu.memory_space<vmem>>, %arg6: memref<2x2944xf32, #tpu.memory_space<vmem>>, %arg7: memref<16x32xf32, #tpu.memory_space<vmem>>) attributes {dimension_semantics = [#tpu.dimension_semantics<parallel>], iteration_bounds = array<i64: 1>, scalar_prefetch = 0 : i64, scratch_operands = 0 : i64, tpu.core_type = #tpu.core_type<tc>, window_params = [{transform_indices = @transform_0, window_bounds = array<i64: 16, 32>}, {pipeline_mode = #tpu.pipeline_mode<synchronous>, transform_indices = @transform_1, window_bounds = array<i64: 2, 32, 96>}, {pipeline_mode = #tpu.pipeline_mode<synchronous>, transform_indices = @transform_2, window_bounds = array<i64: 2, 32, 32>}, {pipeline_mode = #tpu.pipeline_mode<synchronous>, transform_indices = @transform_3, window_bounds = array<i64: 2, 32, 2048>}, {pipeline_mode = #tpu.pipeline_mode<synchronous>, transform_indices = @transform_4, window_bounds = array<i64: 2, 32, 2048>}, {pipeline_mode = #tpu.pipeline_mode<synchronous>, transform_indices = @transform_5, window_bounds = array<i64: 2, 2944>}, {transform_indices = @transform_6, window_bounds = array<i64: 16, 32>}]} {
    %c0 = arith.constant 0 : index
    %c0_0 = arith.constant 0 : index
    %0 = vector.load %arg1[%c0, %c0_0] : memref<16x32xf32, #tpu.memory_space<vmem>>, vector<16x32xf32>
    %1 = arith.truncf %0 : vector<16x32xf32> to vector<16x32xbf16>
    %c0_1 = arith.constant 0 : index
    %c0_2 = arith.constant 0 : index
    %c0_3 = arith.constant 0 : index
    %2 = vector.load %arg2[%c0_1, %c0_2, %c0_3] : memref<2x32x96xbf16, #tpu.memory_space<vmem>>, vector<1x32x96xbf16>
    %3 = vector.shape_cast %2 : vector<1x32x96xbf16> to vector<32x96xbf16>
    %cst = arith.constant dense<0.000000e+00> : vector<16x96xf32>
    %4 = tpu.matmul %1, %3, %cst {dimension_numbers = #tpu.dot_dimension_numbers<[1], [0], [0], [1], [0, 0, 1, 1], [], []>} : vector<16x32xbf16>, vector<32x96xbf16>, vector<16x96xf32> -> vector<16x96xf32>
    %c0_4 = arith.constant 0 : index
    %c0_5 = arith.constant 0 : index
    %5 = vector.load %arg6[%c0_4, %c0_5] : memref<2x2944xf32, #tpu.memory_space<vmem>>, vector<1x96xf32>
    %6 = vector.shape_cast %5 : vector<1x96xf32> to vector<96xf32>
    %7 = vector.shape_cast %6 : vector<96xf32> to vector<1x96xf32>
    %8 = vector.broadcast %7 : vector<1x96xf32> to vector<16x96xf32>
    %9 = arith.addf %4, %8 : vector<16x96xf32>
    %10 = vector.extract_strided_slice %9 {offsets = [0, 0], sizes = [16, 32], strides = [1, 1]} : vector<16x96xf32> to vector<16x32xf32>
    %11 = vector.shape_cast %10 : vector<16x32xf32> to vector<2x8x4x8xf32>
    %12 = tpu.transpose %11, [0, 2, 1, 3] : vector<2x8x4x8xf32> -> vector<2x4x8x8xf32>
    %13 = vector.shape_cast %12 : vector<2x4x8x8xf32> to vector<8x8x8xf32>
    %14 = arith.truncf %13 : vector<8x8x8xf32> to vector<8x8x8xbf16>
    %15 = vector.extract_strided_slice %9 {offsets = [0, 32], sizes = [16, 32], strides = [1, 1]} : vector<16x96xf32> to vector<16x32xf32>
    %16 = vector.shape_cast %15 : vector<16x32xf32> to vector<2x8x4x8xf32>
    %17 = tpu.transpose %16, [0, 2, 1, 3] : vector<2x8x4x8xf32> -> vector<2x4x8x8xf32>
    %18 = vector.shape_cast %17 : vector<2x4x8x8xf32> to vector<8x8x8xf32>
    %19 = arith.truncf %18 : vector<8x8x8xf32> to vector<8x8x8xbf16>
    %20 = vector.extract_strided_slice %9 {offsets = [0, 64], sizes = [16, 32], strides = [1, 1]} : vector<16x96xf32> to vector<16x32xf32>
    %21 = vector.shape_cast %20 : vector<16x32xf32> to vector<2x8x4x8xf32>
    %22 = tpu.transpose %21, [0, 2, 1, 3] : vector<2x8x4x8xf32> -> vector<2x4x8x8xf32>
    %23 = vector.shape_cast %22 : vector<2x4x8x8xf32> to vector<8x8x8xf32>
    %24 = arith.truncf %23 : vector<8x8x8xf32> to vector<8x8x8xbf16>
    "tpu.trace_start"() <{level = 10 : i32, message = "gqd,gkd->gqk"}> : () -> ()
    %cst_6 = arith.constant dense<0.000000e+00> : vector<8x8x8xf32>
    %25 = tpu.matmul %14, %19, %cst_6 {dimension_numbers = #tpu.dot_dimension_numbers<[2], [2], [1], [1], [0, 0, 0, 1, 1, 1], [0], [0]>} : vector<8x8x8xbf16>, vector<8x8x8xbf16>, vector<8x8x8xf32> -> vector<8x8x8xf32>
    "tpu.trace_stop"() : () -> ()
    %cst_7 = arith.constant 0.353553385 : f32
    %26 = vector.broadcast %cst_7 : f32 to vector<8x8x8xf32>
    %27 = arith.mulf %25, %26 : vector<8x8x8xf32>
    %cst_8 = arith.constant dense<0xFF800000> : vector<8x8xf32>
    %28 = vector.multi_reduction <maximumf>, %27, %cst_8 [2] : vector<8x8x8xf32> to vector<8x8xf32>
    %29 = vector.shape_cast %28 : vector<8x8xf32> to vector<8x8x1xf32>
    %30 = vector.broadcast %29 : vector<8x8x1xf32> to vector<8x8x8xf32>
    %31 = arith.subf %27, %30 : vector<8x8x8xf32>
    %32 = math.exp %31 : vector<8x8x8xf32>
    %cst_9 = arith.constant dense<0.000000e+00> : vector<8x8xf32>
    %33 = vector.multi_reduction <add>, %32, %cst_9 [2] : vector<8x8x8xf32> to vector<8x8xf32>
    %34 = vector.shape_cast %33 : vector<8x8xf32> to vector<8x8x1xf32>
    %35 = tpu.reciprocal %34 {approx = true} : vector<8x8x1xf32> -> vector<8x8x1xf32>
    %36 = vector.broadcast %35 : vector<8x8x1xf32> to vector<8x8x8xf32>
    %37 = arith.mulf %32, %36 : vector<8x8x8xf32>
    %38 = arith.truncf %37 : vector<8x8x8xf32> to vector<8x8x8xbf16>
    "tpu.trace_start"() <{level = 10 : i32, message = "gqk,gkd->gqd"}> : () -> ()
    %cst_10 = arith.constant dense<0.000000e+00> : vector<8x8x8xf32>
    %39 = tpu.matmul %38, %24, %cst_10 {dimension_numbers = #tpu.dot_dimension_numbers<[2], [1], [1], [2], [0, 0, 0, 1, 1, 2], [0], [0]>} : vector<8x8x8xbf16>, vector<8x8x8xbf16>, vector<8x8x8xf32> -> vector<8x8x8xf32>
    "tpu.trace_stop"() : () -> ()
    %40 = vector.shape_cast %39 : vector<8x8x8xf32> to vector<2x4x8x8xf32>
    %41 = tpu.transpose %40, [0, 2, 1, 3] : vector<2x4x8x8xf32> -> vector<2x8x4x8xf32>
    %42 = vector.shape_cast %41 : vector<2x8x4x8xf32> to vector<16x32xf32>
    %43 = arith.truncf %42 : vector<16x32xf32> to vector<16x32xbf16>
    %c0_11 = arith.constant 0 : index
    %c0_12 = arith.constant 0 : index
    %c0_13 = arith.constant 0 : index
    %44 = vector.load %arg3[%c0_11, %c0_12, %c0_13] : memref<2x32x32xbf16, #tpu.memory_space<vmem>>, vector<1x32x32xbf16>
    %45 = vector.shape_cast %44 : vector<1x32x32xbf16> to vector<32x32xbf16>
    %cst_14 = arith.constant dense<0.000000e+00> : vector<16x32xf32>
    %46 = tpu.matmul %43, %45, %cst_14 {dimension_numbers = #tpu.dot_dimension_numbers<[1], [0], [0], [1], [0, 0, 1, 1], [], []>} : vector<16x32xbf16>, vector<32x32xbf16>, vector<16x32xf32> -> vector<16x32xf32>
    %c0_15 = arith.constant 0 : index
    %c128 = arith.constant 128 : index
    %47 = vector.load %arg6[%c0_15, %c128] : memref<2x2944xf32, #tpu.memory_space<vmem>>, vector<1x32xf32>
    %48 = vector.shape_cast %47 : vector<1x32xf32> to vector<32xf32>
    %49 = vector.shape_cast %48 : vector<32xf32> to vector<1x32xf32>
    %50 = vector.broadcast %49 : vector<1x32xf32> to vector<16x32xf32>
    %51 = arith.addf %46, %50 : vector<16x32xf32>
    %52 = arith.addf %0, %51 : vector<16x32xf32>
    %c0_16 = arith.constant 0 : index
    %c256 = arith.constant 256 : index
    %53 = vector.load %arg6[%c0_16, %c256] : memref<2x2944xf32, #tpu.memory_space<vmem>>, vector<1x32xf32>
    %54 = vector.shape_cast %53 : vector<1x32xf32> to vector<32xf32>
    %c0_17 = arith.constant 0 : index
    %c384 = arith.constant 384 : index
    %55 = vector.load %arg6[%c0_17, %c384] : memref<2x2944xf32, #tpu.memory_space<vmem>>, vector<1x32xf32>
    %56 = vector.shape_cast %55 : vector<1x32xf32> to vector<32xf32>
    %cst_18 = arith.constant dense<0.000000e+00> : vector<16xf32>
    %57 = vector.multi_reduction <add>, %52, %cst_18 [1] : vector<16x32xf32> to vector<16xf32>
    %58 = vector.shape_cast %57 : vector<16xf32> to vector<16x1xf32>
    %cst_19 = arith.constant 3.200000e+01 : f32
    %59 = vector.broadcast %cst_19 : f32 to vector<16x1xf32>
    %60 = arith.divf %58, %59 : vector<16x1xf32>
    %61 = vector.broadcast %60 : vector<16x1xf32> to vector<16x32xf32>
    %62 = arith.subf %52, %61 : vector<16x32xf32>
    %63 = arith.mulf %62, %62 : vector<16x32xf32>
    %cst_20 = arith.constant dense<0.000000e+00> : vector<16xf32>
    %64 = vector.multi_reduction <add>, %63, %cst_20 [1] : vector<16x32xf32> to vector<16xf32>
    %65 = vector.shape_cast %64 : vector<16xf32> to vector<16x1xf32>
    %cst_21 = arith.constant 3.200000e+01 : f32
    %66 = vector.broadcast %cst_21 : f32 to vector<16x1xf32>
    %67 = arith.divf %65, %66 : vector<16x1xf32>
    %68 = vector.broadcast %60 : vector<16x1xf32> to vector<16x32xf32>
    %69 = arith.subf %52, %68 : vector<16x32xf32>
    %cst_22 = arith.constant 9.99999974E-6 : f32
    %70 = vector.broadcast %cst_22 : f32 to vector<16x1xf32>
    %71 = arith.addf %67, %70 : vector<16x1xf32>
    %72 = math.rsqrt %71 : vector<16x1xf32>
    %73 = vector.broadcast %72 : vector<16x1xf32> to vector<16x32xf32>
    %74 = arith.mulf %69, %73 : vector<16x32xf32>
    %75 = vector.shape_cast %54 : vector<32xf32> to vector<1x32xf32>
    %76 = vector.broadcast %75 : vector<1x32xf32> to vector<16x32xf32>
    %77 = arith.mulf %74, %76 : vector<16x32xf32>
    %78 = vector.shape_cast %56 : vector<32xf32> to vector<1x32xf32>
    %79 = vector.broadcast %78 : vector<1x32xf32> to vector<16x32xf32>
    %80 = arith.addf %77, %79 : vector<16x32xf32>
    %81 = arith.truncf %80 : vector<16x32xf32> to vector<16x32xbf16>
    %c0_23 = arith.constant 0 : index
    %c0_24 = arith.constant 0 : index
    %c0_25 = arith.constant 0 : index
    %82 = vector.load %arg4[%c0_23, %c0_24, %c0_25] : memref<2x32x2048xbf16, #tpu.memory_space<vmem>>, vector<1x32x2048xbf16>
    %83 = vector.shape_cast %82 : vector<1x32x2048xbf16> to vector<32x2048xbf16>
    %cst_26 = arith.constant dense<0.000000e+00> : vector<16x2048xf32>
    %84 = tpu.matmul %81, %83, %cst_26 {dimension_numbers = #tpu.dot_dimension_numbers<[1], [0], [0], [1], [0, 0, 1, 1], [], []>} : vector<16x32xbf16>, vector<32x2048xbf16>, vector<16x2048xf32> -> vector<16x2048xf32>
    %c0_27 = arith.constant 0 : index
    %c768 = arith.constant 768 : index
    %85 = vector.load %arg6[%c0_27, %c768] : memref<2x2944xf32, #tpu.memory_space<vmem>>, vector<1x2048xf32>
    %86 = vector.shape_cast %85 : vector<1x2048xf32> to vector<2048xf32>
    %87 = vector.shape_cast %86 : vector<2048xf32> to vector<1x2048xf32>
    %88 = vector.broadcast %87 : vector<1x2048xf32> to vector<16x2048xf32>
    %89 = arith.addf %84, %88 : vector<16x2048xf32>
    %cst_28 = arith.constant 0.000000e+00 : f32
    %90 = vector.broadcast %cst_28 : f32 to vector<16x2048xf32>
    %91 = arith.maximumf %89, %90 : vector<16x2048xf32>
    %92 = arith.truncf %91 : vector<16x2048xf32> to vector<16x2048xbf16>
    %c0_29 = arith.constant 0 : index
    %c0_30 = arith.constant 0 : index
    %c0_31 = arith.constant 0 : index
    %93 = vector.load %arg5[%c0_29, %c0_30, %c0_31] : memref<2x32x2048xbf16, #tpu.memory_space<vmem>>, vector<1x32x2048xbf16>
    %94 = vector.shape_cast %93 : vector<1x32x2048xbf16> to vector<32x2048xbf16>
    %cst_32 = arith.constant dense<0.000000e+00> : vector<16x32xf32>
    %95 = tpu.matmul %92, %94, %cst_32 {dimension_numbers = #tpu.dot_dimension_numbers<[1], [1], [0], [0], [0, 0, 1, 0], [], []>} : vector<16x2048xbf16>, vector<32x2048xbf16>, vector<16x32xf32> -> vector<16x32xf32>
    %c0_33 = arith.constant 0 : index
    %c2816 = arith.constant 2816 : index
    %96 = vector.load %arg6[%c0_33, %c2816] : memref<2x2944xf32, #tpu.memory_space<vmem>>, vector<1x32xf32>
    %97 = vector.shape_cast %96 : vector<1x32xf32> to vector<32xf32>
    %98 = vector.shape_cast %97 : vector<32xf32> to vector<1x32xf32>
    %99 = vector.broadcast %98 : vector<1x32xf32> to vector<16x32xf32>
    %100 = arith.addf %95, %99 : vector<16x32xf32>
    %101 = arith.addf %80, %100 : vector<16x32xf32>
    %c0_34 = arith.constant 0 : index
    %c512 = arith.constant 512 : index
    %102 = vector.load %arg6[%c0_34, %c512] : memref<2x2944xf32, #tpu.memory_space<vmem>>, vector<1x32xf32>
    %103 = vector.shape_cast %102 : vector<1x32xf32> to vector<32xf32>
    %c0_35 = arith.constant 0 : index
    %c640 = arith.constant 640 : index
    %104 = vector.load %arg6[%c0_35, %c640] : memref<2x2944xf32, #tpu.memory_space<vmem>>, vector<1x32xf32>
    %105 = vector.shape_cast %104 : vector<1x32xf32> to vector<32xf32>
    %cst_36 = arith.constant dense<0.000000e+00> : vector<16xf32>
    %106 = vector.multi_reduction <add>, %101, %cst_36 [1] : vector<16x32xf32> to vector<16xf32>
    %107 = vector.shape_cast %106 : vector<16xf32> to vector<16x1xf32>
    %cst_37 = arith.constant 3.200000e+01 : f32
    %108 = vector.broadcast %cst_37 : f32 to vector<16x1xf32>
    %109 = arith.divf %107, %108 : vector<16x1xf32>
    %110 = vector.broadcast %109 : vector<16x1xf32> to vector<16x32xf32>
    %111 = arith.subf %101, %110 : vector<16x32xf32>
    %112 = arith.mulf %111, %111 : vector<16x32xf32>
    %cst_38 = arith.constant dense<0.000000e+00> : vector<16xf32>
    %113 = vector.multi_reduction <add>, %112, %cst_38 [1] : vector<16x32xf32> to vector<16xf32>
    %114 = vector.shape_cast %113 : vector<16xf32> to vector<16x1xf32>
    %cst_39 = arith.constant 3.200000e+01 : f32
    %115 = vector.broadcast %cst_39 : f32 to vector<16x1xf32>
    %116 = arith.divf %114, %115 : vector<16x1xf32>
    %117 = vector.broadcast %109 : vector<16x1xf32> to vector<16x32xf32>
    %118 = arith.subf %101, %117 : vector<16x32xf32>
    %cst_40 = arith.constant 9.99999974E-6 : f32
    %119 = vector.broadcast %cst_40 : f32 to vector<16x1xf32>
    %120 = arith.addf %116, %119 : vector<16x1xf32>
    %121 = math.rsqrt %120 : vector<16x1xf32>
    %122 = vector.broadcast %121 : vector<16x1xf32> to vector<16x32xf32>
    %123 = arith.mulf %118, %122 : vector<16x32xf32>
    %124 = vector.shape_cast %103 : vector<32xf32> to vector<1x32xf32>
    %125 = vector.broadcast %124 : vector<1x32xf32> to vector<16x32xf32>
    %126 = arith.mulf %123, %125 : vector<16x32xf32>
    %127 = vector.shape_cast %105 : vector<32xf32> to vector<1x32xf32>
    %128 = vector.broadcast %127 : vector<1x32xf32> to vector<16x32xf32>
    %129 = arith.addf %126, %128 : vector<16x32xf32>
    %130 = arith.truncf %129 : vector<16x32xf32> to vector<16x32xbf16>
    %c1 = arith.constant 1 : index
    %c0_41 = arith.constant 0 : index
    %c0_42 = arith.constant 0 : index
    %131 = vector.load %arg2[%c1, %c0_41, %c0_42] : memref<2x32x96xbf16, #tpu.memory_space<vmem>>, vector<1x32x96xbf16>
    %132 = vector.shape_cast %131 : vector<1x32x96xbf16> to vector<32x96xbf16>
    %cst_43 = arith.constant dense<0.000000e+00> : vector<16x96xf32>
    %133 = tpu.matmul %130, %132, %cst_43 {dimension_numbers = #tpu.dot_dimension_numbers<[1], [0], [0], [1], [0, 0, 1, 1], [], []>} : vector<16x32xbf16>, vector<32x96xbf16>, vector<16x96xf32> -> vector<16x96xf32>
    %c1_44 = arith.constant 1 : index
    %c0_45 = arith.constant 0 : index
    %134 = vector.load %arg6[%c1_44, %c0_45] : memref<2x2944xf32, #tpu.memory_space<vmem>>, vector<1x96xf32>
    %135 = vector.shape_cast %134 : vector<1x96xf32> to vector<96xf32>
    %136 = vector.shape_cast %135 : vector<96xf32> to vector<1x96xf32>
    %137 = vector.broadcast %136 : vector<1x96xf32> to vector<16x96xf32>
    %138 = arith.addf %133, %137 : vector<16x96xf32>
    %139 = vector.extract_strided_slice %138 {offsets = [0, 0], sizes = [16, 32], strides = [1, 1]} : vector<16x96xf32> to vector<16x32xf32>
    %140 = vector.shape_cast %139 : vector<16x32xf32> to vector<2x8x4x8xf32>
    %141 = tpu.transpose %140, [0, 2, 1, 3] : vector<2x8x4x8xf32> -> vector<2x4x8x8xf32>
    %142 = vector.shape_cast %141 : vector<2x4x8x8xf32> to vector<8x8x8xf32>
    %143 = arith.truncf %142 : vector<8x8x8xf32> to vector<8x8x8xbf16>
    %144 = vector.extract_strided_slice %138 {offsets = [0, 32], sizes = [16, 32], strides = [1, 1]} : vector<16x96xf32> to vector<16x32xf32>
    %145 = vector.shape_cast %144 : vector<16x32xf32> to vector<2x8x4x8xf32>
    %146 = tpu.transpose %145, [0, 2, 1, 3] : vector<2x8x4x8xf32> -> vector<2x4x8x8xf32>
    %147 = vector.shape_cast %146 : vector<2x4x8x8xf32> to vector<8x8x8xf32>
    %148 = arith.truncf %147 : vector<8x8x8xf32> to vector<8x8x8xbf16>
    %149 = vector.extract_strided_slice %138 {offsets = [0, 64], sizes = [16, 32], strides = [1, 1]} : vector<16x96xf32> to vector<16x32xf32>
    %150 = vector.shape_cast %149 : vector<16x32xf32> to vector<2x8x4x8xf32>
    %151 = tpu.transpose %150, [0, 2, 1, 3] : vector<2x8x4x8xf32> -> vector<2x4x8x8xf32>
    %152 = vector.shape_cast %151 : vector<2x4x8x8xf32> to vector<8x8x8xf32>
    %153 = arith.truncf %152 : vector<8x8x8xf32> to vector<8x8x8xbf16>
    "tpu.trace_start"() <{level = 10 : i32, message = "gqd,gkd->gqk"}> : () -> ()
    %cst_46 = arith.constant dense<0.000000e+00> : vector<8x8x8xf32>
    %154 = tpu.matmul %143, %148, %cst_46 {dimension_numbers = #tpu.dot_dimension_numbers<[2], [2], [1], [1], [0, 0, 0, 1, 1, 1], [0], [0]>} : vector<8x8x8xbf16>, vector<8x8x8xbf16>, vector<8x8x8xf32> -> vector<8x8x8xf32>
    "tpu.trace_stop"() : () -> ()
    %cst_47 = arith.constant 0.353553385 : f32
    %155 = vector.broadcast %cst_47 : f32 to vector<8x8x8xf32>
    %156 = arith.mulf %154, %155 : vector<8x8x8xf32>
    %cst_48 = arith.constant dense<0xFF800000> : vector<8x8xf32>
    %157 = vector.multi_reduction <maximumf>, %156, %cst_48 [2] : vector<8x8x8xf32> to vector<8x8xf32>
    %158 = vector.shape_cast %157 : vector<8x8xf32> to vector<8x8x1xf32>
    %159 = vector.broadcast %158 : vector<8x8x1xf32> to vector<8x8x8xf32>
    %160 = arith.subf %156, %159 : vector<8x8x8xf32>
    %161 = math.exp %160 : vector<8x8x8xf32>
    %cst_49 = arith.constant dense<0.000000e+00> : vector<8x8xf32>
    %162 = vector.multi_reduction <add>, %161, %cst_49 [2] : vector<8x8x8xf32> to vector<8x8xf32>
    %163 = vector.shape_cast %162 : vector<8x8xf32> to vector<8x8x1xf32>
    %164 = tpu.reciprocal %163 {approx = true} : vector<8x8x1xf32> -> vector<8x8x1xf32>
    %165 = vector.broadcast %164 : vector<8x8x1xf32> to vector<8x8x8xf32>
    %166 = arith.mulf %161, %165 : vector<8x8x8xf32>
    %167 = arith.truncf %166 : vector<8x8x8xf32> to vector<8x8x8xbf16>
    "tpu.trace_start"() <{level = 10 : i32, message = "gqk,gkd->gqd"}> : () -> ()
    %cst_50 = arith.constant dense<0.000000e+00> : vector<8x8x8xf32>
    %168 = tpu.matmul %167, %153, %cst_50 {dimension_numbers = #tpu.dot_dimension_numbers<[2], [1], [1], [2], [0, 0, 0, 1, 1, 2], [0], [0]>} : vector<8x8x8xbf16>, vector<8x8x8xbf16>, vector<8x8x8xf32> -> vector<8x8x8xf32>
    "tpu.trace_stop"() : () -> ()
    %169 = vector.shape_cast %168 : vector<8x8x8xf32> to vector<2x4x8x8xf32>
    %170 = tpu.transpose %169, [0, 2, 1, 3] : vector<2x4x8x8xf32> -> vector<2x8x4x8xf32>
    %171 = vector.shape_cast %170 : vector<2x8x4x8xf32> to vector<16x32xf32>
    %172 = arith.truncf %171 : vector<16x32xf32> to vector<16x32xbf16>
    %c1_51 = arith.constant 1 : index
    %c0_52 = arith.constant 0 : index
    %c0_53 = arith.constant 0 : index
    %173 = vector.load %arg3[%c1_51, %c0_52, %c0_53] : memref<2x32x32xbf16, #tpu.memory_space<vmem>>, vector<1x32x32xbf16>
    %174 = vector.shape_cast %173 : vector<1x32x32xbf16> to vector<32x32xbf16>
    %cst_54 = arith.constant dense<0.000000e+00> : vector<16x32xf32>
    %175 = tpu.matmul %172, %174, %cst_54 {dimension_numbers = #tpu.dot_dimension_numbers<[1], [0], [0], [1], [0, 0, 1, 1], [], []>} : vector<16x32xbf16>, vector<32x32xbf16>, vector<16x32xf32> -> vector<16x32xf32>
    %c1_55 = arith.constant 1 : index
    %c128_56 = arith.constant 128 : index
    %176 = vector.load %arg6[%c1_55, %c128_56] : memref<2x2944xf32, #tpu.memory_space<vmem>>, vector<1x32xf32>
    %177 = vector.shape_cast %176 : vector<1x32xf32> to vector<32xf32>
    %178 = vector.shape_cast %177 : vector<32xf32> to vector<1x32xf32>
    %179 = vector.broadcast %178 : vector<1x32xf32> to vector<16x32xf32>
    %180 = arith.addf %175, %179 : vector<16x32xf32>
    %181 = arith.addf %129, %180 : vector<16x32xf32>
    %c1_57 = arith.constant 1 : index
    %c256_58 = arith.constant 256 : index
    %182 = vector.load %arg6[%c1_57, %c256_58] : memref<2x2944xf32, #tpu.memory_space<vmem>>, vector<1x32xf32>
    %183 = vector.shape_cast %182 : vector<1x32xf32> to vector<32xf32>
    %c1_59 = arith.constant 1 : index
    %c384_60 = arith.constant 384 : index
    %184 = vector.load %arg6[%c1_59, %c384_60] : memref<2x2944xf32, #tpu.memory_space<vmem>>, vector<1x32xf32>
    %185 = vector.shape_cast %184 : vector<1x32xf32> to vector<32xf32>
    %cst_61 = arith.constant dense<0.000000e+00> : vector<16xf32>
    %186 = vector.multi_reduction <add>, %181, %cst_61 [1] : vector<16x32xf32> to vector<16xf32>
    %187 = vector.shape_cast %186 : vector<16xf32> to vector<16x1xf32>
    %cst_62 = arith.constant 3.200000e+01 : f32
    %188 = vector.broadcast %cst_62 : f32 to vector<16x1xf32>
    %189 = arith.divf %187, %188 : vector<16x1xf32>
    %190 = vector.broadcast %189 : vector<16x1xf32> to vector<16x32xf32>
    %191 = arith.subf %181, %190 : vector<16x32xf32>
    %192 = arith.mulf %191, %191 : vector<16x32xf32>
    %cst_63 = arith.constant dense<0.000000e+00> : vector<16xf32>
    %193 = vector.multi_reduction <add>, %192, %cst_63 [1] : vector<16x32xf32> to vector<16xf32>
    %194 = vector.shape_cast %193 : vector<16xf32> to vector<16x1xf32>
    %cst_64 = arith.constant 3.200000e+01 : f32
    %195 = vector.broadcast %cst_64 : f32 to vector<16x1xf32>
    %196 = arith.divf %194, %195 : vector<16x1xf32>
    %197 = vector.broadcast %189 : vector<16x1xf32> to vector<16x32xf32>
    %198 = arith.subf %181, %197 : vector<16x32xf32>
    %cst_65 = arith.constant 9.99999974E-6 : f32
    %199 = vector.broadcast %cst_65 : f32 to vector<16x1xf32>
    %200 = arith.addf %196, %199 : vector<16x1xf32>
    %201 = math.rsqrt %200 : vector<16x1xf32>
    %202 = vector.broadcast %201 : vector<16x1xf32> to vector<16x32xf32>
    %203 = arith.mulf %198, %202 : vector<16x32xf32>
    %204 = vector.shape_cast %183 : vector<32xf32> to vector<1x32xf32>
    %205 = vector.broadcast %204 : vector<1x32xf32> to vector<16x32xf32>
    %206 = arith.mulf %203, %205 : vector<16x32xf32>
    %207 = vector.shape_cast %185 : vector<32xf32> to vector<1x32xf32>
    %208 = vector.broadcast %207 : vector<1x32xf32> to vector<16x32xf32>
    %209 = arith.addf %206, %208 : vector<16x32xf32>
    %210 = arith.truncf %209 : vector<16x32xf32> to vector<16x32xbf16>
    %c1_66 = arith.constant 1 : index
    %c0_67 = arith.constant 0 : index
    %c0_68 = arith.constant 0 : index
    %211 = vector.load %arg4[%c1_66, %c0_67, %c0_68] : memref<2x32x2048xbf16, #tpu.memory_space<vmem>>, vector<1x32x2048xbf16>
    %212 = vector.shape_cast %211 : vector<1x32x2048xbf16> to vector<32x2048xbf16>
    %cst_69 = arith.constant dense<0.000000e+00> : vector<16x2048xf32>
    %213 = tpu.matmul %210, %212, %cst_69 {dimension_numbers = #tpu.dot_dimension_numbers<[1], [0], [0], [1], [0, 0, 1, 1], [], []>} : vector<16x32xbf16>, vector<32x2048xbf16>, vector<16x2048xf32> -> vector<16x2048xf32>
    %c1_70 = arith.constant 1 : index
    %c768_71 = arith.constant 768 : index
    %214 = vector.load %arg6[%c1_70, %c768_71] : memref<2x2944xf32, #tpu.memory_space<vmem>>, vector<1x2048xf32>
    %215 = vector.shape_cast %214 : vector<1x2048xf32> to vector<2048xf32>
    %216 = vector.shape_cast %215 : vector<2048xf32> to vector<1x2048xf32>
    %217 = vector.broadcast %216 : vector<1x2048xf32> to vector<16x2048xf32>
    %218 = arith.addf %213, %217 : vector<16x2048xf32>
    %cst_72 = arith.constant 0.000000e+00 : f32
    %219 = vector.broadcast %cst_72 : f32 to vector<16x2048xf32>
    %220 = arith.maximumf %218, %219 : vector<16x2048xf32>
    %221 = arith.truncf %220 : vector<16x2048xf32> to vector<16x2048xbf16>
    %c1_73 = arith.constant 1 : index
    %c0_74 = arith.constant 0 : index
    %c0_75 = arith.constant 0 : index
    %222 = vector.load %arg5[%c1_73, %c0_74, %c0_75] : memref<2x32x2048xbf16, #tpu.memory_space<vmem>>, vector<1x32x2048xbf16>
    %223 = vector.shape_cast %222 : vector<1x32x2048xbf16> to vector<32x2048xbf16>
    %cst_76 = arith.constant dense<0.000000e+00> : vector<16x32xf32>
    %224 = tpu.matmul %221, %223, %cst_76 {dimension_numbers = #tpu.dot_dimension_numbers<[1], [1], [0], [0], [0, 0, 1, 0], [], []>} : vector<16x2048xbf16>, vector<32x2048xbf16>, vector<16x32xf32> -> vector<16x32xf32>
    %c1_77 = arith.constant 1 : index
    %c2816_78 = arith.constant 2816 : index
    %225 = vector.load %arg6[%c1_77, %c2816_78] : memref<2x2944xf32, #tpu.memory_space<vmem>>, vector<1x32xf32>
    %226 = vector.shape_cast %225 : vector<1x32xf32> to vector<32xf32>
    %227 = vector.shape_cast %226 : vector<32xf32> to vector<1x32xf32>
    %228 = vector.broadcast %227 : vector<1x32xf32> to vector<16x32xf32>
    %229 = arith.addf %224, %228 : vector<16x32xf32>
    %230 = arith.addf %209, %229 : vector<16x32xf32>
    %c1_79 = arith.constant 1 : index
    %c512_80 = arith.constant 512 : index
    %231 = vector.load %arg6[%c1_79, %c512_80] : memref<2x2944xf32, #tpu.memory_space<vmem>>, vector<1x32xf32>
    %232 = vector.shape_cast %231 : vector<1x32xf32> to vector<32xf32>
    %c1_81 = arith.constant 1 : index
    %c640_82 = arith.constant 640 : index
    %233 = vector.load %arg6[%c1_81, %c640_82] : memref<2x2944xf32, #tpu.memory_space<vmem>>, vector<1x32xf32>
    %234 = vector.shape_cast %233 : vector<1x32xf32> to vector<32xf32>
    %cst_83 = arith.constant dense<0.000000e+00> : vector<16xf32>
    %235 = vector.multi_reduction <add>, %230, %cst_83 [1] : vector<16x32xf32> to vector<16xf32>
    %236 = vector.shape_cast %235 : vector<16xf32> to vector<16x1xf32>
    %cst_84 = arith.constant 3.200000e+01 : f32
    %237 = vector.broadcast %cst_84 : f32 to vector<16x1xf32>
    %238 = arith.divf %236, %237 : vector<16x1xf32>
    %239 = vector.broadcast %238 : vector<16x1xf32> to vector<16x32xf32>
    %240 = arith.subf %230, %239 : vector<16x32xf32>
    %241 = arith.mulf %240, %240 : vector<16x32xf32>
    %cst_85 = arith.constant dense<0.000000e+00> : vector<16xf32>
    %242 = vector.multi_reduction <add>, %241, %cst_85 [1] : vector<16x32xf32> to vector<16xf32>
    %243 = vector.shape_cast %242 : vector<16xf32> to vector<16x1xf32>
    %cst_86 = arith.constant 3.200000e+01 : f32
    %244 = vector.broadcast %cst_86 : f32 to vector<16x1xf32>
    %245 = arith.divf %243, %244 : vector<16x1xf32>
    %246 = vector.broadcast %238 : vector<16x1xf32> to vector<16x32xf32>
    %247 = arith.subf %230, %246 : vector<16x32xf32>
    %cst_87 = arith.constant 9.99999974E-6 : f32
    %248 = vector.broadcast %cst_87 : f32 to vector<16x1xf32>
    %249 = arith.addf %245, %248 : vector<16x1xf32>
    %250 = math.rsqrt %249 : vector<16x1xf32>
    %251 = vector.broadcast %250 : vector<16x1xf32> to vector<16x32xf32>
    %252 = arith.mulf %247, %251 : vector<16x32xf32>
    %253 = vector.shape_cast %232 : vector<32xf32> to vector<1x32xf32>
    %254 = vector.broadcast %253 : vector<1x32xf32> to vector<16x32xf32>
    %255 = arith.mulf %252, %254 : vector<16x32xf32>
    %256 = vector.shape_cast %234 : vector<32xf32> to vector<1x32xf32>
    %257 = vector.broadcast %256 : vector<1x32xf32> to vector<16x32xf32>
    %258 = arith.addf %255, %257 : vector<16x32xf32>
    %c0_88 = arith.constant 0 : index
    %c0_89 = arith.constant 0 : index
    %259 = vector.load %arg7[%c0_88, %c0_89] : memref<16x32xf32, #tpu.memory_space<vmem>>, vector<16x32xf32>
    tpu.vector_store %arg7[%c0_88, %c0_89], %258 {strides = array<i32>} : memref<16x32xf32, #tpu.memory_space<vmem>>, vector<16x32xf32>,
    return
  }
  func.func @transform_0(%arg0: i32) -> (i32, i32) {
    %c0_i32 = arith.constant 0 : i32
    %c0_i32_0 = arith.constant 0 : i32
    return %arg0, %c0_i32 : i32, i32
  }
  func.func @transform_1(%arg0: i32) -> (i32, i32, i32) {
    %c0_i32 = arith.constant 0 : i32
    %c0_i32_0 = arith.constant 0 : i32
    %c0_i32_1 = arith.constant 0 : i32
    %c0_i32_2 = arith.constant 0 : i32
    return %c0_i32, %c0_i32_0, %c0_i32_1 : i32, i32, i32
  }
  func.func @transform_2(%arg0: i32) -> (i32, i32, i32) {
    %c0_i32 = arith.constant 0 : i32
    %c0_i32_0 = arith.constant 0 : i32
    %c0_i32_1 = arith.constant 0 : i32
    %c0_i32_2 = arith.constant 0 : i32
    return %c0_i32, %c0_i32_0, %c0_i32_1 : i32, i32, i32
  }
  func.func @transform_3(%arg0: i32) -> (i32, i32, i32) {
    %c0_i32 = arith.constant 0 : i32
    %c0_i32_0 = arith.constant 0 : i32
    %c0_i32_1 = arith.constant 0 : i32
    %c0_i32_2 = arith.constant 0 : i32
    return %c0_i32, %c0_i32_0, %c0_i32_1 : i32, i32, i32
  }
  func.func @transform_4(%arg0: i32) -> (i32, i32, i32) {
    %c0_i32 = arith.constant 0 : i32
    %c0_i32_0 = arith.constant 0 : i32
    %c0_i32_1 = arith.constant 0 : i32
    %c0_i32_2 = arith.constant 0 : i32
    return %c0_i32, %c0_i32_0, %c0_i32_1 : i32, i32, i32
  }
  func.func @transform_5(%arg0: i32) -> (i32, i32) {
    %c0_i32 = arith.constant 0 : i32
    %c0_i32_0 = arith.constant 0 : i32
    %c0_i32_1 = arith.constant 0 : i32
    return %c0_i32, %c0_i32_0 : i32, i32
  }
  func.func @transform_6(%arg0: i32) -> (i32, i32) {
    %c0_i32 = arith.constant 0 : i32
    %c0_i32_0 = arith.constant 0 : i32
    return %arg0, %c0_i32 : i32, i32
  }
}

</mosaic_0001>

<llo_original>
// kernel: tpu_custom_call.1
$region0: #{tpu_custom_call.1}
  #allocation0 [shape = 'u32[]', space=smem, size = 0x4, offset = 0x4, fixed_abs, tag = 'smem constant byte address 0x4 - core index']
  #allocation1 [shape = 'u32[144,128]{1,0:T(1,128)}', space=vmem, size = 0x12000, scoped, tag = 'internal scratch']
  %s0 = inlined_call_operand.hbm [shape: f32[16,32], index: 0, kind: input, shape index: {}]
  %s1 = inlined_call_operand.hbm [shape: bf16[2,32,96], index: 1, kind: input, shape index: {}]
  %s2 = inlined_call_operand.hbm [shape: bf16[2,32,32], index: 2, kind: input, shape index: {}]
  %s3 = inlined_call_operand.hbm [shape: bf16[2,32,2048], index: 3, kind: input, shape index: {}]
  %s4 = inlined_call_operand.hbm [shape: bf16[2,32,2048], index: 4, kind: input, shape index: {}]
  %s5 = inlined_call_operand.hbm [shape: f32[2,2944], index: 5, kind: input, shape index: {}]
  %s6 = inlined_call_operand.hbm [shape: f32[16,32], index: 6, kind: output, shape index: {}]
  %s7 = sld [smem:[#allocation0]]
  $region58: #{tpu_custom_call.1} parent=0
    _
  %s9 = ssub.s32 1, %s7
  %s10 = scalar_select 0, %s9, %s7
  $region1: #{tpu_custom_call.1} parent=0
    #allocation2 [shape = 'u8[8192]{0}', space=vmem, size = 0x2000, scoped, tag = 'input window, operand 0, single buffered']
    #allocation3 [shape = 's32[1]{0}', space=sflag, size = 0x4, scoped, tag = 'scoped memory for tpu_custom_call.1']
    #allocation4 [shape = 's32[1]{0}', space=sflag, size = 0x4, scoped, tag = 'scoped memory for tpu_custom_call.1']
    #allocation5 [shape = 'u8[16384]{0}', space=vmem, size = 0x4000, scoped, tag = 'input window, operand 1, single buffered']
    #allocation6 [shape = 's32[1]{0}', space=sflag, size = 0x4, scoped, tag = 'scoped memory for tpu_custom_call.1']
    #allocation7 [shape = 'u8[16384]{0}', space=vmem, size = 0x4000, scoped, tag = 'input window, operand 2, single buffered']
    #allocation8 [shape = 'u8[262144]{0}', space=vmem, size = 0x40000, scoped, tag = 'input window, operand 3, single buffered']
    #allocation9 [shape = 's32[1]{0}', space=sflag, size = 0x4, scoped, tag = 'scoped memory for tpu_custom_call.1']
    #allocation10 [shape = 'u8[262144]{0}', space=vmem, size = 0x40000, scoped, tag = 'input window, operand 4, single buffered']
    #allocation11 [shape = 'u8[23552]{0}', space=vmem, size = 0x5c00, scoped, tag = 'input window, operand 5, single buffered']
    #allocation12 [shape = 's32[1]{0}', space=sflag, size = 0x4, scoped, tag = 'scoped memory for tpu_custom_call.1']
    #allocation13 [shape = 'u8[8192]{0}', space=vmem, size = 0x2000, scoped, tag = 'output window, operand 0, single buffered']
    %11 = vsyncpa [#allocation3], 0
    %12 = vsyncpa [#allocation6], 0
    %13 = vsyncpa [#allocation9], 0
    %14 = vsyncpa [#allocation12], 0
    %15 = vsyncpa [#allocation4], 0
    // Predicated region
    $region2: #{tpu_custom_call.1} parent=1 // pred_check
      _
    $region3: #{tpu_custom_call.1} parent=1 // pred_check_branch
      %17 = sbr.rel (0) target = $region5
    $region4: #{tpu_custom_call.1} parent=1 // pred_region
      %s19 = ssub.s32 256, 256
      %20 = vsyncadd [#allocation3], %s19
      %s21 = sshll.u32 [#allocation2], 4
      %s22 = int_to_ptr.vmem [resolvable:$true] %s21
      %27 = dma.hbm_to_vmem [thread:$0]  %s0, 256, %s22, [#allocation3], 128, 128, 8
    $region5: #{tpu_custom_call.1} parent=1 // pred_fallthru
      _
    // Predicated region
    $region6: #{tpu_custom_call.1} parent=1 // pred_check
      _
    $region7: #{tpu_custom_call.1} parent=1 // pred_check_branch
      %29 = sbr.rel (0) target = $region9
    $region8: #{tpu_custom_call.1} parent=1 // pred_region
      %s31 = ssub.s32 512, 512
      %32 = vsyncadd [#allocation6], %s31
      %s33 = sshll.u32 [#allocation5], 4
      %s34 = int_to_ptr.vmem [resolvable:$true] %s33
      %39 = dma.hbm_to_vmem [thread:$0]  %s1, 512, %s34, [#allocation6], 64, 64, 4
    $region9: #{tpu_custom_call.1} parent=1 // pred_fallthru
      _
    // Predicated region
    $region10: #{tpu_custom_call.1} parent=1 // pred_check
      _
    $region11: #{tpu_custom_call.1} parent=1 // pred_check_branch
      %41 = sbr.rel (0) target = $region13
    $region12: #{tpu_custom_call.1} parent=1 // pred_region
      %s43 = ssub.s32 512, 512
      %44 = vsyncadd [#allocation6], %s43
      %s45 = sshll.u32 [#allocation7], 4
      %s46 = int_to_ptr.vmem [resolvable:$true] %s45
      %51 = dma.hbm_to_vmem [thread:$0]  %s2, 512, %s46, [#allocation6], 64, 64, 4
    $region13: #{tpu_custom_call.1} parent=1 // pred_fallthru
      _
    // Predicated region
    $region14: #{tpu_custom_call.1} parent=1 // pred_check
      _
    $region15: #{tpu_custom_call.1} parent=1 // pred_check_branch
      %53 = sbr.rel (0) target = $region17
    $region16: #{tpu_custom_call.1} parent=1 // pred_region
      %s55 = ssub.s32 8192, 8192
      %56 = vsyncadd [#allocation9], %s55
      %s57 = sshll.u32 [#allocation8], 4
      %s58 = int_to_ptr.vmem [resolvable:$true] %s57
      %63 = dma.hbm_to_vmem [thread:$0]  %s3, 8192, %s58, [#allocation9], 1024, 1024, 64
    $region17: #{tpu_custom_call.1} parent=1 // pred_fallthru
      _
    // Predicated region
    $region18: #{tpu_custom_call.1} parent=1 // pred_check
      _
    $region19: #{tpu_custom_call.1} parent=1 // pred_check_branch
      %65 = sbr.rel (0) target = $region21
    $region20: #{tpu_custom_call.1} parent=1 // pred_region
      %s67 = ssub.s32 8192, 8192
      %68 = vsyncadd [#allocation9], %s67
      %s69 = sshll.u32 [#allocation10], 4
      %s70 = int_to_ptr.vmem [resolvable:$true] %s69
      %75 = dma.hbm_to_vmem [thread:$0]  %s4, 8192, %s70, [#allocation9], 1024, 1024, 64
    $region21: #{tpu_custom_call.1} parent=1 // pred_fallthru
      _
    // Predicated region
    $region22: #{tpu_custom_call.1} parent=1 // pred_check
      _
    $region23: #{tpu_custom_call.1} parent=1 // pred_check_branch
      %77 = sbr.rel (0) target = $region25
    $region24: #{tpu_custom_call.1} parent=1 // pred_region
      %s79 = ssub.s32 736, 736
      %80 = vsyncadd [#allocation12], %s79
      %s82 = sshll.u32 [#allocation11], 4
      %s83 = int_to_ptr.vmem [resolvable:$true] %s82
      %85 = dma.hbm_to_vmem [thread:$0]  %s5, 736, %s83, [#allocation12]
    $region25: #{tpu_custom_call.1} parent=1 // pred_fallthru
      _
    // Predicated region
    $region26: #{tpu_custom_call.1} parent=1 // pred_check
      _
    $region27: #{tpu_custom_call.1} parent=1 // pred_check_branch
      %87 = sbr.rel (0) target = $region29
    $region28: #{tpu_custom_call.1} parent=1 // pred_region
      %88 = dma.done [#allocation3], 256
    $region29: #{tpu_custom_call.1} parent=1 // pred_fallthru
      _
    // Predicated region
    $region30: #{tpu_custom_call.1} parent=1 // pred_check
      _
    $region31: #{tpu_custom_call.1} parent=1 // pred_check_branch
      %90 = sbr.rel (0) target = $region33
    $region32: #{tpu_custom_call.1} parent=1 // pred_region
      %91 = dma.done [#allocation6], 512
    $region33: #{tpu_custom_call.1} parent=1 // pred_fallthru
      _
    // Predicated region
    $region34: #{tpu_custom_call.1} parent=1 // pred_check
      _
    $region35: #{tpu_custom_call.1} parent=1 // pred_check_branch
      %93 = sbr.rel (0) target = $region37
    $region36: #{tpu_custom_call.1} parent=1 // pred_region
      %94 = dma.done [#allocation6], 512
    $region37: #{tpu_custom_call.1} parent=1 // pred_fallthru
      _
    // Predicated region
    $region38: #{tpu_custom_call.1} parent=1 // pred_check
      _
    $region39: #{tpu_custom_call.1} parent=1 // pred_check_branch
      %96 = sbr.rel (0) target = $region41
    $region40: #{tpu_custom_call.1} parent=1 // pred_region
      %97 = dma.done [#allocation9], 8192
    $region41: #{tpu_custom_call.1} parent=1 // pred_fallthru
      _
    // Predicated region
    $region42: #{tpu_custom_call.1} parent=1 // pred_check
      _
    $region43: #{tpu_custom_call.1} parent=1 // pred_check_branch
      %99 = sbr.rel (0) target = $region45
    $region44: #{tpu_custom_call.1} parent=1 // pred_region
      %100 = dma.done [#allocation9], 8192
    $region45: #{tpu_custom_call.1} parent=1 // pred_fallthru
      _
    // Predicated region
    $region46: #{tpu_custom_call.1} parent=1 // pred_check
      _
    $region47: #{tpu_custom_call.1} parent=1 // pred_check_branch
      %102 = sbr.rel (0) target = $region49
    $region48: #{tpu_custom_call.1} parent=1 // pred_region
      %103 = dma.done [#allocation12], 736
    $region49: #{tpu_custom_call.1} parent=1 // pred_fallthru
      _
    %v105 = vld [vmem:[#allocation2] sm:$0xff]
    %v106 = vld [vmem:[#allocation2 + $0x8] sm:$0xff]
    %v107 = vpack.c.bf16 %v106, %v105
    %v108 = vld [vmem:[#allocation5] sm:$0xf]
    %v109 = vld [vmem:[#allocation5 + $0x4] sm:$0xf]
    %v110 = vld [vmem:[#allocation5 + $0x8] sm:$0xf]
    %v111 = vld [vmem:[#allocation5 + $0xc] sm:$0xf]
    %v112 = vld [vmem:[#allocation11] sm:$0x1]
    %v113 = vlaneseq
    %v114 = vshrl.u32 %v113, 7
    %v115 = vsub.s32 0, %v114
    %v116 = vrot.slane %v112, %v115
    %v121 = vunpack.c.l.b16 %v108
    %v122 = vunpack.c.l.b16 %v109
    %v123 = vunpack.c.l.b16 %v110
    %v124 = vunpack.c.l.b16 %v111
    %v125 = vpack.c.b16 %v122, %v121
    %v126 = vpack.c.b16 %v124, %v123
    %vm129 = vcmask 261120
    %v131 = vsel %vm129, %v107, 0
    %133 = vmatprep.subr.bf16.mxu0 0
    %134 = vmatpush1.bf16.msra.mxu0 0
    %135 = vmatprep.subr.bf16.mxu0 0
    %136 = vmatpush1.bf16.msra.mxu0 0
    %137 = vmatprep.subr.bf16.mxu0 0
    %138 = vmatpush1.bf16.msra.mxu0 0
    %139 = vmatprep.subr.bf16.mxu0 0
    %140 = vmatpush1.bf16.msra.mxu0 0
    %141 = vmatprep.subr.bf16.mxu0 0
    %142 = vmatpush1.bf16.msra.mxu0 0
    %143 = vmatprep.subr.bf16.mxu0 0
    %144 = vmatpush1.bf16.msra.mxu0 0
    %145 = vmatprep.subr.bf16.mxu0 0
    %146 = vmatpush1.bf16.msra.mxu0 %v126
    %147 = vmatprep.subr.bf16.mxu0 0
    %148 = vmatpush1.bf16.msra.mxu0 %v125
    %149 = vmatprep.subr.bf16.mxu0 0
    %150 = vmatpush2.bf16.msra.mxu0 0
    %151 = vmatprep.subr.bf16.mxu0 0
    %152 = vmatpush2.bf16.msra.mxu0 0
    %153 = vmatprep.subr.bf16.mxu0 0
    %154 = vmatpush2.bf16.msra.mxu0 0
    %155 = vmatprep.subr.bf16.mxu0 0
    %156 = vmatpush2.bf16.msra.mxu0 0
    %157 = vmatprep.subr.bf16.mxu0 0
    %158 = vmatpush2.bf16.msra.mxu0 0
    %159 = vmatprep.subr.bf16.mxu0 0
    %160 = vmatpush2.bf16.msra.mxu0 0
    %161 = vmatprep.subr.bf16.mxu0 0
    %162 = vmatpush2.bf16.msra.mxu0 0
    %163 = vmatprep.subr.bf16.mxu0 0
    %164 = vmatpush2.bf16.msra.mxu0 0
    %165 = vmatprep.mubr.bf16.mxu0 0
    %166 = vmatmul.mubr.bf16.gmra.mxu0 %v131
    %v167 = vpop.f32.mrf.mxu0
    %v168 = vadd.f32 %v116, %v167
    %v169 = vpop.f32.mrf.mxu0
    %v170 = vpop.f32.mrf.mxu0
    %v171 = vadd.f32 %v116, %v170
    %v172 = vpop.f32.mrf.mxu0
    %173 = vdwg.mxu0
    %176 = vrot.lane.b32.xlu0 %v168, 120
    %v177 = vpop.permute.xlu0 %176
    %178 = vrot.lane.b32.xlu0 %v171, 120
    %v179 = vpop.permute.xlu0 %178
    %182 = vrot.lane.b32.xlu0 %v168, 112
    %v183 = vpop.permute.xlu0 %182
    %184 = vrot.lane.b32.xlu0 %v171, 112
    %v185 = vpop.permute.xlu0 %184
    %188 = vrot.lane.b32.xlu0 %v168, 104
    %v189 = vpop.permute.xlu0 %188
    %190 = vrot.lane.b32.xlu0 %v171, 104
    %v191 = vpop.permute.xlu0 %190
    %v194 = vcombine.low %v168, %v183
    %v195 = vcombine.high %v168, %v183
    %v197 = vunpack.c.l.s4 1983009808
    %v198 = vunpack.c.0.s8 %v197
    %v199 = vlaneseq
    %v200 = vshrl.u32 %v199, 7
    %v201 = vsub.s32 %v198, %v200
    %v202 = vrot.slane %v194, %v201
    %v204 = vunpack.c.l.s4 1983009808
    %v205 = vunpack.c.0.s8 %v204
    %v206 = vlaneseq
    %v207 = vshrl.u32 %v206, 7
    %v208 = vsub.s32 %v205, %v207
    %v209 = vrot.slane %v195, %v208
    %v210 = vcombine.low %v177, %v189
    %v211 = vcombine.high %v177, %v189
    %v213 = vunpack.c.l.s4 1983009808
    %v214 = vunpack.c.0.s8 %v213
    %v215 = vlaneseq
    %v216 = vshrl.u32 %v215, 7
    %v217 = vsub.s32 %v214, %v216
    %v218 = vrot.slane %v210, %v217
    %v220 = vunpack.c.l.s4 1983009808
    %v221 = vunpack.c.0.s8 %v220
    %v222 = vlaneseq
    %v223 = vshrl.u32 %v222, 7
    %v224 = vsub.s32 %v221, %v223
    %v225 = vrot.slane %v211, %v224
    %v226 = vcombine.low %v202, %v218
    %v227 = vcombine.high %v202, %v218
    %v229 = vunpack.c.l.s4 1934713408
    %v230 = vunpack.c.0.s8 %v229
    %v231 = vlaneseq
    %v232 = vshrl.u32 %v231, 7
    %v233 = vsub.s32 %v230, %v232
    %v234 = vrot.slane %v226, %v233
    %v236 = vunpack.c.l.s4 1934713408
    %v237 = vunpack.c.0.s8 %v236
    %v238 = vlaneseq
    %v239 = vshrl.u32 %v238, 7
    %v240 = vsub.s32 %v237, %v239
    %v241 = vrot.slane %v227, %v240
    %v242 = vcombine.low %v209, %v225
    %v243 = vcombine.high %v209, %v225
    %v245 = vunpack.c.l.s4 1934713408
    %v246 = vunpack.c.0.s8 %v245
    %v247 = vlaneseq
    %v248 = vshrl.u32 %v247, 7
    %v249 = vsub.s32 %v246, %v248
    %v250 = vrot.slane %v242, %v249
    %v252 = vunpack.c.l.s4 1934713408
    %v253 = vunpack.c.0.s8 %v252
    %v254 = vlaneseq
    %v255 = vshrl.u32 %v254, 7
    %v256 = vsub.s32 %v253, %v255
    %v257 = vrot.slane %v243, %v256
    %v258 = vcombine.high %v234, 0.0
    %v259 = vcombine.high %v241, 0.0
    %v260 = vcombine.high %v250, 0.0
    %v261 = vcombine.high %v257, 0.0
    %v262 = vcombine.low %v171, %v185
    %v263 = vcombine.high %v171, %v185
    %v265 = vunpack.c.l.s4 1983009808
    %v266 = vunpack.c.0.s8 %v265
    %v267 = vlaneseq
    %v268 = vshrl.u32 %v267, 7
    %v269 = vsub.s32 %v266, %v268
    %v270 = vrot.slane %v262, %v269
    %v272 = vunpack.c.l.s4 1983009808
    %v273 = vunpack.c.0.s8 %v272
    %v274 = vlaneseq
    %v275 = vshrl.u32 %v274, 7
    %v276 = vsub.s32 %v273, %v275
    %v277 = vrot.slane %v263, %v276
    %v278 = vcombine.low %v179, %v191
    %v279 = vcombine.high %v179, %v191
    %v281 = vunpack.c.l.s4 1983009808
    %v282 = vunpack.c.0.s8 %v281
    %v283 = vlaneseq
    %v284 = vshrl.u32 %v283, 7
    %v285 = vsub.s32 %v282, %v284
    %v286 = vrot.slane %v278, %v285
    %v288 = vunpack.c.l.s4 1983009808
    %v289 = vunpack.c.0.s8 %v288
    %v290 = vlaneseq
    %v291 = vshrl.u32 %v290, 7
    %v292 = vsub.s32 %v289, %v291
    %v293 = vrot.slane %v279, %v292
    %v294 = vcombine.low %v270, %v286
    %v295 = vcombine.high %v270, %v286
    %v297 = vunpack.c.l.s4 1934713408
    %v298 = vunpack.c.0.s8 %v297
    %v299 = vlaneseq
    %v300 = vshrl.u32 %v299, 7
    %v301 = vsub.s32 %v298, %v300
    %v302 = vrot.slane %v294, %v301
    %v304 = vunpack.c.l.s4 1934713408
    %v305 = vunpack.c.0.s8 %v304
    %v306 = vlaneseq
    %v307 = vshrl.u32 %v306, 7
    %v308 = vsub.s32 %v305, %v307
    %v309 = vrot.slane %v295, %v308
    %v310 = vcombine.low %v277, %v293
    %v311 = vcombine.high %v277, %v293
    %v313 = vunpack.c.l.s4 1934713408
    %v314 = vunpack.c.0.s8 %v313
    %v315 = vlaneseq
    %v316 = vshrl.u32 %v315, 7
    %v317 = vsub.s32 %v314, %v316
    %v318 = vrot.slane %v310, %v317
    %v320 = vunpack.c.l.s4 1934713408
    %v321 = vunpack.c.0.s8 %v320
    %v322 = vlaneseq
    %v323 = vshrl.u32 %v322, 7
    %v324 = vsub.s32 %v321, %v323
    %v325 = vrot.slane %v311, %v324
    %v326 = vcombine.high %v302, 0.0
    %v327 = vcombine.high %v309, 0.0
    %v328 = vcombine.high %v318, 0.0
    %v329 = vcombine.high %v325, 0.0
    %v330 = vcombine.low %v234, %v241
    %v332 = vunpack.c.l.s4 1983009808
    %v333 = vunpack.c.0.s8 %v332
    %v334 = vlaneseq
    %v335 = vshrl.u32 %v334, 7
    %v336 = vsub.s32 %v333, %v335
    %v337 = vrot.slane %v330, %v336
    %v338 = vcombine.low %v258, %v259
    %v340 = vunpack.c.l.s4 1983009808
    %v341 = vunpack.c.0.s8 %v340
    %v342 = vlaneseq
    %v343 = vshrl.u32 %v342, 7
    %v344 = vsub.s32 %v341, %v343
    %v345 = vrot.slane %v338, %v344
    %v346 = vcombine.low %v250, %v257
    %v348 = vunpack.c.l.s4 1983009808
    %v349 = vunpack.c.0.s8 %v348
    %v350 = vlaneseq
    %v351 = vshrl.u32 %v350, 7
    %v352 = vsub.s32 %v349, %v351
    %v353 = vrot.slane %v346, %v352
    %v354 = vcombine.low %v260, %v261
    %v356 = vunpack.c.l.s4 1983009808
    %v357 = vunpack.c.0.s8 %v356
    %v358 = vlaneseq
    %v359 = vshrl.u32 %v358, 7
    %v360 = vsub.s32 %v357, %v359
    %v361 = vrot.slane %v354, %v360
    %v362 = vcombine.low %v337, %v345
    %v363 = vcombine.high %v337, %v345
    %v365 = vunpack.c.l.s4 1934713408
    %v366 = vunpack.c.0.s8 %v365
    %v367 = vlaneseq
    %v368 = vshrl.u32 %v367, 7
    %v369 = vsub.s32 %v366, %v368
    %v370 = vrot.slane %v362, %v369
    %v372 = vunpack.c.l.s4 1934713408
    %v373 = vunpack.c.0.s8 %v372
    %v374 = vlaneseq
    %v375 = vshrl.u32 %v374, 7
    %v376 = vsub.s32 %v373, %v375
    %v377 = vrot.slane %v363, %v376
    %v378 = vcombine.low %v353, %v361
    %v379 = vcombine.high %v353, %v361
    %v381 = vunpack.c.l.s4 1934713408
    %v382 = vunpack.c.0.s8 %v381
    %v383 = vlaneseq
    %v384 = vshrl.u32 %v383, 7
    %v385 = vsub.s32 %v382, %v384
    %v386 = vrot.slane %v378, %v385
    %v388 = vunpack.c.l.s4 1934713408
    %v389 = vunpack.c.0.s8 %v388
    %v390 = vlaneseq
    %v391 = vshrl.u32 %v390, 7
    %v392 = vsub.s32 %v389, %v391
    %v393 = vrot.slane %v379, %v392
    %v394 = vcombine.low %v370, %v386
    %v395 = vcombine.high %v370, %v386
    %v396 = vcombine.low %v377, %v393
    %v397 = vcombine.high %v377, %v393
    %v398 = vcombine.low %v302, %v309
    %v400 = vunpack.c.l.s4 1983009808
    %v401 = vunpack.c.0.s8 %v400
    %v402 = vlaneseq
    %v403 = vshrl.u32 %v402, 7
    %v404 = vsub.s32 %v401, %v403
    %v405 = vrot.slane %v398, %v404
    %v406 = vcombine.low %v326, %v327
    %v408 = vunpack.c.l.s4 1983009808
    %v409 = vunpack.c.0.s8 %v408
    %v410 = vlaneseq
    %v411 = vshrl.u32 %v410, 7
    %v412 = vsub.s32 %v409, %v411
    %v413 = vrot.slane %v406, %v412
    %v414 = vcombine.low %v318, %v325
    %v416 = vunpack.c.l.s4 1983009808
    %v417 = vunpack.c.0.s8 %v416
    %v418 = vlaneseq
    %v419 = vshrl.u32 %v418, 7
    %v420 = vsub.s32 %v417, %v419
    %v421 = vrot.slane %v414, %v420
    %v422 = vcombine.low %v328, %v329
    %v424 = vunpack.c.l.s4 1983009808
    %v425 = vunpack.c.0.s8 %v424
    %v426 = vlaneseq
    %v427 = vshrl.u32 %v426, 7
    %v428 = vsub.s32 %v425, %v427
    %v429 = vrot.slane %v422, %v428
    %v430 = vcombine.low %v405, %v413
    %v431 = vcombine.high %v405, %v413
    %v433 = vunpack.c.l.s4 1934713408
    %v434 = vunpack.c.0.s8 %v433
    %v435 = vlaneseq
    %v436 = vshrl.u32 %v435, 7
    %v437 = vsub.s32 %v434, %v436
    %v438 = vrot.slane %v430, %v437
    %v440 = vunpack.c.l.s4 1934713408
    %v441 = vunpack.c.0.s8 %v440
    %v442 = vlaneseq
    %v443 = vshrl.u32 %v442, 7
    %v444 = vsub.s32 %v441, %v443
    %v445 = vrot.slane %v431, %v444
    %v446 = vcombine.low %v421, %v429
    %v447 = vcombine.high %v421, %v429
    %v449 = vunpack.c.l.s4 1934713408
    %v450 = vunpack.c.0.s8 %v449
    %v451 = vlaneseq
    %v452 = vshrl.u32 %v451, 7
    %v453 = vsub.s32 %v450, %v452
    %v454 = vrot.slane %v446, %v453
    %v456 = vunpack.c.l.s4 1934713408
    %v457 = vunpack.c.0.s8 %v456
    %v458 = vlaneseq
    %v459 = vshrl.u32 %v458, 7
    %v460 = vsub.s32 %v457, %v459
    %v461 = vrot.slane %v447, %v460
    %v462 = vcombine.low %v438, %v454
    %v463 = vcombine.high %v438, %v454
    %v464 = vcombine.low %v445, %v461
    %v465 = vcombine.high %v445, %v461
    %v466 = vpack.c.bf16 %v394, %v394
    %v467 = vpack.c.bf16 %v395, %v395
    %v468 = vpack.c.bf16 %v396, %v396
    %v469 = vpack.c.bf16 %v397, %v397
    %v470 = vpack.c.bf16 %v462, %v462
    %v471 = vpack.c.bf16 %v463, %v463
    %v472 = vpack.c.bf16 %v464, %v464
    %v473 = vpack.c.bf16 %v465, %v465
    %474 = vrot.lane.b32.xlu0 %v168, 96
    %v475 = vpop.permute.xlu0 %474
    %476 = vrot.lane.b32.xlu0 %v171, 96
    %v477 = vpop.permute.xlu0 %476
    %478 = vrot.lane.b32.xlu0 %v177, 96
    %v479 = vpop.permute.xlu0 %478
    %480 = vrot.lane.b32.xlu0 %v179, 96
    %v481 = vpop.permute.xlu0 %480
    %482 = vrot.lane.b32.xlu0 %v183, 96
    %v483 = vpop.permute.xlu0 %482
    %484 = vrot.lane.b32.xlu0 %v185, 96
    %v485 = vpop.permute.xlu0 %484
    %486 = vrot.lane.b32.xlu0 %v189, 96
    %v487 = vpop.permute.xlu0 %486
    %488 = vrot.lane.b32.xlu0 %v191, 96
    %v489 = vpop.permute.xlu0 %488
    %v498 = vcombine.low %v475, %v483
    %v499 = vcombine.high %v475, %v483
    %v501 = vunpack.c.l.s4 1983009808
    %v502 = vunpack.c.0.s8 %v501
    %v503 = vlaneseq
    %v504 = vshrl.u32 %v503, 7
    %v505 = vsub.s32 %v502, %v504
    %v506 = vrot.slane %v498, %v505
    %v508 = vunpack.c.l.s4 1983009808
    %v509 = vunpack.c.0.s8 %v508
    %v510 = vlaneseq
    %v511 = vshrl.u32 %v510, 7
    %v512 = vsub.s32 %v509, %v511
    %v513 = vrot.slane %v499, %v512
    %v514 = vcombine.low %v479, %v487
    %v515 = vcombine.high %v479, %v487
    %v517 = vunpack.c.l.s4 1983009808
    %v518 = vunpack.c.0.s8 %v517
    %v519 = vlaneseq
    %v520 = vshrl.u32 %v519, 7
    %v521 = vsub.s32 %v518, %v520
    %v522 = vrot.slane %v514, %v521
    %v524 = vunpack.c.l.s4 1983009808
    %v525 = vunpack.c.0.s8 %v524
    %v526 = vlaneseq
    %v527 = vshrl.u32 %v526, 7
    %v528 = vsub.s32 %v525, %v527
    %v529 = vrot.slane %v515, %v528
    %v530 = vcombine.low %v506, %v522
    %v531 = vcombine.high %v506, %v522
    %v533 = vunpack.c.l.s4 1934713408
    %v534 = vunpack.c.0.s8 %v533
    %v535 = vlaneseq
    %v536 = vshrl.u32 %v535, 7
    %v537 = vsub.s32 %v534, %v536
    %v538 = vrot.slane %v530, %v537
    %v540 = vunpack.c.l.s4 1934713408
    %v541 = vunpack.c.0.s8 %v540
    %v542 = vlaneseq
    %v543 = vshrl.u32 %v542, 7
    %v544 = vsub.s32 %v541, %v543
    %v545 = vrot.slane %v531, %v544
    %v546 = vcombine.low %v513, %v529
    %v547 = vcombine.high %v513, %v529
    %v549 = vunpack.c.l.s4 1934713408
    %v550 = vunpack.c.0.s8 %v549
    %v551 = vlaneseq
    %v552 = vshrl.u32 %v551, 7
    %v553 = vsub.s32 %v550, %v552
    %v554 = vrot.slane %v546, %v553
    %v556 = vunpack.c.l.s4 1934713408
    %v557 = vunpack.c.0.s8 %v556
    %v558 = vlaneseq
    %v559 = vshrl.u32 %v558, 7
    %v560 = vsub.s32 %v557, %v559
    %v561 = vrot.slane %v547, %v560
    %v562 = vcombine.high %v538, 0.0
    %v563 = vcombine.high %v545, 0.0
    %v564 = vcombine.high %v554, 0.0
    %v565 = vcombine.high %v561, 0.0
    %v566 = vcombine.low %v477, %v485
    %v567 = vcombine.high %v477, %v485
    %v569 = vunpack.c.l.s4 1983009808
    %v570 = vunpack.c.0.s8 %v569
    %v571 = vlaneseq
    %v572 = vshrl.u32 %v571, 7
    %v573 = vsub.s32 %v570, %v572
    %v574 = vrot.slane %v566, %v573
    %v576 = vunpack.c.l.s4 1983009808
    %v577 = vunpack.c.0.s8 %v576
    %v578 = vlaneseq
    %v579 = vshrl.u32 %v578, 7
    %v580 = vsub.s32 %v577, %v579
    %v581 = vrot.slane %v567, %v580
    %v582 = vcombine.low %v481, %v489
    %v583 = vcombine.high %v481, %v489
    %v585 = vunpack.c.l.s4 1983009808
    %v586 = vunpack.c.0.s8 %v585
    %v587 = vlaneseq
    %v588 = vshrl.u32 %v587, 7
    %v589 = vsub.s32 %v586, %v588
    %v590 = vrot.slane %v582, %v589
    %v592 = vunpack.c.l.s4 1983009808
    %v593 = vunpack.c.0.s8 %v592
    %v594 = vlaneseq
    %v595 = vshrl.u32 %v594, 7
    %v596 = vsub.s32 %v593, %v595
    %v597 = vrot.slane %v583, %v596
    %v598 = vcombine.low %v574, %v590
    %v599 = vcombine.high %v574, %v590
    %v601 = vunpack.c.l.s4 1934713408
    %v602 = vunpack.c.0.s8 %v601
    %v603 = vlaneseq
    %v604 = vshrl.u32 %v603, 7
    %v605 = vsub.s32 %v602, %v604
    %v606 = vrot.slane %v598, %v605
    %v608 = vunpack.c.l.s4 1934713408
    %v609 = vunpack.c.0.s8 %v608
    %v610 = vlaneseq
    %v611 = vshrl.u32 %v610, 7
    %v612 = vsub.s32 %v609, %v611
    %v613 = vrot.slane %v599, %v612
    %v614 = vcombine.low %v581, %v597
    %v615 = vcombine.high %v581, %v597
    %v617 = vunpack.c.l.s4 1934713408
    %v618 = vunpack.c.0.s8 %v617
    %v619 = vlaneseq
    %v620 = vshrl.u32 %v619, 7
    %v621 = vsub.s32 %v618, %v620
    %v622 = vrot.slane %v614, %v621
    %v624 = vunpack.c.l.s4 1934713408
    %v625 = vunpack.c.0.s8 %v624
    %v626 = vlaneseq
    %v627 = vshrl.u32 %v626, 7
    %v628 = vsub.s32 %v625, %v627
    %v629 = vrot.slane %v615, %v628
    %v630 = vcombine.high %v606, 0.0
    %v631 = vcombine.high %v613, 0.0
    %v632 = vcombine.high %v622, 0.0
    %v633 = vcombine.high %v629, 0.0
    %v634 = vcombine.low %v538, %v545
    %v636 = vunpack.c.l.s4 1983009808
    %v637 = vunpack.c.0.s8 %v636
    %v638 = vlaneseq
    %v639 = vshrl.u32 %v638, 7
    %v640 = vsub.s32 %v637, %v639
    %v641 = vrot.slane %v634, %v640
    %v642 = vcombine.low %v562, %v563
    %v644 = vunpack.c.l.s4 1983009808
    %v645 = vunpack.c.0.s8 %v644
    %v646 = vlaneseq
    %v647 = vshrl.u32 %v646, 7
    %v648 = vsub.s32 %v645, %v647
    %v649 = vrot.slane %v642, %v648
    %v650 = vcombine.low %v554, %v561
    %v652 = vunpack.c.l.s4 1983009808
    %v653 = vunpack.c.0.s8 %v652
    %v654 = vlaneseq
    %v655 = vshrl.u32 %v654, 7
    %v656 = vsub.s32 %v653, %v655
    %v657 = vrot.slane %v650, %v656
    %v658 = vcombine.low %v564, %v565
    %v660 = vunpack.c.l.s4 1983009808
    %v661 = vunpack.c.0.s8 %v660
    %v662 = vlaneseq
    %v663 = vshrl.u32 %v662, 7
    %v664 = vsub.s32 %v661, %v663
    %v665 = vrot.slane %v658, %v664
    %v666 = vcombine.low %v641, %v649
    %v667 = vcombine.high %v641, %v649
    %v669 = vunpack.c.l.s4 1934713408
    %v670 = vunpack.c.0.s8 %v669
    %v671 = vlaneseq
    %v672 = vshrl.u32 %v671, 7
    %v673 = vsub.s32 %v670, %v672
    %v674 = vrot.slane %v666, %v673
    %v676 = vunpack.c.l.s4 1934713408
    %v677 = vunpack.c.0.s8 %v676
    %v678 = vlaneseq
    %v679 = vshrl.u32 %v678, 7
    %v680 = vsub.s32 %v677, %v679
    %v681 = vrot.slane %v667, %v680
    %v682 = vcombine.low %v657, %v665
    %v683 = vcombine.high %v657, %v665
    %v685 = vunpack.c.l.s4 1934713408
    %v686 = vunpack.c.0.s8 %v685
    %v687 = vlaneseq
    %v688 = vshrl.u32 %v687, 7
    %v689 = vsub.s32 %v686, %v688
    %v690 = vrot.slane %v682, %v689
    %v692 = vunpack.c.l.s4 1934713408
    %v693 = vunpack.c.0.s8 %v692
    %v694 = vlaneseq
    %v695 = vshrl.u32 %v694, 7
    %v696 = vsub.s32 %v693, %v695
    %v697 = vrot.slane %v683, %v696
    %v698 = vcombine.low %v674, %v690
    %v699 = vcombine.high %v674, %v690
    %v700 = vcombine.low %v681, %v697
    %v701 = vcombine.high %v681, %v697
    %v702 = vcombine.low %v606, %v613
    %v704 = vunpack.c.l.s4 1983009808
    %v705 = vunpack.c.0.s8 %v704
    %v706 = vlaneseq
    %v707 = vshrl.u32 %v706, 7
    %v708 = vsub.s32 %v705, %v707
    %v709 = vrot.slane %v702, %v708
    %v710 = vcombine.low %v630, %v631
    %v712 = vunpack.c.l.s4 1983009808
    %v713 = vunpack.c.0.s8 %v712
    %v714 = vlaneseq
    %v715 = vshrl.u32 %v714, 7
    %v716 = vsub.s32 %v713, %v715
    %v717 = vrot.slane %v710, %v716
    %v718 = vcombine.low %v622, %v629
    %v720 = vunpack.c.l.s4 1983009808
    %v721 = vunpack.c.0.s8 %v720
    %v722 = vlaneseq
    %v723 = vshrl.u32 %v722, 7
    %v724 = vsub.s32 %v721, %v723
    %v725 = vrot.slane %v718, %v724
    %v726 = vcombine.low %v632, %v633
    %v728 = vunpack.c.l.s4 1983009808
    %v729 = vunpack.c.0.s8 %v728
    %v730 = vlaneseq
    %v731 = vshrl.u32 %v730, 7
    %v732 = vsub.s32 %v729, %v731
    %v733 = vrot.slane %v726, %v732
    %v734 = vcombine.low %v709, %v717
    %v735 = vcombine.high %v709, %v717
    %v737 = vunpack.c.l.s4 1934713408
    %v738 = vunpack.c.0.s8 %v737
    %v739 = vlaneseq
    %v740 = vshrl.u32 %v739, 7
    %v741 = vsub.s32 %v738, %v740
    %v742 = vrot.slane %v734, %v741
    %v744 = vunpack.c.l.s4 1934713408
    %v745 = vunpack.c.0.s8 %v744
    %v746 = vlaneseq
    %v747 = vshrl.u32 %v746, 7
    %v748 = vsub.s32 %v745, %v747
    %v749 = vrot.slane %v735, %v748
    %v750 = vcombine.low %v725, %v733
    %v751 = vcombine.high %v725, %v733
    %v753 = vunpack.c.l.s4 1934713408
    %v754 = vunpack.c.0.s8 %v753
    %v755 = vlaneseq
    %v756 = vshrl.u32 %v755, 7
    %v757 = vsub.s32 %v754, %v756
    %v758 = vrot.slane %v750, %v757
    %v760 = vunpack.c.l.s4 1934713408
    %v761 = vunpack.c.0.s8 %v760
    %v762 = vlaneseq
    %v763 = vshrl.u32 %v762, 7
    %v764 = vsub.s32 %v761, %v763
    %v765 = vrot.slane %v751, %v764
    %v766 = vcombine.low %v742, %v758
    %v767 = vcombine.high %v742, %v758
    %v768 = vcombine.low %v749, %v765
    %v769 = vcombine.high %v749, %v765
    %v770 = vpack.c.bf16 %v698, %v698
    %v771 = vpack.c.bf16 %v699, %v699
    %v772 = vpack.c.bf16 %v700, %v700
    %v773 = vpack.c.bf16 %v701, %v701
    %v774 = vpack.c.bf16 %v766, %v766
    %v775 = vpack.c.bf16 %v767, %v767
    %v776 = vpack.c.bf16 %v768, %v768
    %v777 = vpack.c.bf16 %v769, %v769
    %778 = vrot.lane.b32.xlu0 %v168, 64
    %v779 = vpop.permute.xlu0 %778
    %780 = vrot.lane.b32.xlu0 %v171, 64
    %v781 = vpop.permute.xlu0 %780
    %782 = vrot.lane.b32.xlu0 %v177, 64
    %v783 = vpop.permute.xlu0 %782
    %784 = vrot.lane.b32.xlu0 %v179, 64
    %v785 = vpop.permute.xlu0 %784
    %786 = vrot.lane.b32.xlu0 %v183, 64
    %v787 = vpop.permute.xlu0 %786
    %788 = vrot.lane.b32.xlu0 %v185, 64
    %v789 = vpop.permute.xlu0 %788
    %790 = vrot.lane.b32.xlu0 %v189, 64
    %v791 = vpop.permute.xlu0 %790
    %792 = vrot.lane.b32.xlu0 %v191, 64
    %v793 = vpop.permute.xlu0 %792
    %v802 = vcombine.low %v779, %v787
    %v803 = vcombine.high %v779, %v787
    %v805 = vunpack.c.l.s4 1983009808
    %v806 = vunpack.c.0.s8 %v805
    %v807 = vlaneseq
    %v808 = vshrl.u32 %v807, 7
    %v809 = vsub.s32 %v806, %v808
    %v810 = vrot.slane %v802, %v809
    %v812 = vunpack.c.l.s4 1983009808
    %v813 = vunpack.c.0.s8 %v812
    %v814 = vlaneseq
    %v815 = vshrl.u32 %v814, 7
    %v816 = vsub.s32 %v813, %v815
    %v817 = vrot.slane %v803, %v816
    %v818 = vcombine.low %v783, %v791
    %v819 = vcombine.high %v783, %v791
    %v821 = vunpack.c.l.s4 1983009808
    %v822 = vunpack.c.0.s8 %v821
    %v823 = vlaneseq
    %v824 = vshrl.u32 %v823, 7
    %v825 = vsub.s32 %v822, %v824
    %v826 = vrot.slane %v818, %v825
    %v828 = vunpack.c.l.s4 1983009808
    %v829 = vunpack.c.0.s8 %v828
    %v830 = vlaneseq
    %v831 = vshrl.u32 %v830, 7
    %v832 = vsub.s32 %v829, %v831
    %v833 = vrot.slane %v819, %v832
    %v834 = vcombine.low %v810, %v826
    %v835 = vcombine.high %v810, %v826
    %v837 = vunpack.c.l.s4 1934713408
    %v838 = vunpack.c.0.s8 %v837
    %v839 = vlaneseq
    %v840 = vshrl.u32 %v839, 7
    %v841 = vsub.s32 %v838, %v840
    %v842 = vrot.slane %v834, %v841
    %v844 = vunpack.c.l.s4 1934713408
    %v845 = vunpack.c.0.s8 %v844
    %v846 = vlaneseq
    %v847 = vshrl.u32 %v846, 7
    %v848 = vsub.s32 %v845, %v847
    %v849 = vrot.slane %v835, %v848
    %v850 = vcombine.low %v817, %v833
    %v851 = vcombine.high %v817, %v833
    %v853 = vunpack.c.l.s4 1934713408
    %v854 = vunpack.c.0.s8 %v853
    %v855 = vlaneseq
    %v856 = vshrl.u32 %v855, 7
    %v857 = vsub.s32 %v854, %v856
    %v858 = vrot.slane %v850, %v857
    %v860 = vunpack.c.l.s4 1934713408
    %v861 = vunpack.c.0.s8 %v860
    %v862 = vlaneseq
    %v863 = vshrl.u32 %v862, 7
    %v864 = vsub.s32 %v861, %v863
    %v865 = vrot.slane %v851, %v864
    %v866 = vcombine.high %v842, 0.0
    %v867 = vcombine.high %v849, 0.0
    %v868 = vcombine.high %v858, 0.0
    %v869 = vcombine.high %v865, 0.0
    %v870 = vcombine.low %v781, %v789
    %v871 = vcombine.high %v781, %v789
    %v873 = vunpack.c.l.s4 1983009808
    %v874 = vunpack.c.0.s8 %v873
    %v875 = vlaneseq
    %v876 = vshrl.u32 %v875, 7
    %v877 = vsub.s32 %v874, %v876
    %v878 = vrot.slane %v870, %v877
    %v880 = vunpack.c.l.s4 1983009808
    %v881 = vunpack.c.0.s8 %v880
    %v882 = vlaneseq
    %v883 = vshrl.u32 %v882, 7
    %v884 = vsub.s32 %v881, %v883
    %v885 = vrot.slane %v871, %v884
    %v886 = vcombine.low %v785, %v793
    %v887 = vcombine.high %v785, %v793
    %v889 = vunpack.c.l.s4 1983009808
    %v890 = vunpack.c.0.s8 %v889
    %v891 = vlaneseq
    %v892 = vshrl.u32 %v891, 7
    %v893 = vsub.s32 %v890, %v892
    %v894 = vrot.slane %v886, %v893
    %v896 = vunpack.c.l.s4 1983009808
    %v897 = vunpack.c.0.s8 %v896
    %v898 = vlaneseq
    %v899 = vshrl.u32 %v898, 7
    %v900 = vsub.s32 %v897, %v899
    %v901 = vrot.slane %v887, %v900
    %v902 = vcombine.low %v878, %v894
    %v903 = vcombine.high %v878, %v894
    %v905 = vunpack.c.l.s4 1934713408
    %v906 = vunpack.c.0.s8 %v905
    %v907 = vlaneseq
    %v908 = vshrl.u32 %v907, 7
    %v909 = vsub.s32 %v906, %v908
    %v910 = vrot.slane %v902, %v909
    %v912 = vunpack.c.l.s4 1934713408
    %v913 = vunpack.c.0.s8 %v912
    %v914 = vlaneseq
    %v915 = vshrl.u32 %v914, 7
    %v916 = vsub.s32 %v913, %v915
    %v917 = vrot.slane %v903, %v916
    %v918 = vcombine.low %v885, %v901
    %v919 = vcombine.high %v885, %v901
    %v921 = vunpack.c.l.s4 1934713408
    %v922 = vunpack.c.0.s8 %v921
    %v923 = vlaneseq
    %v924 = vshrl.u32 %v923, 7
    %v925 = vsub.s32 %v922, %v924
    %v926 = vrot.slane %v918, %v925
    %v928 = vunpack.c.l.s4 1934713408
    %v929 = vunpack.c.0.s8 %v928
    %v930 = vlaneseq
    %v931 = vshrl.u32 %v930, 7
    %v932 = vsub.s32 %v929, %v931
    %v933 = vrot.slane %v919, %v932
    %v934 = vcombine.high %v910, 0.0
    %v935 = vcombine.high %v917, 0.0
    %v936 = vcombine.high %v926, 0.0
    %v937 = vcombine.high %v933, 0.0
    %v938 = vcombine.low %v842, %v849
    %v940 = vunpack.c.l.s4 1983009808
    %v941 = vunpack.c.0.s8 %v940
    %v942 = vlaneseq
    %v943 = vshrl.u32 %v942, 7
    %v944 = vsub.s32 %v941, %v943
    %v945 = vrot.slane %v938, %v944
    %v946 = vcombine.low %v866, %v867
    %v948 = vunpack.c.l.s4 1983009808
    %v949 = vunpack.c.0.s8 %v948
    %v950 = vlaneseq
    %v951 = vshrl.u32 %v950, 7
    %v952 = vsub.s32 %v949, %v951
    %v953 = vrot.slane %v946, %v952
    %v954 = vcombine.low %v858, %v865
    %v956 = vunpack.c.l.s4 1983009808
    %v957 = vunpack.c.0.s8 %v956
    %v958 = vlaneseq
    %v959 = vshrl.u32 %v958, 7
    %v960 = vsub.s32 %v957, %v959
    %v961 = vrot.slane %v954, %v960
    %v962 = vcombine.low %v868, %v869
    %v964 = vunpack.c.l.s4 1983009808
    %v965 = vunpack.c.0.s8 %v964
    %v966 = vlaneseq
    %v967 = vshrl.u32 %v966, 7
    %v968 = vsub.s32 %v965, %v967
    %v969 = vrot.slane %v962, %v968
    %v970 = vcombine.low %v945, %v953
    %v971 = vcombine.high %v945, %v953
    %v973 = vunpack.c.l.s4 1934713408
    %v974 = vunpack.c.0.s8 %v973
    %v975 = vlaneseq
    %v976 = vshrl.u32 %v975, 7
    %v977 = vsub.s32 %v974, %v976
    %v978 = vrot.slane %v970, %v977
    %v980 = vunpack.c.l.s4 1934713408
    %v981 = vunpack.c.0.s8 %v980
    %v982 = vlaneseq
    %v983 = vshrl.u32 %v982, 7
    %v984 = vsub.s32 %v981, %v983
    %v985 = vrot.slane %v971, %v984
    %v986 = vcombine.low %v961, %v969
    %v987 = vcombine.high %v961, %v969
    %v989 = vunpack.c.l.s4 1934713408
    %v990 = vunpack.c.0.s8 %v989
    %v991 = vlaneseq
    %v992 = vshrl.u32 %v991, 7
    %v993 = vsub.s32 %v990, %v992
    %v994 = vrot.slane %v986, %v993
    %v996 = vunpack.c.l.s4 1934713408
    %v997 = vunpack.c.0.s8 %v996
    %v998 = vlaneseq
    %v999 = vshrl.u32 %v998, 7
    %v1000 = vsub.s32 %v997, %v999
    %v1001 = vrot.slane %v987, %v1000
    %v1002 = vcombine.low %v978, %v994
    %v1003 = vcombine.high %v978, %v994
    %v1004 = vcombine.low %v985, %v1001
    %v1005 = vcombine.high %v985, %v1001
    %v1006 = vcombine.low %v910, %v917
    %v1008 = vunpack.c.l.s4 1983009808
    %v1009 = vunpack.c.0.s8 %v1008
    %v1010 = vlaneseq
    %v1011 = vshrl.u32 %v1010, 7
    %v1012 = vsub.s32 %v1009, %v1011
    %v1013 = vrot.slane %v1006, %v1012
    %v1014 = vcombine.low %v934, %v935
    %v1016 = vunpack.c.l.s4 1983009808
    %v1017 = vunpack.c.0.s8 %v1016
    %v1018 = vlaneseq
    %v1019 = vshrl.u32 %v1018, 7
    %v1020 = vsub.s32 %v1017, %v1019
    %v1021 = vrot.slane %v1014, %v1020
    %v1022 = vcombine.low %v926, %v933
    %v1024 = vunpack.c.l.s4 1983009808
    %v1025 = vunpack.c.0.s8 %v1024
    %v1026 = vlaneseq
    %v1027 = vshrl.u32 %v1026, 7
    %v1028 = vsub.s32 %v1025, %v1027
    %v1029 = vrot.slane %v1022, %v1028
    %v1030 = vcombine.low %v936, %v937
    %v1032 = vunpack.c.l.s4 1983009808
    %v1033 = vunpack.c.0.s8 %v1032
    %v1034 = vlaneseq
    %v1035 = vshrl.u32 %v1034, 7
    %v1036 = vsub.s32 %v1033, %v1035
    %v1037 = vrot.slane %v1030, %v1036
    %v1038 = vcombine.low %v1013, %v1021
    %v1039 = vcombine.high %v1013, %v1021
    %v1041 = vunpack.c.l.s4 1934713408
    %v1042 = vunpack.c.0.s8 %v1041
    %v1043 = vlaneseq
    %v1044 = vshrl.u32 %v1043, 7
    %v1045 = vsub.s32 %v1042, %v1044
    %v1046 = vrot.slane %v1038, %v1045
    %v1048 = vunpack.c.l.s4 1934713408
    %v1049 = vunpack.c.0.s8 %v1048
    %v1050 = vlaneseq
    %v1051 = vshrl.u32 %v1050, 7
    %v1052 = vsub.s32 %v1049, %v1051
    %v1053 = vrot.slane %v1039, %v1052
    %v1054 = vcombine.low %v1029, %v1037
    %v1055 = vcombine.high %v1029, %v1037
    %v1057 = vunpack.c.l.s4 1934713408
    %v1058 = vunpack.c.0.s8 %v1057
    %v1059 = vlaneseq
    %v1060 = vshrl.u32 %v1059, 7
    %v1061 = vsub.s32 %v1058, %v1060
    %v1062 = vrot.slane %v1054, %v1061
    %v1064 = vunpack.c.l.s4 1934713408
    %v1065 = vunpack.c.0.s8 %v1064
    %v1066 = vlaneseq
    %v1067 = vshrl.u32 %v1066, 7
    %v1068 = vsub.s32 %v1065, %v1067
    %v1069 = vrot.slane %v1055, %v1068
    %v1070 = vcombine.low %v1046, %v1062
    %v1071 = vcombine.high %v1046, %v1062
    %v1072 = vcombine.low %v1053, %v1069
    %v1073 = vcombine.high %v1053, %v1069
    %v1074 = vpack.c.bf16 %v1002, %v1002
    %v1075 = vpack.c.bf16 %v1003, %v1003
    %v1076 = vpack.c.bf16 %v1004, %v1004
    %v1077 = vpack.c.bf16 %v1005, %v1005
    %v1078 = vpack.c.bf16 %v1070, %v1070
    %v1079 = vpack.c.bf16 %v1071, %v1071
    %v1080 = vpack.c.bf16 %v1072, %v1072
    %v1081 = vpack.c.bf16 %v1073, %v1073
    %vm1082 = vcmask 64512
    %v1084 = vsel %vm1082, %v466, 0
    %v1087 = vsel %vm1082, %v770, 0
    %1089 = vmatprep.subr.bf16.mxu0 0
    %1090 = vmatpush1.bf16.xpose.msra.mxu0 0
    %1091 = vmatprep.subr.bf16.mxu0 0
    %1092 = vmatpush1.bf16.xpose.msra.mxu0 0
    %1093 = vmatprep.subr.bf16.mxu0 0
    %1094 = vmatpush1.bf16.xpose.msra.mxu0 0
    %1095 = vmatprep.subr.bf16.mxu0 0
    %1096 = vmatpush1.bf16.xpose.msra.mxu0 0
    %1097 = vmatprep.subr.bf16.mxu0 0
    %1098 = vmatpush1.bf16.xpose.msra.mxu0 0
    %1099 = vmatprep.subr.bf16.mxu0 0
    %1100 = vmatpush1.bf16.xpose.msra.mxu0 0
    %1101 = vmatprep.subr.bf16.mxu0 0
    %1102 = vmatpush1.bf16.xpose.msra.mxu0 0
    %1103 = vmatprep.subr.bf16.mxu0 0
    %1104 = vmatpush1.bf16.xpose.msra.mxu0 %v1087
    %1105 = vmatprep.subr.bf16.mxu0 0
    %1106 = vmatpush2.bf16.xpose.msra.mxu0 0
    %1107 = vmatprep.subr.bf16.mxu0 0
    %1108 = vmatpush2.bf16.xpose.msra.mxu0 0
    %1109 = vmatprep.subr.bf16.mxu0 0
    %1110 = vmatpush2.bf16.xpose.msra.mxu0 0
    %1111 = vmatprep.subr.bf16.mxu0 0
    %1112 = vmatpush2.bf16.xpose.msra.mxu0 0
    %1113 = vmatprep.subr.bf16.mxu0 0
    %1114 = vmatpush2.bf16.xpose.msra.mxu0 0
    %1115 = vmatprep.subr.bf16.mxu0 0
    %1116 = vmatpush2.bf16.xpose.msra.mxu0 0
    %1117 = vmatprep.subr.bf16.mxu0 0
    %1118 = vmatpush2.bf16.xpose.msra.mxu0 0
    %1119 = vmatprep.subr.bf16.mxu0 0
    %1120 = vmatpush2.bf16.xpose.msra.mxu0 0
    %1121 = vmatprep.mubr.bf16.mxu0 0
    %1122 = vmatmul.mubr.bf16.gmra.mxu0 %v1084
    %v1123 = vpop.f32.mrf.mxu0
    %v1124 = vadd.f32 0.0, %v1123
    %v1125 = vpop.f32.mrf.mxu0
    %v1126 = vpop.f32.mrf.mxu0
    %v1127 = vpop.f32.mrf.mxu0
    %1128 = vdwg.mxu0
    %v1130 = vsel %vm1082, %v467, 0
    %v1133 = vsel %vm1082, %v771, 0
    %1135 = vmatprep.subr.bf16.mxu0 0
    %1136 = vmatpush1.bf16.xpose.msra.mxu0 0
    %1137 = vmatprep.subr.bf16.mxu0 0
    %1138 = vmatpush1.bf16.xpose.msra.mxu0 0
    %1139 = vmatprep.subr.bf16.mxu0 0
    %1140 = vmatpush1.bf16.xpose.msra.mxu0 0
    %1141 = vmatprep.subr.bf16.mxu0 0
    %1142 = vmatpush1.bf16.xpose.msra.mxu0 0
    %1143 = vmatprep.subr.bf16.mxu0 0
    %1144 = vmatpush1.bf16.xpose.msra.mxu0 0
    %1145 = vmatprep.subr.bf16.mxu0 0
    %1146 = vmatpush1.bf16.xpose.msra.mxu0 0
    %1147 = vmatprep.subr.bf16.mxu0 0
    %1148 = vmatpush1.bf16.xpose.msra.mxu0 0
    %1149 = vmatprep.subr.bf16.mxu0 0
    %1150 = vmatpush1.bf16.xpose.msra.mxu0 %v1133
    %1151 = vmatprep.subr.bf16.mxu0 0
    %1152 = vmatpush2.bf16.xpose.msra.mxu0 0
    %1153 = vmatprep.subr.bf16.mxu0 0
    %1154 = vmatpush2.bf16.xpose.msra.mxu0 0
    %1155 = vmatprep.subr.bf16.mxu0 0
    %1156 = vmatpush2.bf16.xpose.msra.mxu0 0
    %1157 = vmatprep.subr.bf16.mxu0 0
    %1158 = vmatpush2.bf16.xpose.msra.mxu0 0
    %1159 = vmatprep.subr.bf16.mxu0 0
    %1160 = vmatpush2.bf16.xpose.msra.mxu0 0
    %1161 = vmatprep.subr.bf16.mxu0 0
    %1162 = vmatpush2.bf16.xpose.msra.mxu0 0
    %1163 = vmatprep.subr.bf16.mxu0 0
    %1164 = vmatpush2.bf16.xpose.msra.mxu0 0
    %1165 = vmatprep.subr.bf16.mxu0 0
    %1166 = vmatpush2.bf16.xpose.msra.mxu0 0
    %1167 = vmatprep.mubr.bf16.mxu0 0
    %1168 = vmatmul.mubr.bf16.gmra.mxu0 %v1130
    %v1169 = vpop.f32.mrf.mxu0
    %v1170 = vadd.f32 0.0, %v1169
    %v1171 = vpop.f32.mrf.mxu0
    %v1172 = vpop.f32.mrf.mxu0
    %v1173 = vpop.f32.mrf.mxu0
    %1174 = vdwg.mxu0
    %v1176 = vsel %vm1082, %v468, 0
    %v1179 = vsel %vm1082, %v772, 0
    %1181 = vmatprep.subr.bf16.mxu0 0
    %1182 = vmatpush1.bf16.xpose.msra.mxu0 0
    %1183 = vmatprep.subr.bf16.mxu0 0
    %1184 = vmatpush1.bf16.xpose.msra.mxu0 0
    %1185 = vmatprep.subr.bf16.mxu0 0
    %1186 = vmatpush1.bf16.xpose.msra.mxu0 0
    %1187 = vmatprep.subr.bf16.mxu0 0
    %1188 = vmatpush1.bf16.xpose.msra.mxu0 0
    %1189 = vmatprep.subr.bf16.mxu0 0
    %1190 = vmatpush1.bf16.xpose.msra.mxu0 0
    %1191 = vmatprep.subr.bf16.mxu0 0
    %1192 = vmatpush1.bf16.xpose.msra.mxu0 0
    %1193 = vmatprep.subr.bf16.mxu0 0
    %1194 = vmatpush1.bf16.xpose.msra.mxu0 0
    %1195 = vmatprep.subr.bf16.mxu0 0
    %1196 = vmatpush1.bf16.xpose.msra.mxu0 %v1179
    %1197 = vmatprep.subr.bf16.mxu0 0
    %1198 = vmatpush2.bf16.xpose.msra.mxu0 0
    %1199 = vmatprep.subr.bf16.mxu0 0
    %1200 = vmatpush2.bf16.xpose.msra.mxu0 0
    %1201 = vmatprep.subr.bf16.mxu0 0
    %1202 = vmatpush2.bf16.xpose.msra.mxu0 0
    %1203 = vmatprep.subr.bf16.mxu0 0
    %1204 = vmatpush2.bf16.xpose.msra.mxu0 0
    %1205 = vmatprep.subr.bf16.mxu0 0
    %1206 = vmatpush2.bf16.xpose.msra.mxu0 0
    %1207 = vmatprep.subr.bf16.mxu0 0
    %1208 = vmatpush2.bf16.xpose.msra.mxu0 0
    %1209 = vmatprep.subr.bf16.mxu0 0
    %1210 = vmatpush2.bf16.xpose.msra.mxu0 0
    %1211 = vmatprep.subr.bf16.mxu0 0
    %1212 = vmatpush2.bf16.xpose.msra.mxu0 0
    %1213 = vmatprep.mubr.bf16.mxu0 0
    %1214 = vmatmul.mubr.bf16.gmra.mxu0 %v1176
    %v1215 = vpop.f32.mrf.mxu0
    %v1216 = vadd.f32 0.0, %v1215
    %v1217 = vpop.f32.mrf.mxu0
    %v1218 = vpop.f32.mrf.mxu0
    %v1219 = vpop.f32.mrf.mxu0
    %1220 = vdwg.mxu0
    %v1222 = vsel %vm1082, %v469, 0
    %v1225 = vsel %vm1082, %v773, 0
    %1227 = vmatprep.subr.bf16.mxu0 0
    %1228 = vmatpush1.bf16.xpose.msra.mxu0 0
    %1229 = vmatprep.subr.bf16.mxu0 0
    %1230 = vmatpush1.bf16.xpose.msra.mxu0 0
    %1231 = vmatprep.subr.bf16.mxu0 0
    %1232 = vmatpush1.bf16.xpose.msra.mxu0 0
    %1233 = vmatprep.subr.bf16.mxu0 0
    %1234 = vmatpush1.bf16.xpose.msra.mxu0 0
    %1235 = vmatprep.subr.bf16.mxu0 0
    %1236 = vmatpush1.bf16.xpose.msra.mxu0 0
    %1237 = vmatprep.subr.bf16.mxu0 0
    %1238 = vmatpush1.bf16.xpose.msra.mxu0 0
    %1239 = vmatprep.subr.bf16.mxu0 0
    %1240 = vmatpush1.bf16.xpose.msra.mxu0 0
    %1241 = vmatprep.subr.bf16.mxu0 0
    %1242 = vmatpush1.bf16.xpose.msra.mxu0 %v1225
    %1243 = vmatprep.subr.bf16.mxu0 0
    %1244 = vmatpush2.bf16.xpose.msra.mxu0 0
    %1245 = vmatprep.subr.bf16.mxu0 0
    %1246 = vmatpush2.bf16.xpose.msra.mxu0 0
    %1247 = vmatprep.subr.bf16.mxu0 0
    %1248 = vmatpush2.bf16.xpose.msra.mxu0 0
    %1249 = vmatprep.subr.bf16.mxu0 0
    %1250 = vmatpush2.bf16.xpose.msra.mxu0 0
    %1251 = vmatprep.subr.bf16.mxu0 0
    %1252 = vmatpush2.bf16.xpose.msra.mxu0 0
    %1253 = vmatprep.subr.bf16.mxu0 0
    %1254 = vmatpush2.bf16.xpose.msra.mxu0 0
    %1255 = vmatprep.subr.bf16.mxu0 0
    %1256 = vmatpush2.bf16.xpose.msra.mxu0 0
    %1257 = vmatprep.subr.bf16.mxu0 0
    %1258 = vmatpush2.bf16.xpose.msra.mxu0 0
    %1259 = vmatprep.mubr.bf16.mxu0 0
    %1260 = vmatmul.mubr.bf16.gmra.mxu0 %v1222
    %v1261 = vpop.f32.mrf.mxu0
    %v1262 = vadd.f32 0.0, %v1261
    %v1263 = vpop.f32.mrf.mxu0
    %v1264 = vpop.f32.mrf.mxu0
    %v1265 = vpop.f32.mrf.mxu0
    %1266 = vdwg.mxu0
    %v1268 = vsel %vm1082, %v470, 0
    %v1271 = vsel %vm1082, %v774, 0
    %1273 = vmatprep.subr.bf16.mxu0 0
    %1274 = vmatpush1.bf16.xpose.msra.mxu0 0
    %1275 = vmatprep.subr.bf16.mxu0 0
    %1276 = vmatpush1.bf16.xpose.msra.mxu0 0
    %1277 = vmatprep.subr.bf16.mxu0 0
    %1278 = vmatpush1.bf16.xpose.msra.mxu0 0
    %1279 = vmatprep.subr.bf16.mxu0 0
    %1280 = vmatpush1.bf16.xpose.msra.mxu0 0
    %1281 = vmatprep.subr.bf16.mxu0 0
    %1282 = vmatpush1.bf16.xpose.msra.mxu0 0
    %1283 = vmatprep.subr.bf16.mxu0 0
    %1284 = vmatpush1.bf16.xpose.msra.mxu0 0
    %1285 = vmatprep.subr.bf16.mxu0 0
    %1286 = vmatpush1.bf16.xpose.msra.mxu0 0
    %1287 = vmatprep.subr.bf16.mxu0 0
    %1288 = vmatpush1.bf16.xpose.msra.mxu0 %v1271
    %1289 = vmatprep.subr.bf16.mxu0 0
    %1290 = vmatpush2.bf16.xpose.msra.mxu0 0
    %1291 = vmatprep.subr.bf16.mxu0 0
    %1292 = vmatpush2.bf16.xpose.msra.mxu0 0
    %1293 = vmatprep.subr.bf16.mxu0 0
    %1294 = vmatpush2.bf16.xpose.msra.mxu0 0
    %1295 = vmatprep.subr.bf16.mxu0 0
    %1296 = vmatpush2.bf16.xpose.msra.mxu0 0
    %1297 = vmatprep.subr.bf16.mxu0 0
    %1298 = vmatpush2.bf16.xpose.msra.mxu0 0
    %1299 = vmatprep.subr.bf16.mxu0 0
    %1300 = vmatpush2.bf16.xpose.msra.mxu0 0
    %1301 = vmatprep.subr.bf16.mxu0 0
    %1302 = vmatpush2.bf16.xpose.msra.mxu0 0
    %1303 = vmatprep.subr.bf16.mxu0 0
    %1304 = vmatpush2.bf16.xpose.msra.mxu0 0
    %1305 = vmatprep.mubr.bf16.mxu0 0
    %1306 = vmatmul.mubr.bf16.gmra.mxu0 %v1268
    %v1307 = vpop.f32.mrf.mxu0
    %v1308 = vadd.f32 0.0, %v1307
    %v1309 = vpop.f32.mrf.mxu0
    %v1310 = vpop.f32.mrf.mxu0
    %v1311 = vpop.f32.mrf.mxu0
    %1312 = vdwg.mxu0
    %v1314 = vsel %vm1082, %v471, 0
    %v1317 = vsel %vm1082, %v775, 0
    %1319 = vmatprep.subr.bf16.mxu0 0
    %1320 = vmatpush1.bf16.xpose.msra.mxu0 0
    %1321 = vmatprep.subr.bf16.mxu0 0
    %1322 = vmatpush1.bf16.xpose.msra.mxu0 0
    %1323 = vmatprep.subr.bf16.mxu0 0
    %1324 = vmatpush1.bf16.xpose.msra.mxu0 0
    %1325 = vmatprep.subr.bf16.mxu0 0
    %1326 = vmatpush1.bf16.xpose.msra.mxu0 0
    %1327 = vmatprep.subr.bf16.mxu0 0
    %1328 = vmatpush1.bf16.xpose.msra.mxu0 0
    %1329 = vmatprep.subr.bf16.mxu0 0
    %1330 = vmatpush1.bf16.xpose.msra.mxu0 0
    %1331 = vmatprep.subr.bf16.mxu0 0
    %1332 = vmatpush1.bf16.xpose.msra.mxu0 0
    %1333 = vmatprep.subr.bf16.mxu0 0
    %1334 = vmatpush1.bf16.xpose.msra.mxu0 %v1317
    %1335 = vmatprep.subr.bf16.mxu0 0
    %1336 = vmatpush2.bf16.xpose.msra.mxu0 0
    %1337 = vmatprep.subr.bf16.mxu0 0
    %1338 = vmatpush2.bf16.xpose.msra.mxu0 0
    %1339 = vmatprep.subr.bf16.mxu0 0
    %1340 = vmatpush2.bf16.xpose.msra.mxu0 0
    %1341 = vmatprep.subr.bf16.mxu0 0
    %1342 = vmatpush2.bf16.xpose.msra.mxu0 0
    %1343 = vmatprep.subr.bf16.mxu0 0
    %1344 = vmatpush2.bf16.xpose.msra.mxu0 0
    %1345 = vmatprep.subr.bf16.mxu0 0
    %1346 = vmatpush2.bf16.xpose.msra.mxu0 0
    %1347 = vmatprep.subr.bf16.mxu0 0
    %1348 = vmatpush2.bf16.xpose.msra.mxu0 0
    %1349 = vmatprep.subr.bf16.mxu0 0
    %1350 = vmatpush2.bf16.xpose.msra.mxu0 0
    %1351 = vmatprep.mubr.bf16.mxu0 0
    %1352 = vmatmul.mubr.bf16.gmra.mxu0 %v1314
    %v1353 = vpop.f32.mrf.mxu0
    %v1354 = vadd.f32 0.0, %v1353
    %v1355 = vpop.f32.mrf.mxu0
    %v1356 = vpop.f32.mrf.mxu0
    %v1357 = vpop.f32.mrf.mxu0
    %1358 = vdwg.mxu0
    %v1360 = vsel %vm1082, %v472, 0
    %v1363 = vsel %vm1082, %v776, 0
    %1365 = vmatprep.subr.bf16.mxu0 0
    %1366 = vmatpush1.bf16.xpose.msra.mxu0 0
    %1367 = vmatprep.subr.bf16.mxu0 0
    %1368 = vmatpush1.bf16.xpose.msra.mxu0 0
    %1369 = vmatprep.subr.bf16.mxu0 0
    %1370 = vmatpush1.bf16.xpose.msra.mxu0 0
    %1371 = vmatprep.subr.bf16.mxu0 0
    %1372 = vmatpush1.bf16.xpose.msra.mxu0 0
    %1373 = vmatprep.subr.bf16.mxu0 0
    %1374 = vmatpush1.bf16.xpose.msra.mxu0 0
    %1375 = vmatprep.subr.bf16.mxu0 0
    %1376 = vmatpush1.bf16.xpose.msra.mxu0 0
    %1377 = vmatprep.subr.bf16.mxu0 0
    %1378 = vmatpush1.bf16.xpose.msra.mxu0 0
    %1379 = vmatprep.subr.bf16.mxu0 0
    %1380 = vmatpush1.bf16.xpose.msra.mxu0 %v1363
    %1381 = vmatprep.subr.bf16.mxu0 0
    %1382 = vmatpush2.bf16.xpose.msra.mxu0 0
    %1383 = vmatprep.subr.bf16.mxu0 0
    %1384 = vmatpush2.bf16.xpose.msra.mxu0 0
    %1385 = vmatprep.subr.bf16.mxu0 0
    %1386 = vmatpush2.bf16.xpose.msra.mxu0 0
    %1387 = vmatprep.subr.bf16.mxu0 0
    %1388 = vmatpush2.bf16.xpose.msra.mxu0 0
    %1389 = vmatprep.subr.bf16.mxu0 0
    %1390 = vmatpush2.bf16.xpose.msra.mxu0 0
    %1391 = vmatprep.subr.bf16.mxu0 0
    %1392 = vmatpush2.bf16.xpose.msra.mxu0 0
    %1393 = vmatprep.subr.bf16.mxu0 0
    %1394 = vmatpush2.bf16.xpose.msra.mxu0 0
    %1395 = vmatprep.subr.bf16.mxu0 0
    %1396 = vmatpush2.bf16.xpose.msra.mxu0 0
    %1397 = vmatprep.mubr.bf16.mxu0 0
    %1398 = vmatmul.mubr.bf16.gmra.mxu0 %v1360
    %v1399 = vpop.f32.mrf.mxu0
    %v1400 = vadd.f32 0.0, %v1399
    %v1401 = vpop.f32.mrf.mxu0
    %v1402 = vpop.f32.mrf.mxu0
    %v1403 = vpop.f32.mrf.mxu0
    %1404 = vdwg.mxu0
    %v1406 = vsel %vm1082, %v473, 0
    %v1409 = vsel %vm1082, %v777, 0
    %1411 = vmatprep.subr.bf16.mxu0 0
    %1412 = vmatpush1.bf16.xpose.msra.mxu0 0
    %1413 = vmatprep.subr.bf16.mxu0 0
    %1414 = vmatpush1.bf16.xpose.msra.mxu0 0
    %1415 = vmatprep.subr.bf16.mxu0 0
    %1416 = vmatpush1.bf16.xpose.msra.mxu0 0
    %1417 = vmatprep.subr.bf16.mxu0 0
    %1418 = vmatpush1.bf16.xpose.msra.mxu0 0
    %1419 = vmatprep.subr.bf16.mxu0 0
    %1420 = vmatpush1.bf16.xpose.msra.mxu0 0
    %1421 = vmatprep.subr.bf16.mxu0 0
    %1422 = vmatpush1.bf16.xpose.msra.mxu0 0
    %1423 = vmatprep.subr.bf16.mxu0 0
    %1424 = vmatpush1.bf16.xpose.msra.mxu0 0
    %1425 = vmatprep.subr.bf16.mxu0 0
    %1426 = vmatpush1.bf16.xpose.msra.mxu0 %v1409
    %1427 = vmatprep.subr.bf16.mxu0 0
    %1428 = vmatpush2.bf16.xpose.msra.mxu0 0
    %1429 = vmatprep.subr.bf16.mxu0 0
    %1430 = vmatpush2.bf16.xpose.msra.mxu0 0
    %1431 = vmatprep.subr.bf16.mxu0 0
    %1432 = vmatpush2.bf16.xpose.msra.mxu0 0
    %1433 = vmatprep.subr.bf16.mxu0 0
    %1434 = vmatpush2.bf16.xpose.msra.mxu0 0
    %1435 = vmatprep.subr.bf16.mxu0 0
    %1436 = vmatpush2.bf16.xpose.msra.mxu0 0
    %1437 = vmatprep.subr.bf16.mxu0 0
    %1438 = vmatpush2.bf16.xpose.msra.mxu0 0
    %1439 = vmatprep.subr.bf16.mxu0 0
    %1440 = vmatpush2.bf16.xpose.msra.mxu0 0
    %1441 = vmatprep.subr.bf16.mxu0 0
    %1442 = vmatpush2.bf16.xpose.msra.mxu0 0
    %1443 = vmatprep.mubr.bf16.mxu0 0
    %1444 = vmatmul.mubr.bf16.gmra.mxu0 %v1406
    %v1445 = vpop.f32.mrf.mxu0
    %v1446 = vadd.f32 0.0, %v1445
    %v1447 = vpop.f32.mrf.mxu0
    %v1448 = vpop.f32.mrf.mxu0
    %v1449 = vpop.f32.mrf.mxu0
    %1450 = vdwg.mxu0
    %v1451 = vmul.f32 %v1124, 0.35355338
    %v1452 = vmul.f32 %v1170, 0.35355338
    %v1453 = vmul.f32 %v1216, 0.35355338
    %v1454 = vmul.f32 %v1262, 0.35355338
    %v1455 = vmul.f32 %v1308, 0.35355338
    %v1456 = vmul.f32 %v1354, 0.35355338
    %v1457 = vmul.f32 %v1400, 0.35355338
    %v1458 = vmul.f32 %v1446, 0.35355338
    %v1459 = vsel %vm1082, %v1451, -inf
    %1460 = vmax.xlane.f32.xlu0 %v1459
    %v1461 = vpop.xlane.xlu0 %1460
    %v1462 = vsel %vm1082, %v1452, -inf
    %1463 = vmax.xlane.f32.xlu0 %v1462
    %v1464 = vpop.xlane.xlu0 %1463
    %v1465 = vsel %vm1082, %v1453, -inf
    %1466 = vmax.xlane.f32.xlu0 %v1465
    %v1467 = vpop.xlane.xlu0 %1466
    %v1468 = vsel %vm1082, %v1454, -inf
    %1469 = vmax.xlane.f32.xlu0 %v1468
    %v1470 = vpop.xlane.xlu0 %1469
    %v1471 = vsel %vm1082, %v1455, -inf
    %1472 = vmax.xlane.f32.xlu0 %v1471
    %v1473 = vpop.xlane.xlu0 %1472
    %v1474 = vsel %vm1082, %v1456, -inf
    %1475 = vmax.xlane.f32.xlu0 %v1474
    %v1476 = vpop.xlane.xlu0 %1475
    %v1477 = vsel %vm1082, %v1457, -inf
    %1478 = vmax.xlane.f32.xlu0 %v1477
    %v1479 = vpop.xlane.xlu0 %1478
    %v1480 = vsel %vm1082, %v1458, -inf
    %1481 = vmax.xlane.f32.xlu0 %v1480
    %v1482 = vpop.xlane.xlu0 %1481
    %v1483 = vsub.f32 %v1451, %v1461
    %v1484 = vsub.f32 %v1452, %v1464
    %v1485 = vsub.f32 %v1453, %v1467
    %v1486 = vsub.f32 %v1454, %v1470
    %v1487 = vsub.f32 %v1455, %v1473
    %v1488 = vsub.f32 %v1456, %v1476
    %v1489 = vsub.f32 %v1457, %v1479
    %v1490 = vsub.f32 %v1458, %v1482
    %v1491 = vmul.f32 %v1483, 1.442695
    %v1492 = vpow.pop %v1491
    %v1493 = vmul.f32 %v1484, 1.442695
    %v1494 = vpow.pop %v1493
    %v1495 = vmul.f32 %v1485, 1.442695
    %v1496 = vpow.pop %v1495
    %v1497 = vmul.f32 %v1486, 1.442695
    %v1498 = vpow.pop %v1497
    %v1499 = vmul.f32 %v1487, 1.442695
    %v1500 = vpow.pop %v1499
    %v1501 = vmul.f32 %v1488, 1.442695
    %v1502 = vpow.pop %v1501
    %v1503 = vmul.f32 %v1489, 1.442695
    %v1504 = vpow.pop %v1503
    %v1505 = vmul.f32 %v1490, 1.442695
    %v1506 = vpow.pop %v1505
    %v1507 = vsel %vm1082, %v1492, 0.0
    %1508 = vadd.xlane.f32.xlu0 %v1507
    %v1509 = vpop.xlane.xlu0 %1508
    %v1510 = vsel %vm1082, %v1494, 0.0
    %1511 = vadd.xlane.f32.xlu0 %v1510
    %v1512 = vpop.xlane.xlu0 %1511
    %v1513 = vsel %vm1082, %v1496, 0.0
    %1514 = vadd.xlane.f32.xlu0 %v1513
    %v1515 = vpop.xlane.xlu0 %1514
    %v1516 = vsel %vm1082, %v1498, 0.0
    %1517 = vadd.xlane.f32.xlu0 %v1516
    %v1518 = vpop.xlane.xlu0 %1517
    %v1519 = vsel %vm1082, %v1500, 0.0
    %1520 = vadd.xlane.f32.xlu0 %v1519
    %v1521 = vpop.xlane.xlu0 %1520
    %v1522 = vsel %vm1082, %v1502, 0.0
    %1523 = vadd.xlane.f32.xlu0 %v1522
    %v1524 = vpop.xlane.xlu0 %1523
    %v1525 = vsel %vm1082, %v1504, 0.0
    %1526 = vadd.xlane.f32.xlu0 %v1525
    %v1527 = vpop.xlane.xlu0 %1526
    %v1528 = vsel %vm1082, %v1506, 0.0
    %1529 = vadd.xlane.f32.xlu0 %v1528
    %v1530 = vpop.xlane.xlu0 %1529
    %v1531 = vrcp.pop %v1509
    %v1532 = vrcp.pop %v1512
    %v1533 = vrcp.pop %v1515
    %v1534 = vrcp.pop %v1518
    %v1535 = vrcp.pop %v1521
    %v1536 = vrcp.pop %v1524
    %v1537 = vrcp.pop %v1527
    %v1538 = vrcp.pop %v1530
    %v1539 = vmul.f32 %v1492, %v1531
    %v1540 = vmul.f32 %v1494, %v1532
    %v1541 = vmul.f32 %v1496, %v1533
    %v1542 = vmul.f32 %v1498, %v1534
    %v1543 = vmul.f32 %v1500, %v1535
    %v1544 = vmul.f32 %v1502, %v1536
    %v1545 = vmul.f32 %v1504, %v1537
    %v1546 = vmul.f32 %v1506, %v1538
    %v1547 = vpack.c.bf16 %v1539, %v1539
    %v1548 = vpack.c.bf16 %v1540, %v1540
    %v1549 = vpack.c.bf16 %v1541, %v1541
    %v1550 = vpack.c.bf16 %v1542, %v1542
    %v1551 = vpack.c.bf16 %v1543, %v1543
    %v1552 = vpack.c.bf16 %v1544, %v1544
    %v1553 = vpack.c.bf16 %v1545, %v1545
    %v1554 = vpack.c.bf16 %v1546, %v1546
    %v1556 = vsel %vm1082, %v1547, 0
    %vm1558 = vcmask 1043456
    %v1560 = vsel %vm1558, %v1074, 0
    %1562 = vmatprep.subr.bf16.mxu0 0
    %1563 = vmatpush1.bf16.msra.mxu0 0
    %1564 = vmatprep.subr.bf16.mxu0 0
    %1565 = vmatpush1.bf16.msra.mxu0 0
    %1566 = vmatprep.subr.bf16.mxu0 0
    %1567 = vmatpush1.bf16.msra.mxu0 0
    %1568 = vmatprep.subr.bf16.mxu0 0
    %1569 = vmatpush1.bf16.msra.mxu0 0
    %1570 = vmatprep.subr.bf16.mxu0 0
    %1571 = vmatpush1.bf16.msra.mxu0 0
    %1572 = vmatprep.subr.bf16.mxu0 0
    %1573 = vmatpush1.bf16.msra.mxu0 0
    %1574 = vmatprep.subr.bf16.mxu0 0
    %1575 = vmatpush1.bf16.msra.mxu0 0
    %1576 = vmatprep.subr.bf16.mxu0 0
    %1577 = vmatpush1.bf16.msra.mxu0 %v1560
    %1578 = vmatprep.subr.bf16.mxu0 0
    %1579 = vmatpush2.bf16.msra.mxu0 0
    %1580 = vmatprep.subr.bf16.mxu0 0
    %1581 = vmatpush2.bf16.msra.mxu0 0
    %1582 = vmatprep.subr.bf16.mxu0 0
    %1583 = vmatpush2.bf16.msra.mxu0 0
    %1584 = vmatprep.subr.bf16.mxu0 0
    %1585 = vmatpush2.bf16.msra.mxu0 0
    %1586 = vmatprep.subr.bf16.mxu0 0
    %1587 = vmatpush2.bf16.msra.mxu0 0
    %1588 = vmatprep.subr.bf16.mxu0 0
    %1589 = vmatpush2.bf16.msra.mxu0 0
    %1590 = vmatprep.subr.bf16.mxu0 0
    %1591 = vmatpush2.bf16.msra.mxu0 0
    %1592 = vmatprep.subr.bf16.mxu0 0
    %1593 = vmatpush2.bf16.msra.mxu0 0
    %1594 = vmatprep.mubr.bf16.mxu0 0
    %1595 = vmatmul.mubr.bf16.gmra.mxu0 %v1556
    %v1596 = vpop.f32.mrf.mxu0
    %v1597 = vadd.f32 0.0, %v1596
    %v1598 = vpop.f32.mrf.mxu0
    %v1599 = vpop.f32.mrf.mxu0
    %v1600 = vpop.f32.mrf.mxu0
    %1601 = vdwg.mxu0
    %v1603 = vsel %vm1082, %v1548, 0
    %v1606 = vsel %vm1558, %v1075, 0
    %1608 = vmatprep.subr.bf16.mxu0 0
    %1609 = vmatpush1.bf16.msra.mxu0 0
    %1610 = vmatprep.subr.bf16.mxu0 0
    %1611 = vmatpush1.bf16.msra.mxu0 0
    %1612 = vmatprep.subr.bf16.mxu0 0
    %1613 = vmatpush1.bf16.msra.mxu0 0
    %1614 = vmatprep.subr.bf16.mxu0 0
    %1615 = vmatpush1.bf16.msra.mxu0 0
    %1616 = vmatprep.subr.bf16.mxu0 0
    %1617 = vmatpush1.bf16.msra.mxu0 0
    %1618 = vmatprep.subr.bf16.mxu0 0
    %1619 = vmatpush1.bf16.msra.mxu0 0
    %1620 = vmatprep.subr.bf16.mxu0 0
    %1621 = vmatpush1.bf16.msra.mxu0 0
    %1622 = vmatprep.subr.bf16.mxu0 0
    %1623 = vmatpush1.bf16.msra.mxu0 %v1606
    %1624 = vmatprep.subr.bf16.mxu0 0
    %1625 = vmatpush2.bf16.msra.mxu0 0
    %1626 = vmatprep.subr.bf16.mxu0 0
    %1627 = vmatpush2.bf16.msra.mxu0 0
    %1628 = vmatprep.subr.bf16.mxu0 0
    %1629 = vmatpush2.bf16.msra.mxu0 0
    %1630 = vmatprep.subr.bf16.mxu0 0
    %1631 = vmatpush2.bf16.msra.mxu0 0
    %1632 = vmatprep.subr.bf16.mxu0 0
    %1633 = vmatpush2.bf16.msra.mxu0 0
    %1634 = vmatprep.subr.bf16.mxu0 0
    %1635 = vmatpush2.bf16.msra.mxu0 0
    %1636 = vmatprep.subr.bf16.mxu0 0
    %1637 = vmatpush2.bf16.msra.mxu0 0
    %1638 = vmatprep.subr.bf16.mxu0 0
    %1639 = vmatpush2.bf16.msra.mxu0 0
    %1640 = vmatprep.mubr.bf16.mxu0 0
    %1641 = vmatmul.mubr.bf16.gmra.mxu0 %v1603
    %v1642 = vpop.f32.mrf.mxu0
    %v1643 = vadd.f32 0.0, %v1642
    %v1644 = vpop.f32.mrf.mxu0
    %v1645 = vpop.f32.mrf.mxu0
    %v1646 = vpop.f32.mrf.mxu0
    %1647 = vdwg.mxu0
    %v1649 = vsel %vm1082, %v1549, 0
    %v1652 = vsel %vm1558, %v1076, 0
    %1654 = vmatprep.subr.bf16.mxu0 0
    %1655 = vmatpush1.bf16.msra.mxu0 0
    %1656 = vmatprep.subr.bf16.mxu0 0
    %1657 = vmatpush1.bf16.msra.mxu0 0
    %1658 = vmatprep.subr.bf16.mxu0 0
    %1659 = vmatpush1.bf16.msra.mxu0 0
    %1660 = vmatprep.subr.bf16.mxu0 0
    %1661 = vmatpush1.bf16.msra.mxu0 0
    %1662 = vmatprep.subr.bf16.mxu0 0
    %1663 = vmatpush1.bf16.msra.mxu0 0
    %1664 = vmatprep.subr.bf16.mxu0 0
    %1665 = vmatpush1.bf16.msra.mxu0 0
    %1666 = vmatprep.subr.bf16.mxu0 0
    %1667 = vmatpush1.bf16.msra.mxu0 0
    %1668 = vmatprep.subr.bf16.mxu0 0
    %1669 = vmatpush1.bf16.msra.mxu0 %v1652
    %1670 = vmatprep.subr.bf16.mxu0 0
    %1671 = vmatpush2.bf16.msra.mxu0 0
    %1672 = vmatprep.subr.bf16.mxu0 0
    %1673 = vmatpush2.bf16.msra.mxu0 0
    %1674 = vmatprep.subr.bf16.mxu0 0
    %1675 = vmatpush2.bf16.msra.mxu0 0
    %1676 = vmatprep.subr.bf16.mxu0 0
    %1677 = vmatpush2.bf16.msra.mxu0 0
    %1678 = vmatprep.subr.bf16.mxu0 0
    %1679 = vmatpush2.bf16.msra.mxu0 0
    %1680 = vmatprep.subr.bf16.mxu0 0
    %1681 = vmatpush2.bf16.msra.mxu0 0
    %1682 = vmatprep.subr.bf16.mxu0 0
    %1683 = vmatpush2.bf16.msra.mxu0 0
    %1684 = vmatprep.subr.bf16.mxu0 0
    %1685 = vmatpush2.bf16.msra.mxu0 0
    %1686 = vmatprep.mubr.bf16.mxu0 0
    %1687 = vmatmul.mubr.bf16.gmra.mxu0 %v1649
    %v1688 = vpop.f32.mrf.mxu0
    %v1689 = vadd.f32 0.0, %v1688
    %v1690 = vpop.f32.mrf.mxu0
    %v1691 = vpop.f32.mrf.mxu0
    %v1692 = vpop.f32.mrf.mxu0
    %1693 = vdwg.mxu0
    %v1695 = vsel %vm1082, %v1550, 0
    %v1698 = vsel %vm1558, %v1077, 0
    %1700 = vmatprep.subr.bf16.mxu0 0
    %1701 = vmatpush1.bf16.msra.mxu0 0
    %1702 = vmatprep.subr.bf16.mxu0 0
    %1703 = vmatpush1.bf16.msra.mxu0 0
    %1704 = vmatprep.subr.bf16.mxu0 0
    %1705 = vmatpush1.bf16.msra.mxu0 0
    %1706 = vmatprep.subr.bf16.mxu0 0
    %1707 = vmatpush1.bf16.msra.mxu0 0
    %1708 = vmatprep.subr.bf16.mxu0 0
    %1709 = vmatpush1.bf16.msra.mxu0 0
    %1710 = vmatprep.subr.bf16.mxu0 0
    %1711 = vmatpush1.bf16.msra.mxu0 0
    %1712 = vmatprep.subr.bf16.mxu0 0
    %1713 = vmatpush1.bf16.msra.mxu0 0
    %1714 = vmatprep.subr.bf16.mxu0 0
    %1715 = vmatpush1.bf16.msra.mxu0 %v1698
    %1716 = vmatprep.subr.bf16.mxu0 0
    %1717 = vmatpush2.bf16.msra.mxu0 0
    %1718 = vmatprep.subr.bf16.mxu0 0
    %1719 = vmatpush2.bf16.msra.mxu0 0
    %1720 = vmatprep.subr.bf16.mxu0 0
    %1721 = vmatpush2.bf16.msra.mxu0 0
    %1722 = vmatprep.subr.bf16.mxu0 0
    %1723 = vmatpush2.bf16.msra.mxu0 0
    %1724 = vmatprep.subr.bf16.mxu0 0
    %1725 = vmatpush2.bf16.msra.mxu0 0
    %1726 = vmatprep.subr.bf16.mxu0 0
    %1727 = vmatpush2.bf16.msra.mxu0 0
    %1728 = vmatprep.subr.bf16.mxu0 0
    %1729 = vmatpush2.bf16.msra.mxu0 0
    %1730 = vmatprep.subr.bf16.mxu0 0
    %1731 = vmatpush2.bf16.msra.mxu0 0
    %1732 = vmatprep.mubr.bf16.mxu0 0
    %1733 = vmatmul.mubr.bf16.gmra.mxu0 %v1695
    %v1734 = vpop.f32.mrf.mxu0
    %v1735 = vadd.f32 0.0, %v1734
    %v1736 = vpop.f32.mrf.mxu0
    %v1737 = vpop.f32.mrf.mxu0
    %v1738 = vpop.f32.mrf.mxu0
    %1739 = vdwg.mxu0
    %v1741 = vsel %vm1082, %v1551, 0
    %v1744 = vsel %vm1558, %v1078, 0
    %1746 = vmatprep.subr.bf16.mxu0 0
    %1747 = vmatpush1.bf16.msra.mxu0 0
    %1748 = vmatprep.subr.bf16.mxu0 0
    %1749 = vmatpush1.bf16.msra.mxu0 0
    %1750 = vmatprep.subr.bf16.mxu0 0
    %1751 = vmatpush1.bf16.msra.mxu0 0
    %1752 = vmatprep.subr.bf16.mxu0 0
    %1753 = vmatpush1.bf16.msra.mxu0 0
    %1754 = vmatprep.subr.bf16.mxu0 0
    %1755 = vmatpush1.bf16.msra.mxu0 0
    %1756 = vmatprep.subr.bf16.mxu0 0
    %1757 = vmatpush1.bf16.msra.mxu0 0
    %1758 = vmatprep.subr.bf16.mxu0 0
    %1759 = vmatpush1.bf16.msra.mxu0 0
    %1760 = vmatprep.subr.bf16.mxu0 0
    %1761 = vmatpush1.bf16.msra.mxu0 %v1744
    %1762 = vmatprep.subr.bf16.mxu0 0
    %1763 = vmatpush2.bf16.msra.mxu0 0
    %1764 = vmatprep.subr.bf16.mxu0 0
    %1765 = vmatpush2.bf16.msra.mxu0 0
    %1766 = vmatprep.subr.bf16.mxu0 0
    %1767 = vmatpush2.bf16.msra.mxu0 0
    %1768 = vmatprep.subr.bf16.mxu0 0
    %1769 = vmatpush2.bf16.msra.mxu0 0
    %1770 = vmatprep.subr.bf16.mxu0 0
    %1771 = vmatpush2.bf16.msra.mxu0 0
    %1772 = vmatprep.subr.bf16.mxu0 0
    %1773 = vmatpush2.bf16.msra.mxu0 0
    %1774 = vmatprep.subr.bf16.mxu0 0
    %1775 = vmatpush2.bf16.msra.mxu0 0
    %1776 = vmatprep.subr.bf16.mxu0 0
    %1777 = vmatpush2.bf16.msra.mxu0 0
    %1778 = vmatprep.mubr.bf16.mxu0 0
    %1779 = vmatmul.mubr.bf16.gmra.mxu0 %v1741
    %v1780 = vpop.f32.mrf.mxu0
    %v1781 = vadd.f32 0.0, %v1780
    %v1782 = vpop.f32.mrf.mxu0
    %v1783 = vpop.f32.mrf.mxu0
    %v1784 = vpop.f32.mrf.mxu0
    %1785 = vdwg.mxu0
    %v1787 = vsel %vm1082, %v1552, 0
    %v1790 = vsel %vm1558, %v1079, 0
    %1792 = vmatprep.subr.bf16.mxu0 0
    %1793 = vmatpush1.bf16.msra.mxu0 0
    %1794 = vmatprep.subr.bf16.mxu0 0
    %1795 = vmatpush1.bf16.msra.mxu0 0
    %1796 = vmatprep.subr.bf16.mxu0 0
    %1797 = vmatpush1.bf16.msra.mxu0 0
    %1798 = vmatprep.subr.bf16.mxu0 0
    %1799 = vmatpush1.bf16.msra.mxu0 0
    %1800 = vmatprep.subr.bf16.mxu0 0
    %1801 = vmatpush1.bf16.msra.mxu0 0
    %1802 = vmatprep.subr.bf16.mxu0 0
    %1803 = vmatpush1.bf16.msra.mxu0 0
    %1804 = vmatprep.subr.bf16.mxu0 0
    %1805 = vmatpush1.bf16.msra.mxu0 0
    %1806 = vmatprep.subr.bf16.mxu0 0
    %1807 = vmatpush1.bf16.msra.mxu0 %v1790
    %1808 = vmatprep.subr.bf16.mxu0 0
    %1809 = vmatpush2.bf16.msra.mxu0 0
    %1810 = vmatprep.subr.bf16.mxu0 0
    %1811 = vmatpush2.bf16.msra.mxu0 0
    %1812 = vmatprep.subr.bf16.mxu0 0
    %1813 = vmatpush2.bf16.msra.mxu0 0
    %1814 = vmatprep.subr.bf16.mxu0 0
    %1815 = vmatpush2.bf16.msra.mxu0 0
    %1816 = vmatprep.subr.bf16.mxu0 0
    %1817 = vmatpush2.bf16.msra.mxu0 0
    %1818 = vmatprep.subr.bf16.mxu0 0
    %1819 = vmatpush2.bf16.msra.mxu0 0
    %1820 = vmatprep.subr.bf16.mxu0 0
    %1821 = vmatpush2.bf16.msra.mxu0 0
    %1822 = vmatprep.subr.bf16.mxu0 0
    %1823 = vmatpush2.bf16.msra.mxu0 0
    %1824 = vmatprep.mubr.bf16.mxu0 0
    %1825 = vmatmul.mubr.bf16.gmra.mxu0 %v1787
    %v1826 = vpop.f32.mrf.mxu0
    %v1827 = vadd.f32 0.0, %v1826
    %v1828 = vpop.f32.mrf.mxu0
    %v1829 = vpop.f32.mrf.mxu0
    %v1830 = vpop.f32.mrf.mxu0
    %1831 = vdwg.mxu0
    %v1833 = vsel %vm1082, %v1553, 0
    %v1836 = vsel %vm1558, %v1080, 0
    %1838 = vmatprep.subr.bf16.mxu0 0
    %1839 = vmatpush1.bf16.msra.mxu0 0
    %1840 = vmatprep.subr.bf16.mxu0 0
    %1841 = vmatpush1.bf16.msra.mxu0 0
    %1842 = vmatprep.subr.bf16.mxu0 0
    %1843 = vmatpush1.bf16.msra.mxu0 0
    %1844 = vmatprep.subr.bf16.mxu0 0
    %1845 = vmatpush1.bf16.msra.mxu0 0
    %1846 = vmatprep.subr.bf16.mxu0 0
    %1847 = vmatpush1.bf16.msra.mxu0 0
    %1848 = vmatprep.subr.bf16.mxu0 0
    %1849 = vmatpush1.bf16.msra.mxu0 0
    %1850 = vmatprep.subr.bf16.mxu0 0
    %1851 = vmatpush1.bf16.msra.mxu0 0
    %1852 = vmatprep.subr.bf16.mxu0 0
    %1853 = vmatpush1.bf16.msra.mxu0 %v1836
    %1854 = vmatprep.subr.bf16.mxu0 0
    %1855 = vmatpush2.bf16.msra.mxu0 0
    %1856 = vmatprep.subr.bf16.mxu0 0
    %1857 = vmatpush2.bf16.msra.mxu0 0
    %1858 = vmatprep.subr.bf16.mxu0 0
    %1859 = vmatpush2.bf16.msra.mxu0 0
    %1860 = vmatprep.subr.bf16.mxu0 0
    %1861 = vmatpush2.bf16.msra.mxu0 0
    %1862 = vmatprep.subr.bf16.mxu0 0
    %1863 = vmatpush2.bf16.msra.mxu0 0
    %1864 = vmatprep.subr.bf16.mxu0 0
    %1865 = vmatpush2.bf16.msra.mxu0 0
    %1866 = vmatprep.subr.bf16.mxu0 0
    %1867 = vmatpush2.bf16.msra.mxu0 0
    %1868 = vmatprep.subr.bf16.mxu0 0
    %1869 = vmatpush2.bf16.msra.mxu0 0
    %1870 = vmatprep.mubr.bf16.mxu0 0
    %1871 = vmatmul.mubr.bf16.gmra.mxu0 %v1833
    %v1872 = vpop.f32.mrf.mxu0
    %v1873 = vadd.f32 0.0, %v1872
    %v1874 = vpop.f32.mrf.mxu0
    %v1875 = vpop.f32.mrf.mxu0
    %v1876 = vpop.f32.mrf.mxu0
    %1877 = vdwg.mxu0
    %v1879 = vsel %vm1082, %v1554, 0
    %v1882 = vsel %vm1558, %v1081, 0
    %1884 = vmatprep.subr.bf16.mxu0 0
    %1885 = vmatpush1.bf16.msra.mxu0 0
    %1886 = vmatprep.subr.bf16.mxu0 0
    %1887 = vmatpush1.bf16.msra.mxu0 0
    %1888 = vmatprep.subr.bf16.mxu0 0
    %1889 = vmatpush1.bf16.msra.mxu0 0
    %1890 = vmatprep.subr.bf16.mxu0 0
    %1891 = vmatpush1.bf16.msra.mxu0 0
    %1892 = vmatprep.subr.bf16.mxu0 0
    %1893 = vmatpush1.bf16.msra.mxu0 0
    %1894 = vmatprep.subr.bf16.mxu0 0
    %1895 = vmatpush1.bf16.msra.mxu0 0
    %1896 = vmatprep.subr.bf16.mxu0 0
    %1897 = vmatpush1.bf16.msra.mxu0 0
    %1898 = vmatprep.subr.bf16.mxu0 0
    %1899 = vmatpush1.bf16.msra.mxu0 %v1882
    %1900 = vmatprep.subr.bf16.mxu0 0
    %1901 = vmatpush2.bf16.msra.mxu0 0
    %1902 = vmatprep.subr.bf16.mxu0 0
    %1903 = vmatpush2.bf16.msra.mxu0 0
    %1904 = vmatprep.subr.bf16.mxu0 0
    %1905 = vmatpush2.bf16.msra.mxu0 0
    %1906 = vmatprep.subr.bf16.mxu0 0
    %1907 = vmatpush2.bf16.msra.mxu0 0
    %1908 = vmatprep.subr.bf16.mxu0 0
    %1909 = vmatpush2.bf16.msra.mxu0 0
    %1910 = vmatprep.subr.bf16.mxu0 0
    %1911 = vmatpush2.bf16.msra.mxu0 0
    %1912 = vmatprep.subr.bf16.mxu0 0
    %1913 = vmatpush2.bf16.msra.mxu0 0
    %1914 = vmatprep.subr.bf16.mxu0 0
    %1915 = vmatpush2.bf16.msra.mxu0 0
    %1916 = vmatprep.mubr.bf16.mxu0 0
    %1917 = vmatmul.mubr.bf16.gmra.mxu0 %v1879
    %v1918 = vpop.f32.mrf.mxu0
    %v1919 = vadd.f32 0.0, %v1918
    %v1920 = vpop.f32.mrf.mxu0
    %v1921 = vpop.f32.mrf.mxu0
    %v1922 = vpop.f32.mrf.mxu0
    %1923 = vdwg.mxu0
    %v1924 = vcombine.low %v1597, %v1689
    %v1925 = vcombine.high %v1597, %v1689
    %v1927 = vunpack.c.l.s4 1983009808
    %v1928 = vunpack.c.0.s8 %v1927
    %v1929 = vlaneseq
    %v1930 = vshrl.u32 %v1929, 7
    %v1931 = vsub.s32 %v1928, %v1930
    %v1932 = vrot.slane %v1924, %v1931
    %v1934 = vunpack.c.l.s4 1983009808
    %v1935 = vunpack.c.0.s8 %v1934
    %v1936 = vlaneseq
    %v1937 = vshrl.u32 %v1936, 7
    %v1938 = vsub.s32 %v1935, %v1937
    %v1939 = vrot.slane %v1925, %v1938
    %v1940 = vcombine.low %v1643, %v1735
    %v1941 = vcombine.high %v1643, %v1735
    %v1943 = vunpack.c.l.s4 1983009808
    %v1944 = vunpack.c.0.s8 %v1943
    %v1945 = vlaneseq
    %v1946 = vshrl.u32 %v1945, 7
    %v1947 = vsub.s32 %v1944, %v1946
    %v1948 = vrot.slane %v1940, %v1947
    %v1950 = vunpack.c.l.s4 1983009808
    %v1951 = vunpack.c.0.s8 %v1950
    %v1952 = vlaneseq
    %v1953 = vshrl.u32 %v1952, 7
    %v1954 = vsub.s32 %v1951, %v1953
    %v1955 = vrot.slane %v1941, %v1954
    %v1956 = vcombine.low %v1932, %v1948
    %v1957 = vcombine.high %v1932, %v1948
    %v1959 = vunpack.c.l.s4 1934713408
    %v1960 = vunpack.c.0.s8 %v1959
    %v1961 = vlaneseq
    %v1962 = vshrl.u32 %v1961, 7
    %v1963 = vsub.s32 %v1960, %v1962
    %v1964 = vrot.slane %v1956, %v1963
    %v1966 = vunpack.c.l.s4 1934713408
    %v1967 = vunpack.c.0.s8 %v1966
    %v1968 = vlaneseq
    %v1969 = vshrl.u32 %v1968, 7
    %v1970 = vsub.s32 %v1967, %v1969
    %v1971 = vrot.slane %v1957, %v1970
    %v1972 = vcombine.low %v1939, %v1955
    %v1973 = vcombine.high %v1939, %v1955
    %v1975 = vunpack.c.l.s4 1934713408
    %v1976 = vunpack.c.0.s8 %v1975
    %v1977 = vlaneseq
    %v1978 = vshrl.u32 %v1977, 7
    %v1979 = vsub.s32 %v1976, %v1978
    %v1980 = vrot.slane %v1972, %v1979
    %v1982 = vunpack.c.l.s4 1934713408
    %v1983 = vunpack.c.0.s8 %v1982
    %v1984 = vlaneseq
    %v1985 = vshrl.u32 %v1984, 7
    %v1986 = vsub.s32 %v1983, %v1985
    %v1987 = vrot.slane %v1973, %v1986
    %v1988 = vcombine.high %v1964, 0.0
    %v1989 = vcombine.high %v1971, 0.0
    %v1990 = vcombine.high %v1980, 0.0
    %v1991 = vcombine.high %v1987, 0.0
    %v1992 = vcombine.low %v1781, %v1873
    %v1993 = vcombine.high %v1781, %v1873
    %v1995 = vunpack.c.l.s4 1983009808
    %v1996 = vunpack.c.0.s8 %v1995
    %v1997 = vlaneseq
    %v1998 = vshrl.u32 %v1997, 7
    %v1999 = vsub.s32 %v1996, %v1998
    %v2000 = vrot.slane %v1992, %v1999
    %v2002 = vunpack.c.l.s4 1983009808
    %v2003 = vunpack.c.0.s8 %v2002
    %v2004 = vlaneseq
    %v2005 = vshrl.u32 %v2004, 7
    %v2006 = vsub.s32 %v2003, %v2005
    %v2007 = vrot.slane %v1993, %v2006
    %v2008 = vcombine.low %v1827, %v1919
    %v2009 = vcombine.high %v1827, %v1919
    %v2011 = vunpack.c.l.s4 1983009808
    %v2012 = vunpack.c.0.s8 %v2011
    %v2013 = vlaneseq
    %v2014 = vshrl.u32 %v2013, 7
    %v2015 = vsub.s32 %v2012, %v2014
    %v2016 = vrot.slane %v2008, %v2015
    %v2018 = vunpack.c.l.s4 1983009808
    %v2019 = vunpack.c.0.s8 %v2018
    %v2020 = vlaneseq
    %v2021 = vshrl.u32 %v2020, 7
    %v2022 = vsub.s32 %v2019, %v2021
    %v2023 = vrot.slane %v2009, %v2022
    %v2024 = vcombine.low %v2000, %v2016
    %v2025 = vcombine.high %v2000, %v2016
    %v2027 = vunpack.c.l.s4 1934713408
    %v2028 = vunpack.c.0.s8 %v2027
    %v2029 = vlaneseq
    %v2030 = vshrl.u32 %v2029, 7
    %v2031 = vsub.s32 %v2028, %v2030
    %v2032 = vrot.slane %v2024, %v2031
    %v2034 = vunpack.c.l.s4 1934713408
    %v2035 = vunpack.c.0.s8 %v2034
    %v2036 = vlaneseq
    %v2037 = vshrl.u32 %v2036, 7
    %v2038 = vsub.s32 %v2035, %v2037
    %v2039 = vrot.slane %v2025, %v2038
    %v2040 = vcombine.low %v2007, %v2023
    %v2041 = vcombine.high %v2007, %v2023
    %v2043 = vunpack.c.l.s4 1934713408
    %v2044 = vunpack.c.0.s8 %v2043
    %v2045 = vlaneseq
    %v2046 = vshrl.u32 %v2045, 7
    %v2047 = vsub.s32 %v2044, %v2046
    %v2048 = vrot.slane %v2040, %v2047
    %v2050 = vunpack.c.l.s4 1934713408
    %v2051 = vunpack.c.0.s8 %v2050
    %v2052 = vlaneseq
    %v2053 = vshrl.u32 %v2052, 7
    %v2054 = vsub.s32 %v2051, %v2053
    %v2055 = vrot.slane %v2041, %v2054
    %v2056 = vcombine.high %v2032, 0.0
    %v2057 = vcombine.high %v2039, 0.0
    %v2058 = vcombine.high %v2048, 0.0
    %v2059 = vcombine.high %v2055, 0.0
    %v2060 = vcombine.low %v1964, %v1971
    %v2062 = vunpack.c.l.s4 1983009808
    %v2063 = vunpack.c.0.s8 %v2062
    %v2064 = vlaneseq
    %v2065 = vshrl.u32 %v2064, 7
    %v2066 = vsub.s32 %v2063, %v2065
    %v2067 = vrot.slane %v2060, %v2066
    %v2068 = vcombine.low %v1988, %v1989
    %v2070 = vunpack.c.l.s4 1983009808
    %v2071 = vunpack.c.0.s8 %v2070
    %v2072 = vlaneseq
    %v2073 = vshrl.u32 %v2072, 7
    %v2074 = vsub.s32 %v2071, %v2073
    %v2075 = vrot.slane %v2068, %v2074
    %v2076 = vcombine.low %v1980, %v1987
    %v2078 = vunpack.c.l.s4 1983009808
    %v2079 = vunpack.c.0.s8 %v2078
    %v2080 = vlaneseq
    %v2081 = vshrl.u32 %v2080, 7
    %v2082 = vsub.s32 %v2079, %v2081
    %v2083 = vrot.slane %v2076, %v2082
    %v2084 = vcombine.low %v1990, %v1991
    %v2086 = vunpack.c.l.s4 1983009808
    %v2087 = vunpack.c.0.s8 %v2086
    %v2088 = vlaneseq
    %v2089 = vshrl.u32 %v2088, 7
    %v2090 = vsub.s32 %v2087, %v2089
    %v2091 = vrot.slane %v2084, %v2090
    %v2092 = vcombine.low %v2067, %v2075
    %v2093 = vcombine.high %v2067, %v2075
    %v2095 = vunpack.c.l.s4 1934713408
    %v2096 = vunpack.c.0.s8 %v2095
    %v2097 = vlaneseq
    %v2098 = vshrl.u32 %v2097, 7
    %v2099 = vsub.s32 %v2096, %v2098
    %v2100 = vrot.slane %v2092, %v2099
    %v2102 = vunpack.c.l.s4 1934713408
    %v2103 = vunpack.c.0.s8 %v2102
    %v2104 = vlaneseq
    %v2105 = vshrl.u32 %v2104, 7
    %v2106 = vsub.s32 %v2103, %v2105
    %v2107 = vrot.slane %v2093, %v2106
    %v2108 = vcombine.low %v2083, %v2091
    %v2109 = vcombine.high %v2083, %v2091
    %v2111 = vunpack.c.l.s4 1934713408
    %v2112 = vunpack.c.0.s8 %v2111
    %v2113 = vlaneseq
    %v2114 = vshrl.u32 %v2113, 7
    %v2115 = vsub.s32 %v2112, %v2114
    %v2116 = vrot.slane %v2108, %v2115
    %v2118 = vunpack.c.l.s4 1934713408
    %v2119 = vunpack.c.0.s8 %v2118
    %v2120 = vlaneseq
    %v2121 = vshrl.u32 %v2120, 7
    %v2122 = vsub.s32 %v2119, %v2121
    %v2123 = vrot.slane %v2109, %v2122
    %v2124 = vcombine.low %v2100, %v2116
    %v2125 = vcombine.high %v2100, %v2116
    %v2126 = vcombine.low %v2107, %v2123
    %v2127 = vcombine.high %v2107, %v2123
    %v2128 = vcombine.low %v2032, %v2039
    %v2130 = vunpack.c.l.s4 1983009808
    %v2131 = vunpack.c.0.s8 %v2130
    %v2132 = vlaneseq
    %v2133 = vshrl.u32 %v2132, 7
    %v2134 = vsub.s32 %v2131, %v2133
    %v2135 = vrot.slane %v2128, %v2134
    %v2136 = vcombine.low %v2056, %v2057
    %v2138 = vunpack.c.l.s4 1983009808
    %v2139 = vunpack.c.0.s8 %v2138
    %v2140 = vlaneseq
    %v2141 = vshrl.u32 %v2140, 7
    %v2142 = vsub.s32 %v2139, %v2141
    %v2143 = vrot.slane %v2136, %v2142
    %v2144 = vcombine.low %v2048, %v2055
    %v2146 = vunpack.c.l.s4 1983009808
    %v2147 = vunpack.c.0.s8 %v2146
    %v2148 = vlaneseq
    %v2149 = vshrl.u32 %v2148, 7
    %v2150 = vsub.s32 %v2147, %v2149
    %v2151 = vrot.slane %v2144, %v2150
    %v2152 = vcombine.low %v2058, %v2059
    %v2154 = vunpack.c.l.s4 1983009808
    %v2155 = vunpack.c.0.s8 %v2154
    %v2156 = vlaneseq
    %v2157 = vshrl.u32 %v2156, 7
    %v2158 = vsub.s32 %v2155, %v2157
    %v2159 = vrot.slane %v2152, %v2158
    %v2160 = vcombine.low %v2135, %v2143
    %v2161 = vcombine.high %v2135, %v2143
    %v2163 = vunpack.c.l.s4 1934713408
    %v2164 = vunpack.c.0.s8 %v2163
    %v2165 = vlaneseq
    %v2166 = vshrl.u32 %v2165, 7
    %v2167 = vsub.s32 %v2164, %v2166
    %v2168 = vrot.slane %v2160, %v2167
    %v2170 = vunpack.c.l.s4 1934713408
    %v2171 = vunpack.c.0.s8 %v2170
    %v2172 = vlaneseq
    %v2173 = vshrl.u32 %v2172, 7
    %v2174 = vsub.s32 %v2171, %v2173
    %v2175 = vrot.slane %v2161, %v2174
    %v2176 = vcombine.low %v2151, %v2159
    %v2177 = vcombine.high %v2151, %v2159
    %v2179 = vunpack.c.l.s4 1934713408
    %v2180 = vunpack.c.0.s8 %v2179
    %v2181 = vlaneseq
    %v2182 = vshrl.u32 %v2181, 7
    %v2183 = vsub.s32 %v2180, %v2182
    %v2184 = vrot.slane %v2176, %v2183
    %v2186 = vunpack.c.l.s4 1934713408
    %v2187 = vunpack.c.0.s8 %v2186
    %v2188 = vlaneseq
    %v2189 = vshrl.u32 %v2188, 7
    %v2190 = vsub.s32 %v2187, %v2189
    %v2191 = vrot.slane %v2177, %v2190
    %v2192 = vcombine.low %v2168, %v2184
    %v2193 = vcombine.high %v2168, %v2184
    %v2194 = vcombine.low %v2175, %v2191
    %v2195 = vcombine.high %v2175, %v2191
    %2198 = vrot.lane.b32.xlu0 %v2125, 8
    %v2199 = vpop.permute.xlu0 %2198
    %2200 = vrot.lane.b32.xlu0 %v2193, 8
    %v2201 = vpop.permute.xlu0 %2200
    %2206 = vrot.lane.b32.xlu0 %v2126, 16
    %v2207 = vpop.permute.xlu0 %2206
    %2208 = vrot.lane.b32.xlu0 %v2194, 16
    %v2209 = vpop.permute.xlu0 %2208
    %2214 = vrot.lane.b32.xlu0 %v2127, 24
    %v2215 = vpop.permute.xlu0 %2214
    %2216 = vrot.lane.b32.xlu0 %v2195, 24
    %v2217 = vpop.permute.xlu0 %2216
    %v2220 = vsel %vm1082, %v2124, %v2199
    %v2221 = vsel %vm1082, %v2192, %v2201
    %vm2222 = vcmask 130048
    %v2223 = vsel %vm2222, %v2220, %v2207
    %v2224 = vsel %vm2222, %v2221, %v2209
    %vm2225 = vcmask 195584
    %v2226 = vsel %vm2225, %v2223, %v2215
    %v2227 = vsel %vm2225, %v2224, %v2217
    %v2228 = vpack.c.bf16 %v2227, %v2226
    %v2229 = vld [vmem:[#allocation7] sm:$0xf]
    %v2230 = vld [vmem:[#allocation7 + $0x4] sm:$0xf]
    %v2231 = vld [vmem:[#allocation7 + $0x8] sm:$0xf]
    %v2232 = vld [vmem:[#allocation7 + $0xc] sm:$0xf]
    %v2233 = vld [vmem:[#allocation11 + $0x2] sm:$0x1]
    %v2234 = vlaneseq
    %v2235 = vshrl.u32 %v2234, 7
    %v2236 = vsub.s32 0, %v2235
    %v2237 = vrot.slane %v2233, %v2236
    %v2242 = vunpack.c.l.b16 %v2229
    %v2243 = vunpack.c.l.b16 %v2230
    %v2244 = vunpack.c.l.b16 %v2231
    %v2245 = vunpack.c.l.b16 %v2232
    %v2246 = vpack.c.b16 %v2243, %v2242
    %v2247 = vpack.c.b16 %v2245, %v2244
    %v2251 = vsel %vm129, %v2228, 0
    %2253 = vmatprep.subr.bf16.mxu0 0
    %2254 = vmatpush1.bf16.msra.mxu0 0
    %2255 = vmatprep.subr.bf16.mxu0 0
    %2256 = vmatpush1.bf16.msra.mxu0 0
    %2257 = vmatprep.subr.bf16.mxu0 0
    %2258 = vmatpush1.bf16.msra.mxu0 0
    %2259 = vmatprep.subr.bf16.mxu0 0
    %2260 = vmatpush1.bf16.msra.mxu0 0
    %2261 = vmatprep.subr.bf16.mxu0 0
    %2262 = vmatpush1.bf16.msra.mxu0 0
    %2263 = vmatprep.subr.bf16.mxu0 0
    %2264 = vmatpush1.bf16.msra.mxu0 0
    %2265 = vmatprep.subr.bf16.mxu0 0
    %2266 = vmatpush1.bf16.msra.mxu0 %v2247
    %2267 = vmatprep.subr.bf16.mxu0 0
    %2268 = vmatpush1.bf16.msra.mxu0 %v2246
    %2269 = vmatprep.subr.bf16.mxu0 0
    %2270 = vmatpush2.bf16.msra.mxu0 0
    %2271 = vmatprep.subr.bf16.mxu0 0
    %2272 = vmatpush2.bf16.msra.mxu0 0
    %2273 = vmatprep.subr.bf16.mxu0 0
    %2274 = vmatpush2.bf16.msra.mxu0 0
    %2275 = vmatprep.subr.bf16.mxu0 0
    %2276 = vmatpush2.bf16.msra.mxu0 0
    %2277 = vmatprep.subr.bf16.mxu0 0
    %2278 = vmatpush2.bf16.msra.mxu0 0
    %2279 = vmatprep.subr.bf16.mxu0 0
    %2280 = vmatpush2.bf16.msra.mxu0 0
    %2281 = vmatprep.subr.bf16.mxu0 0
    %2282 = vmatpush2.bf16.msra.mxu0 0
    %2283 = vmatprep.subr.bf16.mxu0 0
    %2284 = vmatpush2.bf16.msra.mxu0 0
    %2285 = vmatprep.mubr.bf16.mxu0 0
    %2286 = vmatmul.mubr.bf16.gmra.mxu0 %v2251
    %v2287 = vpop.f32.mrf.mxu0
    %v2288 = vadd.f32 %v2237, %v2287
    %v2289 = vpop.f32.mrf.mxu0
    %v2290 = vpop.f32.mrf.mxu0
    %v2291 = vadd.f32 %v2237, %v2290
    %v2292 = vpop.f32.mrf.mxu0
    %2293 = vdwg.mxu0
    %v2294 = vadd.f32 %v105, %v2288
    %v2295 = vadd.f32 %v106, %v2291
    %v2296 = vld [vmem:[#allocation11 + $0x4] sm:$0x1]
    %v2297 = vld [vmem:[#allocation11 + $0x6] sm:$0x1]
    %v2298 = vsel %vm129, %v2294, 0.0
    %2299 = vadd.xlane.f32.xlu0 %v2298
    %v2300 = vpop.xlane.xlu0 %2299
    %v2301 = vsel %vm129, %v2295, 0.0
    %2302 = vadd.xlane.f32.xlu0 %v2301
    %v2303 = vpop.xlane.xlu0 %2302
    %v2304 = vrcp.pop 32.0
    %v2305 = vmul.f32 %v2300, %v2304
    %v2306 = vmul.f32 %v2303, %v2304
    %v2307 = vsub.f32 %v2294, %v2305
    %v2308 = vsub.f32 %v2295, %v2306
    %v2309 = vmul.f32 %v2307, %v2307
    %v2310 = vmul.f32 %v2308, %v2308
    %v2311 = vsel %vm129, %v2309, 0.0
    %2312 = vadd.xlane.f32.xlu0 %v2311
    %v2313 = vpop.xlane.xlu0 %2312
    %v2314 = vsel %vm129, %v2310, 0.0
    %2315 = vadd.xlane.f32.xlu0 %v2314
    %v2316 = vpop.xlane.xlu0 %2315
    %v2317 = vmul.f32 %v2313, %v2304
    %v2318 = vmul.f32 %v2316, %v2304
    %v2319 = vadd.f32 %v2317, 1e-05
    %v2320 = vadd.f32 %v2318, 1e-05
    %v2321 = vrsqrt.pop %v2319
    %v2322 = vrsqrt.pop %v2320
    %v2323 = vmul.f32 %v2307, %v2321
    %v2324 = vmul.f32 %v2308, %v2322
    %v2325 = vlaneseq
    %v2326 = vshrl.u32 %v2325, 7
    %v2327 = vsub.s32 0, %v2326
    %v2328 = vrot.slane %v2296, %v2327
    %v2329 = vmul.f32 %v2323, %v2328
    %v2330 = vmul.f32 %v2324, %v2328
    %v2331 = vlaneseq
    %v2332 = vshrl.u32 %v2331, 7
    %v2333 = vsub.s32 0, %v2332
    %v2334 = vrot.slane %v2297, %v2333
    %v2335 = vadd.f32 %v2329, %v2334
    %v2336 = vadd.f32 %v2330, %v2334
    %v2337 = vpack.c.bf16 %v2336, %v2335
    %v2338 = vld [vmem:[#allocation8] sm:$0xff]
    %v2339 = vld [vmem:[#allocation8 + $0x8] sm:$0xff]
    %v2340 = vld [vmem:[#allocation8 + $0x10] sm:$0xff]
    %v2341 = vld [vmem:[#allocation8 + $0x18] sm:$0xff]
    %v2342 = vld [vmem:[#allocation8 + $0x20] sm:$0xff]
    %v2343 = vld [vmem:[#allocation8 + $0x28] sm:$0xff]
    %v2344 = vld [vmem:[#allocation8 + $0x30] sm:$0xff]
    %v2345 = vld [vmem:[#allocation8 + $0x38] sm:$0xff]
    %v2346 = vld [vmem:[#allocation8 + $0x40] sm:$0xff]
    %v2347 = vld [vmem:[#allocation8 + $0x48] sm:$0xff]
    %v2348 = vld [vmem:[#allocation8 + $0x50] sm:$0xff]
    %v2349 = vld [vmem:[#allocation8 + $0x58] sm:$0xff]
    %v2350 = vld [vmem:[#allocation8 + $0x60] sm:$0xff]
    %v2351 = vld [vmem:[#allocation8 + $0x68] sm:$0xff]
    %v2352 = vld [vmem:[#allocation8 + $0x70] sm:$0xff]
    %v2353 = vld [vmem:[#allocation8 + $0x78] sm:$0xff]
    %v2354 = vld [vmem:[#allocation8 + $0x80] sm:$0xff]
    %v2355 = vld [vmem:[#allocation8 + $0x88] sm:$0xff]
    %v2356 = vld [vmem:[#allocation8 + $0x90] sm:$0xff]
    %v2357 = vld [vmem:[#allocation8 + $0x98] sm:$0xff]
    %v2358 = vld [vmem:[#allocation8 + $0xa0] sm:$0xff]
    %v2359 = vld [vmem:[#allocation8 + $0xa8] sm:$0xff]
    %v2360 = vld [vmem:[#allocation8 + $0xb0] sm:$0xff]
    %v2361 = vld [vmem:[#allocation8 + $0xb8] sm:$0xff]
    %v2362 = vld [vmem:[#allocation8 + $0xc0] sm:$0xff]
    %v2363 = vld [vmem:[#allocation8 + $0xc8] sm:$0xff]
    %v2364 = vld [vmem:[#allocation8 + $0xd0] sm:$0xff]
    %v2365 = vld [vmem:[#allocation8 + $0xd8] sm:$0xff]
    %v2366 = vld [vmem:[#allocation8 + $0xe0] sm:$0xff]
    %v2367 = vld [vmem:[#allocation8 + $0xe8] sm:$0xff]
    %v2368 = vld [vmem:[#allocation8 + $0xf0] sm:$0xff]
    %v2369 = vld [vmem:[#allocation8 + $0xf8] sm:$0xff]
    %s2370 = scalar_lea.vmem [#allocation11], 12
    %v2371 = vld [vmem:[%s2370] ss:$2 sm:$0xff]
    %s2372 = scalar_lea.vmem [#allocation11], 28
    %v2373 = vld [vmem:[%s2372] ss:$2 sm:$0xff]
    %v2376 = vlaneseq
    %v2377 = vshrl.u32 %v2376, 7
    %v2378 = vsub.s32 0, %v2377
    %v2379 = vrot.slane %v2371, %v2378
    %v2380 = vlaneseq
    %v2381 = vshrl.u32 %v2380, 7
    %v2382 = vsub.s32 1, %v2381
    %v2383 = vrot.slane %v2371, %v2382
    %v2384 = vlaneseq
    %v2385 = vshrl.u32 %v2384, 7
    %v2386 = vsub.s32 2, %v2385
    %v2387 = vrot.slane %v2371, %v2386
    %v2388 = vlaneseq
    %v2389 = vshrl.u32 %v2388, 7
    %v2390 = vsub.s32 3, %v2389
    %v2391 = vrot.slane %v2371, %v2390
    %v2392 = vlaneseq
    %v2393 = vshrl.u32 %v2392, 7
    %v2394 = vsub.s32 4, %v2393
    %v2395 = vrot.slane %v2371, %v2394
    %v2396 = vlaneseq
    %v2397 = vshrl.u32 %v2396, 7
    %v2398 = vsub.s32 5, %v2397
    %v2399 = vrot.slane %v2371, %v2398
    %v2400 = vlaneseq
    %v2401 = vshrl.u32 %v2400, 7
    %v2402 = vsub.s32 6, %v2401
    %v2403 = vrot.slane %v2371, %v2402
    %v2404 = vlaneseq
    %v2405 = vshrl.u32 %v2404, 7
    %v2406 = vsub.s32 7, %v2405
    %v2407 = vrot.slane %v2371, %v2406
    %v2408 = vlaneseq
    %v2409 = vshrl.u32 %v2408, 7
    %v2410 = vsub.s32 0, %v2409
    %v2411 = vrot.slane %v2373, %v2410
    %v2412 = vlaneseq
    %v2413 = vshrl.u32 %v2412, 7
    %v2414 = vsub.s32 1, %v2413
    %v2415 = vrot.slane %v2373, %v2414
    %v2416 = vlaneseq
    %v2417 = vshrl.u32 %v2416, 7
    %v2418 = vsub.s32 2, %v2417
    %v2419 = vrot.slane %v2373, %v2418
    %v2420 = vlaneseq
    %v2421 = vshrl.u32 %v2420, 7
    %v2422 = vsub.s32 3, %v2421
    %v2423 = vrot.slane %v2373, %v2422
    %v2424 = vlaneseq
    %v2425 = vshrl.u32 %v2424, 7
    %v2426 = vsub.s32 4, %v2425
    %v2427 = vrot.slane %v2373, %v2426
    %v2428 = vlaneseq
    %v2429 = vshrl.u32 %v2428, 7
    %v2430 = vsub.s32 5, %v2429
    %v2431 = vrot.slane %v2373, %v2430
    %v2432 = vlaneseq
    %v2433 = vshrl.u32 %v2432, 7
    %v2434 = vsub.s32 6, %v2433
    %v2435 = vrot.slane %v2373, %v2434
    %v2436 = vlaneseq
    %v2437 = vshrl.u32 %v2436, 7
    %v2438 = vsub.s32 7, %v2437
    %v2439 = vrot.slane %v2373, %v2438
    %v2488 = vunpack.c.l.b16 %v2338
    %v2489 = vunpack.c.h.b16 %v2338
    %v2490 = vunpack.c.l.b16 %v2339
    %v2491 = vunpack.c.h.b16 %v2339
    %v2492 = vunpack.c.l.b16 %v2340
    %v2493 = vunpack.c.h.b16 %v2340
    %v2494 = vunpack.c.l.b16 %v2341
    %v2495 = vunpack.c.h.b16 %v2341
    %v2496 = vunpack.c.l.b16 %v2342
    %v2497 = vunpack.c.h.b16 %v2342
    %v2498 = vunpack.c.l.b16 %v2343
    %v2499 = vunpack.c.h.b16 %v2343
    %v2500 = vunpack.c.l.b16 %v2344
    %v2501 = vunpack.c.h.b16 %v2344
    %v2502 = vunpack.c.l.b16 %v2345
    %v2503 = vunpack.c.h.b16 %v2345
    %v2504 = vunpack.c.l.b16 %v2346
    %v2505 = vunpack.c.h.b16 %v2346
    %v2506 = vunpack.c.l.b16 %v2347
    %v2507 = vunpack.c.h.b16 %v2347
    %v2508 = vunpack.c.l.b16 %v2348
    %v2509 = vunpack.c.h.b16 %v2348
    %v2510 = vunpack.c.l.b16 %v2349
    %v2511 = vunpack.c.h.b16 %v2349
    %v2512 = vunpack.c.l.b16 %v2350
    %v2513 = vunpack.c.h.b16 %v2350
    %v2514 = vunpack.c.l.b16 %v2351
    %v2515 = vunpack.c.h.b16 %v2351
    %v2516 = vunpack.c.l.b16 %v2352
    %v2517 = vunpack.c.h.b16 %v2352
    %v2518 = vunpack.c.l.b16 %v2353
    %v2519 = vunpack.c.h.b16 %v2353
    %v2520 = vunpack.c.l.b16 %v2354
    %v2521 = vunpack.c.h.b16 %v2354
    %v2522 = vunpack.c.l.b16 %v2355
    %v2523 = vunpack.c.h.b16 %v2355
    %v2524 = vunpack.c.l.b16 %v2356
    %v2525 = vunpack.c.h.b16 %v2356
    %v2526 = vunpack.c.l.b16 %v2357
    %v2527 = vunpack.c.h.b16 %v2357
    %v2528 = vunpack.c.l.b16 %v2358
    %v2529 = vunpack.c.h.b16 %v2358
    %v2530 = vunpack.c.l.b16 %v2359
    %v2531 = vunpack.c.h.b16 %v2359
    %v2532 = vunpack.c.l.b16 %v2360
    %v2533 = vunpack.c.h.b16 %v2360
    %v2534 = vunpack.c.l.b16 %v2361
    %v2535 = vunpack.c.h.b16 %v2361
    %v2536 = vunpack.c.l.b16 %v2362
    %v2537 = vunpack.c.h.b16 %v2362
    %v2538 = vunpack.c.l.b16 %v2363
    %v2539 = vunpack.c.h.b16 %v2363
    %v2540 = vunpack.c.l.b16 %v2364
    %v2541 = vunpack.c.h.b16 %v2364
    %v2542 = vunpack.c.l.b16 %v2365
    %v2543 = vunpack.c.h.b16 %v2365
    %v2544 = vunpack.c.l.b16 %v2366
    %v2545 = vunpack.c.h.b16 %v2366
    %v2546 = vunpack.c.l.b16 %v2367
    %v2547 = vunpack.c.h.b16 %v2367
    %v2548 = vunpack.c.l.b16 %v2368
    %v2549 = vunpack.c.h.b16 %v2368
    %v2550 = vunpack.c.l.b16 %v2369
    %v2551 = vunpack.c.h.b16 %v2369
    %v2552 = vpack.c.b16 %v2504, %v2488
    %v2553 = vpack.c.b16 %v2505, %v2489
    %v2554 = vpack.c.b16 %v2506, %v2490
    %v2555 = vpack.c.b16 %v2507, %v2491
    %v2556 = vpack.c.b16 %v2508, %v2492
    %v2557 = vpack.c.b16 %v2509, %v2493
    %v2558 = vpack.c.b16 %v2510, %v2494
    %v2559 = vpack.c.b16 %v2511, %v2495
    %v2560 = vpack.c.b16 %v2512, %v2496
    %v2561 = vpack.c.b16 %v2513, %v2497
    %v2562 = vpack.c.b16 %v2514, %v2498
    %v2563 = vpack.c.b16 %v2515, %v2499
    %v2564 = vpack.c.b16 %v2516, %v2500
    %v2565 = vpack.c.b16 %v2517, %v2501
    %v2566 = vpack.c.b16 %v2518, %v2502
    %v2567 = vpack.c.b16 %v2519, %v2503
    %v2568 = vpack.c.b16 %v2536, %v2520
    %v2569 = vpack.c.b16 %v2537, %v2521
    %v2570 = vpack.c.b16 %v2538, %v2522
    %v2571 = vpack.c.b16 %v2539, %v2523
    %v2572 = vpack.c.b16 %v2540, %v2524
    %v2573 = vpack.c.b16 %v2541, %v2525
    %v2574 = vpack.c.b16 %v2542, %v2526
    %v2575 = vpack.c.b16 %v2543, %v2527
    %v2576 = vpack.c.b16 %v2544, %v2528
    %v2577 = vpack.c.b16 %v2545, %v2529
    %v2578 = vpack.c.b16 %v2546, %v2530
    %v2579 = vpack.c.b16 %v2547, %v2531
    %v2580 = vpack.c.b16 %v2548, %v2532
    %v2581 = vpack.c.b16 %v2549, %v2533
    %v2582 = vpack.c.b16 %v2550, %v2534
    %v2583 = vpack.c.b16 %v2551, %v2535
    %v2617 = vsel %vm129, %v2337, 0
    %2619 = vmatprep.subr.bf16.mxu0 0
    %2620 = vmatpush1.bf16.msra.mxu0 0
    %2621 = vmatprep.subr.bf16.mxu0 0
    %2622 = vmatpush1.bf16.msra.mxu0 0
    %2623 = vmatprep.subr.bf16.mxu0 0
    %2624 = vmatpush1.bf16.msra.mxu0 0
    %2625 = vmatprep.subr.bf16.mxu0 0
    %2626 = vmatpush1.bf16.msra.mxu0 0
    %2627 = vmatprep.subr.bf16.mxu0 0
    %2628 = vmatpush1.bf16.msra.mxu0 0
    %2629 = vmatprep.subr.bf16.mxu0 0
    %2630 = vmatpush1.bf16.msra.mxu0 0
    %2631 = vmatprep.subr.bf16.mxu0 %v2569
    %2632 = vmatpush1.bf16.msra.mxu0 %v2568
    %2633 = vmatprep.subr.bf16.mxu0 %v2553
    %2634 = vmatpush1.bf16.msra.mxu0 %v2552
    %2635 = vmatprep.subr.bf16.mxu0 0
    %2636 = vmatpush2.bf16.msra.mxu0 0
    %2637 = vmatprep.subr.bf16.mxu0 0
    %2638 = vmatpush2.bf16.msra.mxu0 0
    %2639 = vmatprep.subr.bf16.mxu0 0
    %2640 = vmatpush2.bf16.msra.mxu0 0
    %2641 = vmatprep.subr.bf16.mxu0 0
    %2642 = vmatpush2.bf16.msra.mxu0 0
    %2643 = vmatprep.subr.bf16.mxu0 0
    %2644 = vmatpush2.bf16.msra.mxu0 0
    %2645 = vmatprep.subr.bf16.mxu0 0
    %2646 = vmatpush2.bf16.msra.mxu0 0
    %2647 = vmatprep.subr.bf16.mxu0 0
    %2648 = vmatpush2.bf16.msra.mxu0 0
    %2649 = vmatprep.subr.bf16.mxu0 0
    %2650 = vmatpush2.bf16.msra.mxu0 0
    %2651 = vmatprep.mubr.bf16.mxu0 0
    %2652 = vmatmul.mubr.bf16.gmra.mxu0 %v2617
    %v2653 = vpop.f32.mrf.mxu0
    %v2654 = vadd.f32 %v2379, %v2653
    %v2655 = vpop.f32.mrf.mxu0
    %v2656 = vadd.f32 %v2383, %v2655
    %v2657 = vpop.f32.mrf.mxu0
    %v2658 = vadd.f32 %v2379, %v2657
    %v2659 = vpop.f32.mrf.mxu0
    %v2660 = vadd.f32 %v2383, %v2659
    %2661 = vdwg.mxu0
    %2662 = vmatprep.subr.bf16.mxu0 0
    %2663 = vmatpush1.bf16.msra.mxu0 0
    %2664 = vmatprep.subr.bf16.mxu0 0
    %2665 = vmatpush1.bf16.msra.mxu0 0
    %2666 = vmatprep.subr.bf16.mxu0 0
    %2667 = vmatpush1.bf16.msra.mxu0 0
    %2668 = vmatprep.subr.bf16.mxu0 0
    %2669 = vmatpush1.bf16.msra.mxu0 0
    %2670 = vmatprep.subr.bf16.mxu0 0
    %2671 = vmatpush1.bf16.msra.mxu0 0
    %2672 = vmatprep.subr.bf16.mxu0 0
    %2673 = vmatpush1.bf16.msra.mxu0 0
    %2674 = vmatprep.subr.bf16.mxu0 %v2571
    %2675 = vmatpush1.bf16.msra.mxu0 %v2570
    %2676 = vmatprep.subr.bf16.mxu0 %v2555
    %2677 = vmatpush1.bf16.msra.mxu0 %v2554
    %2678 = vmatprep.subr.bf16.mxu0 0
    %2679 = vmatpush2.bf16.msra.mxu0 0
    %2680 = vmatprep.subr.bf16.mxu0 0
    %2681 = vmatpush2.bf16.msra.mxu0 0
    %2682 = vmatprep.subr.bf16.mxu0 0
    %2683 = vmatpush2.bf16.msra.mxu0 0
    %2684 = vmatprep.subr.bf16.mxu0 0
    %2685 = vmatpush2.bf16.msra.mxu0 0
    %2686 = vmatprep.subr.bf16.mxu0 0
    %2687 = vmatpush2.bf16.msra.mxu0 0
    %2688 = vmatprep.subr.bf16.mxu0 0
    %2689 = vmatpush2.bf16.msra.mxu0 0
    %2690 = vmatprep.subr.bf16.mxu0 0
    %2691 = vmatpush2.bf16.msra.mxu0 0
    %2692 = vmatprep.subr.bf16.mxu0 0
    %2693 = vmatpush2.bf16.msra.mxu0 0
    %2694 = vmatprep.mubr.bf16.mxu0 0
    %2695 = vmatmul.mubr.bf16.gmra.mxu0 %v2617
    %v2696 = vpop.f32.mrf.mxu0
    %v2697 = vadd.f32 %v2387, %v2696
    %v2698 = vpop.f32.mrf.mxu0
    %v2699 = vadd.f32 %v2391, %v2698
    %v2700 = vpop.f32.mrf.mxu0
    %v2701 = vadd.f32 %v2387, %v2700
    %v2702 = vpop.f32.mrf.mxu0
    %v2703 = vadd.f32 %v2391, %v2702
    %2704 = vdwg.mxu0
    %2705 = vmatprep.subr.bf16.mxu0 0
    %2706 = vmatpush1.bf16.msra.mxu0 0
    %2707 = vmatprep.subr.bf16.mxu0 0
    %2708 = vmatpush1.bf16.msra.mxu0 0
    %2709 = vmatprep.subr.bf16.mxu0 0
    %2710 = vmatpush1.bf16.msra.mxu0 0
    %2711 = vmatprep.subr.bf16.mxu0 0
    %2712 = vmatpush1.bf16.msra.mxu0 0
    %2713 = vmatprep.subr.bf16.mxu0 0
    %2714 = vmatpush1.bf16.msra.mxu0 0
    %2715 = vmatprep.subr.bf16.mxu0 0
    %2716 = vmatpush1.bf16.msra.mxu0 0
    %2717 = vmatprep.subr.bf16.mxu0 %v2573
    %2718 = vmatpush1.bf16.msra.mxu0 %v2572
    %2719 = vmatprep.subr.bf16.mxu0 %v2557
    %2720 = vmatpush1.bf16.msra.mxu0 %v2556
    %2721 = vmatprep.subr.bf16.mxu0 0
    %2722 = vmatpush2.bf16.msra.mxu0 0
    %2723 = vmatprep.subr.bf16.mxu0 0
    %2724 = vmatpush2.bf16.msra.mxu0 0
    %2725 = vmatprep.subr.bf16.mxu0 0
    %2726 = vmatpush2.bf16.msra.mxu0 0
    %2727 = vmatprep.subr.bf16.mxu0 0
    %2728 = vmatpush2.bf16.msra.mxu0 0
    %2729 = vmatprep.subr.bf16.mxu0 0
    %2730 = vmatpush2.bf16.msra.mxu0 0
    %2731 = vmatprep.subr.bf16.mxu0 0
    %2732 = vmatpush2.bf16.msra.mxu0 0
    %2733 = vmatprep.subr.bf16.mxu0 0
    %2734 = vmatpush2.bf16.msra.mxu0 0
    %2735 = vmatprep.subr.bf16.mxu0 0
    %2736 = vmatpush2.bf16.msra.mxu0 0
    %2737 = vmatprep.mubr.bf16.mxu0 0
    %2738 = vmatmul.mubr.bf16.gmra.mxu0 %v2617
    %v2739 = vpop.f32.mrf.mxu0
    %v2740 = vadd.f32 %v2395, %v2739
    %v2741 = vpop.f32.mrf.mxu0
    %v2742 = vadd.f32 %v2399, %v2741
    %v2743 = vpop.f32.mrf.mxu0
    %v2744 = vadd.f32 %v2395, %v2743
    %v2745 = vpop.f32.mrf.mxu0
    %v2746 = vadd.f32 %v2399, %v2745
    %2747 = vdwg.mxu0
    %2748 = vmatprep.subr.bf16.mxu0 0
    %2749 = vmatpush1.bf16.msra.mxu0 0
    %2750 = vmatprep.subr.bf16.mxu0 0
    %2751 = vmatpush1.bf16.msra.mxu0 0
    %2752 = vmatprep.subr.bf16.mxu0 0
    %2753 = vmatpush1.bf16.msra.mxu0 0
    %2754 = vmatprep.subr.bf16.mxu0 0
    %2755 = vmatpush1.bf16.msra.mxu0 0
    %2756 = vmatprep.subr.bf16.mxu0 0
    %2757 = vmatpush1.bf16.msra.mxu0 0
    %2758 = vmatprep.subr.bf16.mxu0 0
    %2759 = vmatpush1.bf16.msra.mxu0 0
    %2760 = vmatprep.subr.bf16.mxu0 %v2575
    %2761 = vmatpush1.bf16.msra.mxu0 %v2574
    %2762 = vmatprep.subr.bf16.mxu0 %v2559
    %2763 = vmatpush1.bf16.msra.mxu0 %v2558
    %2764 = vmatprep.subr.bf16.mxu0 0
    %2765 = vmatpush2.bf16.msra.mxu0 0
    %2766 = vmatprep.subr.bf16.mxu0 0
    %2767 = vmatpush2.bf16.msra.mxu0 0
    %2768 = vmatprep.subr.bf16.mxu0 0
    %2769 = vmatpush2.bf16.msra.mxu0 0
    %2770 = vmatprep.subr.bf16.mxu0 0
    %2771 = vmatpush2.bf16.msra.mxu0 0
    %2772 = vmatprep.subr.bf16.mxu0 0
    %2773 = vmatpush2.bf16.msra.mxu0 0
    %2774 = vmatprep.subr.bf16.mxu0 0
    %2775 = vmatpush2.bf16.msra.mxu0 0
    %2776 = vmatprep.subr.bf16.mxu0 0
    %2777 = vmatpush2.bf16.msra.mxu0 0
    %2778 = vmatprep.subr.bf16.mxu0 0
    %2779 = vmatpush2.bf16.msra.mxu0 0
    %2780 = vmatprep.mubr.bf16.mxu0 0
    %2781 = vmatmul.mubr.bf16.gmra.mxu0 %v2617
    %v2782 = vpop.f32.mrf.mxu0
    %v2783 = vadd.f32 %v2403, %v2782
    %v2784 = vpop.f32.mrf.mxu0
    %v2785 = vadd.f32 %v2407, %v2784
    %v2786 = vpop.f32.mrf.mxu0
    %v2787 = vadd.f32 %v2403, %v2786
    %v2788 = vpop.f32.mrf.mxu0
    %v2789 = vadd.f32 %v2407, %v2788
    %2790 = vdwg.mxu0
    %2791 = vmatprep.subr.bf16.mxu0 0
    %2792 = vmatpush1.bf16.msra.mxu0 0
    %2793 = vmatprep.subr.bf16.mxu0 0
    %2794 = vmatpush1.bf16.msra.mxu0 0
    %2795 = vmatprep.subr.bf16.mxu0 0
    %2796 = vmatpush1.bf16.msra.mxu0 0
    %2797 = vmatprep.subr.bf16.mxu0 0
    %2798 = vmatpush1.bf16.msra.mxu0 0
    %2799 = vmatprep.subr.bf16.mxu0 0
    %2800 = vmatpush1.bf16.msra.mxu0 0
    %2801 = vmatprep.subr.bf16.mxu0 0
    %2802 = vmatpush1.bf16.msra.mxu0 0
    %2803 = vmatprep.subr.bf16.mxu0 %v2577
    %2804 = vmatpush1.bf16.msra.mxu0 %v2576
    %2805 = vmatprep.subr.bf16.mxu0 %v2561
    %2806 = vmatpush1.bf16.msra.mxu0 %v2560
    %2807 = vmatprep.subr.bf16.mxu0 0
    %2808 = vmatpush2.bf16.msra.mxu0 0
    %2809 = vmatprep.subr.bf16.mxu0 0
    %2810 = vmatpush2.bf16.msra.mxu0 0
    %2811 = vmatprep.subr.bf16.mxu0 0
    %2812 = vmatpush2.bf16.msra.mxu0 0
    %2813 = vmatprep.subr.bf16.mxu0 0
    %2814 = vmatpush2.bf16.msra.mxu0 0
    %2815 = vmatprep.subr.bf16.mxu0 0
    %2816 = vmatpush2.bf16.msra.mxu0 0
    %2817 = vmatprep.subr.bf16.mxu0 0
    %2818 = vmatpush2.bf16.msra.mxu0 0
    %2819 = vmatprep.subr.bf16.mxu0 0
    %2820 = vmatpush2.bf16.msra.mxu0 0
    %2821 = vmatprep.subr.bf16.mxu0 0
    %2822 = vmatpush2.bf16.msra.mxu0 0
    %2823 = vmatprep.mubr.bf16.mxu0 0
    %2824 = vmatmul.mubr.bf16.gmra.mxu0 %v2617
    %v2825 = vpop.f32.mrf.mxu0
    %v2826 = vadd.f32 %v2411, %v2825
    %v2827 = vpop.f32.mrf.mxu0
    %v2828 = vadd.f32 %v2415, %v2827
    %v2829 = vpop.f32.mrf.mxu0
    %v2830 = vadd.f32 %v2411, %v2829
    %v2831 = vpop.f32.mrf.mxu0
    %v2832 = vadd.f32 %v2415, %v2831
    %2833 = vdwg.mxu0
    %2834 = vmatprep.subr.bf16.mxu0 0
    %2835 = vmatpush1.bf16.msra.mxu0 0
    %2836 = vmatprep.subr.bf16.mxu0 0
    %2837 = vmatpush1.bf16.msra.mxu0 0
    %2838 = vmatprep.subr.bf16.mxu0 0
    %2839 = vmatpush1.bf16.msra.mxu0 0
    %2840 = vmatprep.subr.bf16.mxu0 0
    %2841 = vmatpush1.bf16.msra.mxu0 0
    %2842 = vmatprep.subr.bf16.mxu0 0
    %2843 = vmatpush1.bf16.msra.mxu0 0
    %2844 = vmatprep.subr.bf16.mxu0 0
    %2845 = vmatpush1.bf16.msra.mxu0 0
    %2846 = vmatprep.subr.bf16.mxu0 %v2579
    %2847 = vmatpush1.bf16.msra.mxu0 %v2578
    %2848 = vmatprep.subr.bf16.mxu0 %v2563
    %2849 = vmatpush1.bf16.msra.mxu0 %v2562
    %2850 = vmatprep.subr.bf16.mxu0 0
    %2851 = vmatpush2.bf16.msra.mxu0 0
    %2852 = vmatprep.subr.bf16.mxu0 0
    %2853 = vmatpush2.bf16.msra.mxu0 0
    %2854 = vmatprep.subr.bf16.mxu0 0
    %2855 = vmatpush2.bf16.msra.mxu0 0
    %2856 = vmatprep.subr.bf16.mxu0 0
    %2857 = vmatpush2.bf16.msra.mxu0 0
    %2858 = vmatprep.subr.bf16.mxu0 0
    %2859 = vmatpush2.bf16.msra.mxu0 0
    %2860 = vmatprep.subr.bf16.mxu0 0
    %2861 = vmatpush2.bf16.msra.mxu0 0
    %2862 = vmatprep.subr.bf16.mxu0 0
    %2863 = vmatpush2.bf16.msra.mxu0 0
    %2864 = vmatprep.subr.bf16.mxu0 0
    %2865 = vmatpush2.bf16.msra.mxu0 0
    %2866 = vmatprep.mubr.bf16.mxu0 0
    %2867 = vmatmul.mubr.bf16.gmra.mxu0 %v2617
    %v2868 = vpop.f32.mrf.mxu0
    %v2869 = vadd.f32 %v2419, %v2868
    %v2870 = vpop.f32.mrf.mxu0
    %v2871 = vadd.f32 %v2423, %v2870
    %v2872 = vpop.f32.mrf.mxu0
    %v2873 = vadd.f32 %v2419, %v2872
    %v2874 = vpop.f32.mrf.mxu0
    %v2875 = vadd.f32 %v2423, %v2874
    %2876 = vdwg.mxu0
    %2877 = vmatprep.subr.bf16.mxu0 0
    %2878 = vmatpush1.bf16.msra.mxu0 0
    %2879 = vmatprep.subr.bf16.mxu0 0
    %2880 = vmatpush1.bf16.msra.mxu0 0
    %2881 = vmatprep.subr.bf16.mxu0 0
    %2882 = vmatpush1.bf16.msra.mxu0 0
    %2883 = vmatprep.subr.bf16.mxu0 0
    %2884 = vmatpush1.bf16.msra.mxu0 0
    %2885 = vmatprep.subr.bf16.mxu0 0
    %2886 = vmatpush1.bf16.msra.mxu0 0
    %2887 = vmatprep.subr.bf16.mxu0 0
    %2888 = vmatpush1.bf16.msra.mxu0 0
    %2889 = vmatprep.subr.bf16.mxu0 %v2581
    %2890 = vmatpush1.bf16.msra.mxu0 %v2580
    %2891 = vmatprep.subr.bf16.mxu0 %v2565
    %2892 = vmatpush1.bf16.msra.mxu0 %v2564
    %2893 = vmatprep.subr.bf16.mxu0 0
    %2894 = vmatpush2.bf16.msra.mxu0 0
    %2895 = vmatprep.subr.bf16.mxu0 0
    %2896 = vmatpush2.bf16.msra.mxu0 0
    %2897 = vmatprep.subr.bf16.mxu0 0
    %2898 = vmatpush2.bf16.msra.mxu0 0
    %2899 = vmatprep.subr.bf16.mxu0 0
    %2900 = vmatpush2.bf16.msra.mxu0 0
    %2901 = vmatprep.subr.bf16.mxu0 0
    %2902 = vmatpush2.bf16.msra.mxu0 0
    %2903 = vmatprep.subr.bf16.mxu0 0
    %2904 = vmatpush2.bf16.msra.mxu0 0
    %2905 = vmatprep.subr.bf16.mxu0 0
    %2906 = vmatpush2.bf16.msra.mxu0 0
    %2907 = vmatprep.subr.bf16.mxu0 0
    %2908 = vmatpush2.bf16.msra.mxu0 0
    %2909 = vmatprep.mubr.bf16.mxu0 0
    %2910 = vmatmul.mubr.bf16.gmra.mxu0 %v2617
    %v2911 = vpop.f32.mrf.mxu0
    %v2912 = vadd.f32 %v2427, %v2911
    %v2913 = vpop.f32.mrf.mxu0
    %v2914 = vadd.f32 %v2431, %v2913
    %v2915 = vpop.f32.mrf.mxu0
    %v2916 = vadd.f32 %v2427, %v2915
    %v2917 = vpop.f32.mrf.mxu0
    %v2918 = vadd.f32 %v2431, %v2917
    %2919 = vdwg.mxu0
    %2920 = vmatprep.subr.bf16.mxu0 0
    %2921 = vmatpush1.bf16.msra.mxu0 0
    %2922 = vmatprep.subr.bf16.mxu0 0
    %2923 = vmatpush1.bf16.msra.mxu0 0
    %2924 = vmatprep.subr.bf16.mxu0 0
    %2925 = vmatpush1.bf16.msra.mxu0 0
    %2926 = vmatprep.subr.bf16.mxu0 0
    %2927 = vmatpush1.bf16.msra.mxu0 0
    %2928 = vmatprep.subr.bf16.mxu0 0
    %2929 = vmatpush1.bf16.msra.mxu0 0
    %2930 = vmatprep.subr.bf16.mxu0 0
    %2931 = vmatpush1.bf16.msra.mxu0 0
    %2932 = vmatprep.subr.bf16.mxu0 %v2583
    %2933 = vmatpush1.bf16.msra.mxu0 %v2582
    %2934 = vmatprep.subr.bf16.mxu0 %v2567
    %2935 = vmatpush1.bf16.msra.mxu0 %v2566
    %2936 = vmatprep.subr.bf16.mxu0 0
    %2937 = vmatpush2.bf16.msra.mxu0 0
    %2938 = vmatprep.subr.bf16.mxu0 0
    %2939 = vmatpush2.bf16.msra.mxu0 0
    %2940 = vmatprep.subr.bf16.mxu0 0
    %2941 = vmatpush2.bf16.msra.mxu0 0
    %2942 = vmatprep.subr.bf16.mxu0 0
    %2943 = vmatpush2.bf16.msra.mxu0 0
    %2944 = vmatprep.subr.bf16.mxu0 0
    %2945 = vmatpush2.bf16.msra.mxu0 0
    %2946 = vmatprep.subr.bf16.mxu0 0
    %2947 = vmatpush2.bf16.msra.mxu0 0
    %2948 = vmatprep.subr.bf16.mxu0 0
    %2949 = vmatpush2.bf16.msra.mxu0 0
    %2950 = vmatprep.subr.bf16.mxu0 0
    %2951 = vmatpush2.bf16.msra.mxu0 0
    %2952 = vmatprep.mubr.bf16.mxu0 0
    %2953 = vmatmul.mubr.bf16.gmra.mxu0 %v2617
    %v2954 = vpop.f32.mrf.mxu0
    %v2955 = vadd.f32 %v2435, %v2954
    %v2956 = vpop.f32.mrf.mxu0
    %v2957 = vadd.f32 %v2439, %v2956
    %v2958 = vpop.f32.mrf.mxu0
    %v2959 = vadd.f32 %v2435, %v2958
    %v2960 = vpop.f32.mrf.mxu0
    %v2961 = vadd.f32 %v2439, %v2960
    %2962 = vdwg.mxu0
    %v2963 = vmax.f32 %v2654, 0.0
    %v2964 = vmax.f32 %v2656, 0.0
    %v2965 = vmax.f32 %v2697, 0.0
    %v2966 = vmax.f32 %v2699, 0.0
    %v2967 = vmax.f32 %v2740, 0.0
    %v2968 = vmax.f32 %v2742, 0.0
    %v2969 = vmax.f32 %v2783, 0.0
    %v2970 = vmax.f32 %v2785, 0.0
    %v2971 = vmax.f32 %v2826, 0.0
    %v2972 = vmax.f32 %v2828, 0.0
    %v2973 = vmax.f32 %v2869, 0.0
    %v2974 = vmax.f32 %v2871, 0.0
    %v2975 = vmax.f32 %v2912, 0.0
    %v2976 = vmax.f32 %v2914, 0.0
    %v2977 = vmax.f32 %v2955, 0.0
    %v2978 = vmax.f32 %v2957, 0.0
    %v2979 = vmax.f32 %v2658, 0.0
    %v2980 = vmax.f32 %v2660, 0.0
    %v2981 = vmax.f32 %v2701, 0.0
    %v2982 = vmax.f32 %v2703, 0.0
    %v2983 = vmax.f32 %v2744, 0.0
    %v2984 = vmax.f32 %v2746, 0.0
    %v2985 = vmax.f32 %v2787, 0.0
    %v2986 = vmax.f32 %v2789, 0.0
    %v2987 = vmax.f32 %v2830, 0.0
    %v2988 = vmax.f32 %v2832, 0.0
    %v2989 = vmax.f32 %v2873, 0.0
    %v2990 = vmax.f32 %v2875, 0.0
    %v2991 = vmax.f32 %v2916, 0.0
    %v2992 = vmax.f32 %v2918, 0.0
    %v2993 = vmax.f32 %v2959, 0.0
    %v2994 = vmax.f32 %v2961, 0.0
    %v2995 = vpack.c.bf16 %v2979, %v2963
    %v2996 = vpack.c.bf16 %v2980, %v2964
    %v2997 = vpack.c.bf16 %v2981, %v2965
    %v2998 = vpack.c.bf16 %v2982, %v2966
    %v2999 = vpack.c.bf16 %v2983, %v2967
    %v3000 = vpack.c.bf16 %v2984, %v2968
    %v3001 = vpack.c.bf16 %v2985, %v2969
    %v3002 = vpack.c.bf16 %v2986, %v2970
    %v3003 = vpack.c.bf16 %v2987, %v2971
    %v3004 = vpack.c.bf16 %v2988, %v2972
    %v3005 = vpack.c.bf16 %v2989, %v2973
    %v3006 = vpack.c.bf16 %v2990, %v2974
    %v3007 = vpack.c.bf16 %v2991, %v2975
    %v3008 = vpack.c.bf16 %v2992, %v2976
    %v3009 = vpack.c.bf16 %v2993, %v2977
    %v3010 = vpack.c.bf16 %v2994, %v2978
    %v3011 = vld [vmem:[#allocation10] sm:$0xff]
    %v3012 = vld [vmem:[#allocation10 + $0x8] sm:$0xff]
    %v3013 = vld [vmem:[#allocation10 + $0x10] sm:$0xff]
    %v3014 = vld [vmem:[#allocation10 + $0x18] sm:$0xff]
    %v3015 = vld [vmem:[#allocation10 + $0x20] sm:$0xff]
    %v3016 = vld [vmem:[#allocation10 + $0x28] sm:$0xff]
    %v3017 = vld [vmem:[#allocation10 + $0x30] sm:$0xff]
    %v3018 = vld [vmem:[#allocation10 + $0x38] sm:$0xff]
    %v3019 = vld [vmem:[#allocation10 + $0x40] sm:$0xff]
    %v3020 = vld [vmem:[#allocation10 + $0x48] sm:$0xff]
    %v3021 = vld [vmem:[#allocation10 + $0x50] sm:$0xff]
    %v3022 = vld [vmem:[#allocation10 + $0x58] sm:$0xff]
    %v3023 = vld [vmem:[#allocation10 + $0x60] sm:$0xff]
    %v3024 = vld [vmem:[#allocation10 + $0x68] sm:$0xff]
    %v3025 = vld [vmem:[#allocation10 + $0x70] sm:$0xff]
    %v3026 = vld [vmem:[#allocation10 + $0x78] sm:$0xff]
    %v3027 = vld [vmem:[#allocation10 + $0x80] sm:$0xff]
    %v3028 = vld [vmem:[#allocation10 + $0x88] sm:$0xff]
    %v3029 = vld [vmem:[#allocation10 + $0x90] sm:$0xff]
    %v3030 = vld [vmem:[#allocation10 + $0x98] sm:$0xff]
    %v3031 = vld [vmem:[#allocation10 + $0xa0] sm:$0xff]
    %v3032 = vld [vmem:[#allocation10 + $0xa8] sm:$0xff]
    %v3033 = vld [vmem:[#allocation10 + $0xb0] sm:$0xff]
    %v3034 = vld [vmem:[#allocation10 + $0xb8] sm:$0xff]
    %v3035 = vld [vmem:[#allocation10 + $0xc0] sm:$0xff]
    %v3036 = vld [vmem:[#allocation10 + $0xc8] sm:$0xff]
    %v3037 = vld [vmem:[#allocation10 + $0xd0] sm:$0xff]
    %v3038 = vld [vmem:[#allocation10 + $0xd8] sm:$0xff]
    %v3039 = vld [vmem:[#allocation10 + $0xe0] sm:$0xff]
    %v3040 = vld [vmem:[#allocation10 + $0xe8] sm:$0xff]
    %v3041 = vld [vmem:[#allocation10 + $0xf0] sm:$0xff]
    %v3042 = vld [vmem:[#allocation10 + $0xf8] sm:$0xff]
    %v3043 = vld [vmem:[#allocation11 + $0x2c] sm:$0x1]
    %v3044 = vlaneseq
    %v3045 = vshrl.u32 %v3044, 7
    %v3046 = vsub.s32 0, %v3045
    %v3047 = vrot.slane %v3043, %v3046
    %v3080 = vunpack.c.l.b16 %v3011
    %v3081 = vunpack.c.h.b16 %v3011
    %v3082 = vunpack.c.l.b16 %v3012
    %v3083 = vunpack.c.h.b16 %v3012
    %v3084 = vunpack.c.l.b16 %v3013
    %v3085 = vunpack.c.h.b16 %v3013
    %v3086 = vunpack.c.l.b16 %v3014
    %v3087 = vunpack.c.h.b16 %v3014
    %v3088 = vunpack.c.l.b16 %v3015
    %v3089 = vunpack.c.h.b16 %v3015
    %v3090 = vunpack.c.l.b16 %v3016
    %v3091 = vunpack.c.h.b16 %v3016
    %v3092 = vunpack.c.l.b16 %v3017
    %v3093 = vunpack.c.h.b16 %v3017
    %v3094 = vunpack.c.l.b16 %v3018
    %v3095 = vunpack.c.h.b16 %v3018
    %v3096 = vunpack.c.l.b16 %v3019
    %v3097 = vunpack.c.h.b16 %v3019
    %v3098 = vunpack.c.l.b16 %v3020
    %v3099 = vunpack.c.h.b16 %v3020
    %v3100 = vunpack.c.l.b16 %v3021
    %v3101 = vunpack.c.h.b16 %v3021
    %v3102 = vunpack.c.l.b16 %v3022
    %v3103 = vunpack.c.h.b16 %v3022
    %v3104 = vunpack.c.l.b16 %v3023
    %v3105 = vunpack.c.h.b16 %v3023
    %v3106 = vunpack.c.l.b16 %v3024
    %v3107 = vunpack.c.h.b16 %v3024
    %v3108 = vunpack.c.l.b16 %v3025
    %v3109 = vunpack.c.h.b16 %v3025
    %v3110 = vunpack.c.l.b16 %v3026
    %v3111 = vunpack.c.h.b16 %v3026
    %v3112 = vunpack.c.l.b16 %v3027
    %v3113 = vunpack.c.h.b16 %v3027
    %v3114 = vunpack.c.l.b16 %v3028
    %v3115 = vunpack.c.h.b16 %v3028
    %v3116 = vunpack.c.l.b16 %v3029
    %v3117 = vunpack.c.h.b16 %v3029
    %v3118 = vunpack.c.l.b16 %v3030
    %v3119 = vunpack.c.h.b16 %v3030
    %v3120 = vunpack.c.l.b16 %v3031
    %v3121 = vunpack.c.h.b16 %v3031
    %v3122 = vunpack.c.l.b16 %v3032
    %v3123 = vunpack.c.h.b16 %v3032
    %v3124 = vunpack.c.l.b16 %v3033
    %v3125 = vunpack.c.h.b16 %v3033
    %v3126 = vunpack.c.l.b16 %v3034
    %v3127 = vunpack.c.h.b16 %v3034
    %v3128 = vunpack.c.l.b16 %v3035
    %v3129 = vunpack.c.h.b16 %v3035
    %v3130 = vunpack.c.l.b16 %v3036
    %v3131 = vunpack.c.h.b16 %v3036
    %v3132 = vunpack.c.l.b16 %v3037
    %v3133 = vunpack.c.h.b16 %v3037
    %v3134 = vunpack.c.l.b16 %v3038
    %v3135 = vunpack.c.h.b16 %v3038
    %v3136 = vunpack.c.l.b16 %v3039
    %v3137 = vunpack.c.h.b16 %v3039
    %v3138 = vunpack.c.l.b16 %v3040
    %v3139 = vunpack.c.h.b16 %v3040
    %v3140 = vunpack.c.l.b16 %v3041
    %v3141 = vunpack.c.h.b16 %v3041
    %v3142 = vunpack.c.l.b16 %v3042
    %v3143 = vunpack.c.h.b16 %v3042
    %v3144 = vpack.c.b16 %v3096, %v3080
    %v3145 = vpack.c.b16 %v3097, %v3081
    %v3146 = vpack.c.b16 %v3098, %v3082
    %v3147 = vpack.c.b16 %v3099, %v3083
    %v3148 = vpack.c.b16 %v3100, %v3084
    %v3149 = vpack.c.b16 %v3101, %v3085
    %v3150 = vpack.c.b16 %v3102, %v3086
    %v3151 = vpack.c.b16 %v3103, %v3087
    %v3152 = vpack.c.b16 %v3104, %v3088
    %v3153 = vpack.c.b16 %v3105, %v3089
    %v3154 = vpack.c.b16 %v3106, %v3090
    %v3155 = vpack.c.b16 %v3107, %v3091
    %v3156 = vpack.c.b16 %v3108, %v3092
    %v3157 = vpack.c.b16 %v3109, %v3093
    %v3158 = vpack.c.b16 %v3110, %v3094
    %v3159 = vpack.c.b16 %v3111, %v3095
    %v3160 = vpack.c.b16 %v3128, %v3112
    %v3161 = vpack.c.b16 %v3129, %v3113
    %v3162 = vpack.c.b16 %v3130, %v3114
    %v3163 = vpack.c.b16 %v3131, %v3115
    %v3164 = vpack.c.b16 %v3132, %v3116
    %v3165 = vpack.c.b16 %v3133, %v3117
    %v3166 = vpack.c.b16 %v3134, %v3118
    %v3167 = vpack.c.b16 %v3135, %v3119
    %v3168 = vpack.c.b16 %v3136, %v3120
    %v3169 = vpack.c.b16 %v3137, %v3121
    %v3170 = vpack.c.b16 %v3138, %v3122
    %v3171 = vpack.c.b16 %v3139, %v3123
    %v3172 = vpack.c.b16 %v3140, %v3124
    %v3173 = vpack.c.b16 %v3141, %v3125
    %v3174 = vpack.c.b16 %v3142, %v3126
    %v3175 = vpack.c.b16 %v3143, %v3127
    %3208 = vmatprep.subr.bf16.mxu0 0
    %3209 = vmatpush1.bf16.xpose.msra.mxu0 0
    %3210 = vmatprep.subr.bf16.mxu0 0
    %3211 = vmatpush1.bf16.xpose.msra.mxu0 0
    %3212 = vmatprep.subr.bf16.mxu0 0
    %3213 = vmatpush1.bf16.xpose.msra.mxu0 0
    %3214 = vmatprep.subr.bf16.mxu0 0
    %3215 = vmatpush1.bf16.xpose.msra.mxu0 0
    %3216 = vmatprep.subr.bf16.mxu0 0
    %3217 = vmatpush1.bf16.xpose.msra.mxu0 0
    %3218 = vmatprep.subr.bf16.mxu0 0
    %3219 = vmatpush1.bf16.xpose.msra.mxu0 0
    %3220 = vmatprep.subr.bf16.mxu0 %v3161
    %3221 = vmatpush1.bf16.xpose.msra.mxu0 %v3160
    %3222 = vmatprep.subr.bf16.mxu0 %v3145
    %3223 = vmatpush1.bf16.xpose.msra.mxu0 %v3144
    %3224 = vmatprep.subr.bf16.mxu0 0
    %3225 = vmatpush2.bf16.xpose.msra.mxu0 0
    %3226 = vmatprep.subr.bf16.mxu0 0
    %3227 = vmatpush2.bf16.xpose.msra.mxu0 0
    %3228 = vmatprep.subr.bf16.mxu0 0
    %3229 = vmatpush2.bf16.xpose.msra.mxu0 0
    %3230 = vmatprep.subr.bf16.mxu0 0
    %3231 = vmatpush2.bf16.xpose.msra.mxu0 0
    %3232 = vmatprep.subr.bf16.mxu0 0
    %3233 = vmatpush2.bf16.xpose.msra.mxu0 0
    %3234 = vmatprep.subr.bf16.mxu0 0
    %3235 = vmatpush2.bf16.xpose.msra.mxu0 0
    %3236 = vmatprep.subr.bf16.mxu0 0
    %3237 = vmatpush2.bf16.xpose.msra.mxu0 0
    %3238 = vmatprep.subr.bf16.mxu0 0
    %3239 = vmatpush2.bf16.xpose.msra.mxu0 0
    %3240 = vmatprep.mubr.bf16.mxu0 %v2996
    %3241 = vmatmul.mubr.bf16.gmra.mxu0 %v2995
    %v3242 = vpop.f32.mrf.mxu0
    %v3243 = vadd.f32 %v3047, %v3242
    %v3244 = vpop.f32.mrf.mxu0
    %v3245 = vpop.f32.mrf.mxu0
    %v3246 = vadd.f32 %v3047, %v3245
    %v3247 = vpop.f32.mrf.mxu0
    %3248 = vdwg.mxu0
    %3249 = vmatprep.subr.bf16.mxu0 0
    %3250 = vmatpush1.bf16.xpose.msra.mxu0 0
    %3251 = vmatprep.subr.bf16.mxu0 0
    %3252 = vmatpush1.bf16.xpose.msra.mxu0 0
    %3253 = vmatprep.subr.bf16.mxu0 0
    %3254 = vmatpush1.bf16.xpose.msra.mxu0 0
    %3255 = vmatprep.subr.bf16.mxu0 0
    %3256 = vmatpush1.bf16.xpose.msra.mxu0 0
    %3257 = vmatprep.subr.bf16.mxu0 0
    %3258 = vmatpush1.bf16.xpose.msra.mxu0 0
    %3259 = vmatprep.subr.bf16.mxu0 0
    %3260 = vmatpush1.bf16.xpose.msra.mxu0 0
    %3261 = vmatprep.subr.bf16.mxu0 %v3163
    %3262 = vmatpush1.bf16.xpose.msra.mxu0 %v3162
    %3263 = vmatprep.subr.bf16.mxu0 %v3147
    %3264 = vmatpush1.bf16.xpose.msra.mxu0 %v3146
    %3265 = vmatprep.subr.bf16.mxu0 0
    %3266 = vmatpush2.bf16.xpose.msra.mxu0 0
    %3267 = vmatprep.subr.bf16.mxu0 0
    %3268 = vmatpush2.bf16.xpose.msra.mxu0 0
    %3269 = vmatprep.subr.bf16.mxu0 0
    %3270 = vmatpush2.bf16.xpose.msra.mxu0 0
    %3271 = vmatprep.subr.bf16.mxu0 0
    %3272 = vmatpush2.bf16.xpose.msra.mxu0 0
    %3273 = vmatprep.subr.bf16.mxu0 0
    %3274 = vmatpush2.bf16.xpose.msra.mxu0 0
    %3275 = vmatprep.subr.bf16.mxu0 0
    %3276 = vmatpush2.bf16.xpose.msra.mxu0 0
    %3277 = vmatprep.subr.bf16.mxu0 0
    %3278 = vmatpush2.bf16.xpose.msra.mxu0 0
    %3279 = vmatprep.subr.bf16.mxu0 0
    %3280 = vmatpush2.bf16.xpose.msra.mxu0 0
    %3281 = vmatprep.mubr.bf16.mxu0 %v2998
    %3282 = vmatmul.mubr.bf16.gmra.mxu0 %v2997
    %v3283 = vpop.f32.mrf.mxu0
    %v3284 = vadd.f32 %v3243, %v3283
    %v3285 = vpop.f32.mrf.mxu0
    %v3286 = vpop.f32.mrf.mxu0
    %v3287 = vadd.f32 %v3246, %v3286
    %v3288 = vpop.f32.mrf.mxu0
    %3289 = vdwg.mxu0
    %3290 = vmatprep.subr.bf16.mxu0 0
    %3291 = vmatpush1.bf16.xpose.msra.mxu0 0
    %3292 = vmatprep.subr.bf16.mxu0 0
    %3293 = vmatpush1.bf16.xpose.msra.mxu0 0
    %3294 = vmatprep.subr.bf16.mxu0 0
    %3295 = vmatpush1.bf16.xpose.msra.mxu0 0
    %3296 = vmatprep.subr.bf16.mxu0 0
    %3297 = vmatpush1.bf16.xpose.msra.mxu0 0
    %3298 = vmatprep.subr.bf16.mxu0 0
    %3299 = vmatpush1.bf16.xpose.msra.mxu0 0
    %3300 = vmatprep.subr.bf16.mxu0 0
    %3301 = vmatpush1.bf16.xpose.msra.mxu0 0
    %3302 = vmatprep.subr.bf16.mxu0 %v3165
    %3303 = vmatpush1.bf16.xpose.msra.mxu0 %v3164
    %3304 = vmatprep.subr.bf16.mxu0 %v3149
    %3305 = vmatpush1.bf16.xpose.msra.mxu0 %v3148
    %3306 = vmatprep.subr.bf16.mxu0 0
    %3307 = vmatpush2.bf16.xpose.msra.mxu0 0
    %3308 = vmatprep.subr.bf16.mxu0 0
    %3309 = vmatpush2.bf16.xpose.msra.mxu0 0
    %3310 = vmatprep.subr.bf16.mxu0 0
    %3311 = vmatpush2.bf16.xpose.msra.mxu0 0
    %3312 = vmatprep.subr.bf16.mxu0 0
    %3313 = vmatpush2.bf16.xpose.msra.mxu0 0
    %3314 = vmatprep.subr.bf16.mxu0 0
    %3315 = vmatpush2.bf16.xpose.msra.mxu0 0
    %3316 = vmatprep.subr.bf16.mxu0 0
    %3317 = vmatpush2.bf16.xpose.msra.mxu0 0
    %3318 = vmatprep.subr.bf16.mxu0 0
    %3319 = vmatpush2.bf16.xpose.msra.mxu0 0
    %3320 = vmatprep.subr.bf16.mxu0 0
    %3321 = vmatpush2.bf16.xpose.msra.mxu0 0
    %3322 = vmatprep.mubr.bf16.mxu0 %v3000
    %3323 = vmatmul.mubr.bf16.gmra.mxu0 %v2999
    %v3324 = vpop.f32.mrf.mxu0
    %v3325 = vadd.f32 %v3284, %v3324
    %v3326 = vpop.f32.mrf.mxu0
    %v3327 = vpop.f32.mrf.mxu0
    %v3328 = vadd.f32 %v3287, %v3327
    %v3329 = vpop.f32.mrf.mxu0
    %3330 = vdwg.mxu0
    %3331 = vmatprep.subr.bf16.mxu0 0
    %3332 = vmatpush1.bf16.xpose.msra.mxu0 0
    %3333 = vmatprep.subr.bf16.mxu0 0
    %3334 = vmatpush1.bf16.xpose.msra.mxu0 0
    %3335 = vmatprep.subr.bf16.mxu0 0
    %3336 = vmatpush1.bf16.xpose.msra.mxu0 0
    %3337 = vmatprep.subr.bf16.mxu0 0
    %3338 = vmatpush1.bf16.xpose.msra.mxu0 0
    %3339 = vmatprep.subr.bf16.mxu0 0
    %3340 = vmatpush1.bf16.xpose.msra.mxu0 0
    %3341 = vmatprep.subr.bf16.mxu0 0
    %3342 = vmatpush1.bf16.xpose.msra.mxu0 0
    %3343 = vmatprep.subr.bf16.mxu0 %v3167
    %3344 = vmatpush1.bf16.xpose.msra.mxu0 %v3166
    %3345 = vmatprep.subr.bf16.mxu0 %v3151
    %3346 = vmatpush1.bf16.xpose.msra.mxu0 %v3150
    %3347 = vmatprep.subr.bf16.mxu0 0
    %3348 = vmatpush2.bf16.xpose.msra.mxu0 0
    %3349 = vmatprep.subr.bf16.mxu0 0
    %3350 = vmatpush2.bf16.xpose.msra.mxu0 0
    %3351 = vmatprep.subr.bf16.mxu0 0
    %3352 = vmatpush2.bf16.xpose.msra.mxu0 0
    %3353 = vmatprep.subr.bf16.mxu0 0
    %3354 = vmatpush2.bf16.xpose.msra.mxu0 0
    %3355 = vmatprep.subr.bf16.mxu0 0
    %3356 = vmatpush2.bf16.xpose.msra.mxu0 0
    %3357 = vmatprep.subr.bf16.mxu0 0
    %3358 = vmatpush2.bf16.xpose.msra.mxu0 0
    %3359 = vmatprep.subr.bf16.mxu0 0
    %3360 = vmatpush2.bf16.xpose.msra.mxu0 0
    %3361 = vmatprep.subr.bf16.mxu0 0
    %3362 = vmatpush2.bf16.xpose.msra.mxu0 0
    %3363 = vmatprep.mubr.bf16.mxu0 %v3002
    %3364 = vmatmul.mubr.bf16.gmra.mxu0 %v3001
    %v3365 = vpop.f32.mrf.mxu0
    %v3366 = vadd.f32 %v3325, %v3365
    %v3367 = vpop.f32.mrf.mxu0
    %v3368 = vpop.f32.mrf.mxu0
    %v3369 = vadd.f32 %v3328, %v3368
    %v3370 = vpop.f32.mrf.mxu0
    %3371 = vdwg.mxu0
    %3372 = vmatprep.subr.bf16.mxu0 0
    %3373 = vmatpush1.bf16.xpose.msra.mxu0 0
    %3374 = vmatprep.subr.bf16.mxu0 0
    %3375 = vmatpush1.bf16.xpose.msra.mxu0 0
    %3376 = vmatprep.subr.bf16.mxu0 0
    %3377 = vmatpush1.bf16.xpose.msra.mxu0 0
    %3378 = vmatprep.subr.bf16.mxu0 0
    %3379 = vmatpush1.bf16.xpose.msra.mxu0 0
    %3380 = vmatprep.subr.bf16.mxu0 0
    %3381 = vmatpush1.bf16.xpose.msra.mxu0 0
    %3382 = vmatprep.subr.bf16.mxu0 0
    %3383 = vmatpush1.bf16.xpose.msra.mxu0 0
    %3384 = vmatprep.subr.bf16.mxu0 %v3169
    %3385 = vmatpush1.bf16.xpose.msra.mxu0 %v3168
    %3386 = vmatprep.subr.bf16.mxu0 %v3153
    %3387 = vmatpush1.bf16.xpose.msra.mxu0 %v3152
    %3388 = vmatprep.subr.bf16.mxu0 0
    %3389 = vmatpush2.bf16.xpose.msra.mxu0 0
    %3390 = vmatprep.subr.bf16.mxu0 0
    %3391 = vmatpush2.bf16.xpose.msra.mxu0 0
    %3392 = vmatprep.subr.bf16.mxu0 0
    %3393 = vmatpush2.bf16.xpose.msra.mxu0 0
    %3394 = vmatprep.subr.bf16.mxu0 0
    %3395 = vmatpush2.bf16.xpose.msra.mxu0 0
    %3396 = vmatprep.subr.bf16.mxu0 0
    %3397 = vmatpush2.bf16.xpose.msra.mxu0 0
    %3398 = vmatprep.subr.bf16.mxu0 0
    %3399 = vmatpush2.bf16.xpose.msra.mxu0 0
    %3400 = vmatprep.subr.bf16.mxu0 0
    %3401 = vmatpush2.bf16.xpose.msra.mxu0 0
    %3402 = vmatprep.subr.bf16.mxu0 0
    %3403 = vmatpush2.bf16.xpose.msra.mxu0 0
    %3404 = vmatprep.mubr.bf16.mxu0 %v3004
    %3405 = vmatmul.mubr.bf16.gmra.mxu0 %v3003
    %v3406 = vpop.f32.mrf.mxu0
    %v3407 = vadd.f32 %v3366, %v3406
    %v3408 = vpop.f32.mrf.mxu0
    %v3409 = vpop.f32.mrf.mxu0
    %v3410 = vadd.f32 %v3369, %v3409
    %v3411 = vpop.f32.mrf.mxu0
    %3412 = vdwg.mxu0
    %3413 = vmatprep.subr.bf16.mxu0 0
    %3414 = vmatpush1.bf16.xpose.msra.mxu0 0
    %3415 = vmatprep.subr.bf16.mxu0 0
    %3416 = vmatpush1.bf16.xpose.msra.mxu0 0
    %3417 = vmatprep.subr.bf16.mxu0 0
    %3418 = vmatpush1.bf16.xpose.msra.mxu0 0
    %3419 = vmatprep.subr.bf16.mxu0 0
    %3420 = vmatpush1.bf16.xpose.msra.mxu0 0
    %3421 = vmatprep.subr.bf16.mxu0 0
    %3422 = vmatpush1.bf16.xpose.msra.mxu0 0
    %3423 = vmatprep.subr.bf16.mxu0 0
    %3424 = vmatpush1.bf16.xpose.msra.mxu0 0
    %3425 = vmatprep.subr.bf16.mxu0 %v3171
    %3426 = vmatpush1.bf16.xpose.msra.mxu0 %v3170
    %3427 = vmatprep.subr.bf16.mxu0 %v3155
    %3428 = vmatpush1.bf16.xpose.msra.mxu0 %v3154
    %3429 = vmatprep.subr.bf16.mxu0 0
    %3430 = vmatpush2.bf16.xpose.msra.mxu0 0
    %3431 = vmatprep.subr.bf16.mxu0 0
    %3432 = vmatpush2.bf16.xpose.msra.mxu0 0
    %3433 = vmatprep.subr.bf16.mxu0 0
    %3434 = vmatpush2.bf16.xpose.msra.mxu0 0
    %3435 = vmatprep.subr.bf16.mxu0 0
    %3436 = vmatpush2.bf16.xpose.msra.mxu0 0
    %3437 = vmatprep.subr.bf16.mxu0 0
    %3438 = vmatpush2.bf16.xpose.msra.mxu0 0
    %3439 = vmatprep.subr.bf16.mxu0 0
    %3440 = vmatpush2.bf16.xpose.msra.mxu0 0
    %3441 = vmatprep.subr.bf16.mxu0 0
    %3442 = vmatpush2.bf16.xpose.msra.mxu0 0
    %3443 = vmatprep.subr.bf16.mxu0 0
    %3444 = vmatpush2.bf16.xpose.msra.mxu0 0
    %3445 = vmatprep.mubr.bf16.mxu0 %v3006
    %3446 = vmatmul.mubr.bf16.gmra.mxu0 %v3005
    %v3447 = vpop.f32.mrf.mxu0
    %v3448 = vadd.f32 %v3407, %v3447
    %v3449 = vpop.f32.mrf.mxu0
    %v3450 = vpop.f32.mrf.mxu0
    %v3451 = vadd.f32 %v3410, %v3450
    %v3452 = vpop.f32.mrf.mxu0
    %3453 = vdwg.mxu0
    %3454 = vmatprep.subr.bf16.mxu0 0
    %3455 = vmatpush1.bf16.xpose.msra.mxu0 0
    %3456 = vmatprep.subr.bf16.mxu0 0
    %3457 = vmatpush1.bf16.xpose.msra.mxu0 0
    %3458 = vmatprep.subr.bf16.mxu0 0
    %3459 = vmatpush1.bf16.xpose.msra.mxu0 0
    %3460 = vmatprep.subr.bf16.mxu0 0
    %3461 = vmatpush1.bf16.xpose.msra.mxu0 0
    %3462 = vmatprep.subr.bf16.mxu0 0
    %3463 = vmatpush1.bf16.xpose.msra.mxu0 0
    %3464 = vmatprep.subr.bf16.mxu0 0
    %3465 = vmatpush1.bf16.xpose.msra.mxu0 0
    %3466 = vmatprep.subr.bf16.mxu0 %v3173
    %3467 = vmatpush1.bf16.xpose.msra.mxu0 %v3172
    %3468 = vmatprep.subr.bf16.mxu0 %v3157
    %3469 = vmatpush1.bf16.xpose.msra.mxu0 %v3156
    %3470 = vmatprep.subr.bf16.mxu0 0
    %3471 = vmatpush2.bf16.xpose.msra.mxu0 0
    %3472 = vmatprep.subr.bf16.mxu0 0
    %3473 = vmatpush2.bf16.xpose.msra.mxu0 0
    %3474 = vmatprep.subr.bf16.mxu0 0
    %3475 = vmatpush2.bf16.xpose.msra.mxu0 0
    %3476 = vmatprep.subr.bf16.mxu0 0
    %3477 = vmatpush2.bf16.xpose.msra.mxu0 0
    %3478 = vmatprep.subr.bf16.mxu0 0
    %3479 = vmatpush2.bf16.xpose.msra.mxu0 0
    %3480 = vmatprep.subr.bf16.mxu0 0
    %3481 = vmatpush2.bf16.xpose.msra.mxu0 0
    %3482 = vmatprep.subr.bf16.mxu0 0
    %3483 = vmatpush2.bf16.xpose.msra.mxu0 0
    %3484 = vmatprep.subr.bf16.mxu0 0
    %3485 = vmatpush2.bf16.xpose.msra.mxu0 0
    %3486 = vmatprep.mubr.bf16.mxu0 %v3008
    %3487 = vmatmul.mubr.bf16.gmra.mxu0 %v3007
    %v3488 = vpop.f32.mrf.mxu0
    %v3489 = vadd.f32 %v3448, %v3488
    %v3490 = vpop.f32.mrf.mxu0
    %v3491 = vpop.f32.mrf.mxu0
    %v3492 = vadd.f32 %v3451, %v3491
    %v3493 = vpop.f32.mrf.mxu0
    %3494 = vdwg.mxu0
    %3495 = vmatprep.subr.bf16.mxu0 0
    %3496 = vmatpush1.bf16.xpose.msra.mxu0 0
    %3497 = vmatprep.subr.bf16.mxu0 0
    %3498 = vmatpush1.bf16.xpose.msra.mxu0 0
    %3499 = vmatprep.subr.bf16.mxu0 0
    %3500 = vmatpush1.bf16.xpose.msra.mxu0 0
    %3501 = vmatprep.subr.bf16.mxu0 0
    %3502 = vmatpush1.bf16.xpose.msra.mxu0 0
    %3503 = vmatprep.subr.bf16.mxu0 0
    %3504 = vmatpush1.bf16.xpose.msra.mxu0 0
    %3505 = vmatprep.subr.bf16.mxu0 0
    %3506 = vmatpush1.bf16.xpose.msra.mxu0 0
    %3507 = vmatprep.subr.bf16.mxu0 %v3175
    %3508 = vmatpush1.bf16.xpose.msra.mxu0 %v3174
    %3509 = vmatprep.subr.bf16.mxu0 %v3159
    %3510 = vmatpush1.bf16.xpose.msra.mxu0 %v3158
    %3511 = vmatprep.subr.bf16.mxu0 0
    %3512 = vmatpush2.bf16.xpose.msra.mxu0 0
    %3513 = vmatprep.subr.bf16.mxu0 0
    %3514 = vmatpush2.bf16.xpose.msra.mxu0 0
    %3515 = vmatprep.subr.bf16.mxu0 0
    %3516 = vmatpush2.bf16.xpose.msra.mxu0 0
    %3517 = vmatprep.subr.bf16.mxu0 0
    %3518 = vmatpush2.bf16.xpose.msra.mxu0 0
    %3519 = vmatprep.subr.bf16.mxu0 0
    %3520 = vmatpush2.bf16.xpose.msra.mxu0 0
    %3521 = vmatprep.subr.bf16.mxu0 0
    %3522 = vmatpush2.bf16.xpose.msra.mxu0 0
    %3523 = vmatprep.subr.bf16.mxu0 0
    %3524 = vmatpush2.bf16.xpose.msra.mxu0 0
    %3525 = vmatprep.subr.bf16.mxu0 0
    %3526 = vmatpush2.bf16.xpose.msra.mxu0 0
    %3527 = vmatprep.mubr.bf16.mxu0 %v3010
    %3528 = vmatmul.mubr.bf16.gmra.mxu0 %v3009
    %v3529 = vpop.f32.mrf.mxu0
    %v3530 = vadd.f32 %v3489, %v3529
    %v3531 = vpop.f32.mrf.mxu0
    %v3532 = vpop.f32.mrf.mxu0
    %v3533 = vadd.f32 %v3492, %v3532
    %v3534 = vpop.f32.mrf.mxu0
    %3535 = vdwg.mxu0
    %v3536 = vadd.f32 %v2335, %v3530
    %v3537 = vadd.f32 %v2336, %v3533
    %v3538 = vld [vmem:[#allocation11 + $0x8] sm:$0x1]
    %v3539 = vld [vmem:[#allocation11 + $0xa] sm:$0x1]
    %v3540 = vsel %vm129, %v3536, 0.0
    %3541 = vadd.xlane.f32.xlu0 %v3540
    %v3542 = vpop.xlane.xlu0 %3541
    %v3543 = vsel %vm129, %v3537, 0.0
    %3544 = vadd.xlane.f32.xlu0 %v3543
    %v3545 = vpop.xlane.xlu0 %3544
    %v3546 = vmul.f32 %v3542, %v2304
    %v3547 = vmul.f32 %v3545, %v2304
    %v3548 = vsub.f32 %v3536, %v3546
    %v3549 = vsub.f32 %v3537, %v3547
    %v3550 = vmul.f32 %v3548, %v3548
    %v3551 = vmul.f32 %v3549, %v3549
    %v3552 = vsel %vm129, %v3550, 0.0
    %3553 = vadd.xlane.f32.xlu0 %v3552
    %v3554 = vpop.xlane.xlu0 %3553
    %v3555 = vsel %vm129, %v3551, 0.0
    %3556 = vadd.xlane.f32.xlu0 %v3555
    %v3557 = vpop.xlane.xlu0 %3556
    %v3558 = vmul.f32 %v3554, %v2304
    %v3559 = vmul.f32 %v3557, %v2304
    %v3560 = vadd.f32 %v3558, 1e-05
    %v3561 = vadd.f32 %v3559, 1e-05
    %v3562 = vrsqrt.pop %v3560
    %v3563 = vrsqrt.pop %v3561
    %v3564 = vmul.f32 %v3548, %v3562
    %v3565 = vmul.f32 %v3549, %v3563
    %v3566 = vlaneseq
    %v3567 = vshrl.u32 %v3566, 7
    %v3568 = vsub.s32 0, %v3567
    %v3569 = vrot.slane %v3538, %v3568
    %v3570 = vmul.f32 %v3564, %v3569
    %v3571 = vmul.f32 %v3565, %v3569
    %v3572 = vlaneseq
    %v3573 = vshrl.u32 %v3572, 7
    %v3574 = vsub.s32 0, %v3573
    %v3575 = vrot.slane %v3539, %v3574
    %v3576 = vadd.f32 %v3570, %v3575
    %v3577 = vadd.f32 %v3571, %v3575
    %v3578 = vpack.c.bf16 %v3577, %v3576
    %s3579 = scalar_lea.vmem [#allocation5], 16
    %v3580 = vld [vmem:[%s3579] sm:$0xf]
    %v3581 = vld [vmem:[%s3579 + $0x4] sm:$0xf]
    %v3582 = vld [vmem:[%s3579 + $0x8] sm:$0xf]
    %v3583 = vld [vmem:[%s3579 + $0xc] sm:$0xf]
    %v3584 = vld [vmem:[#allocation11 + $0x1] sm:$0x1]
    %v3585 = vlaneseq
    %v3586 = vshrl.u32 %v3585, 7
    %v3587 = vsub.s32 0, %v3586
    %v3588 = vrot.slane %v3584, %v3587
    %v3593 = vunpack.c.l.b16 %v3580
    %v3594 = vunpack.c.l.b16 %v3581
    %v3595 = vunpack.c.l.b16 %v3582
    %v3596 = vunpack.c.l.b16 %v3583
    %v3597 = vpack.c.b16 %v3594, %v3593
    %v3598 = vpack.c.b16 %v3596, %v3595
    %v3602 = vsel %vm129, %v3578, 0
    %3604 = vmatprep.subr.bf16.mxu0 0
    %3605 = vmatpush1.bf16.msra.mxu0 0
    %3606 = vmatprep.subr.bf16.mxu0 0
    %3607 = vmatpush1.bf16.msra.mxu0 0
    %3608 = vmatprep.subr.bf16.mxu0 0
    %3609 = vmatpush1.bf16.msra.mxu0 0
    %3610 = vmatprep.subr.bf16.mxu0 0
    %3611 = vmatpush1.bf16.msra.mxu0 0
    %3612 = vmatprep.subr.bf16.mxu0 0
    %3613 = vmatpush1.bf16.msra.mxu0 0
    %3614 = vmatprep.subr.bf16.mxu0 0
    %3615 = vmatpush1.bf16.msra.mxu0 0
    %3616 = vmatprep.subr.bf16.mxu0 0
    %3617 = vmatpush1.bf16.msra.mxu0 %v3598
    %3618 = vmatprep.subr.bf16.mxu0 0
    %3619 = vmatpush1.bf16.msra.mxu0 %v3597
    %3620 = vmatprep.subr.bf16.mxu0 0
    %3621 = vmatpush2.bf16.msra.mxu0 0
    %3622 = vmatprep.subr.bf16.mxu0 0
    %3623 = vmatpush2.bf16.msra.mxu0 0
    %3624 = vmatprep.subr.bf16.mxu0 0
    %3625 = vmatpush2.bf16.msra.mxu0 0
    %3626 = vmatprep.subr.bf16.mxu0 0
    %3627 = vmatpush2.bf16.msra.mxu0 0
    %3628 = vmatprep.subr.bf16.mxu0 0
    %3629 = vmatpush2.bf16.msra.mxu0 0
    %3630 = vmatprep.subr.bf16.mxu0 0
    %3631 = vmatpush2.bf16.msra.mxu0 0
    %3632 = vmatprep.subr.bf16.mxu0 0
    %3633 = vmatpush2.bf16.msra.mxu0 0
    %3634 = vmatprep.subr.bf16.mxu0 0
    %3635 = vmatpush2.bf16.msra.mxu0 0
    %3636 = vmatprep.mubr.bf16.mxu0 0
    %3637 = vmatmul.mubr.bf16.gmra.mxu0 %v3602
    %v3638 = vpop.f32.mrf.mxu0
    %v3639 = vadd.f32 %v3588, %v3638
    %v3640 = vpop.f32.mrf.mxu0
    %v3641 = vpop.f32.mrf.mxu0
    %v3642 = vadd.f32 %v3588, %v3641
    %v3643 = vpop.f32.mrf.mxu0
    %3644 = vdwg.mxu0
    %3647 = vrot.lane.b32.xlu0 %v3639, 120
    %v3648 = vpop.permute.xlu0 %3647
    %3649 = vrot.lane.b32.xlu0 %v3642, 120
    %v3650 = vpop.permute.xlu0 %3649
    %3653 = vrot.lane.b32.xlu0 %v3639, 112
    %v3654 = vpop.permute.xlu0 %3653
    %3655 = vrot.lane.b32.xlu0 %v3642, 112
    %v3656 = vpop.permute.xlu0 %3655
    %3659 = vrot.lane.b32.xlu0 %v3639, 104
    %v3660 = vpop.permute.xlu0 %3659
    %3661 = vrot.lane.b32.xlu0 %v3642, 104
    %v3662 = vpop.permute.xlu0 %3661
    %v3665 = vcombine.low %v3639, %v3654
    %v3666 = vcombine.high %v3639, %v3654
    %v3668 = vunpack.c.l.s4 1983009808
    %v3669 = vunpack.c.0.s8 %v3668
    %v3670 = vlaneseq
    %v3671 = vshrl.u32 %v3670, 7
    %v3672 = vsub.s32 %v3669, %v3671
    %v3673 = vrot.slane %v3665, %v3672
    %v3675 = vunpack.c.l.s4 1983009808
    %v3676 = vunpack.c.0.s8 %v3675
    %v3677 = vlaneseq
    %v3678 = vshrl.u32 %v3677, 7
    %v3679 = vsub.s32 %v3676, %v3678
    %v3680 = vrot.slane %v3666, %v3679
    %v3681 = vcombine.low %v3648, %v3660
    %v3682 = vcombine.high %v3648, %v3660
    %v3684 = vunpack.c.l.s4 1983009808
    %v3685 = vunpack.c.0.s8 %v3684
    %v3686 = vlaneseq
    %v3687 = vshrl.u32 %v3686, 7
    %v3688 = vsub.s32 %v3685, %v3687
    %v3689 = vrot.slane %v3681, %v3688
    %v3691 = vunpack.c.l.s4 1983009808
    %v3692 = vunpack.c.0.s8 %v3691
    %v3693 = vlaneseq
    %v3694 = vshrl.u32 %v3693, 7
    %v3695 = vsub.s32 %v3692, %v3694
    %v3696 = vrot.slane %v3682, %v3695
    %v3697 = vcombine.low %v3673, %v3689
    %v3698 = vcombine.high %v3673, %v3689
    %v3700 = vunpack.c.l.s4 1934713408
    %v3701 = vunpack.c.0.s8 %v3700
    %v3702 = vlaneseq
    %v3703 = vshrl.u32 %v3702, 7
    %v3704 = vsub.s32 %v3701, %v3703
    %v3705 = vrot.slane %v3697, %v3704
    %v3707 = vunpack.c.l.s4 1934713408
    %v3708 = vunpack.c.0.s8 %v3707
    %v3709 = vlaneseq
    %v3710 = vshrl.u32 %v3709, 7
    %v3711 = vsub.s32 %v3708, %v3710
    %v3712 = vrot.slane %v3698, %v3711
    %v3713 = vcombine.low %v3680, %v3696
    %v3714 = vcombine.high %v3680, %v3696
    %v3716 = vunpack.c.l.s4 1934713408
    %v3717 = vunpack.c.0.s8 %v3716
    %v3718 = vlaneseq
    %v3719 = vshrl.u32 %v3718, 7
    %v3720 = vsub.s32 %v3717, %v3719
    %v3721 = vrot.slane %v3713, %v3720
    %v3723 = vunpack.c.l.s4 1934713408
    %v3724 = vunpack.c.0.s8 %v3723
    %v3725 = vlaneseq
    %v3726 = vshrl.u32 %v3725, 7
    %v3727 = vsub.s32 %v3724, %v3726
    %v3728 = vrot.slane %v3714, %v3727
    %v3729 = vcombine.high %v3705, 0.0
    %v3730 = vcombine.high %v3712, 0.0
    %v3731 = vcombine.high %v3721, 0.0
    %v3732 = vcombine.high %v3728, 0.0
    %v3733 = vcombine.low %v3642, %v3656
    %v3734 = vcombine.high %v3642, %v3656
    %v3736 = vunpack.c.l.s4 1983009808
    %v3737 = vunpack.c.0.s8 %v3736
    %v3738 = vlaneseq
    %v3739 = vshrl.u32 %v3738, 7
    %v3740 = vsub.s32 %v3737, %v3739
    %v3741 = vrot.slane %v3733, %v3740
    %v3743 = vunpack.c.l.s4 1983009808
    %v3744 = vunpack.c.0.s8 %v3743
    %v3745 = vlaneseq
    %v3746 = vshrl.u32 %v3745, 7
    %v3747 = vsub.s32 %v3744, %v3746
    %v3748 = vrot.slane %v3734, %v3747
    %v3749 = vcombine.low %v3650, %v3662
    %v3750 = vcombine.high %v3650, %v3662
    %v3752 = vunpack.c.l.s4 1983009808
    %v3753 = vunpack.c.0.s8 %v3752
    %v3754 = vlaneseq
    %v3755 = vshrl.u32 %v3754, 7
    %v3756 = vsub.s32 %v3753, %v3755
    %v3757 = vrot.slane %v3749, %v3756
    %v3759 = vunpack.c.l.s4 1983009808
    %v3760 = vunpack.c.0.s8 %v3759
    %v3761 = vlaneseq
    %v3762 = vshrl.u32 %v3761, 7
    %v3763 = vsub.s32 %v3760, %v3762
    %v3764 = vrot.slane %v3750, %v3763
    %v3765 = vcombine.low %v3741, %v3757
    %v3766 = vcombine.high %v3741, %v3757
    %v3768 = vunpack.c.l.s4 1934713408
    %v3769 = vunpack.c.0.s8 %v3768
    %v3770 = vlaneseq
    %v3771 = vshrl.u32 %v3770, 7
    %v3772 = vsub.s32 %v3769, %v3771
    %v3773 = vrot.slane %v3765, %v3772
    %v3775 = vunpack.c.l.s4 1934713408
    %v3776 = vunpack.c.0.s8 %v3775
    %v3777 = vlaneseq
    %v3778 = vshrl.u32 %v3777, 7
    %v3779 = vsub.s32 %v3776, %v3778
    %v3780 = vrot.slane %v3766, %v3779
    %v3781 = vcombine.low %v3748, %v3764
    %v3782 = vcombine.high %v3748, %v3764
    %v3784 = vunpack.c.l.s4 1934713408
    %v3785 = vunpack.c.0.s8 %v3784
    %v3786 = vlaneseq
    %v3787 = vshrl.u32 %v3786, 7
    %v3788 = vsub.s32 %v3785, %v3787
    %v3789 = vrot.slane %v3781, %v3788
    %v3791 = vunpack.c.l.s4 1934713408
    %v3792 = vunpack.c.0.s8 %v3791
    %v3793 = vlaneseq
    %v3794 = vshrl.u32 %v3793, 7
    %v3795 = vsub.s32 %v3792, %v3794
    %v3796 = vrot.slane %v3782, %v3795
    %v3797 = vcombine.high %v3773, 0.0
    %v3798 = vcombine.high %v3780, 0.0
    %v3799 = vcombine.high %v3789, 0.0
    %v3800 = vcombine.high %v3796, 0.0
    %v3801 = vcombine.low %v3705, %v3712
    %v3803 = vunpack.c.l.s4 1983009808
    %v3804 = vunpack.c.0.s8 %v3803
    %v3805 = vlaneseq
    %v3806 = vshrl.u32 %v3805, 7
    %v3807 = vsub.s32 %v3804, %v3806
    %v3808 = vrot.slane %v3801, %v3807
    %v3809 = vcombine.low %v3729, %v3730
    %v3811 = vunpack.c.l.s4 1983009808
    %v3812 = vunpack.c.0.s8 %v3811
    %v3813 = vlaneseq
    %v3814 = vshrl.u32 %v3813, 7
    %v3815 = vsub.s32 %v3812, %v3814
    %v3816 = vrot.slane %v3809, %v3815
    %v3817 = vcombine.low %v3721, %v3728
    %v3819 = vunpack.c.l.s4 1983009808
    %v3820 = vunpack.c.0.s8 %v3819
    %v3821 = vlaneseq
    %v3822 = vshrl.u32 %v3821, 7
    %v3823 = vsub.s32 %v3820, %v3822
    %v3824 = vrot.slane %v3817, %v3823
    %v3825 = vcombine.low %v3731, %v3732
    %v3827 = vunpack.c.l.s4 1983009808
    %v3828 = vunpack.c.0.s8 %v3827
    %v3829 = vlaneseq
    %v3830 = vshrl.u32 %v3829, 7
    %v3831 = vsub.s32 %v3828, %v3830
    %v3832 = vrot.slane %v3825, %v3831
    %v3833 = vcombine.low %v3808, %v3816
    %v3834 = vcombine.high %v3808, %v3816
    %v3836 = vunpack.c.l.s4 1934713408
    %v3837 = vunpack.c.0.s8 %v3836
    %v3838 = vlaneseq
    %v3839 = vshrl.u32 %v3838, 7
    %v3840 = vsub.s32 %v3837, %v3839
    %v3841 = vrot.slane %v3833, %v3840
    %v3843 = vunpack.c.l.s4 1934713408
    %v3844 = vunpack.c.0.s8 %v3843
    %v3845 = vlaneseq
    %v3846 = vshrl.u32 %v3845, 7
    %v3847 = vsub.s32 %v3844, %v3846
    %v3848 = vrot.slane %v3834, %v3847
    %v3849 = vcombine.low %v3824, %v3832
    %v3850 = vcombine.high %v3824, %v3832
    %v3852 = vunpack.c.l.s4 1934713408
    %v3853 = vunpack.c.0.s8 %v3852
    %v3854 = vlaneseq
    %v3855 = vshrl.u32 %v3854, 7
    %v3856 = vsub.s32 %v3853, %v3855
    %v3857 = vrot.slane %v3849, %v3856
    %v3859 = vunpack.c.l.s4 1934713408
    %v3860 = vunpack.c.0.s8 %v3859
    %v3861 = vlaneseq
    %v3862 = vshrl.u32 %v3861, 7
    %v3863 = vsub.s32 %v3860, %v3862
    %v3864 = vrot.slane %v3850, %v3863
    %v3865 = vcombine.low %v3841, %v3857
    %v3866 = vcombine.high %v3841, %v3857
    %v3867 = vcombine.low %v3848, %v3864
    %v3868 = vcombine.high %v3848, %v3864
    %v3869 = vcombine.low %v3773, %v3780
    %v3871 = vunpack.c.l.s4 1983009808
    %v3872 = vunpack.c.0.s8 %v3871
    %v3873 = vlaneseq
    %v3874 = vshrl.u32 %v3873, 7
    %v3875 = vsub.s32 %v3872, %v3874
    %v3876 = vrot.slane %v3869, %v3875
    %v3877 = vcombine.low %v3797, %v3798
    %v3879 = vunpack.c.l.s4 1983009808
    %v3880 = vunpack.c.0.s8 %v3879
    %v3881 = vlaneseq
    %v3882 = vshrl.u32 %v3881, 7
    %v3883 = vsub.s32 %v3880, %v3882
    %v3884 = vrot.slane %v3877, %v3883
    %v3885 = vcombine.low %v3789, %v3796
    %v3887 = vunpack.c.l.s4 1983009808
    %v3888 = vunpack.c.0.s8 %v3887
    %v3889 = vlaneseq
    %v3890 = vshrl.u32 %v3889, 7
    %v3891 = vsub.s32 %v3888, %v3890
    %v3892 = vrot.slane %v3885, %v3891
    %v3893 = vcombine.low %v3799, %v3800
    %v3895 = vunpack.c.l.s4 1983009808
    %v3896 = vunpack.c.0.s8 %v3895
    %v3897 = vlaneseq
    %v3898 = vshrl.u32 %v3897, 7
    %v3899 = vsub.s32 %v3896, %v3898
    %v3900 = vrot.slane %v3893, %v3899
    %v3901 = vcombine.low %v3876, %v3884
    %v3902 = vcombine.high %v3876, %v3884
    %v3904 = vunpack.c.l.s4 1934713408
    %v3905 = vunpack.c.0.s8 %v3904
    %v3906 = vlaneseq
    %v3907 = vshrl.u32 %v3906, 7
    %v3908 = vsub.s32 %v3905, %v3907
    %v3909 = vrot.slane %v3901, %v3908
    %v3911 = vunpack.c.l.s4 1934713408
    %v3912 = vunpack.c.0.s8 %v3911
    %v3913 = vlaneseq
    %v3914 = vshrl.u32 %v3913, 7
    %v3915 = vsub.s32 %v3912, %v3914
    %v3916 = vrot.slane %v3902, %v3915
    %v3917 = vcombine.low %v3892, %v3900
    %v3918 = vcombine.high %v3892, %v3900
    %v3920 = vunpack.c.l.s4 1934713408
    %v3921 = vunpack.c.0.s8 %v3920
    %v3922 = vlaneseq
    %v3923 = vshrl.u32 %v3922, 7
    %v3924 = vsub.s32 %v3921, %v3923
    %v3925 = vrot.slane %v3917, %v3924
    %v3927 = vunpack.c.l.s4 1934713408
    %v3928 = vunpack.c.0.s8 %v3927
    %v3929 = vlaneseq
    %v3930 = vshrl.u32 %v3929, 7
    %v3931 = vsub.s32 %v3928, %v3930
    %v3932 = vrot.slane %v3918, %v3931
    %v3933 = vcombine.low %v3909, %v3925
    %v3934 = vcombine.high %v3909, %v3925
    %v3935 = vcombine.low %v3916, %v3932
    %v3936 = vcombine.high %v3916, %v3932
    %v3937 = vpack.c.bf16 %v3865, %v3865
    %v3938 = vpack.c.bf16 %v3866, %v3866
    %v3939 = vpack.c.bf16 %v3867, %v3867
    %v3940 = vpack.c.bf16 %v3868, %v3868
    %v3941 = vpack.c.bf16 %v3933, %v3933
    %v3942 = vpack.c.bf16 %v3934, %v3934
    %v3943 = vpack.c.bf16 %v3935, %v3935
    %v3944 = vpack.c.bf16 %v3936, %v3936
    %3945 = vrot.lane.b32.xlu0 %v3639, 96
    %v3946 = vpop.permute.xlu0 %3945
    %3947 = vrot.lane.b32.xlu0 %v3642, 96
    %v3948 = vpop.permute.xlu0 %3947
    %3949 = vrot.lane.b32.xlu0 %v3648, 96
    %v3950 = vpop.permute.xlu0 %3949
    %3951 = vrot.lane.b32.xlu0 %v3650, 96
    %v3952 = vpop.permute.xlu0 %3951
    %3953 = vrot.lane.b32.xlu0 %v3654, 96
    %v3954 = vpop.permute.xlu0 %3953
    %3955 = vrot.lane.b32.xlu0 %v3656, 96
    %v3956 = vpop.permute.xlu0 %3955
    %3957 = vrot.lane.b32.xlu0 %v3660, 96
    %v3958 = vpop.permute.xlu0 %3957
    %3959 = vrot.lane.b32.xlu0 %v3662, 96
    %v3960 = vpop.permute.xlu0 %3959
    %v3969 = vcombine.low %v3946, %v3954
    %v3970 = vcombine.high %v3946, %v3954
    %v3972 = vunpack.c.l.s4 1983009808
    %v3973 = vunpack.c.0.s8 %v3972
    %v3974 = vlaneseq
    %v3975 = vshrl.u32 %v3974, 7
    %v3976 = vsub.s32 %v3973, %v3975
    %v3977 = vrot.slane %v3969, %v3976
    %v3979 = vunpack.c.l.s4 1983009808
    %v3980 = vunpack.c.0.s8 %v3979
    %v3981 = vlaneseq
    %v3982 = vshrl.u32 %v3981, 7
    %v3983 = vsub.s32 %v3980, %v3982
    %v3984 = vrot.slane %v3970, %v3983
    %v3985 = vcombine.low %v3950, %v3958
    %v3986 = vcombine.high %v3950, %v3958
    %v3988 = vunpack.c.l.s4 1983009808
    %v3989 = vunpack.c.0.s8 %v3988
    %v3990 = vlaneseq
    %v3991 = vshrl.u32 %v3990, 7
    %v3992 = vsub.s32 %v3989, %v3991
    %v3993 = vrot.slane %v3985, %v3992
    %v3995 = vunpack.c.l.s4 1983009808
    %v3996 = vunpack.c.0.s8 %v3995
    %v3997 = vlaneseq
    %v3998 = vshrl.u32 %v3997, 7
    %v3999 = vsub.s32 %v3996, %v3998
    %v4000 = vrot.slane %v3986, %v3999
    %v4001 = vcombine.low %v3977, %v3993
    %v4002 = vcombine.high %v3977, %v3993
    %v4004 = vunpack.c.l.s4 1934713408
    %v4005 = vunpack.c.0.s8 %v4004
    %v4006 = vlaneseq
    %v4007 = vshrl.u32 %v4006, 7
    %v4008 = vsub.s32 %v4005, %v4007
    %v4009 = vrot.slane %v4001, %v4008
    %v4011 = vunpack.c.l.s4 1934713408
    %v4012 = vunpack.c.0.s8 %v4011
    %v4013 = vlaneseq
    %v4014 = vshrl.u32 %v4013, 7
    %v4015 = vsub.s32 %v4012, %v4014
    %v4016 = vrot.slane %v4002, %v4015
    %v4017 = vcombine.low %v3984, %v4000
    %v4018 = vcombine.high %v3984, %v4000
    %v4020 = vunpack.c.l.s4 1934713408
    %v4021 = vunpack.c.0.s8 %v4020
    %v4022 = vlaneseq
    %v4023 = vshrl.u32 %v4022, 7
    %v4024 = vsub.s32 %v4021, %v4023
    %v4025 = vrot.slane %v4017, %v4024
    %v4027 = vunpack.c.l.s4 1934713408
    %v4028 = vunpack.c.0.s8 %v4027
    %v4029 = vlaneseq
    %v4030 = vshrl.u32 %v4029, 7
    %v4031 = vsub.s32 %v4028, %v4030
    %v4032 = vrot.slane %v4018, %v4031
    %v4033 = vcombine.high %v4009, 0.0
    %v4034 = vcombine.high %v4016, 0.0
    %v4035 = vcombine.high %v4025, 0.0
    %v4036 = vcombine.high %v4032, 0.0
    %v4037 = vcombine.low %v3948, %v3956
    %v4038 = vcombine.high %v3948, %v3956
    %v4040 = vunpack.c.l.s4 1983009808
    %v4041 = vunpack.c.0.s8 %v4040
    %v4042 = vlaneseq
    %v4043 = vshrl.u32 %v4042, 7
    %v4044 = vsub.s32 %v4041, %v4043
    %v4045 = vrot.slane %v4037, %v4044
    %v4047 = vunpack.c.l.s4 1983009808
    %v4048 = vunpack.c.0.s8 %v4047
    %v4049 = vlaneseq
    %v4050 = vshrl.u32 %v4049, 7
    %v4051 = vsub.s32 %v4048, %v4050
    %v4052 = vrot.slane %v4038, %v4051
    %v4053 = vcombine.low %v3952, %v3960
    %v4054 = vcombine.high %v3952, %v3960
    %v4056 = vunpack.c.l.s4 1983009808
    %v4057 = vunpack.c.0.s8 %v4056
    %v4058 = vlaneseq
    %v4059 = vshrl.u32 %v4058, 7
    %v4060 = vsub.s32 %v4057, %v4059
    %v4061 = vrot.slane %v4053, %v4060
    %v4063 = vunpack.c.l.s4 1983009808
    %v4064 = vunpack.c.0.s8 %v4063
    %v4065 = vlaneseq
    %v4066 = vshrl.u32 %v4065, 7
    %v4067 = vsub.s32 %v4064, %v4066
    %v4068 = vrot.slane %v4054, %v4067
    %v4069 = vcombine.low %v4045, %v4061
    %v4070 = vcombine.high %v4045, %v4061
    %v4072 = vunpack.c.l.s4 1934713408
    %v4073 = vunpack.c.0.s8 %v4072
    %v4074 = vlaneseq
    %v4075 = vshrl.u32 %v4074, 7
    %v4076 = vsub.s32 %v4073, %v4075
    %v4077 = vrot.slane %v4069, %v4076
    %v4079 = vunpack.c.l.s4 1934713408
    %v4080 = vunpack.c.0.s8 %v4079
    %v4081 = vlaneseq
    %v4082 = vshrl.u32 %v4081, 7
    %v4083 = vsub.s32 %v4080, %v4082
    %v4084 = vrot.slane %v4070, %v4083
    %v4085 = vcombine.low %v4052, %v4068
    %v4086 = vcombine.high %v4052, %v4068
    %v4088 = vunpack.c.l.s4 1934713408
    %v4089 = vunpack.c.0.s8 %v4088
    %v4090 = vlaneseq
    %v4091 = vshrl.u32 %v4090, 7
    %v4092 = vsub.s32 %v4089, %v4091
    %v4093 = vrot.slane %v4085, %v4092
    %v4095 = vunpack.c.l.s4 1934713408
    %v4096 = vunpack.c.0.s8 %v4095
    %v4097 = vlaneseq
    %v4098 = vshrl.u32 %v4097, 7
    %v4099 = vsub.s32 %v4096, %v4098
    %v4100 = vrot.slane %v4086, %v4099
    %v4101 = vcombine.high %v4077, 0.0
    %v4102 = vcombine.high %v4084, 0.0
    %v4103 = vcombine.high %v4093, 0.0
    %v4104 = vcombine.high %v4100, 0.0
    %v4105 = vcombine.low %v4009, %v4016
    %v4107 = vunpack.c.l.s4 1983009808
    %v4108 = vunpack.c.0.s8 %v4107
    %v4109 = vlaneseq
    %v4110 = vshrl.u32 %v4109, 7
    %v4111 = vsub.s32 %v4108, %v4110
    %v4112 = vrot.slane %v4105, %v4111
    %v4113 = vcombine.low %v4033, %v4034
    %v4115 = vunpack.c.l.s4 1983009808
    %v4116 = vunpack.c.0.s8 %v4115
    %v4117 = vlaneseq
    %v4118 = vshrl.u32 %v4117, 7
    %v4119 = vsub.s32 %v4116, %v4118
    %v4120 = vrot.slane %v4113, %v4119
    %v4121 = vcombine.low %v4025, %v4032
    %v4123 = vunpack.c.l.s4 1983009808
    %v4124 = vunpack.c.0.s8 %v4123
    %v4125 = vlaneseq
    %v4126 = vshrl.u32 %v4125, 7
    %v4127 = vsub.s32 %v4124, %v4126
    %v4128 = vrot.slane %v4121, %v4127
    %v4129 = vcombine.low %v4035, %v4036
    %v4131 = vunpack.c.l.s4 1983009808
    %v4132 = vunpack.c.0.s8 %v4131
    %v4133 = vlaneseq
    %v4134 = vshrl.u32 %v4133, 7
    %v4135 = vsub.s32 %v4132, %v4134
    %v4136 = vrot.slane %v4129, %v4135
    %v4137 = vcombine.low %v4112, %v4120
    %v4138 = vcombine.high %v4112, %v4120
    %v4140 = vunpack.c.l.s4 1934713408
    %v4141 = vunpack.c.0.s8 %v4140
    %v4142 = vlaneseq
    %v4143 = vshrl.u32 %v4142, 7
    %v4144 = vsub.s32 %v4141, %v4143
    %v4145 = vrot.slane %v4137, %v4144
    %v4147 = vunpack.c.l.s4 1934713408
    %v4148 = vunpack.c.0.s8 %v4147
    %v4149 = vlaneseq
    %v4150 = vshrl.u32 %v4149, 7
    %v4151 = vsub.s32 %v4148, %v4150
    %v4152 = vrot.slane %v4138, %v4151
    %v4153 = vcombine.low %v4128, %v4136
    %v4154 = vcombine.high %v4128, %v4136
    %v4156 = vunpack.c.l.s4 1934713408
    %v4157 = vunpack.c.0.s8 %v4156
    %v4158 = vlaneseq
    %v4159 = vshrl.u32 %v4158, 7
    %v4160 = vsub.s32 %v4157, %v4159
    %v4161 = vrot.slane %v4153, %v4160
    %v4163 = vunpack.c.l.s4 1934713408
    %v4164 = vunpack.c.0.s8 %v4163
    %v4165 = vlaneseq
    %v4166 = vshrl.u32 %v4165, 7
    %v4167 = vsub.s32 %v4164, %v4166
    %v4168 = vrot.slane %v4154, %v4167
    %v4169 = vcombine.low %v4145, %v4161
    %v4170 = vcombine.high %v4145, %v4161
    %v4171 = vcombine.low %v4152, %v4168
    %v4172 = vcombine.high %v4152, %v4168
    %v4173 = vcombine.low %v4077, %v4084
    %v4175 = vunpack.c.l.s4 1983009808
    %v4176 = vunpack.c.0.s8 %v4175
    %v4177 = vlaneseq
    %v4178 = vshrl.u32 %v4177, 7
    %v4179 = vsub.s32 %v4176, %v4178
    %v4180 = vrot.slane %v4173, %v4179
    %v4181 = vcombine.low %v4101, %v4102
    %v4183 = vunpack.c.l.s4 1983009808
    %v4184 = vunpack.c.0.s8 %v4183
    %v4185 = vlaneseq
    %v4186 = vshrl.u32 %v4185, 7
    %v4187 = vsub.s32 %v4184, %v4186
    %v4188 = vrot.slane %v4181, %v4187
    %v4189 = vcombine.low %v4093, %v4100
    %v4191 = vunpack.c.l.s4 1983009808
    %v4192 = vunpack.c.0.s8 %v4191
    %v4193 = vlaneseq
    %v4194 = vshrl.u32 %v4193, 7
    %v4195 = vsub.s32 %v4192, %v4194
    %v4196 = vrot.slane %v4189, %v4195
    %v4197 = vcombine.low %v4103, %v4104
    %v4199 = vunpack.c.l.s4 1983009808
    %v4200 = vunpack.c.0.s8 %v4199
    %v4201 = vlaneseq
    %v4202 = vshrl.u32 %v4201, 7
    %v4203 = vsub.s32 %v4200, %v4202
    %v4204 = vrot.slane %v4197, %v4203
    %v4205 = vcombine.low %v4180, %v4188
    %v4206 = vcombine.high %v4180, %v4188
    %v4208 = vunpack.c.l.s4 1934713408
    %v4209 = vunpack.c.0.s8 %v4208
    %v4210 = vlaneseq
    %v4211 = vshrl.u32 %v4210, 7
    %v4212 = vsub.s32 %v4209, %v4211
    %v4213 = vrot.slane %v4205, %v4212
    %v4215 = vunpack.c.l.s4 1934713408
    %v4216 = vunpack.c.0.s8 %v4215
    %v4217 = vlaneseq
    %v4218 = vshrl.u32 %v4217, 7
    %v4219 = vsub.s32 %v4216, %v4218
    %v4220 = vrot.slane %v4206, %v4219
    %v4221 = vcombine.low %v4196, %v4204
    %v4222 = vcombine.high %v4196, %v4204
    %v4224 = vunpack.c.l.s4 1934713408
    %v4225 = vunpack.c.0.s8 %v4224
    %v4226 = vlaneseq
    %v4227 = vshrl.u32 %v4226, 7
    %v4228 = vsub.s32 %v4225, %v4227
    %v4229 = vrot.slane %v4221, %v4228
    %v4231 = vunpack.c.l.s4 1934713408
    %v4232 = vunpack.c.0.s8 %v4231
    %v4233 = vlaneseq
    %v4234 = vshrl.u32 %v4233, 7
    %v4235 = vsub.s32 %v4232, %v4234
    %v4236 = vrot.slane %v4222, %v4235
    %v4237 = vcombine.low %v4213, %v4229
    %v4238 = vcombine.high %v4213, %v4229
    %v4239 = vcombine.low %v4220, %v4236
    %v4240 = vcombine.high %v4220, %v4236
    %v4241 = vpack.c.bf16 %v4169, %v4169
    %v4242 = vpack.c.bf16 %v4170, %v4170
    %v4243 = vpack.c.bf16 %v4171, %v4171
    %v4244 = vpack.c.bf16 %v4172, %v4172
    %v4245 = vpack.c.bf16 %v4237, %v4237
    %v4246 = vpack.c.bf16 %v4238, %v4238
    %v4247 = vpack.c.bf16 %v4239, %v4239
    %v4248 = vpack.c.bf16 %v4240, %v4240
    %4249 = vrot.lane.b32.xlu0 %v3639, 64
    %v4250 = vpop.permute.xlu0 %4249
    %4251 = vrot.lane.b32.xlu0 %v3642, 64
    %v4252 = vpop.permute.xlu0 %4251
    %4253 = vrot.lane.b32.xlu0 %v3648, 64
    %v4254 = vpop.permute.xlu0 %4253
    %4255 = vrot.lane.b32.xlu0 %v3650, 64
    %v4256 = vpop.permute.xlu0 %4255
    %4257 = vrot.lane.b32.xlu0 %v3654, 64
    %v4258 = vpop.permute.xlu0 %4257
    %4259 = vrot.lane.b32.xlu0 %v3656, 64
    %v4260 = vpop.permute.xlu0 %4259
    %4261 = vrot.lane.b32.xlu0 %v3660, 64
    %v4262 = vpop.permute.xlu0 %4261
    %4263 = vrot.lane.b32.xlu0 %v3662, 64
    %v4264 = vpop.permute.xlu0 %4263
    %v4273 = vcombine.low %v4250, %v4258
    %v4274 = vcombine.high %v4250, %v4258
    %v4276 = vunpack.c.l.s4 1983009808
    %v4277 = vunpack.c.0.s8 %v4276
    %v4278 = vlaneseq
    %v4279 = vshrl.u32 %v4278, 7
    %v4280 = vsub.s32 %v4277, %v4279
    %v4281 = vrot.slane %v4273, %v4280
    %v4283 = vunpack.c.l.s4 1983009808
    %v4284 = vunpack.c.0.s8 %v4283
    %v4285 = vlaneseq
    %v4286 = vshrl.u32 %v4285, 7
    %v4287 = vsub.s32 %v4284, %v4286
    %v4288 = vrot.slane %v4274, %v4287
    %v4289 = vcombine.low %v4254, %v4262
    %v4290 = vcombine.high %v4254, %v4262
    %v4292 = vunpack.c.l.s4 1983009808
    %v4293 = vunpack.c.0.s8 %v4292
    %v4294 = vlaneseq
    %v4295 = vshrl.u32 %v4294, 7
    %v4296 = vsub.s32 %v4293, %v4295
    %v4297 = vrot.slane %v4289, %v4296
    %v4299 = vunpack.c.l.s4 1983009808
    %v4300 = vunpack.c.0.s8 %v4299
    %v4301 = vlaneseq
    %v4302 = vshrl.u32 %v4301, 7
    %v4303 = vsub.s32 %v4300, %v4302
    %v4304 = vrot.slane %v4290, %v4303
    %v4305 = vcombine.low %v4281, %v4297
    %v4306 = vcombine.high %v4281, %v4297
    %v4308 = vunpack.c.l.s4 1934713408
    %v4309 = vunpack.c.0.s8 %v4308
    %v4310 = vlaneseq
    %v4311 = vshrl.u32 %v4310, 7
    %v4312 = vsub.s32 %v4309, %v4311
    %v4313 = vrot.slane %v4305, %v4312
    %v4315 = vunpack.c.l.s4 1934713408
    %v4316 = vunpack.c.0.s8 %v4315
    %v4317 = vlaneseq
    %v4318 = vshrl.u32 %v4317, 7
    %v4319 = vsub.s32 %v4316, %v4318
    %v4320 = vrot.slane %v4306, %v4319
    %v4321 = vcombine.low %v4288, %v4304
    %v4322 = vcombine.high %v4288, %v4304
    %v4324 = vunpack.c.l.s4 1934713408
    %v4325 = vunpack.c.0.s8 %v4324
    %v4326 = vlaneseq
    %v4327 = vshrl.u32 %v4326, 7
    %v4328 = vsub.s32 %v4325, %v4327
    %v4329 = vrot.slane %v4321, %v4328
    %v4331 = vunpack.c.l.s4 1934713408
    %v4332 = vunpack.c.0.s8 %v4331
    %v4333 = vlaneseq
    %v4334 = vshrl.u32 %v4333, 7
    %v4335 = vsub.s32 %v4332, %v4334
    %v4336 = vrot.slane %v4322, %v4335
    %v4337 = vcombine.high %v4313, 0.0
    %v4338 = vcombine.high %v4320, 0.0
    %v4339 = vcombine.high %v4329, 0.0
    %v4340 = vcombine.high %v4336, 0.0
    %v4341 = vcombine.low %v4252, %v4260
    %v4342 = vcombine.high %v4252, %v4260
    %v4344 = vunpack.c.l.s4 1983009808
    %v4345 = vunpack.c.0.s8 %v4344
    %v4346 = vlaneseq
    %v4347 = vshrl.u32 %v4346, 7
    %v4348 = vsub.s32 %v4345, %v4347
    %v4349 = vrot.slane %v4341, %v4348
    %v4351 = vunpack.c.l.s4 1983009808
    %v4352 = vunpack.c.0.s8 %v4351
    %v4353 = vlaneseq
    %v4354 = vshrl.u32 %v4353, 7
    %v4355 = vsub.s32 %v4352, %v4354
    %v4356 = vrot.slane %v4342, %v4355
    %v4357 = vcombine.low %v4256, %v4264
    %v4358 = vcombine.high %v4256, %v4264
    %v4360 = vunpack.c.l.s4 1983009808
    %v4361 = vunpack.c.0.s8 %v4360
    %v4362 = vlaneseq
    %v4363 = vshrl.u32 %v4362, 7
    %v4364 = vsub.s32 %v4361, %v4363
    %v4365 = vrot.slane %v4357, %v4364
    %v4367 = vunpack.c.l.s4 1983009808
    %v4368 = vunpack.c.0.s8 %v4367
    %v4369 = vlaneseq
    %v4370 = vshrl.u32 %v4369, 7
    %v4371 = vsub.s32 %v4368, %v4370
    %v4372 = vrot.slane %v4358, %v4371
    %v4373 = vcombine.low %v4349, %v4365
    %v4374 = vcombine.high %v4349, %v4365
    %v4376 = vunpack.c.l.s4 1934713408
    %v4377 = vunpack.c.0.s8 %v4376
    %v4378 = vlaneseq
    %v4379 = vshrl.u32 %v4378, 7
    %v4380 = vsub.s32 %v4377, %v4379
    %v4381 = vrot.slane %v4373, %v4380
    %v4383 = vunpack.c.l.s4 1934713408
    %v4384 = vunpack.c.0.s8 %v4383
    %v4385 = vlaneseq
    %v4386 = vshrl.u32 %v4385, 7
    %v4387 = vsub.s32 %v4384, %v4386
    %v4388 = vrot.slane %v4374, %v4387
    %v4389 = vcombine.low %v4356, %v4372
    %v4390 = vcombine.high %v4356, %v4372
    %v4392 = vunpack.c.l.s4 1934713408
    %v4393 = vunpack.c.0.s8 %v4392
    %v4394 = vlaneseq
    %v4395 = vshrl.u32 %v4394, 7
    %v4396 = vsub.s32 %v4393, %v4395
    %v4397 = vrot.slane %v4389, %v4396
    %v4399 = vunpack.c.l.s4 1934713408
    %v4400 = vunpack.c.0.s8 %v4399
    %v4401 = vlaneseq
    %v4402 = vshrl.u32 %v4401, 7
    %v4403 = vsub.s32 %v4400, %v4402
    %v4404 = vrot.slane %v4390, %v4403
    %v4405 = vcombine.high %v4381, 0.0
    %v4406 = vcombine.high %v4388, 0.0
    %v4407 = vcombine.high %v4397, 0.0
    %v4408 = vcombine.high %v4404, 0.0
    %v4409 = vcombine.low %v4313, %v4320
    %v4411 = vunpack.c.l.s4 1983009808
    %v4412 = vunpack.c.0.s8 %v4411
    %v4413 = vlaneseq
    %v4414 = vshrl.u32 %v4413, 7
    %v4415 = vsub.s32 %v4412, %v4414
    %v4416 = vrot.slane %v4409, %v4415
    %v4417 = vcombine.low %v4337, %v4338
    %v4419 = vunpack.c.l.s4 1983009808
    %v4420 = vunpack.c.0.s8 %v4419
    %v4421 = vlaneseq
    %v4422 = vshrl.u32 %v4421, 7
    %v4423 = vsub.s32 %v4420, %v4422
    %v4424 = vrot.slane %v4417, %v4423
    %v4425 = vcombine.low %v4329, %v4336
    %v4427 = vunpack.c.l.s4 1983009808
    %v4428 = vunpack.c.0.s8 %v4427
    %v4429 = vlaneseq
    %v4430 = vshrl.u32 %v4429, 7
    %v4431 = vsub.s32 %v4428, %v4430
    %v4432 = vrot.slane %v4425, %v4431
    %v4433 = vcombine.low %v4339, %v4340
    %v4435 = vunpack.c.l.s4 1983009808
    %v4436 = vunpack.c.0.s8 %v4435
    %v4437 = vlaneseq
    %v4438 = vshrl.u32 %v4437, 7
    %v4439 = vsub.s32 %v4436, %v4438
    %v4440 = vrot.slane %v4433, %v4439
    %v4441 = vcombine.low %v4416, %v4424
    %v4442 = vcombine.high %v4416, %v4424
    %v4444 = vunpack.c.l.s4 1934713408
    %v4445 = vunpack.c.0.s8 %v4444
    %v4446 = vlaneseq
    %v4447 = vshrl.u32 %v4446, 7
    %v4448 = vsub.s32 %v4445, %v4447
    %v4449 = vrot.slane %v4441, %v4448
    %v4451 = vunpack.c.l.s4 1934713408
    %v4452 = vunpack.c.0.s8 %v4451
    %v4453 = vlaneseq
    %v4454 = vshrl.u32 %v4453, 7
    %v4455 = vsub.s32 %v4452, %v4454
    %v4456 = vrot.slane %v4442, %v4455
    %v4457 = vcombine.low %v4432, %v4440
    %v4458 = vcombine.high %v4432, %v4440
    %v4460 = vunpack.c.l.s4 1934713408
    %v4461 = vunpack.c.0.s8 %v4460
    %v4462 = vlaneseq
    %v4463 = vshrl.u32 %v4462, 7
    %v4464 = vsub.s32 %v4461, %v4463
    %v4465 = vrot.slane %v4457, %v4464
    %v4467 = vunpack.c.l.s4 1934713408
    %v4468 = vunpack.c.0.s8 %v4467
    %v4469 = vlaneseq
    %v4470 = vshrl.u32 %v4469, 7
    %v4471 = vsub.s32 %v4468, %v4470
    %v4472 = vrot.slane %v4458, %v4471
    %v4473 = vcombine.low %v4449, %v4465
    %v4474 = vcombine.high %v4449, %v4465
    %v4475 = vcombine.low %v4456, %v4472
    %v4476 = vcombine.high %v4456, %v4472
    %v4477 = vcombine.low %v4381, %v4388
    %v4479 = vunpack.c.l.s4 1983009808
    %v4480 = vunpack.c.0.s8 %v4479
    %v4481 = vlaneseq
    %v4482 = vshrl.u32 %v4481, 7
    %v4483 = vsub.s32 %v4480, %v4482
    %v4484 = vrot.slane %v4477, %v4483
    %v4485 = vcombine.low %v4405, %v4406
    %v4487 = vunpack.c.l.s4 1983009808
    %v4488 = vunpack.c.0.s8 %v4487
    %v4489 = vlaneseq
    %v4490 = vshrl.u32 %v4489, 7
    %v4491 = vsub.s32 %v4488, %v4490
    %v4492 = vrot.slane %v4485, %v4491
    %v4493 = vcombine.low %v4397, %v4404
    %v4495 = vunpack.c.l.s4 1983009808
    %v4496 = vunpack.c.0.s8 %v4495
    %v4497 = vlaneseq
    %v4498 = vshrl.u32 %v4497, 7
    %v4499 = vsub.s32 %v4496, %v4498
    %v4500 = vrot.slane %v4493, %v4499
    %v4501 = vcombine.low %v4407, %v4408
    %v4503 = vunpack.c.l.s4 1983009808
    %v4504 = vunpack.c.0.s8 %v4503
    %v4505 = vlaneseq
    %v4506 = vshrl.u32 %v4505, 7
    %v4507 = vsub.s32 %v4504, %v4506
    %v4508 = vrot.slane %v4501, %v4507
    %v4509 = vcombine.low %v4484, %v4492
    %v4510 = vcombine.high %v4484, %v4492
    %v4512 = vunpack.c.l.s4 1934713408
    %v4513 = vunpack.c.0.s8 %v4512
    %v4514 = vlaneseq
    %v4515 = vshrl.u32 %v4514, 7
    %v4516 = vsub.s32 %v4513, %v4515
    %v4517 = vrot.slane %v4509, %v4516
    %v4519 = vunpack.c.l.s4 1934713408
    %v4520 = vunpack.c.0.s8 %v4519
    %v4521 = vlaneseq
    %v4522 = vshrl.u32 %v4521, 7
    %v4523 = vsub.s32 %v4520, %v4522
    %v4524 = vrot.slane %v4510, %v4523
    %v4525 = vcombine.low %v4500, %v4508
    %v4526 = vcombine.high %v4500, %v4508
    %v4528 = vunpack.c.l.s4 1934713408
    %v4529 = vunpack.c.0.s8 %v4528
    %v4530 = vlaneseq
    %v4531 = vshrl.u32 %v4530, 7
    %v4532 = vsub.s32 %v4529, %v4531
    %v4533 = vrot.slane %v4525, %v4532
    %v4535 = vunpack.c.l.s4 1934713408
    %v4536 = vunpack.c.0.s8 %v4535
    %v4537 = vlaneseq
    %v4538 = vshrl.u32 %v4537, 7
    %v4539 = vsub.s32 %v4536, %v4538
    %v4540 = vrot.slane %v4526, %v4539
    %v4541 = vcombine.low %v4517, %v4533
    %v4542 = vcombine.high %v4517, %v4533
    %v4543 = vcombine.low %v4524, %v4540
    %v4544 = vcombine.high %v4524, %v4540
    %v4545 = vpack.c.bf16 %v4473, %v4473
    %v4546 = vpack.c.bf16 %v4474, %v4474
    %v4547 = vpack.c.bf16 %v4475, %v4475
    %v4548 = vpack.c.bf16 %v4476, %v4476
    %v4549 = vpack.c.bf16 %v4541, %v4541
    %v4550 = vpack.c.bf16 %v4542, %v4542
    %v4551 = vpack.c.bf16 %v4543, %v4543
    %v4552 = vpack.c.bf16 %v4544, %v4544
    %v4554 = vsel %vm1082, %v3937, 0
    %v4557 = vsel %vm1082, %v4241, 0
    %4559 = vmatprep.subr.bf16.mxu0 0
    %4560 = vmatpush1.bf16.xpose.msra.mxu0 0
    %4561 = vmatprep.subr.bf16.mxu0 0
    %4562 = vmatpush1.bf16.xpose.msra.mxu0 0
    %4563 = vmatprep.subr.bf16.mxu0 0
    %4564 = vmatpush1.bf16.xpose.msra.mxu0 0
    %4565 = vmatprep.subr.bf16.mxu0 0
    %4566 = vmatpush1.bf16.xpose.msra.mxu0 0
    %4567 = vmatprep.subr.bf16.mxu0 0
    %4568 = vmatpush1.bf16.xpose.msra.mxu0 0
    %4569 = vmatprep.subr.bf16.mxu0 0
    %4570 = vmatpush1.bf16.xpose.msra.mxu0 0
    %4571 = vmatprep.subr.bf16.mxu0 0
    %4572 = vmatpush1.bf16.xpose.msra.mxu0 0
    %4573 = vmatprep.subr.bf16.mxu0 0
    %4574 = vmatpush1.bf16.xpose.msra.mxu0 %v4557
    %4575 = vmatprep.subr.bf16.mxu0 0
    %4576 = vmatpush2.bf16.xpose.msra.mxu0 0
    %4577 = vmatprep.subr.bf16.mxu0 0
    %4578 = vmatpush2.bf16.xpose.msra.mxu0 0
    %4579 = vmatprep.subr.bf16.mxu0 0
    %4580 = vmatpush2.bf16.xpose.msra.mxu0 0
    %4581 = vmatprep.subr.bf16.mxu0 0
    %4582 = vmatpush2.bf16.xpose.msra.mxu0 0
    %4583 = vmatprep.subr.bf16.mxu0 0
    %4584 = vmatpush2.bf16.xpose.msra.mxu0 0
    %4585 = vmatprep.subr.bf16.mxu0 0
    %4586 = vmatpush2.bf16.xpose.msra.mxu0 0
    %4587 = vmatprep.subr.bf16.mxu0 0
    %4588 = vmatpush2.bf16.xpose.msra.mxu0 0
    %4589 = vmatprep.subr.bf16.mxu0 0
    %4590 = vmatpush2.bf16.xpose.msra.mxu0 0
    %4591 = vmatprep.mubr.bf16.mxu0 0
    %4592 = vmatmul.mubr.bf16.gmra.mxu0 %v4554
    %v4593 = vpop.f32.mrf.mxu0
    %v4594 = vadd.f32 0.0, %v4593
    %v4595 = vpop.f32.mrf.mxu0
    %v4596 = vpop.f32.mrf.mxu0
    %v4597 = vpop.f32.mrf.mxu0
    %4598 = vdwg.mxu0
    %v4600 = vsel %vm1082, %v3938, 0
    %v4603 = vsel %vm1082, %v4242, 0
    %4605 = vmatprep.subr.bf16.mxu0 0
    %4606 = vmatpush1.bf16.xpose.msra.mxu0 0
    %4607 = vmatprep.subr.bf16.mxu0 0
    %4608 = vmatpush1.bf16.xpose.msra.mxu0 0
    %4609 = vmatprep.subr.bf16.mxu0 0
    %4610 = vmatpush1.bf16.xpose.msra.mxu0 0
    %4611 = vmatprep.subr.bf16.mxu0 0
    %4612 = vmatpush1.bf16.xpose.msra.mxu0 0
    %4613 = vmatprep.subr.bf16.mxu0 0
    %4614 = vmatpush1.bf16.xpose.msra.mxu0 0
    %4615 = vmatprep.subr.bf16.mxu0 0
    %4616 = vmatpush1.bf16.xpose.msra.mxu0 0
    %4617 = vmatprep.subr.bf16.mxu0 0
    %4618 = vmatpush1.bf16.xpose.msra.mxu0 0
    %4619 = vmatprep.subr.bf16.mxu0 0
    %4620 = vmatpush1.bf16.xpose.msra.mxu0 %v4603
    %4621 = vmatprep.subr.bf16.mxu0 0
    %4622 = vmatpush2.bf16.xpose.msra.mxu0 0
    %4623 = vmatprep.subr.bf16.mxu0 0
    %4624 = vmatpush2.bf16.xpose.msra.mxu0 0
    %4625 = vmatprep.subr.bf16.mxu0 0
    %4626 = vmatpush2.bf16.xpose.msra.mxu0 0
    %4627 = vmatprep.subr.bf16.mxu0 0
    %4628 = vmatpush2.bf16.xpose.msra.mxu0 0
    %4629 = vmatprep.subr.bf16.mxu0 0
    %4630 = vmatpush2.bf16.xpose.msra.mxu0 0
    %4631 = vmatprep.subr.bf16.mxu0 0
    %4632 = vmatpush2.bf16.xpose.msra.mxu0 0
    %4633 = vmatprep.subr.bf16.mxu0 0
    %4634 = vmatpush2.bf16.xpose.msra.mxu0 0
    %4635 = vmatprep.subr.bf16.mxu0 0
    %4636 = vmatpush2.bf16.xpose.msra.mxu0 0
    %4637 = vmatprep.mubr.bf16.mxu0 0
    %4638 = vmatmul.mubr.bf16.gmra.mxu0 %v4600
    %v4639 = vpop.f32.mrf.mxu0
    %v4640 = vadd.f32 0.0, %v4639
    %v4641 = vpop.f32.mrf.mxu0
    %v4642 = vpop.f32.mrf.mxu0
    %v4643 = vpop.f32.mrf.mxu0
    %4644 = vdwg.mxu0
    %v4646 = vsel %vm1082, %v3939, 0
    %v4649 = vsel %vm1082, %v4243, 0
    %4651 = vmatprep.subr.bf16.mxu0 0
    %4652 = vmatpush1.bf16.xpose.msra.mxu0 0
    %4653 = vmatprep.subr.bf16.mxu0 0
    %4654 = vmatpush1.bf16.xpose.msra.mxu0 0
    %4655 = vmatprep.subr.bf16.mxu0 0
    %4656 = vmatpush1.bf16.xpose.msra.mxu0 0
    %4657 = vmatprep.subr.bf16.mxu0 0
    %4658 = vmatpush1.bf16.xpose.msra.mxu0 0
    %4659 = vmatprep.subr.bf16.mxu0 0
    %4660 = vmatpush1.bf16.xpose.msra.mxu0 0
    %4661 = vmatprep.subr.bf16.mxu0 0
    %4662 = vmatpush1.bf16.xpose.msra.mxu0 0
    %4663 = vmatprep.subr.bf16.mxu0 0
    %4664 = vmatpush1.bf16.xpose.msra.mxu0 0
    %4665 = vmatprep.subr.bf16.mxu0 0
    %4666 = vmatpush1.bf16.xpose.msra.mxu0 %v4649
    %4667 = vmatprep.subr.bf16.mxu0 0
    %4668 = vmatpush2.bf16.xpose.msra.mxu0 0
    %4669 = vmatprep.subr.bf16.mxu0 0
    %4670 = vmatpush2.bf16.xpose.msra.mxu0 0
    %4671 = vmatprep.subr.bf16.mxu0 0
    %4672 = vmatpush2.bf16.xpose.msra.mxu0 0
    %4673 = vmatprep.subr.bf16.mxu0 0
    %4674 = vmatpush2.bf16.xpose.msra.mxu0 0
    %4675 = vmatprep.subr.bf16.mxu0 0
    %4676 = vmatpush2.bf16.xpose.msra.mxu0 0
    %4677 = vmatprep.subr.bf16.mxu0 0
    %4678 = vmatpush2.bf16.xpose.msra.mxu0 0
    %4679 = vmatprep.subr.bf16.mxu0 0
    %4680 = vmatpush2.bf16.xpose.msra.mxu0 0
    %4681 = vmatprep.subr.bf16.mxu0 0
    %4682 = vmatpush2.bf16.xpose.msra.mxu0 0
    %4683 = vmatprep.mubr.bf16.mxu0 0
    %4684 = vmatmul.mubr.bf16.gmra.mxu0 %v4646
    %v4685 = vpop.f32.mrf.mxu0
    %v4686 = vadd.f32 0.0, %v4685
    %v4687 = vpop.f32.mrf.mxu0
    %v4688 = vpop.f32.mrf.mxu0
    %v4689 = vpop.f32.mrf.mxu0
    %4690 = vdwg.mxu0
    %v4692 = vsel %vm1082, %v3940, 0
    %v4695 = vsel %vm1082, %v4244, 0
    %4697 = vmatprep.subr.bf16.mxu0 0
    %4698 = vmatpush1.bf16.xpose.msra.mxu0 0
    %4699 = vmatprep.subr.bf16.mxu0 0
    %4700 = vmatpush1.bf16.xpose.msra.mxu0 0
    %4701 = vmatprep.subr.bf16.mxu0 0
    %4702 = vmatpush1.bf16.xpose.msra.mxu0 0
    %4703 = vmatprep.subr.bf16.mxu0 0
    %4704 = vmatpush1.bf16.xpose.msra.mxu0 0
    %4705 = vmatprep.subr.bf16.mxu0 0
    %4706 = vmatpush1.bf16.xpose.msra.mxu0 0
    %4707 = vmatprep.subr.bf16.mxu0 0
    %4708 = vmatpush1.bf16.xpose.msra.mxu0 0
    %4709 = vmatprep.subr.bf16.mxu0 0
    %4710 = vmatpush1.bf16.xpose.msra.mxu0 0
    %4711 = vmatprep.subr.bf16.mxu0 0
    %4712 = vmatpush1.bf16.xpose.msra.mxu0 %v4695
    %4713 = vmatprep.subr.bf16.mxu0 0
    %4714 = vmatpush2.bf16.xpose.msra.mxu0 0
    %4715 = vmatprep.subr.bf16.mxu0 0
    %4716 = vmatpush2.bf16.xpose.msra.mxu0 0
    %4717 = vmatprep.subr.bf16.mxu0 0
    %4718 = vmatpush2.bf16.xpose.msra.mxu0 0
    %4719 = vmatprep.subr.bf16.mxu0 0
    %4720 = vmatpush2.bf16.xpose.msra.mxu0 0
    %4721 = vmatprep.subr.bf16.mxu0 0
    %4722 = vmatpush2.bf16.xpose.msra.mxu0 0
    %4723 = vmatprep.subr.bf16.mxu0 0
    %4724 = vmatpush2.bf16.xpose.msra.mxu0 0
    %4725 = vmatprep.subr.bf16.mxu0 0
    %4726 = vmatpush2.bf16.xpose.msra.mxu0 0
    %4727 = vmatprep.subr.bf16.mxu0 0
    %4728 = vmatpush2.bf16.xpose.msra.mxu0 0
    %4729 = vmatprep.mubr.bf16.mxu0 0
    %4730 = vmatmul.mubr.bf16.gmra.mxu0 %v4692
    %v4731 = vpop.f32.mrf.mxu0
    %v4732 = vadd.f32 0.0, %v4731
    %v4733 = vpop.f32.mrf.mxu0
    %v4734 = vpop.f32.mrf.mxu0
    %v4735 = vpop.f32.mrf.mxu0
    %4736 = vdwg.mxu0
    %v4738 = vsel %vm1082, %v3941, 0
    %v4741 = vsel %vm1082, %v4245, 0
    %4743 = vmatprep.subr.bf16.mxu0 0
    %4744 = vmatpush1.bf16.xpose.msra.mxu0 0
    %4745 = vmatprep.subr.bf16.mxu0 0
    %4746 = vmatpush1.bf16.xpose.msra.mxu0 0
    %4747 = vmatprep.subr.bf16.mxu0 0
    %4748 = vmatpush1.bf16.xpose.msra.mxu0 0
    %4749 = vmatprep.subr.bf16.mxu0 0
    %4750 = vmatpush1.bf16.xpose.msra.mxu0 0
    %4751 = vmatprep.subr.bf16.mxu0 0
    %4752 = vmatpush1.bf16.xpose.msra.mxu0 0
    %4753 = vmatprep.subr.bf16.mxu0 0
    %4754 = vmatpush1.bf16.xpose.msra.mxu0 0
    %4755 = vmatprep.subr.bf16.mxu0 0
    %4756 = vmatpush1.bf16.xpose.msra.mxu0 0
    %4757 = vmatprep.subr.bf16.mxu0 0
    %4758 = vmatpush1.bf16.xpose.msra.mxu0 %v4741
    %4759 = vmatprep.subr.bf16.mxu0 0
    %4760 = vmatpush2.bf16.xpose.msra.mxu0 0
    %4761 = vmatprep.subr.bf16.mxu0 0
    %4762 = vmatpush2.bf16.xpose.msra.mxu0 0
    %4763 = vmatprep.subr.bf16.mxu0 0
    %4764 = vmatpush2.bf16.xpose.msra.mxu0 0
    %4765 = vmatprep.subr.bf16.mxu0 0
    %4766 = vmatpush2.bf16.xpose.msra.mxu0 0
    %4767 = vmatprep.subr.bf16.mxu0 0
    %4768 = vmatpush2.bf16.xpose.msra.mxu0 0
    %4769 = vmatprep.subr.bf16.mxu0 0
    %4770 = vmatpush2.bf16.xpose.msra.mxu0 0
    %4771 = vmatprep.subr.bf16.mxu0 0
    %4772 = vmatpush2.bf16.xpose.msra.mxu0 0
    %4773 = vmatprep.subr.bf16.mxu0 0
    %4774 = vmatpush2.bf16.xpose.msra.mxu0 0
    %4775 = vmatprep.mubr.bf16.mxu0 0
    %4776 = vmatmul.mubr.bf16.gmra.mxu0 %v4738
    %v4777 = vpop.f32.mrf.mxu0
    %v4778 = vadd.f32 0.0, %v4777
    %v4779 = vpop.f32.mrf.mxu0
    %v4780 = vpop.f32.mrf.mxu0
    %v4781 = vpop.f32.mrf.mxu0
    %4782 = vdwg.mxu0
    %v4784 = vsel %vm1082, %v3942, 0
    %v4787 = vsel %vm1082, %v4246, 0
    %4789 = vmatprep.subr.bf16.mxu0 0
    %4790 = vmatpush1.bf16.xpose.msra.mxu0 0
    %4791 = vmatprep.subr.bf16.mxu0 0
    %4792 = vmatpush1.bf16.xpose.msra.mxu0 0
    %4793 = vmatprep.subr.bf16.mxu0 0
    %4794 = vmatpush1.bf16.xpose.msra.mxu0 0
    %4795 = vmatprep.subr.bf16.mxu0 0
    %4796 = vmatpush1.bf16.xpose.msra.mxu0 0
    %4797 = vmatprep.subr.bf16.mxu0 0
    %4798 = vmatpush1.bf16.xpose.msra.mxu0 0
    %4799 = vmatprep.subr.bf16.mxu0 0
    %4800 = vmatpush1.bf16.xpose.msra.mxu0 0
    %4801 = vmatprep.subr.bf16.mxu0 0
    %4802 = vmatpush1.bf16.xpose.msra.mxu0 0
    %4803 = vmatprep.subr.bf16.mxu0 0
    %4804 = vmatpush1.bf16.xpose.msra.mxu0 %v4787
    %4805 = vmatprep.subr.bf16.mxu0 0
    %4806 = vmatpush2.bf16.xpose.msra.mxu0 0
    %4807 = vmatprep.subr.bf16.mxu0 0
    %4808 = vmatpush2.bf16.xpose.msra.mxu0 0
    %4809 = vmatprep.subr.bf16.mxu0 0
    %4810 = vmatpush2.bf16.xpose.msra.mxu0 0
    %4811 = vmatprep.subr.bf16.mxu0 0
    %4812 = vmatpush2.bf16.xpose.msra.mxu0 0
    %4813 = vmatprep.subr.bf16.mxu0 0
    %4814 = vmatpush2.bf16.xpose.msra.mxu0 0
    %4815 = vmatprep.subr.bf16.mxu0 0
    %4816 = vmatpush2.bf16.xpose.msra.mxu0 0
    %4817 = vmatprep.subr.bf16.mxu0 0
    %4818 = vmatpush2.bf16.xpose.msra.mxu0 0
    %4819 = vmatprep.subr.bf16.mxu0 0
    %4820 = vmatpush2.bf16.xpose.msra.mxu0 0
    %4821 = vmatprep.mubr.bf16.mxu0 0
    %4822 = vmatmul.mubr.bf16.gmra.mxu0 %v4784
    %v4823 = vpop.f32.mrf.mxu0
    %v4824 = vadd.f32 0.0, %v4823
    %v4825 = vpop.f32.mrf.mxu0
    %v4826 = vpop.f32.mrf.mxu0
    %v4827 = vpop.f32.mrf.mxu0
    %4828 = vdwg.mxu0
    %v4830 = vsel %vm1082, %v3943, 0
    %v4833 = vsel %vm1082, %v4247, 0
    %4835 = vmatprep.subr.bf16.mxu0 0
    %4836 = vmatpush1.bf16.xpose.msra.mxu0 0
    %4837 = vmatprep.subr.bf16.mxu0 0
    %4838 = vmatpush1.bf16.xpose.msra.mxu0 0
    %4839 = vmatprep.subr.bf16.mxu0 0
    %4840 = vmatpush1.bf16.xpose.msra.mxu0 0
    %4841 = vmatprep.subr.bf16.mxu0 0
    %4842 = vmatpush1.bf16.xpose.msra.mxu0 0
    %4843 = vmatprep.subr.bf16.mxu0 0
    %4844 = vmatpush1.bf16.xpose.msra.mxu0 0
    %4845 = vmatprep.subr.bf16.mxu0 0
    %4846 = vmatpush1.bf16.xpose.msra.mxu0 0
    %4847 = vmatprep.subr.bf16.mxu0 0
    %4848 = vmatpush1.bf16.xpose.msra.mxu0 0
    %4849 = vmatprep.subr.bf16.mxu0 0
    %4850 = vmatpush1.bf16.xpose.msra.mxu0 %v4833
    %4851 = vmatprep.subr.bf16.mxu0 0
    %4852 = vmatpush2.bf16.xpose.msra.mxu0 0
    %4853 = vmatprep.subr.bf16.mxu0 0
    %4854 = vmatpush2.bf16.xpose.msra.mxu0 0
    %4855 = vmatprep.subr.bf16.mxu0 0
    %4856 = vmatpush2.bf16.xpose.msra.mxu0 0
    %4857 = vmatprep.subr.bf16.mxu0 0
    %4858 = vmatpush2.bf16.xpose.msra.mxu0 0
    %4859 = vmatprep.subr.bf16.mxu0 0
    %4860 = vmatpush2.bf16.xpose.msra.mxu0 0
    %4861 = vmatprep.subr.bf16.mxu0 0
    %4862 = vmatpush2.bf16.xpose.msra.mxu0 0
    %4863 = vmatprep.subr.bf16.mxu0 0
    %4864 = vmatpush2.bf16.xpose.msra.mxu0 0
    %4865 = vmatprep.subr.bf16.mxu0 0
    %4866 = vmatpush2.bf16.xpose.msra.mxu0 0
    %4867 = vmatprep.mubr.bf16.mxu0 0
    %4868 = vmatmul.mubr.bf16.gmra.mxu0 %v4830
    %v4869 = vpop.f32.mrf.mxu0
    %v4870 = vadd.f32 0.0, %v4869
    %v4871 = vpop.f32.mrf.mxu0
    %v4872 = vpop.f32.mrf.mxu0
    %v4873 = vpop.f32.mrf.mxu0
    %4874 = vdwg.mxu0
    %v4876 = vsel %vm1082, %v3944, 0
    %v4879 = vsel %vm1082, %v4248, 0
    %4881 = vmatprep.subr.bf16.mxu0 0
    %4882 = vmatpush1.bf16.xpose.msra.mxu0 0
    %4883 = vmatprep.subr.bf16.mxu0 0
    %4884 = vmatpush1.bf16.xpose.msra.mxu0 0
    %4885 = vmatprep.subr.bf16.mxu0 0
    %4886 = vmatpush1.bf16.xpose.msra.mxu0 0
    %4887 = vmatprep.subr.bf16.mxu0 0
    %4888 = vmatpush1.bf16.xpose.msra.mxu0 0
    %4889 = vmatprep.subr.bf16.mxu0 0
    %4890 = vmatpush1.bf16.xpose.msra.mxu0 0
    %4891 = vmatprep.subr.bf16.mxu0 0
    %4892 = vmatpush1.bf16.xpose.msra.mxu0 0
    %4893 = vmatprep.subr.bf16.mxu0 0
    %4894 = vmatpush1.bf16.xpose.msra.mxu0 0
    %4895 = vmatprep.subr.bf16.mxu0 0
    %4896 = vmatpush1.bf16.xpose.msra.mxu0 %v4879
    %4897 = vmatprep.subr.bf16.mxu0 0
    %4898 = vmatpush2.bf16.xpose.msra.mxu0 0
    %4899 = vmatprep.subr.bf16.mxu0 0
    %4900 = vmatpush2.bf16.xpose.msra.mxu0 0
    %4901 = vmatprep.subr.bf16.mxu0 0
    %4902 = vmatpush2.bf16.xpose.msra.mxu0 0
    %4903 = vmatprep.subr.bf16.mxu0 0
    %4904 = vmatpush2.bf16.xpose.msra.mxu0 0
    %4905 = vmatprep.subr.bf16.mxu0 0
    %4906 = vmatpush2.bf16.xpose.msra.mxu0 0
    %4907 = vmatprep.subr.bf16.mxu0 0
    %4908 = vmatpush2.bf16.xpose.msra.mxu0 0
    %4909 = vmatprep.subr.bf16.mxu0 0
    %4910 = vmatpush2.bf16.xpose.msra.mxu0 0
    %4911 = vmatprep.subr.bf16.mxu0 0
    %4912 = vmatpush2.bf16.xpose.msra.mxu0 0
    %4913 = vmatprep.mubr.bf16.mxu0 0
    %4914 = vmatmul.mubr.bf16.gmra.mxu0 %v4876
    %v4915 = vpop.f32.mrf.mxu0
    %v4916 = vadd.f32 0.0, %v4915
    %v4917 = vpop.f32.mrf.mxu0
    %v4918 = vpop.f32.mrf.mxu0
    %v4919 = vpop.f32.mrf.mxu0
    %4920 = vdwg.mxu0
    %v4921 = vmul.f32 %v4594, 0.35355338
    %v4922 = vmul.f32 %v4640, 0.35355338
    %v4923 = vmul.f32 %v4686, 0.35355338
    %v4924 = vmul.f32 %v4732, 0.35355338
    %v4925 = vmul.f32 %v4778, 0.35355338
    %v4926 = vmul.f32 %v4824, 0.35355338
    %v4927 = vmul.f32 %v4870, 0.35355338
    %v4928 = vmul.f32 %v4916, 0.35355338
    %v4929 = vsel %vm1082, %v4921, -inf
    %4930 = vmax.xlane.f32.xlu0 %v4929
    %v4931 = vpop.xlane.xlu0 %4930
    %v4932 = vsel %vm1082, %v4922, -inf
    %4933 = vmax.xlane.f32.xlu0 %v4932
    %v4934 = vpop.xlane.xlu0 %4933
    %v4935 = vsel %vm1082, %v4923, -inf
    %4936 = vmax.xlane.f32.xlu0 %v4935
    %v4937 = vpop.xlane.xlu0 %4936
    %v4938 = vsel %vm1082, %v4924, -inf
    %4939 = vmax.xlane.f32.xlu0 %v4938
    %v4940 = vpop.xlane.xlu0 %4939
    %v4941 = vsel %vm1082, %v4925, -inf
    %4942 = vmax.xlane.f32.xlu0 %v4941
    %v4943 = vpop.xlane.xlu0 %4942
    %v4944 = vsel %vm1082, %v4926, -inf
    %4945 = vmax.xlane.f32.xlu0 %v4944
    %v4946 = vpop.xlane.xlu0 %4945
    %v4947 = vsel %vm1082, %v4927, -inf
    %4948 = vmax.xlane.f32.xlu0 %v4947
    %v4949 = vpop.xlane.xlu0 %4948
    %v4950 = vsel %vm1082, %v4928, -inf
    %4951 = vmax.xlane.f32.xlu0 %v4950
    %v4952 = vpop.xlane.xlu0 %4951
    %v4953 = vsub.f32 %v4921, %v4931
    %v4954 = vsub.f32 %v4922, %v4934
    %v4955 = vsub.f32 %v4923, %v4937
    %v4956 = vsub.f32 %v4924, %v4940
    %v4957 = vsub.f32 %v4925, %v4943
    %v4958 = vsub.f32 %v4926, %v4946
    %v4959 = vsub.f32 %v4927, %v4949
    %v4960 = vsub.f32 %v4928, %v4952
    %v4961 = vmul.f32 %v4953, 1.442695
    %v4962 = vpow.pop %v4961
    %v4963 = vmul.f32 %v4954, 1.442695
    %v4964 = vpow.pop %v4963
    %v4965 = vmul.f32 %v4955, 1.442695
    %v4966 = vpow.pop %v4965
    %v4967 = vmul.f32 %v4956, 1.442695
    %v4968 = vpow.pop %v4967
    %v4969 = vmul.f32 %v4957, 1.442695
    %v4970 = vpow.pop %v4969
    %v4971 = vmul.f32 %v4958, 1.442695
    %v4972 = vpow.pop %v4971
    %v4973 = vmul.f32 %v4959, 1.442695
    %v4974 = vpow.pop %v4973
    %v4975 = vmul.f32 %v4960, 1.442695
    %v4976 = vpow.pop %v4975
    %v4977 = vsel %vm1082, %v4962, 0.0
    %4978 = vadd.xlane.f32.xlu0 %v4977
    %v4979 = vpop.xlane.xlu0 %4978
    %v4980 = vsel %vm1082, %v4964, 0.0
    %4981 = vadd.xlane.f32.xlu0 %v4980
    %v4982 = vpop.xlane.xlu0 %4981
    %v4983 = vsel %vm1082, %v4966, 0.0
    %4984 = vadd.xlane.f32.xlu0 %v4983
    %v4985 = vpop.xlane.xlu0 %4984
    %v4986 = vsel %vm1082, %v4968, 0.0
    %4987 = vadd.xlane.f32.xlu0 %v4986
    %v4988 = vpop.xlane.xlu0 %4987
    %v4989 = vsel %vm1082, %v4970, 0.0
    %4990 = vadd.xlane.f32.xlu0 %v4989
    %v4991 = vpop.xlane.xlu0 %4990
    %v4992 = vsel %vm1082, %v4972, 0.0
    %4993 = vadd.xlane.f32.xlu0 %v4992
    %v4994 = vpop.xlane.xlu0 %4993
    %v4995 = vsel %vm1082, %v4974, 0.0
    %4996 = vadd.xlane.f32.xlu0 %v4995
    %v4997 = vpop.xlane.xlu0 %4996
    %v4998 = vsel %vm1082, %v4976, 0.0
    %4999 = vadd.xlane.f32.xlu0 %v4998
    %v5000 = vpop.xlane.xlu0 %4999
    %v5001 = vrcp.pop %v4979
    %v5002 = vrcp.pop %v4982
    %v5003 = vrcp.pop %v4985
    %v5004 = vrcp.pop %v4988
    %v5005 = vrcp.pop %v4991
    %v5006 = vrcp.pop %v4994
    %v5007 = vrcp.pop %v4997
    %v5008 = vrcp.pop %v5000
    %v5009 = vmul.f32 %v4962, %v5001
    %v5010 = vmul.f32 %v4964, %v5002
    %v5011 = vmul.f32 %v4966, %v5003
    %v5012 = vmul.f32 %v4968, %v5004
    %v5013 = vmul.f32 %v4970, %v5005
    %v5014 = vmul.f32 %v4972, %v5006
    %v5015 = vmul.f32 %v4974, %v5007
    %v5016 = vmul.f32 %v4976, %v5008
    %v5017 = vpack.c.bf16 %v5009, %v5009
    %v5018 = vpack.c.bf16 %v5010, %v5010
    %v5019 = vpack.c.bf16 %v5011, %v5011
    %v5020 = vpack.c.bf16 %v5012, %v5012
    %v5021 = vpack.c.bf16 %v5013, %v5013
    %v5022 = vpack.c.bf16 %v5014, %v5014
    %v5023 = vpack.c.bf16 %v5015, %v5015
    %v5024 = vpack.c.bf16 %v5016, %v5016
    %v5026 = vsel %vm1082, %v5017, 0
    %v5029 = vsel %vm1558, %v4545, 0
    %5031 = vmatprep.subr.bf16.mxu0 0
    %5032 = vmatpush1.bf16.msra.mxu0 0
    %5033 = vmatprep.subr.bf16.mxu0 0
    %5034 = vmatpush1.bf16.msra.mxu0 0
    %5035 = vmatprep.subr.bf16.mxu0 0
    %5036 = vmatpush1.bf16.msra.mxu0 0
    %5037 = vmatprep.subr.bf16.mxu0 0
    %5038 = vmatpush1.bf16.msra.mxu0 0
    %5039 = vmatprep.subr.bf16.mxu0 0
    %5040 = vmatpush1.bf16.msra.mxu0 0
    %5041 = vmatprep.subr.bf16.mxu0 0
    %5042 = vmatpush1.bf16.msra.mxu0 0
    %5043 = vmatprep.subr.bf16.mxu0 0
    %5044 = vmatpush1.bf16.msra.mxu0 0
    %5045 = vmatprep.subr.bf16.mxu0 0
    %5046 = vmatpush1.bf16.msra.mxu0 %v5029
    %5047 = vmatprep.subr.bf16.mxu0 0
    %5048 = vmatpush2.bf16.msra.mxu0 0
    %5049 = vmatprep.subr.bf16.mxu0 0
    %5050 = vmatpush2.bf16.msra.mxu0 0
    %5051 = vmatprep.subr.bf16.mxu0 0
    %5052 = vmatpush2.bf16.msra.mxu0 0
    %5053 = vmatprep.subr.bf16.mxu0 0
    %5054 = vmatpush2.bf16.msra.mxu0 0
    %5055 = vmatprep.subr.bf16.mxu0 0
    %5056 = vmatpush2.bf16.msra.mxu0 0
    %5057 = vmatprep.subr.bf16.mxu0 0
    %5058 = vmatpush2.bf16.msra.mxu0 0
    %5059 = vmatprep.subr.bf16.mxu0 0
    %5060 = vmatpush2.bf16.msra.mxu0 0
    %5061 = vmatprep.subr.bf16.mxu0 0
    %5062 = vmatpush2.bf16.msra.mxu0 0
    %5063 = vmatprep.mubr.bf16.mxu0 0
    %5064 = vmatmul.mubr.bf16.gmra.mxu0 %v5026
    %v5065 = vpop.f32.mrf.mxu0
    %v5066 = vadd.f32 0.0, %v5065
    %v5067 = vpop.f32.mrf.mxu0
    %v5068 = vpop.f32.mrf.mxu0
    %v5069 = vpop.f32.mrf.mxu0
    %5070 = vdwg.mxu0
    %v5072 = vsel %vm1082, %v5018, 0
    %v5075 = vsel %vm1558, %v4546, 0
    %5077 = vmatprep.subr.bf16.mxu0 0
    %5078 = vmatpush1.bf16.msra.mxu0 0
    %5079 = vmatprep.subr.bf16.mxu0 0
    %5080 = vmatpush1.bf16.msra.mxu0 0
    %5081 = vmatprep.subr.bf16.mxu0 0
    %5082 = vmatpush1.bf16.msra.mxu0 0
    %5083 = vmatprep.subr.bf16.mxu0 0
    %5084 = vmatpush1.bf16.msra.mxu0 0
    %5085 = vmatprep.subr.bf16.mxu0 0
    %5086 = vmatpush1.bf16.msra.mxu0 0
    %5087 = vmatprep.subr.bf16.mxu0 0
    %5088 = vmatpush1.bf16.msra.mxu0 0
    %5089 = vmatprep.subr.bf16.mxu0 0
    %5090 = vmatpush1.bf16.msra.mxu0 0
    %5091 = vmatprep.subr.bf16.mxu0 0
    %5092 = vmatpush1.bf16.msra.mxu0 %v5075
    %5093 = vmatprep.subr.bf16.mxu0 0
    %5094 = vmatpush2.bf16.msra.mxu0 0
    %5095 = vmatprep.subr.bf16.mxu0 0
    %5096 = vmatpush2.bf16.msra.mxu0 0
    %5097 = vmatprep.subr.bf16.mxu0 0
    %5098 = vmatpush2.bf16.msra.mxu0 0
    %5099 = vmatprep.subr.bf16.mxu0 0
    %5100 = vmatpush2.bf16.msra.mxu0 0
    %5101 = vmatprep.subr.bf16.mxu0 0
    %5102 = vmatpush2.bf16.msra.mxu0 0
    %5103 = vmatprep.subr.bf16.mxu0 0
    %5104 = vmatpush2.bf16.msra.mxu0 0
    %5105 = vmatprep.subr.bf16.mxu0 0
    %5106 = vmatpush2.bf16.msra.mxu0 0
    %5107 = vmatprep.subr.bf16.mxu0 0
    %5108 = vmatpush2.bf16.msra.mxu0 0
    %5109 = vmatprep.mubr.bf16.mxu0 0
    %5110 = vmatmul.mubr.bf16.gmra.mxu0 %v5072
    %v5111 = vpop.f32.mrf.mxu0
    %v5112 = vadd.f32 0.0, %v5111
    %v5113 = vpop.f32.mrf.mxu0
    %v5114 = vpop.f32.mrf.mxu0
    %v5115 = vpop.f32.mrf.mxu0
    %5116 = vdwg.mxu0
    %v5118 = vsel %vm1082, %v5019, 0
    %v5121 = vsel %vm1558, %v4547, 0
    %5123 = vmatprep.subr.bf16.mxu0 0
    %5124 = vmatpush1.bf16.msra.mxu0 0
    %5125 = vmatprep.subr.bf16.mxu0 0
    %5126 = vmatpush1.bf16.msra.mxu0 0
    %5127 = vmatprep.subr.bf16.mxu0 0
    %5128 = vmatpush1.bf16.msra.mxu0 0
    %5129 = vmatprep.subr.bf16.mxu0 0
    %5130 = vmatpush1.bf16.msra.mxu0 0
    %5131 = vmatprep.subr.bf16.mxu0 0
    %5132 = vmatpush1.bf16.msra.mxu0 0
    %5133 = vmatprep.subr.bf16.mxu0 0
    %5134 = vmatpush1.bf16.msra.mxu0 0
    %5135 = vmatprep.subr.bf16.mxu0 0
    %5136 = vmatpush1.bf16.msra.mxu0 0
    %5137 = vmatprep.subr.bf16.mxu0 0
    %5138 = vmatpush1.bf16.msra.mxu0 %v5121
    %5139 = vmatprep.subr.bf16.mxu0 0
    %5140 = vmatpush2.bf16.msra.mxu0 0
    %5141 = vmatprep.subr.bf16.mxu0 0
    %5142 = vmatpush2.bf16.msra.mxu0 0
    %5143 = vmatprep.subr.bf16.mxu0 0
    %5144 = vmatpush2.bf16.msra.mxu0 0
    %5145 = vmatprep.subr.bf16.mxu0 0
    %5146 = vmatpush2.bf16.msra.mxu0 0
    %5147 = vmatprep.subr.bf16.mxu0 0
    %5148 = vmatpush2.bf16.msra.mxu0 0
    %5149 = vmatprep.subr.bf16.mxu0 0
    %5150 = vmatpush2.bf16.msra.mxu0 0
    %5151 = vmatprep.subr.bf16.mxu0 0
    %5152 = vmatpush2.bf16.msra.mxu0 0
    %5153 = vmatprep.subr.bf16.mxu0 0
    %5154 = vmatpush2.bf16.msra.mxu0 0
    %5155 = vmatprep.mubr.bf16.mxu0 0
    %5156 = vmatmul.mubr.bf16.gmra.mxu0 %v5118
    %v5157 = vpop.f32.mrf.mxu0
    %v5158 = vadd.f32 0.0, %v5157
    %v5159 = vpop.f32.mrf.mxu0
    %v5160 = vpop.f32.mrf.mxu0
    %v5161 = vpop.f32.mrf.mxu0
    %5162 = vdwg.mxu0
    %v5164 = vsel %vm1082, %v5020, 0
    %v5167 = vsel %vm1558, %v4548, 0
    %5169 = vmatprep.subr.bf16.mxu0 0
    %5170 = vmatpush1.bf16.msra.mxu0 0
    %5171 = vmatprep.subr.bf16.mxu0 0
    %5172 = vmatpush1.bf16.msra.mxu0 0
    %5173 = vmatprep.subr.bf16.mxu0 0
    %5174 = vmatpush1.bf16.msra.mxu0 0
    %5175 = vmatprep.subr.bf16.mxu0 0
    %5176 = vmatpush1.bf16.msra.mxu0 0
    %5177 = vmatprep.subr.bf16.mxu0 0
    %5178 = vmatpush1.bf16.msra.mxu0 0
    %5179 = vmatprep.subr.bf16.mxu0 0
    %5180 = vmatpush1.bf16.msra.mxu0 0
    %5181 = vmatprep.subr.bf16.mxu0 0
    %5182 = vmatpush1.bf16.msra.mxu0 0
    %5183 = vmatprep.subr.bf16.mxu0 0
    %5184 = vmatpush1.bf16.msra.mxu0 %v5167
    %5185 = vmatprep.subr.bf16.mxu0 0
    %5186 = vmatpush2.bf16.msra.mxu0 0
    %5187 = vmatprep.subr.bf16.mxu0 0
    %5188 = vmatpush2.bf16.msra.mxu0 0
    %5189 = vmatprep.subr.bf16.mxu0 0
    %5190 = vmatpush2.bf16.msra.mxu0 0
    %5191 = vmatprep.subr.bf16.mxu0 0
    %5192 = vmatpush2.bf16.msra.mxu0 0
    %5193 = vmatprep.subr.bf16.mxu0 0
    %5194 = vmatpush2.bf16.msra.mxu0 0
    %5195 = vmatprep.subr.bf16.mxu0 0
    %5196 = vmatpush2.bf16.msra.mxu0 0
    %5197 = vmatprep.subr.bf16.mxu0 0
    %5198 = vmatpush2.bf16.msra.mxu0 0
    %5199 = vmatprep.subr.bf16.mxu0 0
    %5200 = vmatpush2.bf16.msra.mxu0 0
    %5201 = vmatprep.mubr.bf16.mxu0 0
    %5202 = vmatmul.mubr.bf16.gmra.mxu0 %v5164
    %v5203 = vpop.f32.mrf.mxu0
    %v5204 = vadd.f32 0.0, %v5203
    %v5205 = vpop.f32.mrf.mxu0
    %v5206 = vpop.f32.mrf.mxu0
    %v5207 = vpop.f32.mrf.mxu0
    %5208 = vdwg.mxu0
    %v5210 = vsel %vm1082, %v5021, 0
    %v5213 = vsel %vm1558, %v4549, 0
    %5215 = vmatprep.subr.bf16.mxu0 0
    %5216 = vmatpush1.bf16.msra.mxu0 0
    %5217 = vmatprep.subr.bf16.mxu0 0
    %5218 = vmatpush1.bf16.msra.mxu0 0
    %5219 = vmatprep.subr.bf16.mxu0 0
    %5220 = vmatpush1.bf16.msra.mxu0 0
    %5221 = vmatprep.subr.bf16.mxu0 0
    %5222 = vmatpush1.bf16.msra.mxu0 0
    %5223 = vmatprep.subr.bf16.mxu0 0
    %5224 = vmatpush1.bf16.msra.mxu0 0
    %5225 = vmatprep.subr.bf16.mxu0 0
    %5226 = vmatpush1.bf16.msra.mxu0 0
    %5227 = vmatprep.subr.bf16.mxu0 0
    %5228 = vmatpush1.bf16.msra.mxu0 0
    %5229 = vmatprep.subr.bf16.mxu0 0
    %5230 = vmatpush1.bf16.msra.mxu0 %v5213
    %5231 = vmatprep.subr.bf16.mxu0 0
    %5232 = vmatpush2.bf16.msra.mxu0 0
    %5233 = vmatprep.subr.bf16.mxu0 0
    %5234 = vmatpush2.bf16.msra.mxu0 0
    %5235 = vmatprep.subr.bf16.mxu0 0
    %5236 = vmatpush2.bf16.msra.mxu0 0
    %5237 = vmatprep.subr.bf16.mxu0 0
    %5238 = vmatpush2.bf16.msra.mxu0 0
    %5239 = vmatprep.subr.bf16.mxu0 0
    %5240 = vmatpush2.bf16.msra.mxu0 0
    %5241 = vmatprep.subr.bf16.mxu0 0
    %5242 = vmatpush2.bf16.msra.mxu0 0
    %5243 = vmatprep.subr.bf16.mxu0 0
    %5244 = vmatpush2.bf16.msra.mxu0 0
    %5245 = vmatprep.subr.bf16.mxu0 0
    %5246 = vmatpush2.bf16.msra.mxu0 0
    %5247 = vmatprep.mubr.bf16.mxu0 0
    %5248 = vmatmul.mubr.bf16.gmra.mxu0 %v5210
    %v5249 = vpop.f32.mrf.mxu0
    %v5250 = vadd.f32 0.0, %v5249
    %v5251 = vpop.f32.mrf.mxu0
    %v5252 = vpop.f32.mrf.mxu0
    %v5253 = vpop.f32.mrf.mxu0
    %5254 = vdwg.mxu0
    %v5256 = vsel %vm1082, %v5022, 0
    %v5259 = vsel %vm1558, %v4550, 0
    %5261 = vmatprep.subr.bf16.mxu0 0
    %5262 = vmatpush1.bf16.msra.mxu0 0
    %5263 = vmatprep.subr.bf16.mxu0 0
    %5264 = vmatpush1.bf16.msra.mxu0 0
    %5265 = vmatprep.subr.bf16.mxu0 0
    %5266 = vmatpush1.bf16.msra.mxu0 0
    %5267 = vmatprep.subr.bf16.mxu0 0
    %5268 = vmatpush1.bf16.msra.mxu0 0
    %5269 = vmatprep.subr.bf16.mxu0 0
    %5270 = vmatpush1.bf16.msra.mxu0 0
    %5271 = vmatprep.subr.bf16.mxu0 0
    %5272 = vmatpush1.bf16.msra.mxu0 0
    %5273 = vmatprep.subr.bf16.mxu0 0
    %5274 = vmatpush1.bf16.msra.mxu0 0
    %5275 = vmatprep.subr.bf16.mxu0 0
    %5276 = vmatpush1.bf16.msra.mxu0 %v5259
    %5277 = vmatprep.subr.bf16.mxu0 0
    %5278 = vmatpush2.bf16.msra.mxu0 0
    %5279 = vmatprep.subr.bf16.mxu0 0
    %5280 = vmatpush2.bf16.msra.mxu0 0
    %5281 = vmatprep.subr.bf16.mxu0 0
    %5282 = vmatpush2.bf16.msra.mxu0 0
    %5283 = vmatprep.subr.bf16.mxu0 0
    %5284 = vmatpush2.bf16.msra.mxu0 0
    %5285 = vmatprep.subr.bf16.mxu0 0
    %5286 = vmatpush2.bf16.msra.mxu0 0
    %5287 = vmatprep.subr.bf16.mxu0 0
    %5288 = vmatpush2.bf16.msra.mxu0 0
    %5289 = vmatprep.subr.bf16.mxu0 0
    %5290 = vmatpush2.bf16.msra.mxu0 0
    %5291 = vmatprep.subr.bf16.mxu0 0
    %5292 = vmatpush2.bf16.msra.mxu0 0
    %5293 = vmatprep.mubr.bf16.mxu0 0
    %5294 = vmatmul.mubr.bf16.gmra.mxu0 %v5256
    %v5295 = vpop.f32.mrf.mxu0
    %v5296 = vadd.f32 0.0, %v5295
    %v5297 = vpop.f32.mrf.mxu0
    %v5298 = vpop.f32.mrf.mxu0
    %v5299 = vpop.f32.mrf.mxu0
    %5300 = vdwg.mxu0
    %v5302 = vsel %vm1082, %v5023, 0
    %v5305 = vsel %vm1558, %v4551, 0
    %5307 = vmatprep.subr.bf16.mxu0 0
    %5308 = vmatpush1.bf16.msra.mxu0 0
    %5309 = vmatprep.subr.bf16.mxu0 0
    %5310 = vmatpush1.bf16.msra.mxu0 0
    %5311 = vmatprep.subr.bf16.mxu0 0
    %5312 = vmatpush1.bf16.msra.mxu0 0
    %5313 = vmatprep.subr.bf16.mxu0 0
    %5314 = vmatpush1.bf16.msra.mxu0 0
    %5315 = vmatprep.subr.bf16.mxu0 0
    %5316 = vmatpush1.bf16.msra.mxu0 0
    %5317 = vmatprep.subr.bf16.mxu0 0
    %5318 = vmatpush1.bf16.msra.mxu0 0
    %5319 = vmatprep.subr.bf16.mxu0 0
    %5320 = vmatpush1.bf16.msra.mxu0 0
    %5321 = vmatprep.subr.bf16.mxu0 0
    %5322 = vmatpush1.bf16.msra.mxu0 %v5305
    %5323 = vmatprep.subr.bf16.mxu0 0
    %5324 = vmatpush2.bf16.msra.mxu0 0
    %5325 = vmatprep.subr.bf16.mxu0 0
    %5326 = vmatpush2.bf16.msra.mxu0 0
    %5327 = vmatprep.subr.bf16.mxu0 0
    %5328 = vmatpush2.bf16.msra.mxu0 0
    %5329 = vmatprep.subr.bf16.mxu0 0
    %5330 = vmatpush2.bf16.msra.mxu0 0
    %5331 = vmatprep.subr.bf16.mxu0 0
    %5332 = vmatpush2.bf16.msra.mxu0 0
    %5333 = vmatprep.subr.bf16.mxu0 0
    %5334 = vmatpush2.bf16.msra.mxu0 0
    %5335 = vmatprep.subr.bf16.mxu0 0
    %5336 = vmatpush2.bf16.msra.mxu0 0
    %5337 = vmatprep.subr.bf16.mxu0 0
    %5338 = vmatpush2.bf16.msra.mxu0 0
    %5339 = vmatprep.mubr.bf16.mxu0 0
    %5340 = vmatmul.mubr.bf16.gmra.mxu0 %v5302
    %v5341 = vpop.f32.mrf.mxu0
    %v5342 = vadd.f32 0.0, %v5341
    %v5343 = vpop.f32.mrf.mxu0
    %v5344 = vpop.f32.mrf.mxu0
    %v5345 = vpop.f32.mrf.mxu0
    %5346 = vdwg.mxu0
    %v5348 = vsel %vm1082, %v5024, 0
    %v5351 = vsel %vm1558, %v4552, 0
    %5353 = vmatprep.subr.bf16.mxu0 0
    %5354 = vmatpush1.bf16.msra.mxu0 0
    %5355 = vmatprep.subr.bf16.mxu0 0
    %5356 = vmatpush1.bf16.msra.mxu0 0
    %5357 = vmatprep.subr.bf16.mxu0 0
    %5358 = vmatpush1.bf16.msra.mxu0 0
    %5359 = vmatprep.subr.bf16.mxu0 0
    %5360 = vmatpush1.bf16.msra.mxu0 0
    %5361 = vmatprep.subr.bf16.mxu0 0
    %5362 = vmatpush1.bf16.msra.mxu0 0
    %5363 = vmatprep.subr.bf16.mxu0 0
    %5364 = vmatpush1.bf16.msra.mxu0 0
    %5365 = vmatprep.subr.bf16.mxu0 0
    %5366 = vmatpush1.bf16.msra.mxu0 0
    %5367 = vmatprep.subr.bf16.mxu0 0
    %5368 = vmatpush1.bf16.msra.mxu0 %v5351
    %5369 = vmatprep.subr.bf16.mxu0 0
    %5370 = vmatpush2.bf16.msra.mxu0 0
    %5371 = vmatprep.subr.bf16.mxu0 0
    %5372 = vmatpush2.bf16.msra.mxu0 0
    %5373 = vmatprep.subr.bf16.mxu0 0
    %5374 = vmatpush2.bf16.msra.mxu0 0
    %5375 = vmatprep.subr.bf16.mxu0 0
    %5376 = vmatpush2.bf16.msra.mxu0 0
    %5377 = vmatprep.subr.bf16.mxu0 0
    %5378 = vmatpush2.bf16.msra.mxu0 0
    %5379 = vmatprep.subr.bf16.mxu0 0
    %5380 = vmatpush2.bf16.msra.mxu0 0
    %5381 = vmatprep.subr.bf16.mxu0 0
    %5382 = vmatpush2.bf16.msra.mxu0 0
    %5383 = vmatprep.subr.bf16.mxu0 0
    %5384 = vmatpush2.bf16.msra.mxu0 0
    %5385 = vmatprep.mubr.bf16.mxu0 0
    %5386 = vmatmul.mubr.bf16.gmra.mxu0 %v5348
    %v5387 = vpop.f32.mrf.mxu0
    %v5388 = vadd.f32 0.0, %v5387
    %v5389 = vpop.f32.mrf.mxu0
    %v5390 = vpop.f32.mrf.mxu0
    %v5391 = vpop.f32.mrf.mxu0
    %5392 = vdwg.mxu0
    %v5393 = vcombine.low %v5066, %v5158
    %v5394 = vcombine.high %v5066, %v5158
    %v5396 = vunpack.c.l.s4 1983009808
    %v5397 = vunpack.c.0.s8 %v5396
    %v5398 = vlaneseq
    %v5399 = vshrl.u32 %v5398, 7
    %v5400 = vsub.s32 %v5397, %v5399
    %v5401 = vrot.slane %v5393, %v5400
    %v5403 = vunpack.c.l.s4 1983009808
    %v5404 = vunpack.c.0.s8 %v5403
    %v5405 = vlaneseq
    %v5406 = vshrl.u32 %v5405, 7
    %v5407 = vsub.s32 %v5404, %v5406
    %v5408 = vrot.slane %v5394, %v5407
    %v5409 = vcombine.low %v5112, %v5204
    %v5410 = vcombine.high %v5112, %v5204
    %v5412 = vunpack.c.l.s4 1983009808
    %v5413 = vunpack.c.0.s8 %v5412
    %v5414 = vlaneseq
    %v5415 = vshrl.u32 %v5414, 7
    %v5416 = vsub.s32 %v5413, %v5415
    %v5417 = vrot.slane %v5409, %v5416
    %v5419 = vunpack.c.l.s4 1983009808
    %v5420 = vunpack.c.0.s8 %v5419
    %v5421 = vlaneseq
    %v5422 = vshrl.u32 %v5421, 7
    %v5423 = vsub.s32 %v5420, %v5422
    %v5424 = vrot.slane %v5410, %v5423
    %v5425 = vcombine.low %v5401, %v5417
    %v5426 = vcombine.high %v5401, %v5417
    %v5428 = vunpack.c.l.s4 1934713408
    %v5429 = vunpack.c.0.s8 %v5428
    %v5430 = vlaneseq
    %v5431 = vshrl.u32 %v5430, 7
    %v5432 = vsub.s32 %v5429, %v5431
    %v5433 = vrot.slane %v5425, %v5432
    %v5435 = vunpack.c.l.s4 1934713408
    %v5436 = vunpack.c.0.s8 %v5435
    %v5437 = vlaneseq
    %v5438 = vshrl.u32 %v5437, 7
    %v5439 = vsub.s32 %v5436, %v5438
    %v5440 = vrot.slane %v5426, %v5439
    %v5441 = vcombine.low %v5408, %v5424
    %v5442 = vcombine.high %v5408, %v5424
    %v5444 = vunpack.c.l.s4 1934713408
    %v5445 = vunpack.c.0.s8 %v5444
    %v5446 = vlaneseq
    %v5447 = vshrl.u32 %v5446, 7
    %v5448 = vsub.s32 %v5445, %v5447
    %v5449 = vrot.slane %v5441, %v5448
    %v5451 = vunpack.c.l.s4 1934713408
    %v5452 = vunpack.c.0.s8 %v5451
    %v5453 = vlaneseq
    %v5454 = vshrl.u32 %v5453, 7
    %v5455 = vsub.s32 %v5452, %v5454
    %v5456 = vrot.slane %v5442, %v5455
    %v5457 = vcombine.high %v5433, 0.0
    %v5458 = vcombine.high %v5440, 0.0
    %v5459 = vcombine.high %v5449, 0.0
    %v5460 = vcombine.high %v5456, 0.0
    %v5461 = vcombine.low %v5250, %v5342
    %v5462 = vcombine.high %v5250, %v5342
    %v5464 = vunpack.c.l.s4 1983009808
    %v5465 = vunpack.c.0.s8 %v5464
    %v5466 = vlaneseq
    %v5467 = vshrl.u32 %v5466, 7
    %v5468 = vsub.s32 %v5465, %v5467
    %v5469 = vrot.slane %v5461, %v5468
    %v5471 = vunpack.c.l.s4 1983009808
    %v5472 = vunpack.c.0.s8 %v5471
    %v5473 = vlaneseq
    %v5474 = vshrl.u32 %v5473, 7
    %v5475 = vsub.s32 %v5472, %v5474
    %v5476 = vrot.slane %v5462, %v5475
    %v5477 = vcombine.low %v5296, %v5388
    %v5478 = vcombine.high %v5296, %v5388
    %v5480 = vunpack.c.l.s4 1983009808
    %v5481 = vunpack.c.0.s8 %v5480
    %v5482 = vlaneseq
    %v5483 = vshrl.u32 %v5482, 7
    %v5484 = vsub.s32 %v5481, %v5483
    %v5485 = vrot.slane %v5477, %v5484
    %v5487 = vunpack.c.l.s4 1983009808
    %v5488 = vunpack.c.0.s8 %v5487
    %v5489 = vlaneseq
    %v5490 = vshrl.u32 %v5489, 7
    %v5491 = vsub.s32 %v5488, %v5490
    %v5492 = vrot.slane %v5478, %v5491
    %v5493 = vcombine.low %v5469, %v5485
    %v5494 = vcombine.high %v5469, %v5485
    %v5496 = vunpack.c.l.s4 1934713408
    %v5497 = vunpack.c.0.s8 %v5496
    %v5498 = vlaneseq
    %v5499 = vshrl.u32 %v5498, 7
    %v5500 = vsub.s32 %v5497, %v5499
    %v5501 = vrot.slane %v5493, %v5500
    %v5503 = vunpack.c.l.s4 1934713408
    %v5504 = vunpack.c.0.s8 %v5503
    %v5505 = vlaneseq
    %v5506 = vshrl.u32 %v5505, 7
    %v5507 = vsub.s32 %v5504, %v5506
    %v5508 = vrot.slane %v5494, %v5507
    %v5509 = vcombine.low %v5476, %v5492
    %v5510 = vcombine.high %v5476, %v5492
    %v5512 = vunpack.c.l.s4 1934713408
    %v5513 = vunpack.c.0.s8 %v5512
    %v5514 = vlaneseq
    %v5515 = vshrl.u32 %v5514, 7
    %v5516 = vsub.s32 %v5513, %v5515
    %v5517 = vrot.slane %v5509, %v5516
    %v5519 = vunpack.c.l.s4 1934713408
    %v5520 = vunpack.c.0.s8 %v5519
    %v5521 = vlaneseq
    %v5522 = vshrl.u32 %v5521, 7
    %v5523 = vsub.s32 %v5520, %v5522
    %v5524 = vrot.slane %v5510, %v5523
    %v5525 = vcombine.high %v5501, 0.0
    %v5526 = vcombine.high %v5508, 0.0
    %v5527 = vcombine.high %v5517, 0.0
    %v5528 = vcombine.high %v5524, 0.0
    %v5529 = vcombine.low %v5433, %v5440
    %v5531 = vunpack.c.l.s4 1983009808
    %v5532 = vunpack.c.0.s8 %v5531
    %v5533 = vlaneseq
    %v5534 = vshrl.u32 %v5533, 7
    %v5535 = vsub.s32 %v5532, %v5534
    %v5536 = vrot.slane %v5529, %v5535
    %v5537 = vcombine.low %v5457, %v5458
    %v5539 = vunpack.c.l.s4 1983009808
    %v5540 = vunpack.c.0.s8 %v5539
    %v5541 = vlaneseq
    %v5542 = vshrl.u32 %v5541, 7
    %v5543 = vsub.s32 %v5540, %v5542
    %v5544 = vrot.slane %v5537, %v5543
    %v5545 = vcombine.low %v5449, %v5456
    %v5547 = vunpack.c.l.s4 1983009808
    %v5548 = vunpack.c.0.s8 %v5547
    %v5549 = vlaneseq
    %v5550 = vshrl.u32 %v5549, 7
    %v5551 = vsub.s32 %v5548, %v5550
    %v5552 = vrot.slane %v5545, %v5551
    %v5553 = vcombine.low %v5459, %v5460
    %v5555 = vunpack.c.l.s4 1983009808
    %v5556 = vunpack.c.0.s8 %v5555
    %v5557 = vlaneseq
    %v5558 = vshrl.u32 %v5557, 7
    %v5559 = vsub.s32 %v5556, %v5558
    %v5560 = vrot.slane %v5553, %v5559
    %v5561 = vcombine.low %v5536, %v5544
    %v5562 = vcombine.high %v5536, %v5544
    %v5564 = vunpack.c.l.s4 1934713408
    %v5565 = vunpack.c.0.s8 %v5564
    %v5566 = vlaneseq
    %v5567 = vshrl.u32 %v5566, 7
    %v5568 = vsub.s32 %v5565, %v5567
    %v5569 = vrot.slane %v5561, %v5568
    %v5571 = vunpack.c.l.s4 1934713408
    %v5572 = vunpack.c.0.s8 %v5571
    %v5573 = vlaneseq
    %v5574 = vshrl.u32 %v5573, 7
    %v5575 = vsub.s32 %v5572, %v5574
    %v5576 = vrot.slane %v5562, %v5575
    %v5577 = vcombine.low %v5552, %v5560
    %v5578 = vcombine.high %v5552, %v5560
    %v5580 = vunpack.c.l.s4 1934713408
    %v5581 = vunpack.c.0.s8 %v5580
    %v5582 = vlaneseq
    %v5583 = vshrl.u32 %v5582, 7
    %v5584 = vsub.s32 %v5581, %v5583
    %v5585 = vrot.slane %v5577, %v5584
    %v5587 = vunpack.c.l.s4 1934713408
    %v5588 = vunpack.c.0.s8 %v5587
    %v5589 = vlaneseq
    %v5590 = vshrl.u32 %v5589, 7
    %v5591 = vsub.s32 %v5588, %v5590
    %v5592 = vrot.slane %v5578, %v5591
    %v5593 = vcombine.low %v5569, %v5585
    %v5594 = vcombine.high %v5569, %v5585
    %v5595 = vcombine.low %v5576, %v5592
    %v5596 = vcombine.high %v5576, %v5592
    %v5597 = vcombine.low %v5501, %v5508
    %v5599 = vunpack.c.l.s4 1983009808
    %v5600 = vunpack.c.0.s8 %v5599
    %v5601 = vlaneseq
    %v5602 = vshrl.u32 %v5601, 7
    %v5603 = vsub.s32 %v5600, %v5602
    %v5604 = vrot.slane %v5597, %v5603
    %v5605 = vcombine.low %v5525, %v5526
    %v5607 = vunpack.c.l.s4 1983009808
    %v5608 = vunpack.c.0.s8 %v5607
    %v5609 = vlaneseq
    %v5610 = vshrl.u32 %v5609, 7
    %v5611 = vsub.s32 %v5608, %v5610
    %v5612 = vrot.slane %v5605, %v5611
    %v5613 = vcombine.low %v5517, %v5524
    %v5615 = vunpack.c.l.s4 1983009808
    %v5616 = vunpack.c.0.s8 %v5615
    %v5617 = vlaneseq
    %v5618 = vshrl.u32 %v5617, 7
    %v5619 = vsub.s32 %v5616, %v5618
    %v5620 = vrot.slane %v5613, %v5619
    %v5621 = vcombine.low %v5527, %v5528
    %v5623 = vunpack.c.l.s4 1983009808
    %v5624 = vunpack.c.0.s8 %v5623
    %v5625 = vlaneseq
    %v5626 = vshrl.u32 %v5625, 7
    %v5627 = vsub.s32 %v5624, %v5626
    %v5628 = vrot.slane %v5621, %v5627
    %v5629 = vcombine.low %v5604, %v5612
    %v5630 = vcombine.high %v5604, %v5612
    %v5632 = vunpack.c.l.s4 1934713408
    %v5633 = vunpack.c.0.s8 %v5632
    %v5634 = vlaneseq
    %v5635 = vshrl.u32 %v5634, 7
    %v5636 = vsub.s32 %v5633, %v5635
    %v5637 = vrot.slane %v5629, %v5636
    %v5639 = vunpack.c.l.s4 1934713408
    %v5640 = vunpack.c.0.s8 %v5639
    %v5641 = vlaneseq
    %v5642 = vshrl.u32 %v5641, 7
    %v5643 = vsub.s32 %v5640, %v5642
    %v5644 = vrot.slane %v5630, %v5643
    %v5645 = vcombine.low %v5620, %v5628
    %v5646 = vcombine.high %v5620, %v5628
    %v5648 = vunpack.c.l.s4 1934713408
    %v5649 = vunpack.c.0.s8 %v5648
    %v5650 = vlaneseq
    %v5651 = vshrl.u32 %v5650, 7
    %v5652 = vsub.s32 %v5649, %v5651
    %v5653 = vrot.slane %v5645, %v5652
    %v5655 = vunpack.c.l.s4 1934713408
    %v5656 = vunpack.c.0.s8 %v5655
    %v5657 = vlaneseq
    %v5658 = vshrl.u32 %v5657, 7
    %v5659 = vsub.s32 %v5656, %v5658
    %v5660 = vrot.slane %v5646, %v5659
    %v5661 = vcombine.low %v5637, %v5653
    %v5662 = vcombine.high %v5637, %v5653
    %v5663 = vcombine.low %v5644, %v5660
    %v5664 = vcombine.high %v5644, %v5660
    %5667 = vrot.lane.b32.xlu0 %v5594, 8
    %v5668 = vpop.permute.xlu0 %5667
    %5669 = vrot.lane.b32.xlu0 %v5662, 8
    %v5670 = vpop.permute.xlu0 %5669
    %5675 = vrot.lane.b32.xlu0 %v5595, 16
    %v5676 = vpop.permute.xlu0 %5675
    %5677 = vrot.lane.b32.xlu0 %v5663, 16
    %v5678 = vpop.permute.xlu0 %5677
    %5683 = vrot.lane.b32.xlu0 %v5596, 24
    %v5684 = vpop.permute.xlu0 %5683
    %5685 = vrot.lane.b32.xlu0 %v5664, 24
    %v5686 = vpop.permute.xlu0 %5685
    %v5689 = vsel %vm1082, %v5593, %v5668
    %v5690 = vsel %vm1082, %v5661, %v5670
    %v5691 = vsel %vm2222, %v5689, %v5676
    %v5692 = vsel %vm2222, %v5690, %v5678
    %v5693 = vsel %vm2225, %v5691, %v5684
    %v5694 = vsel %vm2225, %v5692, %v5686
    %v5695 = vpack.c.bf16 %v5694, %v5693
    %s5696 = scalar_lea.vmem [#allocation7], 16
    %v5697 = vld [vmem:[%s5696] sm:$0xf]
    %v5698 = vld [vmem:[%s5696 + $0x4] sm:$0xf]
    %v5699 = vld [vmem:[%s5696 + $0x8] sm:$0xf]
    %v5700 = vld [vmem:[%s5696 + $0xc] sm:$0xf]
    %v5701 = vld [vmem:[#allocation11 + $0x3] sm:$0x1]
    %v5702 = vlaneseq
    %v5703 = vshrl.u32 %v5702, 7
    %v5704 = vsub.s32 0, %v5703
    %v5705 = vrot.slane %v5701, %v5704
    %v5710 = vunpack.c.l.b16 %v5697
    %v5711 = vunpack.c.l.b16 %v5698
    %v5712 = vunpack.c.l.b16 %v5699
    %v5713 = vunpack.c.l.b16 %v5700
    %v5714 = vpack.c.b16 %v5711, %v5710
    %v5715 = vpack.c.b16 %v5713, %v5712
    %v5719 = vsel %vm129, %v5695, 0
    %5721 = vmatprep.subr.bf16.mxu0 0
    %5722 = vmatpush1.bf16.msra.mxu0 0
    %5723 = vmatprep.subr.bf16.mxu0 0
    %5724 = vmatpush1.bf16.msra.mxu0 0
    %5725 = vmatprep.subr.bf16.mxu0 0
    %5726 = vmatpush1.bf16.msra.mxu0 0
    %5727 = vmatprep.subr.bf16.mxu0 0
    %5728 = vmatpush1.bf16.msra.mxu0 0
    %5729 = vmatprep.subr.bf16.mxu0 0
    %5730 = vmatpush1.bf16.msra.mxu0 0
    %5731 = vmatprep.subr.bf16.mxu0 0
    %5732 = vmatpush1.bf16.msra.mxu0 0
    %5733 = vmatprep.subr.bf16.mxu0 0
    %5734 = vmatpush1.bf16.msra.mxu0 %v5715
    %5735 = vmatprep.subr.bf16.mxu0 0
    %5736 = vmatpush1.bf16.msra.mxu0 %v5714
    %5737 = vmatprep.subr.bf16.mxu0 0
    %5738 = vmatpush2.bf16.msra.mxu0 0
    %5739 = vmatprep.subr.bf16.mxu0 0
    %5740 = vmatpush2.bf16.msra.mxu0 0
    %5741 = vmatprep.subr.bf16.mxu0 0
    %5742 = vmatpush2.bf16.msra.mxu0 0
    %5743 = vmatprep.subr.bf16.mxu0 0
    %5744 = vmatpush2.bf16.msra.mxu0 0
    %5745 = vmatprep.subr.bf16.mxu0 0
    %5746 = vmatpush2.bf16.msra.mxu0 0
    %5747 = vmatprep.subr.bf16.mxu0 0
    %5748 = vmatpush2.bf16.msra.mxu0 0
    %5749 = vmatprep.subr.bf16.mxu0 0
    %5750 = vmatpush2.bf16.msra.mxu0 0
    %5751 = vmatprep.subr.bf16.mxu0 0
    %5752 = vmatpush2.bf16.msra.mxu0 0
    %5753 = vmatprep.mubr.bf16.mxu0 0
    %5754 = vmatmul.mubr.bf16.gmra.mxu0 %v5719
    %v5755 = vpop.f32.mrf.mxu0
    %v5756 = vadd.f32 %v5705, %v5755
    %v5757 = vpop.f32.mrf.mxu0
    %v5758 = vpop.f32.mrf.mxu0
    %v5759 = vadd.f32 %v5705, %v5758
    %v5760 = vpop.f32.mrf.mxu0
    %5761 = vdwg.mxu0
    %v5762 = vadd.f32 %v3576, %v5756
    %v5763 = vadd.f32 %v3577, %v5759
    %v5764 = vld [vmem:[#allocation11 + $0x5] sm:$0x1]
    %v5765 = vld [vmem:[#allocation11 + $0x7] sm:$0x1]
    %v5766 = vsel %vm129, %v5762, 0.0
    %5767 = vadd.xlane.f32.xlu0 %v5766
    %v5768 = vpop.xlane.xlu0 %5767
    %v5769 = vsel %vm129, %v5763, 0.0
    %5770 = vadd.xlane.f32.xlu0 %v5769
    %v5771 = vpop.xlane.xlu0 %5770
    %v5772 = vmul.f32 %v5768, %v2304
    %v5773 = vmul.f32 %v5771, %v2304
    %v5774 = vsub.f32 %v5762, %v5772
    %v5775 = vsub.f32 %v5763, %v5773
    %v5776 = vmul.f32 %v5774, %v5774
    %v5777 = vmul.f32 %v5775, %v5775
    %v5778 = vsel %vm129, %v5776, 0.0
    %5779 = vadd.xlane.f32.xlu0 %v5778
    %v5780 = vpop.xlane.xlu0 %5779
    %v5781 = vsel %vm129, %v5777, 0.0
    %5782 = vadd.xlane.f32.xlu0 %v5781
    %v5783 = vpop.xlane.xlu0 %5782
    %v5784 = vmul.f32 %v5780, %v2304
    %v5785 = vmul.f32 %v5783, %v2304
    %v5786 = vadd.f32 %v5784, 1e-05
    %v5787 = vadd.f32 %v5785, 1e-05
    %v5788 = vrsqrt.pop %v5786
    %v5789 = vrsqrt.pop %v5787
    %v5790 = vmul.f32 %v5774, %v5788
    %v5791 = vmul.f32 %v5775, %v5789
    %v5792 = vlaneseq
    %v5793 = vshrl.u32 %v5792, 7
    %v5794 = vsub.s32 0, %v5793
    %v5795 = vrot.slane %v5764, %v5794
    %v5796 = vmul.f32 %v5790, %v5795
    %v5797 = vmul.f32 %v5791, %v5795
    %v5798 = vlaneseq
    %v5799 = vshrl.u32 %v5798, 7
    %v5800 = vsub.s32 0, %v5799
    %v5801 = vrot.slane %v5765, %v5800
    %v5802 = vadd.f32 %v5796, %v5801
    %v5803 = vadd.f32 %v5797, %v5801
    %v5804 = vpack.c.bf16 %v5803, %v5802
    %s5805 = scalar_lea.vmem [#allocation8], 256
    %v5806 = vld [vmem:[%s5805] sm:$0xff]
    %v5807 = vld [vmem:[%s5805 + $0x8] sm:$0xff]
    %v5808 = vld [vmem:[%s5805 + $0x10] sm:$0xff]
    %v5809 = vld [vmem:[%s5805 + $0x18] sm:$0xff]
    %v5810 = vld [vmem:[%s5805 + $0x20] sm:$0xff]
    %v5811 = vld [vmem:[%s5805 + $0x28] sm:$0xff]
    %v5812 = vld [vmem:[%s5805 + $0x30] sm:$0xff]
    %v5813 = vld [vmem:[%s5805 + $0x38] sm:$0xff]
    %v5814 = vld [vmem:[%s5805 + $0x40] sm:$0xff]
    %v5815 = vld [vmem:[%s5805 + $0x48] sm:$0xff]
    %v5816 = vld [vmem:[%s5805 + $0x50] sm:$0xff]
    %v5817 = vld [vmem:[%s5805 + $0x58] sm:$0xff]
    %v5818 = vld [vmem:[%s5805 + $0x60] sm:$0xff]
    %v5819 = vld [vmem:[%s5805 + $0x68] sm:$0xff]
    %v5820 = vld [vmem:[%s5805 + $0x70] sm:$0xff]
    %v5821 = vld [vmem:[%s5805 + $0x78] sm:$0xff]
    %v5822 = vld [vmem:[%s5805 + $0x80] sm:$0xff]
    %v5823 = vld [vmem:[%s5805 + $0x88] sm:$0xff]
    %v5824 = vld [vmem:[%s5805 + $0x90] sm:$0xff]
    %v5825 = vld [vmem:[%s5805 + $0x98] sm:$0xff]
    %v5826 = vld [vmem:[%s5805 + $0xa0] sm:$0xff]
    %v5827 = vld [vmem:[%s5805 + $0xa8] sm:$0xff]
    %v5828 = vld [vmem:[%s5805 + $0xb0] sm:$0xff]
    %v5829 = vld [vmem:[%s5805 + $0xb8] sm:$0xff]
    %v5830 = vld [vmem:[%s5805 + $0xc0] sm:$0xff]
    %v5831 = vld [vmem:[%s5805 + $0xc8] sm:$0xff]
    %v5832 = vld [vmem:[%s5805 + $0xd0] sm:$0xff]
    %v5833 = vld [vmem:[%s5805 + $0xd8] sm:$0xff]
    %v5834 = vld [vmem:[%s5805 + $0xe0] sm:$0xff]
    %v5835 = vld [vmem:[%s5805 + $0xe8] sm:$0xff]
    %v5836 = vld [vmem:[%s5805 + $0xf0] sm:$0xff]
    %v5837 = vld [vmem:[%s5805 + $0xf8] sm:$0xff]
    %s5838 = scalar_lea.vmem [#allocation11], 13
    %v5839 = vld [vmem:[%s5838] ss:$2 sm:$0xff]
    %s5840 = scalar_lea.vmem [#allocation11], 29
    %v5841 = vld [vmem:[%s5840] ss:$2 sm:$0xff]
    %v5844 = vlaneseq
    %v5845 = vshrl.u32 %v5844, 7
    %v5846 = vsub.s32 0, %v5845
    %v5847 = vrot.slane %v5839, %v5846
    %v5848 = vlaneseq
    %v5849 = vshrl.u32 %v5848, 7
    %v5850 = vsub.s32 1, %v5849
    %v5851 = vrot.slane %v5839, %v5850
    %v5852 = vlaneseq
    %v5853 = vshrl.u32 %v5852, 7
    %v5854 = vsub.s32 2, %v5853
    %v5855 = vrot.slane %v5839, %v5854
    %v5856 = vlaneseq
    %v5857 = vshrl.u32 %v5856, 7
    %v5858 = vsub.s32 3, %v5857
    %v5859 = vrot.slane %v5839, %v5858
    %v5860 = vlaneseq
    %v5861 = vshrl.u32 %v5860, 7
    %v5862 = vsub.s32 4, %v5861
    %v5863 = vrot.slane %v5839, %v5862
    %v5864 = vlaneseq
    %v5865 = vshrl.u32 %v5864, 7
    %v5866 = vsub.s32 5, %v5865
    %v5867 = vrot.slane %v5839, %v5866
    %v5868 = vlaneseq
    %v5869 = vshrl.u32 %v5868, 7
    %v5870 = vsub.s32 6, %v5869
    %v5871 = vrot.slane %v5839, %v5870
    %v5872 = vlaneseq
    %v5873 = vshrl.u32 %v5872, 7
    %v5874 = vsub.s32 7, %v5873
    %v5875 = vrot.slane %v5839, %v5874
    %v5876 = vlaneseq
    %v5877 = vshrl.u32 %v5876, 7
    %v5878 = vsub.s32 0, %v5877
    %v5879 = vrot.slane %v5841, %v5878
    %v5880 = vlaneseq
    %v5881 = vshrl.u32 %v5880, 7
    %v5882 = vsub.s32 1, %v5881
    %v5883 = vrot.slane %v5841, %v5882
    %v5884 = vlaneseq
    %v5885 = vshrl.u32 %v5884, 7
    %v5886 = vsub.s32 2, %v5885
    %v5887 = vrot.slane %v5841, %v5886
    %v5888 = vlaneseq
    %v5889 = vshrl.u32 %v5888, 7
    %v5890 = vsub.s32 3, %v5889
    %v5891 = vrot.slane %v5841, %v5890
    %v5892 = vlaneseq
    %v5893 = vshrl.u32 %v5892, 7
    %v5894 = vsub.s32 4, %v5893
    %v5895 = vrot.slane %v5841, %v5894
    %v5896 = vlaneseq
    %v5897 = vshrl.u32 %v5896, 7
    %v5898 = vsub.s32 5, %v5897
    %v5899 = vrot.slane %v5841, %v5898
    %v5900 = vlaneseq
    %v5901 = vshrl.u32 %v5900, 7
    %v5902 = vsub.s32 6, %v5901
    %v5903 = vrot.slane %v5841, %v5902
    %v5904 = vlaneseq
    %v5905 = vshrl.u32 %v5904, 7
    %v5906 = vsub.s32 7, %v5905
    %v5907 = vrot.slane %v5841, %v5906
    %v5956 = vunpack.c.l.b16 %v5806
    %v5957 = vunpack.c.h.b16 %v5806
    %v5958 = vunpack.c.l.b16 %v5807
    %v5959 = vunpack.c.h.b16 %v5807
    %v5960 = vunpack.c.l.b16 %v5808
    %v5961 = vunpack.c.h.b16 %v5808
    %v5962 = vunpack.c.l.b16 %v5809
    %v5963 = vunpack.c.h.b16 %v5809
    %v5964 = vunpack.c.l.b16 %v5810
    %v5965 = vunpack.c.h.b16 %v5810
    %v5966 = vunpack.c.l.b16 %v5811
    %v5967 = vunpack.c.h.b16 %v5811
    %v5968 = vunpack.c.l.b16 %v5812
    %v5969 = vunpack.c.h.b16 %v5812
    %v5970 = vunpack.c.l.b16 %v5813
    %v5971 = vunpack.c.h.b16 %v5813
    %v5972 = vunpack.c.l.b16 %v5814
    %v5973 = vunpack.c.h.b16 %v5814
    %v5974 = vunpack.c.l.b16 %v5815
    %v5975 = vunpack.c.h.b16 %v5815
    %v5976 = vunpack.c.l.b16 %v5816
    %v5977 = vunpack.c.h.b16 %v5816
    %v5978 = vunpack.c.l.b16 %v5817
    %v5979 = vunpack.c.h.b16 %v5817
    %v5980 = vunpack.c.l.b16 %v5818
    %v5981 = vunpack.c.h.b16 %v5818
    %v5982 = vunpack.c.l.b16 %v5819
    %v5983 = vunpack.c.h.b16 %v5819
    %v5984 = vunpack.c.l.b16 %v5820
    %v5985 = vunpack.c.h.b16 %v5820
    %v5986 = vunpack.c.l.b16 %v5821
    %v5987 = vunpack.c.h.b16 %v5821
    %v5988 = vunpack.c.l.b16 %v5822
    %v5989 = vunpack.c.h.b16 %v5822
    %v5990 = vunpack.c.l.b16 %v5823
    %v5991 = vunpack.c.h.b16 %v5823
    %v5992 = vunpack.c.l.b16 %v5824
    %v5993 = vunpack.c.h.b16 %v5824
    %v5994 = vunpack.c.l.b16 %v5825
    %v5995 = vunpack.c.h.b16 %v5825
    %v5996 = vunpack.c.l.b16 %v5826
    %v5997 = vunpack.c.h.b16 %v5826
    %v5998 = vunpack.c.l.b16 %v5827
    %v5999 = vunpack.c.h.b16 %v5827
    %v6000 = vunpack.c.l.b16 %v5828
    %v6001 = vunpack.c.h.b16 %v5828
    %v6002 = vunpack.c.l.b16 %v5829
    %v6003 = vunpack.c.h.b16 %v5829
    %v6004 = vunpack.c.l.b16 %v5830
    %v6005 = vunpack.c.h.b16 %v5830
    %v6006 = vunpack.c.l.b16 %v5831
    %v6007 = vunpack.c.h.b16 %v5831
    %v6008 = vunpack.c.l.b16 %v5832
    %v6009 = vunpack.c.h.b16 %v5832
    %v6010 = vunpack.c.l.b16 %v5833
    %v6011 = vunpack.c.h.b16 %v5833
    %v6012 = vunpack.c.l.b16 %v5834
    %v6013 = vunpack.c.h.b16 %v5834
    %v6014 = vunpack.c.l.b16 %v5835
    %v6015 = vunpack.c.h.b16 %v5835
    %v6016 = vunpack.c.l.b16 %v5836
    %v6017 = vunpack.c.h.b16 %v5836
    %v6018 = vunpack.c.l.b16 %v5837
    %v6019 = vunpack.c.h.b16 %v5837
    %v6020 = vpack.c.b16 %v5972, %v5956
    %v6021 = vpack.c.b16 %v5973, %v5957
    %v6022 = vpack.c.b16 %v5974, %v5958
    %v6023 = vpack.c.b16 %v5975, %v5959
    %v6024 = vpack.c.b16 %v5976, %v5960
    %v6025 = vpack.c.b16 %v5977, %v5961
    %v6026 = vpack.c.b16 %v5978, %v5962
    %v6027 = vpack.c.b16 %v5979, %v5963
    %v6028 = vpack.c.b16 %v5980, %v5964
    %v6029 = vpack.c.b16 %v5981, %v5965
    %v6030 = vpack.c.b16 %v5982, %v5966
    %v6031 = vpack.c.b16 %v5983, %v5967
    %v6032 = vpack.c.b16 %v5984, %v5968
    %v6033 = vpack.c.b16 %v5985, %v5969
    %v6034 = vpack.c.b16 %v5986, %v5970
    %v6035 = vpack.c.b16 %v5987, %v5971
    %v6036 = vpack.c.b16 %v6004, %v5988
    %v6037 = vpack.c.b16 %v6005, %v5989
    %v6038 = vpack.c.b16 %v6006, %v5990
    %v6039 = vpack.c.b16 %v6007, %v5991
    %v6040 = vpack.c.b16 %v6008, %v5992
    %v6041 = vpack.c.b16 %v6009, %v5993
    %v6042 = vpack.c.b16 %v6010, %v5994
    %v6043 = vpack.c.b16 %v6011, %v5995
    %v6044 = vpack.c.b16 %v6012, %v5996
    %v6045 = vpack.c.b16 %v6013, %v5997
    %v6046 = vpack.c.b16 %v6014, %v5998
    %v6047 = vpack.c.b16 %v6015, %v5999
    %v6048 = vpack.c.b16 %v6016, %v6000
    %v6049 = vpack.c.b16 %v6017, %v6001
    %v6050 = vpack.c.b16 %v6018, %v6002
    %v6051 = vpack.c.b16 %v6019, %v6003
    %v6085 = vsel %vm129, %v5804, 0
    %6087 = vmatprep.subr.bf16.mxu0 0
    %6088 = vmatpush1.bf16.msra.mxu0 0
    %6089 = vmatprep.subr.bf16.mxu0 0
    %6090 = vmatpush1.bf16.msra.mxu0 0
    %6091 = vmatprep.subr.bf16.mxu0 0
    %6092 = vmatpush1.bf16.msra.mxu0 0
    %6093 = vmatprep.subr.bf16.mxu0 0
    %6094 = vmatpush1.bf16.msra.mxu0 0
    %6095 = vmatprep.subr.bf16.mxu0 0
    %6096 = vmatpush1.bf16.msra.mxu0 0
    %6097 = vmatprep.subr.bf16.mxu0 0
    %6098 = vmatpush1.bf16.msra.mxu0 0
    %6099 = vmatprep.subr.bf16.mxu0 %v6037
    %6100 = vmatpush1.bf16.msra.mxu0 %v6036
    %6101 = vmatprep.subr.bf16.mxu0 %v6021
    %6102 = vmatpush1.bf16.msra.mxu0 %v6020
    %6103 = vmatprep.subr.bf16.mxu0 0
    %6104 = vmatpush2.bf16.msra.mxu0 0
    %6105 = vmatprep.subr.bf16.mxu0 0
    %6106 = vmatpush2.bf16.msra.mxu0 0
    %6107 = vmatprep.subr.bf16.mxu0 0
    %6108 = vmatpush2.bf16.msra.mxu0 0
    %6109 = vmatprep.subr.bf16.mxu0 0
    %6110 = vmatpush2.bf16.msra.mxu0 0
    %6111 = vmatprep.subr.bf16.mxu0 0
    %6112 = vmatpush2.bf16.msra.mxu0 0
    %6113 = vmatprep.subr.bf16.mxu0 0
    %6114 = vmatpush2.bf16.msra.mxu0 0
    %6115 = vmatprep.subr.bf16.mxu0 0
    %6116 = vmatpush2.bf16.msra.mxu0 0
    %6117 = vmatprep.subr.bf16.mxu0 0
    %6118 = vmatpush2.bf16.msra.mxu0 0
    %6119 = vmatprep.mubr.bf16.mxu0 0
    %6120 = vmatmul.mubr.bf16.gmra.mxu0 %v6085
    %v6121 = vpop.f32.mrf.mxu0
    %v6122 = vadd.f32 %v5847, %v6121
    %v6123 = vpop.f32.mrf.mxu0
    %v6124 = vadd.f32 %v5851, %v6123
    %v6125 = vpop.f32.mrf.mxu0
    %v6126 = vadd.f32 %v5847, %v6125
    %v6127 = vpop.f32.mrf.mxu0
    %v6128 = vadd.f32 %v5851, %v6127
    %6129 = vdwg.mxu0
    %6130 = vmatprep.subr.bf16.mxu0 0
    %6131 = vmatpush1.bf16.msra.mxu0 0
    %6132 = vmatprep.subr.bf16.mxu0 0
    %6133 = vmatpush1.bf16.msra.mxu0 0
    %6134 = vmatprep.subr.bf16.mxu0 0
    %6135 = vmatpush1.bf16.msra.mxu0 0
    %6136 = vmatprep.subr.bf16.mxu0 0
    %6137 = vmatpush1.bf16.msra.mxu0 0
    %6138 = vmatprep.subr.bf16.mxu0 0
    %6139 = vmatpush1.bf16.msra.mxu0 0
    %6140 = vmatprep.subr.bf16.mxu0 0
    %6141 = vmatpush1.bf16.msra.mxu0 0
    %6142 = vmatprep.subr.bf16.mxu0 %v6039
    %6143 = vmatpush1.bf16.msra.mxu0 %v6038
    %6144 = vmatprep.subr.bf16.mxu0 %v6023
    %6145 = vmatpush1.bf16.msra.mxu0 %v6022
    %6146 = vmatprep.subr.bf16.mxu0 0
    %6147 = vmatpush2.bf16.msra.mxu0 0
    %6148 = vmatprep.subr.bf16.mxu0 0
    %6149 = vmatpush2.bf16.msra.mxu0 0
    %6150 = vmatprep.subr.bf16.mxu0 0
    %6151 = vmatpush2.bf16.msra.mxu0 0
    %6152 = vmatprep.subr.bf16.mxu0 0
    %6153 = vmatpush2.bf16.msra.mxu0 0
    %6154 = vmatprep.subr.bf16.mxu0 0
    %6155 = vmatpush2.bf16.msra.mxu0 0
    %6156 = vmatprep.subr.bf16.mxu0 0
    %6157 = vmatpush2.bf16.msra.mxu0 0
    %6158 = vmatprep.subr.bf16.mxu0 0
    %6159 = vmatpush2.bf16.msra.mxu0 0
    %6160 = vmatprep.subr.bf16.mxu0 0
    %6161 = vmatpush2.bf16.msra.mxu0 0
    %6162 = vmatprep.mubr.bf16.mxu0 0
    %6163 = vmatmul.mubr.bf16.gmra.mxu0 %v6085
    %v6164 = vpop.f32.mrf.mxu0
    %v6165 = vadd.f32 %v5855, %v6164
    %v6166 = vpop.f32.mrf.mxu0
    %v6167 = vadd.f32 %v5859, %v6166
    %v6168 = vpop.f32.mrf.mxu0
    %v6169 = vadd.f32 %v5855, %v6168
    %v6170 = vpop.f32.mrf.mxu0
    %v6171 = vadd.f32 %v5859, %v6170
    %6172 = vdwg.mxu0
    %6173 = vmatprep.subr.bf16.mxu0 0
    %6174 = vmatpush1.bf16.msra.mxu0 0
    %6175 = vmatprep.subr.bf16.mxu0 0
    %6176 = vmatpush1.bf16.msra.mxu0 0
    %6177 = vmatprep.subr.bf16.mxu0 0
    %6178 = vmatpush1.bf16.msra.mxu0 0
    %6179 = vmatprep.subr.bf16.mxu0 0
    %6180 = vmatpush1.bf16.msra.mxu0 0
    %6181 = vmatprep.subr.bf16.mxu0 0
    %6182 = vmatpush1.bf16.msra.mxu0 0
    %6183 = vmatprep.subr.bf16.mxu0 0
    %6184 = vmatpush1.bf16.msra.mxu0 0
    %6185 = vmatprep.subr.bf16.mxu0 %v6041
    %6186 = vmatpush1.bf16.msra.mxu0 %v6040
    %6187 = vmatprep.subr.bf16.mxu0 %v6025
    %6188 = vmatpush1.bf16.msra.mxu0 %v6024
    %6189 = vmatprep.subr.bf16.mxu0 0
    %6190 = vmatpush2.bf16.msra.mxu0 0
    %6191 = vmatprep.subr.bf16.mxu0 0
    %6192 = vmatpush2.bf16.msra.mxu0 0
    %6193 = vmatprep.subr.bf16.mxu0 0
    %6194 = vmatpush2.bf16.msra.mxu0 0
    %6195 = vmatprep.subr.bf16.mxu0 0
    %6196 = vmatpush2.bf16.msra.mxu0 0
    %6197 = vmatprep.subr.bf16.mxu0 0
    %6198 = vmatpush2.bf16.msra.mxu0 0
    %6199 = vmatprep.subr.bf16.mxu0 0
    %6200 = vmatpush2.bf16.msra.mxu0 0
    %6201 = vmatprep.subr.bf16.mxu0 0
    %6202 = vmatpush2.bf16.msra.mxu0 0
    %6203 = vmatprep.subr.bf16.mxu0 0
    %6204 = vmatpush2.bf16.msra.mxu0 0
    %6205 = vmatprep.mubr.bf16.mxu0 0
    %6206 = vmatmul.mubr.bf16.gmra.mxu0 %v6085
    %v6207 = vpop.f32.mrf.mxu0
    %v6208 = vadd.f32 %v5863, %v6207
    %v6209 = vpop.f32.mrf.mxu0
    %v6210 = vadd.f32 %v5867, %v6209
    %v6211 = vpop.f32.mrf.mxu0
    %v6212 = vadd.f32 %v5863, %v6211
    %v6213 = vpop.f32.mrf.mxu0
    %v6214 = vadd.f32 %v5867, %v6213
    %6215 = vdwg.mxu0
    %6216 = vmatprep.subr.bf16.mxu0 0
    %6217 = vmatpush1.bf16.msra.mxu0 0
    %6218 = vmatprep.subr.bf16.mxu0 0
    %6219 = vmatpush1.bf16.msra.mxu0 0
    %6220 = vmatprep.subr.bf16.mxu0 0
    %6221 = vmatpush1.bf16.msra.mxu0 0
    %6222 = vmatprep.subr.bf16.mxu0 0
    %6223 = vmatpush1.bf16.msra.mxu0 0
    %6224 = vmatprep.subr.bf16.mxu0 0
    %6225 = vmatpush1.bf16.msra.mxu0 0
    %6226 = vmatprep.subr.bf16.mxu0 0
    %6227 = vmatpush1.bf16.msra.mxu0 0
    %6228 = vmatprep.subr.bf16.mxu0 %v6043
    %6229 = vmatpush1.bf16.msra.mxu0 %v6042
    %6230 = vmatprep.subr.bf16.mxu0 %v6027
    %6231 = vmatpush1.bf16.msra.mxu0 %v6026
    %6232 = vmatprep.subr.bf16.mxu0 0
    %6233 = vmatpush2.bf16.msra.mxu0 0
    %6234 = vmatprep.subr.bf16.mxu0 0
    %6235 = vmatpush2.bf16.msra.mxu0 0
    %6236 = vmatprep.subr.bf16.mxu0 0
    %6237 = vmatpush2.bf16.msra.mxu0 0
    %6238 = vmatprep.subr.bf16.mxu0 0
    %6239 = vmatpush2.bf16.msra.mxu0 0
    %6240 = vmatprep.subr.bf16.mxu0 0
    %6241 = vmatpush2.bf16.msra.mxu0 0
    %6242 = vmatprep.subr.bf16.mxu0 0
    %6243 = vmatpush2.bf16.msra.mxu0 0
    %6244 = vmatprep.subr.bf16.mxu0 0
    %6245 = vmatpush2.bf16.msra.mxu0 0
    %6246 = vmatprep.subr.bf16.mxu0 0
    %6247 = vmatpush2.bf16.msra.mxu0 0
    %6248 = vmatprep.mubr.bf16.mxu0 0
    %6249 = vmatmul.mubr.bf16.gmra.mxu0 %v6085
    %v6250 = vpop.f32.mrf.mxu0
    %v6251 = vadd.f32 %v5871, %v6250
    %v6252 = vpop.f32.mrf.mxu0
    %v6253 = vadd.f32 %v5875, %v6252
    %v6254 = vpop.f32.mrf.mxu0
    %v6255 = vadd.f32 %v5871, %v6254
    %v6256 = vpop.f32.mrf.mxu0
    %v6257 = vadd.f32 %v5875, %v6256
    %6258 = vdwg.mxu0
    %6259 = vmatprep.subr.bf16.mxu0 0
    %6260 = vmatpush1.bf16.msra.mxu0 0
    %6261 = vmatprep.subr.bf16.mxu0 0
    %6262 = vmatpush1.bf16.msra.mxu0 0
    %6263 = vmatprep.subr.bf16.mxu0 0
    %6264 = vmatpush1.bf16.msra.mxu0 0
    %6265 = vmatprep.subr.bf16.mxu0 0
    %6266 = vmatpush1.bf16.msra.mxu0 0
    %6267 = vmatprep.subr.bf16.mxu0 0
    %6268 = vmatpush1.bf16.msra.mxu0 0
    %6269 = vmatprep.subr.bf16.mxu0 0
    %6270 = vmatpush1.bf16.msra.mxu0 0
    %6271 = vmatprep.subr.bf16.mxu0 %v6045
    %6272 = vmatpush1.bf16.msra.mxu0 %v6044
    %6273 = vmatprep.subr.bf16.mxu0 %v6029
    %6274 = vmatpush1.bf16.msra.mxu0 %v6028
    %6275 = vmatprep.subr.bf16.mxu0 0
    %6276 = vmatpush2.bf16.msra.mxu0 0
    %6277 = vmatprep.subr.bf16.mxu0 0
    %6278 = vmatpush2.bf16.msra.mxu0 0
    %6279 = vmatprep.subr.bf16.mxu0 0
    %6280 = vmatpush2.bf16.msra.mxu0 0
    %6281 = vmatprep.subr.bf16.mxu0 0
    %6282 = vmatpush2.bf16.msra.mxu0 0
    %6283 = vmatprep.subr.bf16.mxu0 0
    %6284 = vmatpush2.bf16.msra.mxu0 0
    %6285 = vmatprep.subr.bf16.mxu0 0
    %6286 = vmatpush2.bf16.msra.mxu0 0
    %6287 = vmatprep.subr.bf16.mxu0 0
    %6288 = vmatpush2.bf16.msra.mxu0 0
    %6289 = vmatprep.subr.bf16.mxu0 0
    %6290 = vmatpush2.bf16.msra.mxu0 0
    %6291 = vmatprep.mubr.bf16.mxu0 0
    %6292 = vmatmul.mubr.bf16.gmra.mxu0 %v6085
    %v6293 = vpop.f32.mrf.mxu0
    %v6294 = vadd.f32 %v5879, %v6293
    %v6295 = vpop.f32.mrf.mxu0
    %v6296 = vadd.f32 %v5883, %v6295
    %v6297 = vpop.f32.mrf.mxu0
    %v6298 = vadd.f32 %v5879, %v6297
    %v6299 = vpop.f32.mrf.mxu0
    %v6300 = vadd.f32 %v5883, %v6299
    %6301 = vdwg.mxu0
    %6302 = vmatprep.subr.bf16.mxu0 0
    %6303 = vmatpush1.bf16.msra.mxu0 0
    %6304 = vmatprep.subr.bf16.mxu0 0
    %6305 = vmatpush1.bf16.msra.mxu0 0
    %6306 = vmatprep.subr.bf16.mxu0 0
    %6307 = vmatpush1.bf16.msra.mxu0 0
    %6308 = vmatprep.subr.bf16.mxu0 0
    %6309 = vmatpush1.bf16.msra.mxu0 0
    %6310 = vmatprep.subr.bf16.mxu0 0
    %6311 = vmatpush1.bf16.msra.mxu0 0
    %6312 = vmatprep.subr.bf16.mxu0 0
    %6313 = vmatpush1.bf16.msra.mxu0 0
    %6314 = vmatprep.subr.bf16.mxu0 %v6047
    %6315 = vmatpush1.bf16.msra.mxu0 %v6046
    %6316 = vmatprep.subr.bf16.mxu0 %v6031
    %6317 = vmatpush1.bf16.msra.mxu0 %v6030
    %6318 = vmatprep.subr.bf16.mxu0 0
    %6319 = vmatpush2.bf16.msra.mxu0 0
    %6320 = vmatprep.subr.bf16.mxu0 0
    %6321 = vmatpush2.bf16.msra.mxu0 0
    %6322 = vmatprep.subr.bf16.mxu0 0
    %6323 = vmatpush2.bf16.msra.mxu0 0
    %6324 = vmatprep.subr.bf16.mxu0 0
    %6325 = vmatpush2.bf16.msra.mxu0 0
    %6326 = vmatprep.subr.bf16.mxu0 0
    %6327 = vmatpush2.bf16.msra.mxu0 0
    %6328 = vmatprep.subr.bf16.mxu0 0
    %6329 = vmatpush2.bf16.msra.mxu0 0
    %6330 = vmatprep.subr.bf16.mxu0 0
    %6331 = vmatpush2.bf16.msra.mxu0 0
    %6332 = vmatprep.subr.bf16.mxu0 0
    %6333 = vmatpush2.bf16.msra.mxu0 0
    %6334 = vmatprep.mubr.bf16.mxu0 0
    %6335 = vmatmul.mubr.bf16.gmra.mxu0 %v6085
    %v6336 = vpop.f32.mrf.mxu0
    %v6337 = vadd.f32 %v5887, %v6336
    %v6338 = vpop.f32.mrf.mxu0
    %v6339 = vadd.f32 %v5891, %v6338
    %v6340 = vpop.f32.mrf.mxu0
    %v6341 = vadd.f32 %v5887, %v6340
    %v6342 = vpop.f32.mrf.mxu0
    %v6343 = vadd.f32 %v5891, %v6342
    %6344 = vdwg.mxu0
    %6345 = vmatprep.subr.bf16.mxu0 0
    %6346 = vmatpush1.bf16.msra.mxu0 0
    %6347 = vmatprep.subr.bf16.mxu0 0
    %6348 = vmatpush1.bf16.msra.mxu0 0
    %6349 = vmatprep.subr.bf16.mxu0 0
    %6350 = vmatpush1.bf16.msra.mxu0 0
    %6351 = vmatprep.subr.bf16.mxu0 0
    %6352 = vmatpush1.bf16.msra.mxu0 0
    %6353 = vmatprep.subr.bf16.mxu0 0
    %6354 = vmatpush1.bf16.msra.mxu0 0
    %6355 = vmatprep.subr.bf16.mxu0 0
    %6356 = vmatpush1.bf16.msra.mxu0 0
    %6357 = vmatprep.subr.bf16.mxu0 %v6049
    %6358 = vmatpush1.bf16.msra.mxu0 %v6048
    %6359 = vmatprep.subr.bf16.mxu0 %v6033
    %6360 = vmatpush1.bf16.msra.mxu0 %v6032
    %6361 = vmatprep.subr.bf16.mxu0 0
    %6362 = vmatpush2.bf16.msra.mxu0 0
    %6363 = vmatprep.subr.bf16.mxu0 0
    %6364 = vmatpush2.bf16.msra.mxu0 0
    %6365 = vmatprep.subr.bf16.mxu0 0
    %6366 = vmatpush2.bf16.msra.mxu0 0
    %6367 = vmatprep.subr.bf16.mxu0 0
    %6368 = vmatpush2.bf16.msra.mxu0 0
    %6369 = vmatprep.subr.bf16.mxu0 0
    %6370 = vmatpush2.bf16.msra.mxu0 0
    %6371 = vmatprep.subr.bf16.mxu0 0
    %6372 = vmatpush2.bf16.msra.mxu0 0
    %6373 = vmatprep.subr.bf16.mxu0 0
    %6374 = vmatpush2.bf16.msra.mxu0 0
    %6375 = vmatprep.subr.bf16.mxu0 0
    %6376 = vmatpush2.bf16.msra.mxu0 0
    %6377 = vmatprep.mubr.bf16.mxu0 0
    %6378 = vmatmul.mubr.bf16.gmra.mxu0 %v6085
    %v6379 = vpop.f32.mrf.mxu0
    %v6380 = vadd.f32 %v5895, %v6379
    %v6381 = vpop.f32.mrf.mxu0
    %v6382 = vadd.f32 %v5899, %v6381
    %v6383 = vpop.f32.mrf.mxu0
    %v6384 = vadd.f32 %v5895, %v6383
    %v6385 = vpop.f32.mrf.mxu0
    %v6386 = vadd.f32 %v5899, %v6385
    %6387 = vdwg.mxu0
    %6388 = vmatprep.subr.bf16.mxu0 0
    %6389 = vmatpush1.bf16.msra.mxu0 0
    %6390 = vmatprep.subr.bf16.mxu0 0
    %6391 = vmatpush1.bf16.msra.mxu0 0
    %6392 = vmatprep.subr.bf16.mxu0 0
    %6393 = vmatpush1.bf16.msra.mxu0 0
    %6394 = vmatprep.subr.bf16.mxu0 0
    %6395 = vmatpush1.bf16.msra.mxu0 0
    %6396 = vmatprep.subr.bf16.mxu0 0
    %6397 = vmatpush1.bf16.msra.mxu0 0
    %6398 = vmatprep.subr.bf16.mxu0 0
    %6399 = vmatpush1.bf16.msra.mxu0 0
    %6400 = vmatprep.subr.bf16.mxu0 %v6051
    %6401 = vmatpush1.bf16.msra.mxu0 %v6050
    %6402 = vmatprep.subr.bf16.mxu0 %v6035
    %6403 = vmatpush1.bf16.msra.mxu0 %v6034
    %6404 = vmatprep.subr.bf16.mxu0 0
    %6405 = vmatpush2.bf16.msra.mxu0 0
    %6406 = vmatprep.subr.bf16.mxu0 0
    %6407 = vmatpush2.bf16.msra.mxu0 0
    %6408 = vmatprep.subr.bf16.mxu0 0
    %6409 = vmatpush2.bf16.msra.mxu0 0
    %6410 = vmatprep.subr.bf16.mxu0 0
    %6411 = vmatpush2.bf16.msra.mxu0 0
    %6412 = vmatprep.subr.bf16.mxu0 0
    %6413 = vmatpush2.bf16.msra.mxu0 0
    %6414 = vmatprep.subr.bf16.mxu0 0
    %6415 = vmatpush2.bf16.msra.mxu0 0
    %6416 = vmatprep.subr.bf16.mxu0 0
    %6417 = vmatpush2.bf16.msra.mxu0 0
    %6418 = vmatprep.subr.bf16.mxu0 0
    %6419 = vmatpush2.bf16.msra.mxu0 0
    %6420 = vmatprep.mubr.bf16.mxu0 0
    %6421 = vmatmul.mubr.bf16.gmra.mxu0 %v6085
    %v6422 = vpop.f32.mrf.mxu0
    %v6423 = vadd.f32 %v5903, %v6422
    %v6424 = vpop.f32.mrf.mxu0
    %v6425 = vadd.f32 %v5907, %v6424
    %v6426 = vpop.f32.mrf.mxu0
    %v6427 = vadd.f32 %v5903, %v6426
    %v6428 = vpop.f32.mrf.mxu0
    %v6429 = vadd.f32 %v5907, %v6428
    %6430 = vdwg.mxu0
    %v6431 = vmax.f32 %v6122, 0.0
    %v6432 = vmax.f32 %v6124, 0.0
    %v6433 = vmax.f32 %v6165, 0.0
    %v6434 = vmax.f32 %v6167, 0.0
    %v6435 = vmax.f32 %v6208, 0.0
    %v6436 = vmax.f32 %v6210, 0.0
    %v6437 = vmax.f32 %v6251, 0.0
    %v6438 = vmax.f32 %v6253, 0.0
    %v6439 = vmax.f32 %v6294, 0.0
    %v6440 = vmax.f32 %v6296, 0.0
    %v6441 = vmax.f32 %v6337, 0.0
    %v6442 = vmax.f32 %v6339, 0.0
    %v6443 = vmax.f32 %v6380, 0.0
    %v6444 = vmax.f32 %v6382, 0.0
    %v6445 = vmax.f32 %v6423, 0.0
    %v6446 = vmax.f32 %v6425, 0.0
    %v6447 = vmax.f32 %v6126, 0.0
    %v6448 = vmax.f32 %v6128, 0.0
    %v6449 = vmax.f32 %v6169, 0.0
    %v6450 = vmax.f32 %v6171, 0.0
    %v6451 = vmax.f32 %v6212, 0.0
    %v6452 = vmax.f32 %v6214, 0.0
    %v6453 = vmax.f32 %v6255, 0.0
    %v6454 = vmax.f32 %v6257, 0.0
    %v6455 = vmax.f32 %v6298, 0.0
    %v6456 = vmax.f32 %v6300, 0.0
    %v6457 = vmax.f32 %v6341, 0.0
    %v6458 = vmax.f32 %v6343, 0.0
    %v6459 = vmax.f32 %v6384, 0.0
    %v6460 = vmax.f32 %v6386, 0.0
    %v6461 = vmax.f32 %v6427, 0.0
    %v6462 = vmax.f32 %v6429, 0.0
    %v6463 = vpack.c.bf16 %v6447, %v6431
    %v6464 = vpack.c.bf16 %v6448, %v6432
    %v6465 = vpack.c.bf16 %v6449, %v6433
    %v6466 = vpack.c.bf16 %v6450, %v6434
    %v6467 = vpack.c.bf16 %v6451, %v6435
    %v6468 = vpack.c.bf16 %v6452, %v6436
    %v6469 = vpack.c.bf16 %v6453, %v6437
    %v6470 = vpack.c.bf16 %v6454, %v6438
    %v6471 = vpack.c.bf16 %v6455, %v6439
    %v6472 = vpack.c.bf16 %v6456, %v6440
    %v6473 = vpack.c.bf16 %v6457, %v6441
    %v6474 = vpack.c.bf16 %v6458, %v6442
    %v6475 = vpack.c.bf16 %v6459, %v6443
    %v6476 = vpack.c.bf16 %v6460, %v6444
    %v6477 = vpack.c.bf16 %v6461, %v6445
    %v6478 = vpack.c.bf16 %v6462, %v6446
    %s6479 = scalar_lea.vmem [#allocation10], 256
    %v6480 = vld [vmem:[%s6479] sm:$0xff]
    %v6481 = vld [vmem:[%s6479 + $0x8] sm:$0xff]
    %v6482 = vld [vmem:[%s6479 + $0x10] sm:$0xff]
    %v6483 = vld [vmem:[%s6479 + $0x18] sm:$0xff]
    %v6484 = vld [vmem:[%s6479 + $0x20] sm:$0xff]
    %v6485 = vld [vmem:[%s6479 + $0x28] sm:$0xff]
    %v6486 = vld [vmem:[%s6479 + $0x30] sm:$0xff]
    %v6487 = vld [vmem:[%s6479 + $0x38] sm:$0xff]
    %v6488 = vld [vmem:[%s6479 + $0x40] sm:$0xff]
    %v6489 = vld [vmem:[%s6479 + $0x48] sm:$0xff]
    %v6490 = vld [vmem:[%s6479 + $0x50] sm:$0xff]
    %v6491 = vld [vmem:[%s6479 + $0x58] sm:$0xff]
    %v6492 = vld [vmem:[%s6479 + $0x60] sm:$0xff]
    %v6493 = vld [vmem:[%s6479 + $0x68] sm:$0xff]
    %v6494 = vld [vmem:[%s6479 + $0x70] sm:$0xff]
    %v6495 = vld [vmem:[%s6479 + $0x78] sm:$0xff]
    %v6496 = vld [vmem:[%s6479 + $0x80] sm:$0xff]
    %v6497 = vld [vmem:[%s6479 + $0x88] sm:$0xff]
    %v6498 = vld [vmem:[%s6479 + $0x90] sm:$0xff]
    %v6499 = vld [vmem:[%s6479 + $0x98] sm:$0xff]
    %v6500 = vld [vmem:[%s6479 + $0xa0] sm:$0xff]
    %v6501 = vld [vmem:[%s6479 + $0xa8] sm:$0xff]
    %v6502 = vld [vmem:[%s6479 + $0xb0] sm:$0xff]
    %v6503 = vld [vmem:[%s6479 + $0xb8] sm:$0xff]
    %v6504 = vld [vmem:[%s6479 + $0xc0] sm:$0xff]
    %v6505 = vld [vmem:[%s6479 + $0xc8] sm:$0xff]
    %v6506 = vld [vmem:[%s6479 + $0xd0] sm:$0xff]
    %v6507 = vld [vmem:[%s6479 + $0xd8] sm:$0xff]
    %v6508 = vld [vmem:[%s6479 + $0xe0] sm:$0xff]
    %v6509 = vld [vmem:[%s6479 + $0xe8] sm:$0xff]
    %v6510 = vld [vmem:[%s6479 + $0xf0] sm:$0xff]
    %v6511 = vld [vmem:[%s6479 + $0xf8] sm:$0xff]
    %v6512 = vld [vmem:[#allocation11 + $0x2d] sm:$0x1]
    %v6513 = vlaneseq
    %v6514 = vshrl.u32 %v6513, 7
    %v6515 = vsub.s32 0, %v6514
    %v6516 = vrot.slane %v6512, %v6515
    %v6549 = vunpack.c.l.b16 %v6480
    %v6550 = vunpack.c.h.b16 %v6480
    %v6551 = vunpack.c.l.b16 %v6481
    %v6552 = vunpack.c.h.b16 %v6481
    %v6553 = vunpack.c.l.b16 %v6482
    %v6554 = vunpack.c.h.b16 %v6482
    %v6555 = vunpack.c.l.b16 %v6483
    %v6556 = vunpack.c.h.b16 %v6483
    %v6557 = vunpack.c.l.b16 %v6484
    %v6558 = vunpack.c.h.b16 %v6484
    %v6559 = vunpack.c.l.b16 %v6485
    %v6560 = vunpack.c.h.b16 %v6485
    %v6561 = vunpack.c.l.b16 %v6486
    %v6562 = vunpack.c.h.b16 %v6486
    %v6563 = vunpack.c.l.b16 %v6487
    %v6564 = vunpack.c.h.b16 %v6487
    %v6565 = vunpack.c.l.b16 %v6488
    %v6566 = vunpack.c.h.b16 %v6488
    %v6567 = vunpack.c.l.b16 %v6489
    %v6568 = vunpack.c.h.b16 %v6489
    %v6569 = vunpack.c.l.b16 %v6490
    %v6570 = vunpack.c.h.b16 %v6490
    %v6571 = vunpack.c.l.b16 %v6491
    %v6572 = vunpack.c.h.b16 %v6491
    %v6573 = vunpack.c.l.b16 %v6492
    %v6574 = vunpack.c.h.b16 %v6492
    %v6575 = vunpack.c.l.b16 %v6493
    %v6576 = vunpack.c.h.b16 %v6493
    %v6577 = vunpack.c.l.b16 %v6494
    %v6578 = vunpack.c.h.b16 %v6494
    %v6579 = vunpack.c.l.b16 %v6495
    %v6580 = vunpack.c.h.b16 %v6495
    %v6581 = vunpack.c.l.b16 %v6496
    %v6582 = vunpack.c.h.b16 %v6496
    %v6583 = vunpack.c.l.b16 %v6497
    %v6584 = vunpack.c.h.b16 %v6497
    %v6585 = vunpack.c.l.b16 %v6498
    %v6586 = vunpack.c.h.b16 %v6498
    %v6587 = vunpack.c.l.b16 %v6499
    %v6588 = vunpack.c.h.b16 %v6499
    %v6589 = vunpack.c.l.b16 %v6500
    %v6590 = vunpack.c.h.b16 %v6500
    %v6591 = vunpack.c.l.b16 %v6501
    %v6592 = vunpack.c.h.b16 %v6501
    %v6593 = vunpack.c.l.b16 %v6502
    %v6594 = vunpack.c.h.b16 %v6502
    %v6595 = vunpack.c.l.b16 %v6503
    %v6596 = vunpack.c.h.b16 %v6503
    %v6597 = vunpack.c.l.b16 %v6504
    %v6598 = vunpack.c.h.b16 %v6504
    %v6599 = vunpack.c.l.b16 %v6505
    %v6600 = vunpack.c.h.b16 %v6505
    %v6601 = vunpack.c.l.b16 %v6506
    %v6602 = vunpack.c.h.b16 %v6506
    %v6603 = vunpack.c.l.b16 %v6507
    %v6604 = vunpack.c.h.b16 %v6507
    %v6605 = vunpack.c.l.b16 %v6508
    %v6606 = vunpack.c.h.b16 %v6508
    %v6607 = vunpack.c.l.b16 %v6509
    %v6608 = vunpack.c.h.b16 %v6509
    %v6609 = vunpack.c.l.b16 %v6510
    %v6610 = vunpack.c.h.b16 %v6510
    %v6611 = vunpack.c.l.b16 %v6511
    %v6612 = vunpack.c.h.b16 %v6511
    %v6613 = vpack.c.b16 %v6565, %v6549
    %v6614 = vpack.c.b16 %v6566, %v6550
    %v6615 = vpack.c.b16 %v6567, %v6551
    %v6616 = vpack.c.b16 %v6568, %v6552
    %v6617 = vpack.c.b16 %v6569, %v6553
    %v6618 = vpack.c.b16 %v6570, %v6554
    %v6619 = vpack.c.b16 %v6571, %v6555
    %v6620 = vpack.c.b16 %v6572, %v6556
    %v6621 = vpack.c.b16 %v6573, %v6557
    %v6622 = vpack.c.b16 %v6574, %v6558
    %v6623 = vpack.c.b16 %v6575, %v6559
    %v6624 = vpack.c.b16 %v6576, %v6560
    %v6625 = vpack.c.b16 %v6577, %v6561
    %v6626 = vpack.c.b16 %v6578, %v6562
    %v6627 = vpack.c.b16 %v6579, %v6563
    %v6628 = vpack.c.b16 %v6580, %v6564
    %v6629 = vpack.c.b16 %v6597, %v6581
    %v6630 = vpack.c.b16 %v6598, %v6582
    %v6631 = vpack.c.b16 %v6599, %v6583
    %v6632 = vpack.c.b16 %v6600, %v6584
    %v6633 = vpack.c.b16 %v6601, %v6585
    %v6634 = vpack.c.b16 %v6602, %v6586
    %v6635 = vpack.c.b16 %v6603, %v6587
    %v6636 = vpack.c.b16 %v6604, %v6588
    %v6637 = vpack.c.b16 %v6605, %v6589
    %v6638 = vpack.c.b16 %v6606, %v6590
    %v6639 = vpack.c.b16 %v6607, %v6591
    %v6640 = vpack.c.b16 %v6608, %v6592
    %v6641 = vpack.c.b16 %v6609, %v6593
    %v6642 = vpack.c.b16 %v6610, %v6594
    %v6643 = vpack.c.b16 %v6611, %v6595
    %v6644 = vpack.c.b16 %v6612, %v6596
    %6677 = vmatprep.subr.bf16.mxu0 0
    %6678 = vmatpush1.bf16.xpose.msra.mxu0 0
    %6679 = vmatprep.subr.bf16.mxu0 0
    %6680 = vmatpush1.bf16.xpose.msra.mxu0 0
    %6681 = vmatprep.subr.bf16.mxu0 0
    %6682 = vmatpush1.bf16.xpose.msra.mxu0 0
    %6683 = vmatprep.subr.bf16.mxu0 0
    %6684 = vmatpush1.bf16.xpose.msra.mxu0 0
    %6685 = vmatprep.subr.bf16.mxu0 0
    %6686 = vmatpush1.bf16.xpose.msra.mxu0 0
    %6687 = vmatprep.subr.bf16.mxu0 0
    %6688 = vmatpush1.bf16.xpose.msra.mxu0 0
    %6689 = vmatprep.subr.bf16.mxu0 %v6630
    %6690 = vmatpush1.bf16.xpose.msra.mxu0 %v6629
    %6691 = vmatprep.subr.bf16.mxu0 %v6614
    %6692 = vmatpush1.bf16.xpose.msra.mxu0 %v6613
    %6693 = vmatprep.subr.bf16.mxu0 0
    %6694 = vmatpush2.bf16.xpose.msra.mxu0 0
    %6695 = vmatprep.subr.bf16.mxu0 0
    %6696 = vmatpush2.bf16.xpose.msra.mxu0 0
    %6697 = vmatprep.subr.bf16.mxu0 0
    %6698 = vmatpush2.bf16.xpose.msra.mxu0 0
    %6699 = vmatprep.subr.bf16.mxu0 0
    %6700 = vmatpush2.bf16.xpose.msra.mxu0 0
    %6701 = vmatprep.subr.bf16.mxu0 0
    %6702 = vmatpush2.bf16.xpose.msra.mxu0 0
    %6703 = vmatprep.subr.bf16.mxu0 0
    %6704 = vmatpush2.bf16.xpose.msra.mxu0 0
    %6705 = vmatprep.subr.bf16.mxu0 0
    %6706 = vmatpush2.bf16.xpose.msra.mxu0 0
    %6707 = vmatprep.subr.bf16.mxu0 0
    %6708 = vmatpush2.bf16.xpose.msra.mxu0 0
    %6709 = vmatprep.mubr.bf16.mxu0 %v6464
    %6710 = vmatmul.mubr.bf16.gmra.mxu0 %v6463
    %v6711 = vpop.f32.mrf.mxu0
    %v6712 = vadd.f32 %v6516, %v6711
    %v6713 = vpop.f32.mrf.mxu0
    %v6714 = vpop.f32.mrf.mxu0
    %v6715 = vadd.f32 %v6516, %v6714
    %v6716 = vpop.f32.mrf.mxu0
    %6717 = vdwg.mxu0
    %6718 = vmatprep.subr.bf16.mxu0 0
    %6719 = vmatpush1.bf16.xpose.msra.mxu0 0
    %6720 = vmatprep.subr.bf16.mxu0 0
    %6721 = vmatpush1.bf16.xpose.msra.mxu0 0
    %6722 = vmatprep.subr.bf16.mxu0 0
    %6723 = vmatpush1.bf16.xpose.msra.mxu0 0
    %6724 = vmatprep.subr.bf16.mxu0 0
    %6725 = vmatpush1.bf16.xpose.msra.mxu0 0
    %6726 = vmatprep.subr.bf16.mxu0 0
    %6727 = vmatpush1.bf16.xpose.msra.mxu0 0
    %6728 = vmatprep.subr.bf16.mxu0 0
    %6729 = vmatpush1.bf16.xpose.msra.mxu0 0
    %6730 = vmatprep.subr.bf16.mxu0 %v6632
    %6731 = vmatpush1.bf16.xpose.msra.mxu0 %v6631
    %6732 = vmatprep.subr.bf16.mxu0 %v6616
    %6733 = vmatpush1.bf16.xpose.msra.mxu0 %v6615
    %6734 = vmatprep.subr.bf16.mxu0 0
    %6735 = vmatpush2.bf16.xpose.msra.mxu0 0
    %6736 = vmatprep.subr.bf16.mxu0 0
    %6737 = vmatpush2.bf16.xpose.msra.mxu0 0
    %6738 = vmatprep.subr.bf16.mxu0 0
    %6739 = vmatpush2.bf16.xpose.msra.mxu0 0
    %6740 = vmatprep.subr.bf16.mxu0 0
    %6741 = vmatpush2.bf16.xpose.msra.mxu0 0
    %6742 = vmatprep.subr.bf16.mxu0 0
    %6743 = vmatpush2.bf16.xpose.msra.mxu0 0
    %6744 = vmatprep.subr.bf16.mxu0 0
    %6745 = vmatpush2.bf16.xpose.msra.mxu0 0
    %6746 = vmatprep.subr.bf16.mxu0 0
    %6747 = vmatpush2.bf16.xpose.msra.mxu0 0
    %6748 = vmatprep.subr.bf16.mxu0 0
    %6749 = vmatpush2.bf16.xpose.msra.mxu0 0
    %6750 = vmatprep.mubr.bf16.mxu0 %v6466
    %6751 = vmatmul.mubr.bf16.gmra.mxu0 %v6465
    %v6752 = vpop.f32.mrf.mxu0
    %v6753 = vadd.f32 %v6712, %v6752
    %v6754 = vpop.f32.mrf.mxu0
    %v6755 = vpop.f32.mrf.mxu0
    %v6756 = vadd.f32 %v6715, %v6755
    %v6757 = vpop.f32.mrf.mxu0
    %6758 = vdwg.mxu0
    %6759 = vmatprep.subr.bf16.mxu0 0
    %6760 = vmatpush1.bf16.xpose.msra.mxu0 0
    %6761 = vmatprep.subr.bf16.mxu0 0
    %6762 = vmatpush1.bf16.xpose.msra.mxu0 0
    %6763 = vmatprep.subr.bf16.mxu0 0
    %6764 = vmatpush1.bf16.xpose.msra.mxu0 0
    %6765 = vmatprep.subr.bf16.mxu0 0
    %6766 = vmatpush1.bf16.xpose.msra.mxu0 0
    %6767 = vmatprep.subr.bf16.mxu0 0
    %6768 = vmatpush1.bf16.xpose.msra.mxu0 0
    %6769 = vmatprep.subr.bf16.mxu0 0
    %6770 = vmatpush1.bf16.xpose.msra.mxu0 0
    %6771 = vmatprep.subr.bf16.mxu0 %v6634
    %6772 = vmatpush1.bf16.xpose.msra.mxu0 %v6633
    %6773 = vmatprep.subr.bf16.mxu0 %v6618
    %6774 = vmatpush1.bf16.xpose.msra.mxu0 %v6617
    %6775 = vmatprep.subr.bf16.mxu0 0
    %6776 = vmatpush2.bf16.xpose.msra.mxu0 0
    %6777 = vmatprep.subr.bf16.mxu0 0
    %6778 = vmatpush2.bf16.xpose.msra.mxu0 0
    %6779 = vmatprep.subr.bf16.mxu0 0
    %6780 = vmatpush2.bf16.xpose.msra.mxu0 0
    %6781 = vmatprep.subr.bf16.mxu0 0
    %6782 = vmatpush2.bf16.xpose.msra.mxu0 0
    %6783 = vmatprep.subr.bf16.mxu0 0
    %6784 = vmatpush2.bf16.xpose.msra.mxu0 0
    %6785 = vmatprep.subr.bf16.mxu0 0
    %6786 = vmatpush2.bf16.xpose.msra.mxu0 0
    %6787 = vmatprep.subr.bf16.mxu0 0
    %6788 = vmatpush2.bf16.xpose.msra.mxu0 0
    %6789 = vmatprep.subr.bf16.mxu0 0
    %6790 = vmatpush2.bf16.xpose.msra.mxu0 0
    %6791 = vmatprep.mubr.bf16.mxu0 %v6468
    %6792 = vmatmul.mubr.bf16.gmra.mxu0 %v6467
    %v6793 = vpop.f32.mrf.mxu0
    %v6794 = vadd.f32 %v6753, %v6793
    %v6795 = vpop.f32.mrf.mxu0
    %v6796 = vpop.f32.mrf.mxu0
    %v6797 = vadd.f32 %v6756, %v6796
    %v6798 = vpop.f32.mrf.mxu0
    %6799 = vdwg.mxu0
    %6800 = vmatprep.subr.bf16.mxu0 0
    %6801 = vmatpush1.bf16.xpose.msra.mxu0 0
    %6802 = vmatprep.subr.bf16.mxu0 0
    %6803 = vmatpush1.bf16.xpose.msra.mxu0 0
    %6804 = vmatprep.subr.bf16.mxu0 0
    %6805 = vmatpush1.bf16.xpose.msra.mxu0 0
    %6806 = vmatprep.subr.bf16.mxu0 0
    %6807 = vmatpush1.bf16.xpose.msra.mxu0 0
    %6808 = vmatprep.subr.bf16.mxu0 0
    %6809 = vmatpush1.bf16.xpose.msra.mxu0 0
    %6810 = vmatprep.subr.bf16.mxu0 0
    %6811 = vmatpush1.bf16.xpose.msra.mxu0 0
    %6812 = vmatprep.subr.bf16.mxu0 %v6636
    %6813 = vmatpush1.bf16.xpose.msra.mxu0 %v6635
    %6814 = vmatprep.subr.bf16.mxu0 %v6620
    %6815 = vmatpush1.bf16.xpose.msra.mxu0 %v6619
    %6816 = vmatprep.subr.bf16.mxu0 0
    %6817 = vmatpush2.bf16.xpose.msra.mxu0 0
    %6818 = vmatprep.subr.bf16.mxu0 0
    %6819 = vmatpush2.bf16.xpose.msra.mxu0 0
    %6820 = vmatprep.subr.bf16.mxu0 0
    %6821 = vmatpush2.bf16.xpose.msra.mxu0 0
    %6822 = vmatprep.subr.bf16.mxu0 0
    %6823 = vmatpush2.bf16.xpose.msra.mxu0 0
    %6824 = vmatprep.subr.bf16.mxu0 0
    %6825 = vmatpush2.bf16.xpose.msra.mxu0 0
    %6826 = vmatprep.subr.bf16.mxu0 0
    %6827 = vmatpush2.bf16.xpose.msra.mxu0 0
    %6828 = vmatprep.subr.bf16.mxu0 0
    %6829 = vmatpush2.bf16.xpose.msra.mxu0 0
    %6830 = vmatprep.subr.bf16.mxu0 0
    %6831 = vmatpush2.bf16.xpose.msra.mxu0 0
    %6832 = vmatprep.mubr.bf16.mxu0 %v6470
    %6833 = vmatmul.mubr.bf16.gmra.mxu0 %v6469
    %v6834 = vpop.f32.mrf.mxu0
    %v6835 = vadd.f32 %v6794, %v6834
    %v6836 = vpop.f32.mrf.mxu0
    %v6837 = vpop.f32.mrf.mxu0
    %v6838 = vadd.f32 %v6797, %v6837
    %v6839 = vpop.f32.mrf.mxu0
    %6840 = vdwg.mxu0
    %6841 = vmatprep.subr.bf16.mxu0 0
    %6842 = vmatpush1.bf16.xpose.msra.mxu0 0
    %6843 = vmatprep.subr.bf16.mxu0 0
    %6844 = vmatpush1.bf16.xpose.msra.mxu0 0
    %6845 = vmatprep.subr.bf16.mxu0 0
    %6846 = vmatpush1.bf16.xpose.msra.mxu0 0
    %6847 = vmatprep.subr.bf16.mxu0 0
    %6848 = vmatpush1.bf16.xpose.msra.mxu0 0
    %6849 = vmatprep.subr.bf16.mxu0 0
    %6850 = vmatpush1.bf16.xpose.msra.mxu0 0
    %6851 = vmatprep.subr.bf16.mxu0 0
    %6852 = vmatpush1.bf16.xpose.msra.mxu0 0
    %6853 = vmatprep.subr.bf16.mxu0 %v6638
    %6854 = vmatpush1.bf16.xpose.msra.mxu0 %v6637
    %6855 = vmatprep.subr.bf16.mxu0 %v6622
    %6856 = vmatpush1.bf16.xpose.msra.mxu0 %v6621
    %6857 = vmatprep.subr.bf16.mxu0 0
    %6858 = vmatpush2.bf16.xpose.msra.mxu0 0
    %6859 = vmatprep.subr.bf16.mxu0 0
    %6860 = vmatpush2.bf16.xpose.msra.mxu0 0
    %6861 = vmatprep.subr.bf16.mxu0 0
    %6862 = vmatpush2.bf16.xpose.msra.mxu0 0
    %6863 = vmatprep.subr.bf16.mxu0 0
    %6864 = vmatpush2.bf16.xpose.msra.mxu0 0
    %6865 = vmatprep.subr.bf16.mxu0 0
    %6866 = vmatpush2.bf16.xpose.msra.mxu0 0
    %6867 = vmatprep.subr.bf16.mxu0 0
    %6868 = vmatpush2.bf16.xpose.msra.mxu0 0
    %6869 = vmatprep.subr.bf16.mxu0 0
    %6870 = vmatpush2.bf16.xpose.msra.mxu0 0
    %6871 = vmatprep.subr.bf16.mxu0 0
    %6872 = vmatpush2.bf16.xpose.msra.mxu0 0
    %6873 = vmatprep.mubr.bf16.mxu0 %v6472
    %6874 = vmatmul.mubr.bf16.gmra.mxu0 %v6471
    %v6875 = vpop.f32.mrf.mxu0
    %v6876 = vadd.f32 %v6835, %v6875
    %v6877 = vpop.f32.mrf.mxu0
    %v6878 = vpop.f32.mrf.mxu0
    %v6879 = vadd.f32 %v6838, %v6878
    %v6880 = vpop.f32.mrf.mxu0
    %6881 = vdwg.mxu0
    %6882 = vmatprep.subr.bf16.mxu0 0
    %6883 = vmatpush1.bf16.xpose.msra.mxu0 0
    %6884 = vmatprep.subr.bf16.mxu0 0
    %6885 = vmatpush1.bf16.xpose.msra.mxu0 0
    %6886 = vmatprep.subr.bf16.mxu0 0
    %6887 = vmatpush1.bf16.xpose.msra.mxu0 0
    %6888 = vmatprep.subr.bf16.mxu0 0
    %6889 = vmatpush1.bf16.xpose.msra.mxu0 0
    %6890 = vmatprep.subr.bf16.mxu0 0
    %6891 = vmatpush1.bf16.xpose.msra.mxu0 0
    %6892 = vmatprep.subr.bf16.mxu0 0
    %6893 = vmatpush1.bf16.xpose.msra.mxu0 0
    %6894 = vmatprep.subr.bf16.mxu0 %v6640
    %6895 = vmatpush1.bf16.xpose.msra.mxu0 %v6639
    %6896 = vmatprep.subr.bf16.mxu0 %v6624
    %6897 = vmatpush1.bf16.xpose.msra.mxu0 %v6623
    %6898 = vmatprep.subr.bf16.mxu0 0
    %6899 = vmatpush2.bf16.xpose.msra.mxu0 0
    %6900 = vmatprep.subr.bf16.mxu0 0
    %6901 = vmatpush2.bf16.xpose.msra.mxu0 0
    %6902 = vmatprep.subr.bf16.mxu0 0
    %6903 = vmatpush2.bf16.xpose.msra.mxu0 0
    %6904 = vmatprep.subr.bf16.mxu0 0
    %6905 = vmatpush2.bf16.xpose.msra.mxu0 0
    %6906 = vmatprep.subr.bf16.mxu0 0
    %6907 = vmatpush2.bf16.xpose.msra.mxu0 0
    %6908 = vmatprep.subr.bf16.mxu0 0
    %6909 = vmatpush2.bf16.xpose.msra.mxu0 0
    %6910 = vmatprep.subr.bf16.mxu0 0
    %6911 = vmatpush2.bf16.xpose.msra.mxu0 0
    %6912 = vmatprep.subr.bf16.mxu0 0
    %6913 = vmatpush2.bf16.xpose.msra.mxu0 0
    %6914 = vmatprep.mubr.bf16.mxu0 %v6474
    %6915 = vmatmul.mubr.bf16.gmra.mxu0 %v6473
    %v6916 = vpop.f32.mrf.mxu0
    %v6917 = vadd.f32 %v6876, %v6916
    %v6918 = vpop.f32.mrf.mxu0
    %v6919 = vpop.f32.mrf.mxu0
    %v6920 = vadd.f32 %v6879, %v6919
    %v6921 = vpop.f32.mrf.mxu0
    %6922 = vdwg.mxu0
    %6923 = vmatprep.subr.bf16.mxu0 0
    %6924 = vmatpush1.bf16.xpose.msra.mxu0 0
    %6925 = vmatprep.subr.bf16.mxu0 0
    %6926 = vmatpush1.bf16.xpose.msra.mxu0 0
    %6927 = vmatprep.subr.bf16.mxu0 0
    %6928 = vmatpush1.bf16.xpose.msra.mxu0 0
    %6929 = vmatprep.subr.bf16.mxu0 0
    %6930 = vmatpush1.bf16.xpose.msra.mxu0 0
    %6931 = vmatprep.subr.bf16.mxu0 0
    %6932 = vmatpush1.bf16.xpose.msra.mxu0 0
    %6933 = vmatprep.subr.bf16.mxu0 0
    %6934 = vmatpush1.bf16.xpose.msra.mxu0 0
    %6935 = vmatprep.subr.bf16.mxu0 %v6642
    %6936 = vmatpush1.bf16.xpose.msra.mxu0 %v6641
    %6937 = vmatprep.subr.bf16.mxu0 %v6626
    %6938 = vmatpush1.bf16.xpose.msra.mxu0 %v6625
    %6939 = vmatprep.subr.bf16.mxu0 0
    %6940 = vmatpush2.bf16.xpose.msra.mxu0 0
    %6941 = vmatprep.subr.bf16.mxu0 0
    %6942 = vmatpush2.bf16.xpose.msra.mxu0 0
    %6943 = vmatprep.subr.bf16.mxu0 0
    %6944 = vmatpush2.bf16.xpose.msra.mxu0 0
    %6945 = vmatprep.subr.bf16.mxu0 0
    %6946 = vmatpush2.bf16.xpose.msra.mxu0 0
    %6947 = vmatprep.subr.bf16.mxu0 0
    %6948 = vmatpush2.bf16.xpose.msra.mxu0 0
    %6949 = vmatprep.subr.bf16.mxu0 0
    %6950 = vmatpush2.bf16.xpose.msra.mxu0 0
    %6951 = vmatprep.subr.bf16.mxu0 0
    %6952 = vmatpush2.bf16.xpose.msra.mxu0 0
    %6953 = vmatprep.subr.bf16.mxu0 0
    %6954 = vmatpush2.bf16.xpose.msra.mxu0 0
    %6955 = vmatprep.mubr.bf16.mxu0 %v6476
    %6956 = vmatmul.mubr.bf16.gmra.mxu0 %v6475
    %v6957 = vpop.f32.mrf.mxu0
    %v6958 = vadd.f32 %v6917, %v6957
    %v6959 = vpop.f32.mrf.mxu0
    %v6960 = vpop.f32.mrf.mxu0
    %v6961 = vadd.f32 %v6920, %v6960
    %v6962 = vpop.f32.mrf.mxu0
    %6963 = vdwg.mxu0
    %6964 = vmatprep.subr.bf16.mxu0 0
    %6965 = vmatpush1.bf16.xpose.msra.mxu0 0
    %6966 = vmatprep.subr.bf16.mxu0 0
    %6967 = vmatpush1.bf16.xpose.msra.mxu0 0
    %6968 = vmatprep.subr.bf16.mxu0 0
    %6969 = vmatpush1.bf16.xpose.msra.mxu0 0
    %6970 = vmatprep.subr.bf16.mxu0 0
    %6971 = vmatpush1.bf16.xpose.msra.mxu0 0
    %6972 = vmatprep.subr.bf16.mxu0 0
    %6973 = vmatpush1.bf16.xpose.msra.mxu0 0
    %6974 = vmatprep.subr.bf16.mxu0 0
    %6975 = vmatpush1.bf16.xpose.msra.mxu0 0
    %6976 = vmatprep.subr.bf16.mxu0 %v6644
    %6977 = vmatpush1.bf16.xpose.msra.mxu0 %v6643
    %6978 = vmatprep.subr.bf16.mxu0 %v6628
    %6979 = vmatpush1.bf16.xpose.msra.mxu0 %v6627
    %6980 = vmatprep.subr.bf16.mxu0 0
    %6981 = vmatpush2.bf16.xpose.msra.mxu0 0
    %6982 = vmatprep.subr.bf16.mxu0 0
    %6983 = vmatpush2.bf16.xpose.msra.mxu0 0
    %6984 = vmatprep.subr.bf16.mxu0 0
    %6985 = vmatpush2.bf16.xpose.msra.mxu0 0
    %6986 = vmatprep.subr.bf16.mxu0 0
    %6987 = vmatpush2.bf16.xpose.msra.mxu0 0
    %6988 = vmatprep.subr.bf16.mxu0 0
    %6989 = vmatpush2.bf16.xpose.msra.mxu0 0
    %6990 = vmatprep.subr.bf16.mxu0 0
    %6991 = vmatpush2.bf16.xpose.msra.mxu0 0
    %6992 = vmatprep.subr.bf16.mxu0 0
    %6993 = vmatpush2.bf16.xpose.msra.mxu0 0
    %6994 = vmatprep.subr.bf16.mxu0 0
    %6995 = vmatpush2.bf16.xpose.msra.mxu0 0
    %6996 = vmatprep.mubr.bf16.mxu0 %v6478
    %6997 = vmatmul.mubr.bf16.gmra.mxu0 %v6477
    %v6998 = vpop.f32.mrf.mxu0
    %v6999 = vadd.f32 %v6958, %v6998
    %v7000 = vpop.f32.mrf.mxu0
    %v7001 = vpop.f32.mrf.mxu0
    %v7002 = vadd.f32 %v6961, %v7001
    %v7003 = vpop.f32.mrf.mxu0
    %7004 = vdwg.mxu0
    %v7005 = vadd.f32 %v5802, %v6999
    %v7006 = vadd.f32 %v5803, %v7002
    %v7007 = vld [vmem:[#allocation11 + $0x9] sm:$0x1]
    %v7008 = vld [vmem:[#allocation11 + $0xb] sm:$0x1]
    %v7009 = vsel %vm129, %v7005, 0.0
    %7010 = vadd.xlane.f32.xlu0 %v7009
    %v7011 = vpop.xlane.xlu0 %7010
    %v7012 = vsel %vm129, %v7006, 0.0
    %7013 = vadd.xlane.f32.xlu0 %v7012
    %v7014 = vpop.xlane.xlu0 %7013
    %v7015 = vmul.f32 %v7011, %v2304
    %v7016 = vmul.f32 %v7014, %v2304
    %v7017 = vsub.f32 %v7005, %v7015
    %v7018 = vsub.f32 %v7006, %v7016
    %v7019 = vmul.f32 %v7017, %v7017
    %v7020 = vmul.f32 %v7018, %v7018
    %v7021 = vsel %vm129, %v7019, 0.0
    %7022 = vadd.xlane.f32.xlu0 %v7021
    %v7023 = vpop.xlane.xlu0 %7022
    %v7024 = vsel %vm129, %v7020, 0.0
    %7025 = vadd.xlane.f32.xlu0 %v7024
    %v7026 = vpop.xlane.xlu0 %7025
    %v7027 = vmul.f32 %v7023, %v2304
    %v7028 = vmul.f32 %v7026, %v2304
    %v7029 = vadd.f32 %v7027, 1e-05
    %v7030 = vadd.f32 %v7028, 1e-05
    %v7031 = vrsqrt.pop %v7029
    %v7032 = vrsqrt.pop %v7030
    %v7033 = vmul.f32 %v7017, %v7031
    %v7034 = vmul.f32 %v7018, %v7032
    %v7035 = vlaneseq
    %v7036 = vshrl.u32 %v7035, 7
    %v7037 = vsub.s32 0, %v7036
    %v7038 = vrot.slane %v7007, %v7037
    %v7039 = vmul.f32 %v7033, %v7038
    %v7040 = vmul.f32 %v7034, %v7038
    %v7041 = vlaneseq
    %v7042 = vshrl.u32 %v7041, 7
    %v7043 = vsub.s32 0, %v7042
    %v7044 = vrot.slane %v7008, %v7043
    %v7045 = vadd.f32 %v7039, %v7044
    %v7046 = vadd.f32 %v7040, %v7044
    %7047 = vst.msk [vmem:[#allocation13] sm:$0xff] %vm129, %v7045
    %7048 = vst.msk [vmem:[#allocation13 + $0x8] sm:$0xff] %vm129, %v7046
    // Predicated region
    $region50: #{tpu_custom_call.1} parent=1 // pred_check
      _
    $region51: #{tpu_custom_call.1} parent=1 // pred_check_branch
      %7050 = sbr.rel (0) target = $region53
    $region52: #{tpu_custom_call.1} parent=1 // pred_region
      %s7052 = ssub.s32 256, 256
      %7053 = vsyncadd [#allocation4], %s7052
      %s7054 = sshll.u32 [#allocation13], 4
      %s7055 = int_to_ptr.vmem [resolvable:$true] %s7054
      %7060 = dma.vmem_to_hbm [thread:$0]  %s7055, 256, %s6, [#allocation4], 128, 128, 8
    $region53: #{tpu_custom_call.1} parent=1 // pred_fallthru
      _
    // Predicated region
    $region54: #{tpu_custom_call.1} parent=1 // pred_check
      _
    $region55: #{tpu_custom_call.1} parent=1 // pred_check_branch
      %7062 = sbr.rel (0) target = $region57
    $region56: #{tpu_custom_call.1} parent=1 // pred_region
      %7063 = dma.done [#allocation4], 256
    $region57: #{tpu_custom_call.1} parent=1 // pred_fallthru
      _
    %7064 = vsyncpa [#allocation3], 1
    %7065 = vsyncpa [#allocation6], 1
    %7066 = vsyncpa [#allocation9], 1
    %7067 = vsyncpa [#allocation12], 1
    %7068 = vsyncpa [#allocation4], 1

</llo_original>
